<compile_context>
chip_gen: v5e
topology: v5e:2x2
jax: 0.10.0
libtpu: 0.0.40
codegen_flags: <defaults>
</compile_context>

<pallas_src>
import functools

import numpy as np
import jax
import jax.numpy as jnp
from jax.experimental import pallas as pl
from jax.experimental.pallas import tpu as pltpu

_HI = jax.lax.Precision.HIGHEST


# ----------------------------- DFT constants --------------------------------
@functools.lru_cache(maxsize=None)
def _kron_dft_np(H, W):
    """f32 Re/Im of the (H*W, H*W) Kronecker 2D-DFT matrix, built in f64.

    K[(h*W+w), (u*W+v)] = exp(-2*pi*i*(u*h/H + v*w/W)).  The exponent index is
    reduced mod H*W before forming the angle, and entries that are exactly
    zero in infinite precision are snapped to 0.0.
    """
    hw = H * W
    h = np.arange(H)
    w = np.arange(W)
    idx = (np.outer(h, h)[:, None, :, None] * W
           + np.outer(w, w)[None, :, None, :] * H) % hw
    ang = (-2.0 * np.pi / hw) * idx.reshape(hw, hw).astype(np.float64)
    kr = np.cos(ang)
    ki = np.sin(ang)
    kr[np.abs(kr) < 1e-12] = 0.0
    ki[np.abs(ki) < 1e-12] = 0.0
    return kr.astype(np.float32), ki.astype(np.float32)


# ----------------------------- Pallas kernel --------------------------------
def _fourier_branch_kernel(x_ref, wpre_ref, bpre_ref, wblk_ref, bblk_ref,
                           kfwd_hbm, kinv_hbm, o_ref,
                           kfwd_vmem, kinv_vmem, dma_sem):
    f32 = jnp.float32
    nc, hw = o_ref.shape
    inv_hw = 1.0 / hw

    # Kick off the HBM->VMEM DMAs of the DFT matrices (the bulk of the input
    # bytes) so they overlap with the pre-FFT conv below.
    cp_fwd = pltpu.make_async_copy(kfwd_hbm, kfwd_vmem, dma_sem.at[0])
    cp_inv = pltpu.make_async_copy(kinv_hbm, kinv_vmem, dma_sem.at[1])
    cp_fwd.start()
    cp_inv.start()

    # ---- 1x1 conv (pre-FFT): block-diagonal (NC,NC) matmul + bias ----------
    y = jnp.dot(wpre_ref[...], x_ref[...],
                preferred_element_type=f32, precision=_HI) + bpre_ref[...]

    # ---- forward 2D DFT: one fused matmul against [Kr | Ki]  (HW, 2*HW) ----
    cp_fwd.wait()
    z = jnp.dot(y, kfwd_vmem[...], preferred_element_type=f32, precision=_HI)
    xr = z[:, :hw]
    xi = z[:, hw:]

    amp = jnp.sqrt(xr * xr + xi * xi)          # torch.abs
    ph = jnp.arctan2(xi, xr)                   # torch.angle

    # ---- ConvBlock(amp) / ConvBlock(phase): stacked block-diag conv + ReLU -
    ap = jnp.concatenate([amp, ph], axis=0)    # (2*NC, HW)
    ap = jnp.dot(wblk_ref[...], ap,
                 preferred_element_type=f32, precision=_HI) + bblk_ref[...]
    ap = jnp.maximum(ap, 0.0)                  # BN (eval) folded into weights
    a = ap[:nc, :]
    p = ap[nc:, :]

    # ---- amp * exp(i*phase), inverse 2D DFT real part -----------------------
    # IFFT matrix = conj(K)/(H*W) => Re(out) = (cr@Kr + ci@Ki)/(H*W)
    cr = a * jnp.cos(p)
    ci = a * jnp.sin(p)
    cat = jnp.concatenate([cr, ci], axis=1)    # (NC, 2*HW)
    cp_inv.wait()
    out_r = jnp.dot(cat, kinv_vmem[...],
                    preferred_element_type=f32, precision=_HI)
    o_ref[...] = (out_r * inv_hw).astype(o_ref.dtype)


# ------------------------------ wrapper --------------------------------------
def fourier_branch_pallas(x, w_pre, b_pre, w_amp, b_amp, w_ph, b_ph):
    """w_amp/b_amp, w_ph/b_ph must already have eval-mode BatchNorm folded."""
    N, C, H, W = x.shape
    HW, NC = H * W, N * C

    # Trace-time numpy constants (baked into the jitted graph).
    kr_np, ki_np = _kron_dft_np(H, W)
    kfwd = jnp.asarray(np.concatenate([kr_np, ki_np], axis=1))   # (HW, 2*HW)
    kinv = jnp.asarray(np.concatenate([kr_np, ki_np], axis=0))   # (2*HW, HW)

    # Block-diagonal (over batch) 1x1-conv weights; amp/phase convs stacked.
    eye_n = jnp.eye(N, dtype=jnp.float32)
    wpre_big = jnp.kron(eye_n, w_pre)                            # (NC, NC)
    wamp_big = jnp.kron(eye_n, w_amp)
    wph_big = jnp.kron(eye_n, w_ph)
    zeros = jnp.zeros((NC, NC), jnp.float32)
    wblk = jnp.block([[wamp_big, zeros], [zeros, wph_big]])      # (2*NC, 2*NC)
    bpre = jnp.tile(b_pre, N)[:, None]                           # (NC, 1)
    bblk = jnp.concatenate([jnp.tile(b_amp, N), jnp.tile(b_ph, N)])[:, None]

    x_slab = x.reshape(NC, HW)                                   # lane-dense

    flops = 2 * (NC * NC * HW + NC * HW * (2 * HW)
                 + (2 * NC) * (2 * NC) * HW + NC * (2 * HW) * HW)
    bytes_acc = 4 * (2 * NC * HW + NC * NC + NC + 4 * NC * NC + 2 * NC
                     + 2 * 2 * HW * HW)

    vmem = pl.BlockSpec(memory_space=pltpu.MemorySpace.VMEM)
    hbm = pl.BlockSpec(memory_space=pl.ANY)
    out_slab = pl.pallas_call(
        _fourier_branch_kernel,
        out_shape=jax.ShapeDtypeStruct((NC, HW), jnp.float32),
        in_specs=[vmem, vmem, vmem, vmem, vmem, hbm, hbm],
        out_specs=vmem,
        scratch_shapes=[
            pltpu.VMEM((HW, 2 * HW), jnp.float32),
            pltpu.VMEM((2 * HW, HW), jnp.float32),
            pltpu.SemaphoreType.DMA((2,)),
        ],
        cost_estimate=pl.CostEstimate(
            flops=flops, transcendentals=4 * NC * HW,
            bytes_accessed=bytes_acc),
    )(x_slab, wpre_big, bpre, wblk, bblk, kfwd, kinv)

    return out_slab.reshape(N, C, H, W)


fourier_branch = jax.jit(fourier_branch_pallas)


# --------------------- deterministic parameter setup -------------------------
def init_params(key, C):
    keys = jax.random.split(key, 14)
    bound = 1.0 / jnp.sqrt(jnp.float32(C))  # 1x1 conv fan_in = C

    def u(k, shape):
        return jax.random.uniform(k, shape, jnp.float32, -bound, bound)

    p = {}
    p["w_pre"], p["b_pre"] = u(keys[0], (C, C)), u(keys[1], (C,))
    p["w_amp"], p["b_amp"] = u(keys[2], (C, C)), u(keys[3], (C,))
    p["w_ph"], p["b_ph"] = u(keys[4], (C, C)), u(keys[5], (C,))
    # BatchNorm2d (eval mode) params / running stats — deterministic, nontrivial
    p["g_amp"] = 1.0 + 0.1 * jax.random.normal(keys[6], (C,), jnp.float32)
    p["be_amp"] = 0.05 * jax.random.normal(keys[7], (C,), jnp.float32)
    p["m_amp"] = 0.1 * jax.random.normal(keys[8], (C,), jnp.float32)
    p["v_amp"] = 1.0 + 0.1 * jnp.abs(jax.random.normal(keys[9], (C,), jnp.float32))
    p["g_ph"] = 1.0 + 0.1 * jax.random.normal(keys[10], (C,), jnp.float32)
    p["be_ph"] = 0.05 * jax.random.normal(keys[11], (C,), jnp.float32)
    p["m_ph"] = 0.1 * jax.random.normal(keys[12], (C,), jnp.float32)
    p["v_ph"] = 1.0 + 0.1 * jnp.abs(jax.random.normal(keys[13], (C,), jnp.float32))
    return p


def fold_bn(w, b, gamma, beta, mean, var, eps=1e-5):
    # eval-mode BatchNorm folded into the preceding 1x1 conv
    s = gamma / jnp.sqrt(var + eps)
    return w * s[:, None], (b - mean) * s + beta


# ----------------------------- JAX reference ---------------------------------
def _conv1x1(x, w, b):
    return jnp.einsum("oc,nchw->nohw", w, x, precision=_HI) \
        + b[None, :, None, None]


def _bn_eval(x, gamma, beta, mean, var, eps=1e-5):
    inv = gamma / jnp.sqrt(var + eps)
    return (x - mean[None, :, None, None]) * inv[None, :, None, None] \
        + beta[None, :, None, None]


def reference(x, p):
    """Pure-JAX reference for FourierTransformBranch (BatchNorm in eval mode).

    fft2/ifft2 are evaluated as explicit DFT matmuls (mathematically identical
    to torch.fft.fft2) so the exactly-real DFT bins (DC / Nyquist) keep a zero
    imaginary part and angle()'s +/-pi branch is deterministic — otherwise the
    comparison would depend on implementation-defined float noise.  The DFT
    matrices themselves are validated against jnp.fft.fft2 in __main__.
    """
    N, C, H, W = x.shape
    HW = H * W
    kr_np, ki_np = _kron_dft_np(H, W)
    kr, ki = jnp.asarray(kr_np), jnp.asarray(ki_np)

    y = _conv1x1(x, p["w_pre"], p["b_pre"])
    y_slab = y.reshape(N * C, HW)
    xr = jnp.dot(y_slab, kr, precision=_HI)
    xi = jnp.dot(y_slab, ki, precision=_HI)
    amp = jnp.sqrt(xr * xr + xi * xi).reshape(N, C, H, W)
    ph = jnp.arctan2(xi, xr).reshape(N, C, H, W)
    amp = jnp.maximum(_bn_eval(_conv1x1(amp, p["w_amp"], p["b_amp"]),
                               p["g_amp"], p["be_amp"], p["m_amp"], p["v_amp"]), 0.0)
    ph = jnp.maximum(_bn_eval(_conv1x1(ph, p["w_ph"], p["b_ph"]),
                              p["g_ph"], p["be_ph"], p["m_ph"], p["v_ph"]), 0.0)
    cr = (amp * jnp.cos(ph)).reshape(N * C, HW)
    ci = (amp * jnp.sin(ph)).reshape(N * C, HW)
    out = (jnp.dot(cr, kr, precision=_HI) + jnp.dot(ci, ki, precision=_HI)) / HW
    return out.reshape(N, C, H, W).astype(jnp.float32)


# --------------------------------- main ---------------------------------------
if __name__ == "__main__":
    key = jax.random.PRNGKey(0)
    kx, kp = jax.random.split(key)
    N, C, H, W = 2, 4, 16, 16
    x = jax.random.normal(kx, (N, C, H, W), jnp.float32)
    p = init_params(kp, C)

    w_amp_f, b_amp_f = fold_bn(p["w_amp"], p["b_amp"],
                               p["g_amp"], p["be_amp"], p["m_amp"], p["v_amp"])
    w_ph_f, b_ph_f = fold_bn(p["w_ph"], p["b_ph"],
                             p["g_ph"], p["be_ph"], p["m_ph"], p["v_ph"])

    out = fourier_branch(x, p["w_pre"], p["b_pre"],
                         w_amp_f, b_amp_f, w_ph_f, b_ph_f)
    out = jax.block_until_ready(out)

    # Check 1: the Kronecker-DFT matrices reproduce jnp.fft.fft2 on the
    # (real) pre-conv activations — validates the transform with no
    # angle branch-cut ambiguity involved.
    y = _conv1x1(x, p["w_pre"], p["b_pre"])
    kr_np, ki_np = _kron_dft_np(H, W)
    y_slab = y.reshape(N * C, H * W)
    xr = jnp.dot(y_slab, jnp.asarray(kr_np), precision=_HI)
    xi = jnp.dot(y_slab, jnp.asarray(ki_np), precision=_HI)
    xf = jnp.fft.fft2(y, axes=(-2, -1)).reshape(N * C, H * W)
    dft_err = float(jnp.max(jnp.abs(xr - xf.real)) +
                    jnp.max(jnp.abs(xi - xf.imag)))
    assert dft_err < 1e-2, f"DFT matrix err {dft_err}"

    # Check 2: end-to-end kernel vs the pure-JAX reference.
    ref = reference(x, p)
    max_err = float(jnp.max(jnp.abs(out - ref)))
    assert max_err < 2e-3, f"max abs err {max_err}"
    print("KERNEL_OK")
</pallas_src>

<mosaic_0001>
module attributes {stable_mosaic.version = 11 : i64} {
  func.func @_fourier_branch_kernel(%arg0: memref<8x256xf32, #tpu.memory_space<vmem>>, %arg1: memref<8x8xf32, #tpu.memory_space<vmem>>, %arg2: memref<8x1xf32, #tpu.memory_space<vmem>>, %arg3: memref<16x16xf32, #tpu.memory_space<vmem>>, %arg4: memref<16x1xf32, #tpu.memory_space<vmem>>, %arg5: memref<256x512xf32, #tpu.memory_space<any>>, %arg6: memref<512x256xf32, #tpu.memory_space<any>>, %arg7: memref<8x256xf32, #tpu.memory_space<vmem>>, %arg8: memref<256x512xf32, #tpu.memory_space<vmem>>, %arg9: memref<512x256xf32, #tpu.memory_space<vmem>>, %arg10: memref<2x!tpu.dma_semaphore, #tpu.memory_space<semaphore_mem>>) attributes {dimension_semantics = [], scalar_prefetch = 0 : i64, scratch_operands = 3 : i64, tpu.core_type = #tpu.core_type<tc>} {
    %c0_i32 = arith.constant 0 : i32
    %0 = tpu.memref_slice %arg10[%c0_i32] : memref<2x!tpu.dma_semaphore, #tpu.memory_space<semaphore_mem>> -> memref<1x!tpu.dma_semaphore, #tpu.memory_space<semaphore_mem>>
    %1 = tpu.memref_squeeze %0 : memref<1x!tpu.dma_semaphore, #tpu.memory_space<semaphore_mem>> -> memref<!tpu.dma_semaphore, #tpu.memory_space<semaphore_mem>>
    tpu.enqueue_dma source(%arg5 : memref<256x512xf32, #tpu.memory_space<any>>) target(%arg8 : memref<256x512xf32, #tpu.memory_space<vmem>>) target_semaphore(%1 : memref<!tpu.dma_semaphore, #tpu.memory_space<semaphore_mem>>)
    %c1_i32 = arith.constant 1 : i32
    %2 = tpu.memref_slice %arg10[%c1_i32] : memref<2x!tpu.dma_semaphore, #tpu.memory_space<semaphore_mem>> -> memref<1x!tpu.dma_semaphore, #tpu.memory_space<semaphore_mem>>
    %3 = tpu.memref_squeeze %2 : memref<1x!tpu.dma_semaphore, #tpu.memory_space<semaphore_mem>> -> memref<!tpu.dma_semaphore, #tpu.memory_space<semaphore_mem>>
    tpu.enqueue_dma source(%arg6 : memref<512x256xf32, #tpu.memory_space<any>>) target(%arg9 : memref<512x256xf32, #tpu.memory_space<vmem>>) target_semaphore(%3 : memref<!tpu.dma_semaphore, #tpu.memory_space<semaphore_mem>>)
    %c0 = arith.constant 0 : index
    %c0_0 = arith.constant 0 : index
    %4 = vector.load %arg1[%c0, %c0_0] : memref<8x8xf32, #tpu.memory_space<vmem>>, vector<8x8xf32>
    %c0_1 = arith.constant 0 : index
    %c0_2 = arith.constant 0 : index
    %5 = vector.load %arg0[%c0_1, %c0_2] : memref<8x256xf32, #tpu.memory_space<vmem>>, vector<8x256xf32>
    %cst = arith.constant dense<0.000000e+00> : vector<8x256xf32>
    %6 = tpu.matmul %4, %5, %cst {dimension_numbers = #tpu.dot_dimension_numbers<[1], [0], [0], [1], [0, 0, 1, 1], [], []>, precision = #tpu.contract_precision<fp32>} : vector<8x8xf32>, vector<8x256xf32>, vector<8x256xf32> -> vector<8x256xf32>
    %c0_3 = arith.constant 0 : index
    %c0_4 = arith.constant 0 : index
    %7 = vector.load %arg2[%c0_3, %c0_4] : memref<8x1xf32, #tpu.memory_space<vmem>>, vector<8x1xf32>
    %8 = vector.broadcast %7 : vector<8x1xf32> to vector<8x256xf32>
    %9 = arith.addf %6, %8 : vector<8x256xf32>
    %c0_i32_5 = arith.constant 0 : i32
    %10 = tpu.memref_slice %arg10[%c0_i32_5] : memref<2x!tpu.dma_semaphore, #tpu.memory_space<semaphore_mem>> -> memref<1x!tpu.dma_semaphore, #tpu.memory_space<semaphore_mem>>
    %11 = tpu.memref_squeeze %10 : memref<1x!tpu.dma_semaphore, #tpu.memory_space<semaphore_mem>> -> memref<!tpu.dma_semaphore, #tpu.memory_space<semaphore_mem>>
    tpu.wait_dma2 semaphore(%11 : memref<!tpu.dma_semaphore, #tpu.memory_space<semaphore_mem>>) src(%arg5 : memref<256x512xf32, #tpu.memory_space<any>>) dst(%arg8 : memref<256x512xf32, #tpu.memory_space<vmem>>)
    %c0_6 = arith.constant 0 : index
    %c0_7 = arith.constant 0 : index
    %12 = vector.load %arg8[%c0_6, %c0_7] : memref<256x512xf32, #tpu.memory_space<vmem>>, vector<256x512xf32>
    %cst_8 = arith.constant dense<0.000000e+00> : vector<8x512xf32>
    %13 = tpu.matmul %9, %12, %cst_8 {dimension_numbers = #tpu.dot_dimension_numbers<[1], [0], [0], [1], [0, 0, 1, 1], [], []>, precision = #tpu.contract_precision<fp32>} : vector<8x256xf32>, vector<256x512xf32>, vector<8x512xf32> -> vector<8x512xf32>
    %14 = vector.extract_strided_slice %13 {offsets = [0, 0], sizes = [8, 256], strides = [1, 1]} : vector<8x512xf32> to vector<8x256xf32>
    %15 = vector.extract_strided_slice %13 {offsets = [0, 256], sizes = [8, 256], strides = [1, 1]} : vector<8x512xf32> to vector<8x256xf32>
    %16 = arith.mulf %14, %14 : vector<8x256xf32>
    %17 = arith.mulf %15, %15 : vector<8x256xf32>
    %18 = arith.addf %16, %17 : vector<8x256xf32>
    %19 = math.sqrt %18 : vector<8x256xf32>
    %20 = math.atan2 %15, %14 : vector<8x256xf32>
    %21 = tpu.concatenate %19, %20 in 0 : vector<8x256xf32>, vector<8x256xf32> -> vector<16x256xf32>
    %c0_9 = arith.constant 0 : index
    %c0_10 = arith.constant 0 : index
    %22 = vector.load %arg3[%c0_9, %c0_10] : memref<16x16xf32, #tpu.memory_space<vmem>>, vector<16x16xf32>
    %cst_11 = arith.constant dense<0.000000e+00> : vector<16x256xf32>
    %23 = tpu.matmul %22, %21, %cst_11 {dimension_numbers = #tpu.dot_dimension_numbers<[1], [0], [0], [1], [0, 0, 1, 1], [], []>, precision = #tpu.contract_precision<fp32>} : vector<16x16xf32>, vector<16x256xf32>, vector<16x256xf32> -> vector<16x256xf32>
    %c0_12 = arith.constant 0 : index
    %c0_13 = arith.constant 0 : index
    %24 = vector.load %arg4[%c0_12, %c0_13] : memref<16x1xf32, #tpu.memory_space<vmem>>, vector<16x1xf32>
    %25 = vector.broadcast %24 : vector<16x1xf32> to vector<16x256xf32>
    %26 = arith.addf %23, %25 : vector<16x256xf32>
    %cst_14 = arith.constant 0.000000e+00 : f32
    %27 = vector.broadcast %cst_14 : f32 to vector<16x256xf32>
    %28 = arith.maximumf %26, %27 : vector<16x256xf32>
    %29 = vector.extract_strided_slice %28 {offsets = [0, 0], sizes = [8, 256], strides = [1, 1]} : vector<16x256xf32> to vector<8x256xf32>
    %30 = vector.extract_strided_slice %28 {offsets = [8, 0], sizes = [8, 256], strides = [1, 1]} : vector<16x256xf32> to vector<8x256xf32>
    %31 = math.cos %30 : vector<8x256xf32>
    %32 = arith.mulf %29, %31 : vector<8x256xf32>
    %33 = math.sin %30 : vector<8x256xf32>
    %34 = arith.mulf %29, %33 : vector<8x256xf32>
    %35 = tpu.concatenate %32, %34 in 1 : vector<8x256xf32>, vector<8x256xf32> -> vector<8x512xf32>
    %c1_i32_15 = arith.constant 1 : i32
    %36 = tpu.memref_slice %arg10[%c1_i32_15] : memref<2x!tpu.dma_semaphore, #tpu.memory_space<semaphore_mem>> -> memref<1x!tpu.dma_semaphore, #tpu.memory_space<semaphore_mem>>
    %37 = tpu.memref_squeeze %36 : memref<1x!tpu.dma_semaphore, #tpu.memory_space<semaphore_mem>> -> memref<!tpu.dma_semaphore, #tpu.memory_space<semaphore_mem>>
    tpu.wait_dma2 semaphore(%37 : memref<!tpu.dma_semaphore, #tpu.memory_space<semaphore_mem>>) src(%arg6 : memref<512x256xf32, #tpu.memory_space<any>>) dst(%arg9 : memref<512x256xf32, #tpu.memory_space<vmem>>)
    %c0_16 = arith.constant 0 : index
    %c0_17 = arith.constant 0 : index
    %38 = vector.load %arg9[%c0_16, %c0_17] : memref<512x256xf32, #tpu.memory_space<vmem>>, vector<512x256xf32>
    %cst_18 = arith.constant dense<0.000000e+00> : vector<8x256xf32>
    %39 = tpu.matmul %35, %38, %cst_18 {dimension_numbers = #tpu.dot_dimension_numbers<[1], [0], [0], [1], [0, 0, 1, 1], [], []>, precision = #tpu.contract_precision<fp32>} : vector<8x512xf32>, vector<512x256xf32>, vector<8x256xf32> -> vector<8x256xf32>
    %cst_19 = arith.constant 3.906250e-03 : f32
    %40 = vector.broadcast %cst_19 : f32 to vector<8x256xf32>
    %41 = arith.mulf %39, %40 : vector<8x256xf32>
    %c0_20 = arith.constant 0 : index
    %c0_21 = arith.constant 0 : index
    %42 = vector.load %arg7[%c0_20, %c0_21] : memref<8x256xf32, #tpu.memory_space<vmem>>, vector<8x256xf32>
    tpu.vector_store %arg7[%c0_20, %c0_21], %41 {strides = array<i32>} : memref<8x256xf32, #tpu.memory_space<vmem>>, vector<8x256xf32>,
    return
  }
}

</mosaic_0001>

<llo_original>
// kernel: tile.18
$region0: #{tile.18}
  #allocation0 [shape = 's32[1]{0}', space=sflag, size = 0x4, scoped, tag = 'scoped memory for tile.18']
  %s0 = inlined_call_operand.vmem [shape: f32[4], index: 0, kind: input, shape index: {}]
  %s1 = inlined_call_operand.vmem [shape: f32[2,4], index: 1, kind: output, shape index: {}]
  // Predicated region
  $region2: #{tile.18} parent=0 // pred_check
    _
  $region3: #{tile.18} parent=0 // pred_check_branch
    %3 = sbr.rel (0) target = $region5
  $region4: #{tile.18} parent=0 // pred_region
    _
  $region5: #{tile.18} parent=0 // pred_fallthru
    _
  %v4 = vld [vmem:[%s0] ss:$0 sm:$0xff]
  %5 = vst [vmem:[%s1] sm:$0x3] %v4

// kernel: tile.24
$region0: #{tile.24}
  %s0 = inlined_call_operand.vmem [shape: f32[2,4], index: 0, kind: input, shape index: {}]
  %s1 = inlined_call_operand.vmem [shape: f32[8], index: 1, kind: output, shape index: {}]
  $region1: #{tile.24} parent=0
    #allocation0 [shape = 'u8[4096]{0}', space=vmem, size = 0x1000, scoped, tag = 'scoped mem for output reshape']
    #allocation1 [shape = 'u8[4096]{0}', space=vmem, size = 0x1000, scoped, tag = 'scoped mem for input reshape']
    %s3 = ssub.s32 4, 1
    %v4 = vld [vmem:[%s0] sm:%s3]
    %5 = vst [vmem:[#allocation1] sm:%s3] %v4
    %v6 = vld [vmem:[#allocation1] sm:$0x1]
    %vm7 = vcmask 31744
    %8 = vst.msk [vmem:[#allocation0] sm:$0x1] %vm7, %v6
    %s9 = scalar_lea.vmem [#allocation1], 1
    %v10 = vld [vmem:[%s9] sm:$0x1]
    %11 = vrot.lane.b32.xlu0 %v10, 4
    %v12 = vpop.permute.xlu0 %11
    %vm13 = vcmask 64544
    %14 = vst.msk [vmem:[#allocation0] sm:$0x1] %vm13, %v12
    %s16 = ssub.s32 2, 1
    %v17 = vld [vmem:[#allocation0] sm:%s16]
    %s19 = ssub.s32 2, 1
    %20 = vst [vmem:[%s1] sm:%s19] %v17

// kernel: tile.0
$region0: #{tile.0}
  %s0 = inlined_call_operand.vmem [shape: f32[2,4], index: 0, kind: input, shape index: {}]
  %s1 = inlined_call_operand.vmem [shape: f32[8,1], index: 1, kind: output, shape index: {}]
  $region1: #{tile.0} parent=0
    #allocation0 [shape = 'u8[4096]{0}', space=vmem, size = 0x1000, scoped, tag = 'scoped mem for input reshape']
    %s3 = ssub.s32 4, 1
    %v4 = vld [vmem:[%s0] sm:%s3]
    %5 = vst [vmem:[#allocation0] sm:%s3] %v4
    %v6 = vld [vmem:[#allocation0] sm:$0x3]
    %vm7 = vcmask 7168
    %8 = vst.msk [vmem:[%s1] ss:$4 sm:$0x3] %vm7, %v6
    %v9 = vld [vmem:[#allocation0] sm:$0x3]
    %10 = vrot.lane.b32.xlu0 %v9, 127
    %v11 = vpop.permute.xlu0 %10
    %vm12 = vcmask 7168
    %s13 = scalar_lea.vmem %s1, 1
    %14 = vst.msk [vmem:[%s13] ss:$4 sm:$0x3] %vm12, %v11
    %v15 = vld [vmem:[#allocation0] sm:$0x3]
    %16 = vrot.lane.b32.xlu0 %v15, 126
    %v17 = vpop.permute.xlu0 %16
    %vm18 = vcmask 7168
    %s19 = scalar_lea.vmem %s1, 2
    %20 = vst.msk [vmem:[%s19] ss:$4 sm:$0x3] %vm18, %v17
    %v21 = vld [vmem:[#allocation0] sm:$0x3]
    %22 = vrot.lane.b32.xlu0 %v21, 125
    %v23 = vpop.permute.xlu0 %22
    %vm24 = vcmask 7168
    %s25 = scalar_lea.vmem %s1, 3
    %26 = vst.msk [vmem:[%s25] ss:$4 sm:$0x3] %vm24, %v23

// kernel: fourier_branch_pallas.1
$region0: #{fourier_branch_pallas.1}
  #allocation0 [shape = 'u32[]', space=smem, size = 0x4, offset = 0x4, fixed_abs, tag = 'smem constant byte address 0x4 - core index']
  #allocation1 [shape = 'u32[72,128]{1,0:T(1,128)}', space=vmem, size = 0x9000, scoped, tag = 'internal scratch']
  #allocation2 [shape = 'f32[256,512]{1,0:T(8,128)}', space=vmem, size = 0x80000, scoped, tag = 'scratch operand']
  #allocation3 [shape = 'f32[512,256]{1,0:T(8,128)}', space=vmem, size = 0x80000, scoped, tag = 'scratch operand']
  #allocation4 [shape = 's32[2]{0}', space=sflag, size = 0x8, scoped, tag = 'scratch operand']
  #allocation5 [shape = 's32[]', space=sflag, size = 0x4, offset = 0, fixed_abs, tag = 'sflag constant byte address 0x0 - dummy sync flag']
  #allocation6 [shape = 's32[]', space=sflag, size = 0x4, offset = 0, fixed_abs, tag = 'sflag constant byte address 0x0 - dummy sync flag']
  #allocation7 [shape = 'u32[]', space=smem, size = 0x4, offset = 0x44, fixed_abs, tag = 'smem constant byte address 0x44 - assertion arg 0']
  #allocation8 [shape = 'u32[]', space=smem, size = 0x4, offset = 0x48, fixed_abs, tag = 'smem constant byte address 0x48 - assertion arg 1']
  #allocation9 [shape = 's32[]', space=sflag, size = 0x4, offset = 0, fixed_abs, tag = 'sflag constant byte address 0x0 - dummy sync flag']
  #allocation10 [shape = 's32[]', space=sflag, size = 0x4, offset = 0, fixed_abs, tag = 'sflag constant byte address 0x0 - dummy sync flag']
  %s0 = inlined_call_operand.vmem [shape: f32[8,256], index: 0, kind: input, shape index: {}]
  %s1 = inlined_call_operand.vmem [shape: f32[8,8], index: 1, kind: input, shape index: {}]
  %s2 = inlined_call_operand.vmem [shape: f32[8,1], index: 2, kind: input, shape index: {}]
  %s3 = inlined_call_operand.vmem [shape: f32[16,16], index: 3, kind: input, shape index: {}]
  %s4 = inlined_call_operand.vmem [shape: f32[16,1], index: 4, kind: input, shape index: {}]
  %s5 = inlined_call_operand.hbm [shape: f32[256,512], index: 5, kind: input, shape index: {}]
  %s6 = inlined_call_operand.hbm [shape: f32[512,256], index: 6, kind: input, shape index: {}]
  %s7 = inlined_call_operand.vmem [shape: f32[8,256], index: 7, kind: output, shape index: {}]
  %s8 = sld [smem:[#allocation0]]
  $region38: #{fourier_branch_pallas.1} parent=0
    _
  %s10 = ssub.s32 1, %s8
  %s11 = scalar_select 0, %s10, %s8
  // Predicated region
  $region2: #{fourier_branch_pallas.1} parent=0 // pred_check
    _
  $region3: #{fourier_branch_pallas.1} parent=0 // pred_check_branch
    %13 = sbr.rel (0) target = $region5
  $region4: #{fourier_branch_pallas.1} parent=0 // pred_region
    _
  $region5: #{fourier_branch_pallas.1} parent=0 // pred_fallthru
    _
  // Predicated region
  $region6: #{fourier_branch_pallas.1} parent=0 // pred_check
    _
  $region7: #{fourier_branch_pallas.1} parent=0 // pred_check_branch
    %15 = sbr.rel (0) target = $region9
  $region8: #{fourier_branch_pallas.1} parent=0 // pred_region
    _
  $region9: #{fourier_branch_pallas.1} parent=0 // pred_fallthru
    _
  // Predicated region
  $region10: #{fourier_branch_pallas.1} parent=0 // pred_check
    _
  $region11: #{fourier_branch_pallas.1} parent=0 // pred_check_branch
    %17 = sbr.rel (0) target = $region13
  $region12: #{fourier_branch_pallas.1} parent=0 // pred_region
    _
  $region13: #{fourier_branch_pallas.1} parent=0 // pred_fallthru
    _
  // Predicated region
  $region14: #{fourier_branch_pallas.1} parent=0 // pred_check
    _
  $region15: #{fourier_branch_pallas.1} parent=0 // pred_check_branch
    %19 = sbr.rel (0) target = $region17
  $region16: #{fourier_branch_pallas.1} parent=0 // pred_region
    _
  $region17: #{fourier_branch_pallas.1} parent=0 // pred_fallthru
    _
  // Predicated region
  $region18: #{fourier_branch_pallas.1} parent=0 // pred_check
    _
  $region19: #{fourier_branch_pallas.1} parent=0 // pred_check_branch
    %21 = sbr.rel (0) target = $region21
  $region20: #{fourier_branch_pallas.1} parent=0 // pred_region
    _
  $region21: #{fourier_branch_pallas.1} parent=0 // pred_fallthru
    _
  // Predicated region
  $region22: #{fourier_branch_pallas.1} parent=0 // pred_check
    _
  $region23: #{fourier_branch_pallas.1} parent=0 // pred_check_branch
    %23 = sbr.rel target = $region25
  $region24: #{fourier_branch_pallas.1} parent=0 // pred_region
    %24 = sst [smem:[#allocation7]] [#allocation6]
    %25 = sst [smem:[#allocation8]] [#allocation5]
  $region25: #{fourier_branch_pallas.1} parent=0 // pred_fallthru
    _
  %27 = shalt.err (0)
  %s29 = sshll.u32 %s5, 4
  %s30 = int_to_ptr.hbm [resolvable:$true] %s29
  %s31 = sshll.u32 [#allocation2], 4
  %s32 = int_to_ptr.vmem [resolvable:$true] %s31
  %34 = dma.hbm_to_vmem [thread:$0]  %s30, 16384, %s32, [#allocation4]
  %s35 = scalar_lea.sflag [#allocation4], 1
  // Predicated region
  $region26: #{fourier_branch_pallas.1} parent=0 // pred_check
    _
  $region27: #{fourier_branch_pallas.1} parent=0 // pred_check_branch
    %37 = sbr.rel target = $region29
  $region28: #{fourier_branch_pallas.1} parent=0 // pred_region
    %38 = sst [smem:[#allocation7]] [#allocation10]
    %39 = sst [smem:[#allocation8]] [#allocation9]
  $region29: #{fourier_branch_pallas.1} parent=0 // pred_fallthru
    _
  %41 = shalt.err (0)
  %s43 = sshll.u32 %s6, 4
  %s44 = int_to_ptr.hbm [resolvable:$true] %s43
  %s45 = sshll.u32 [#allocation3], 4
  %s46 = int_to_ptr.vmem [resolvable:$true] %s45
  %48 = dma.hbm_to_vmem [thread:$0]  %s44, 16384, %s46, %s35
  %v49 = vld [vmem:[%s1] sm:$0xff]
  %v50 = vld [vmem:[%s0] sm:$0xff]
  %v51 = vld [vmem:[%s0 + $0x8] sm:$0xff]
  %v52 = vld [vmem:[%s2] sm:$0xff]
  %54 = vset.pattern.permute.xlu0 0
  %55 = vperm.xlu0 %54, %v52
  %v56 = vpop.permute.xlu0 %55
  %vm58 = vcmask 64512
  %v60 = vsel %vm58, %v49, 0
  %62 = vmatpush.msra.mxu0 0.0
  %63 = vmatpush.msra.mxu0 0.0
  %64 = vmatpush.msra.mxu0 0.0
  %65 = vmatpush.msra.mxu0 0.0
  %66 = vmatpush.msra.mxu0 0.0
  %67 = vmatpush.msra.mxu0 0.0
  %68 = vmatpush.msra.mxu0 0.0
  %69 = vmatpush.msra.mxu0 0.0
  %70 = vmatpush.msra.mxu0 0.0
  %71 = vmatpush.msra.mxu0 0.0
  %72 = vmatpush.msra.mxu0 0.0
  %73 = vmatpush.msra.mxu0 0.0
  %74 = vmatpush.msra.mxu0 0.0
  %75 = vmatpush.msra.mxu0 0.0
  %76 = vmatpush.msra.mxu0 0.0
  %v77 = vand.u32 %v50, 4294901760
  %78 = vmatpush.msra.mxu0 %v77
  %v79 = vand.u32 %v60, 4294901760
  %v80 = vsub.f32 %v60, %v79
  %v81 = vand.u32 %v80, 4294901760
  %v82 = vsub.f32 %v80, %v81
  %v83 = vand.u32 %v82, 4294901760
  %84 = vmatmul.f32.gmra.mxu0 %v83
  %v85 = vpop.f32.mrf.mxu0
  %v86 = vadd.f32 %v56, %v85
  %87 = vdwg.mxu0
  %88 = vmatpush.msra.mxu0 0.0
  %89 = vmatpush.msra.mxu0 0.0
  %90 = vmatpush.msra.mxu0 0.0
  %91 = vmatpush.msra.mxu0 0.0
  %92 = vmatpush.msra.mxu0 0.0
  %93 = vmatpush.msra.mxu0 0.0
  %94 = vmatpush.msra.mxu0 0.0
  %95 = vmatpush.msra.mxu0 0.0
  %96 = vmatpush.msra.mxu0 0.0
  %97 = vmatpush.msra.mxu0 0.0
  %98 = vmatpush.msra.mxu0 0.0
  %99 = vmatpush.msra.mxu0 0.0
  %100 = vmatpush.msra.mxu0 0.0
  %101 = vmatpush.msra.mxu0 0.0
  %102 = vmatpush.msra.mxu0 0.0
  %v103 = vand.u32 %v50, 4294901760
  %v104 = vsub.f32 %v50, %v103
  %v105 = vand.u32 %v104, 4294901760
  %v106 = vsub.f32 %v104, %v105
  %v107 = vand.u32 %v106, 4294901760
  %108 = vmatpush.msra.mxu0 %v107
  %v109 = vand.u32 %v60, 4294901760
  %110 = vmatmul.f32.gmra.mxu0 %v109
  %v111 = vpop.f32.mrf.mxu0
  %v112 = vadd.f32 %v86, %v111
  %113 = vdwg.mxu0
  %114 = vmatpush.msra.mxu0 0.0
  %115 = vmatpush.msra.mxu0 0.0
  %116 = vmatpush.msra.mxu0 0.0
  %117 = vmatpush.msra.mxu0 0.0
  %118 = vmatpush.msra.mxu0 0.0
  %119 = vmatpush.msra.mxu0 0.0
  %120 = vmatpush.msra.mxu0 0.0
  %121 = vmatpush.msra.mxu0 0.0
  %122 = vmatpush.msra.mxu0 0.0
  %123 = vmatpush.msra.mxu0 0.0
  %124 = vmatpush.msra.mxu0 0.0
  %125 = vmatpush.msra.mxu0 0.0
  %126 = vmatpush.msra.mxu0 0.0
  %127 = vmatpush.msra.mxu0 0.0
  %128 = vmatpush.msra.mxu0 0.0
  %v129 = vand.u32 %v50, 4294901760
  %v130 = vsub.f32 %v50, %v129
  %131 = vmatpush.msra.mxu0 %v130
  %v132 = vand.u32 %v60, 4294901760
  %v133 = vsub.f32 %v60, %v132
  %134 = vmatmul.f32.gmra.mxu0 %v133
  %v135 = vpop.f32.mrf.mxu0
  %v136 = vadd.f32 %v112, %v135
  %137 = vdwg.mxu0
  %138 = vmatpush.msra.mxu0 0.0
  %139 = vmatpush.msra.mxu0 0.0
  %140 = vmatpush.msra.mxu0 0.0
  %141 = vmatpush.msra.mxu0 0.0
  %142 = vmatpush.msra.mxu0 0.0
  %143 = vmatpush.msra.mxu0 0.0
  %144 = vmatpush.msra.mxu0 0.0
  %145 = vmatpush.msra.mxu0 0.0
  %146 = vmatpush.msra.mxu0 0.0
  %147 = vmatpush.msra.mxu0 0.0
  %148 = vmatpush.msra.mxu0 0.0
  %149 = vmatpush.msra.mxu0 0.0
  %150 = vmatpush.msra.mxu0 0.0
  %151 = vmatpush.msra.mxu0 0.0
  %152 = vmatpush.msra.mxu0 0.0
  %v153 = vand.u32 %v50, 4294901760
  %154 = vmatpush.msra.mxu0 %v153
  %v155 = vand.u32 %v60, 4294901760
  %v156 = vsub.f32 %v60, %v155
  %v157 = vand.u32 %v156, 4294901760
  %158 = vmatmul.f32.gmra.mxu0 %v157
  %v159 = vpop.f32.mrf.mxu0
  %v160 = vadd.f32 %v136, %v159
  %161 = vdwg.mxu0
  %162 = vmatpush.msra.mxu0 0.0
  %163 = vmatpush.msra.mxu0 0.0
  %164 = vmatpush.msra.mxu0 0.0
  %165 = vmatpush.msra.mxu0 0.0
  %166 = vmatpush.msra.mxu0 0.0
  %167 = vmatpush.msra.mxu0 0.0
  %168 = vmatpush.msra.mxu0 0.0
  %169 = vmatpush.msra.mxu0 0.0
  %170 = vmatpush.msra.mxu0 0.0
  %171 = vmatpush.msra.mxu0 0.0
  %172 = vmatpush.msra.mxu0 0.0
  %173 = vmatpush.msra.mxu0 0.0
  %174 = vmatpush.msra.mxu0 0.0
  %175 = vmatpush.msra.mxu0 0.0
  %176 = vmatpush.msra.mxu0 0.0
  %v177 = vand.u32 %v50, 4294901760
  %v178 = vsub.f32 %v50, %v177
  %v179 = vand.u32 %v178, 4294901760
  %180 = vmatpush.msra.mxu0 %v179
  %v181 = vand.u32 %v60, 4294901760
  %182 = vmatmul.f32.gmra.mxu0 %v181
  %v183 = vpop.f32.mrf.mxu0
  %v184 = vadd.f32 %v160, %v183
  %185 = vdwg.mxu0
  %186 = vmatpush.msra.mxu0 0.0
  %187 = vmatpush.msra.mxu0 0.0
  %188 = vmatpush.msra.mxu0 0.0
  %189 = vmatpush.msra.mxu0 0.0
  %190 = vmatpush.msra.mxu0 0.0
  %191 = vmatpush.msra.mxu0 0.0
  %192 = vmatpush.msra.mxu0 0.0
  %193 = vmatpush.msra.mxu0 0.0
  %194 = vmatpush.msra.mxu0 0.0
  %195 = vmatpush.msra.mxu0 0.0
  %196 = vmatpush.msra.mxu0 0.0
  %197 = vmatpush.msra.mxu0 0.0
  %198 = vmatpush.msra.mxu0 0.0
  %199 = vmatpush.msra.mxu0 0.0
  %200 = vmatpush.msra.mxu0 0.0
  %v201 = vand.u32 %v50, 4294901760
  %202 = vmatpush.msra.mxu0 %v201
  %v203 = vand.u32 %v60, 4294901760
  %204 = vmatmul.f32.gmra.mxu0 %v203
  %v205 = vpop.f32.mrf.mxu0
  %v206 = vadd.f32 %v184, %v205
  %207 = vdwg.mxu0
  %208 = vmatpush.msra.mxu0 0.0
  %209 = vmatpush.msra.mxu0 0.0
  %210 = vmatpush.msra.mxu0 0.0
  %211 = vmatpush.msra.mxu0 0.0
  %212 = vmatpush.msra.mxu0 0.0
  %213 = vmatpush.msra.mxu0 0.0
  %214 = vmatpush.msra.mxu0 0.0
  %215 = vmatpush.msra.mxu0 0.0
  %216 = vmatpush.msra.mxu0 0.0
  %217 = vmatpush.msra.mxu0 0.0
  %218 = vmatpush.msra.mxu0 0.0
  %219 = vmatpush.msra.mxu0 0.0
  %220 = vmatpush.msra.mxu0 0.0
  %221 = vmatpush.msra.mxu0 0.0
  %222 = vmatpush.msra.mxu0 0.0
  %v223 = vand.u32 %v51, 4294901760
  %224 = vmatpush.msra.mxu0 %v223
  %v225 = vand.u32 %v60, 4294901760
  %v226 = vsub.f32 %v60, %v225
  %v227 = vand.u32 %v226, 4294901760
  %v228 = vsub.f32 %v226, %v227
  %v229 = vand.u32 %v228, 4294901760
  %230 = vmatmul.f32.gmra.mxu0 %v229
  %v231 = vpop.f32.mrf.mxu0
  %v232 = vadd.f32 %v56, %v231
  %233 = vdwg.mxu0
  %234 = vmatpush.msra.mxu0 0.0
  %235 = vmatpush.msra.mxu0 0.0
  %236 = vmatpush.msra.mxu0 0.0
  %237 = vmatpush.msra.mxu0 0.0
  %238 = vmatpush.msra.mxu0 0.0
  %239 = vmatpush.msra.mxu0 0.0
  %240 = vmatpush.msra.mxu0 0.0
  %241 = vmatpush.msra.mxu0 0.0
  %242 = vmatpush.msra.mxu0 0.0
  %243 = vmatpush.msra.mxu0 0.0
  %244 = vmatpush.msra.mxu0 0.0
  %245 = vmatpush.msra.mxu0 0.0
  %246 = vmatpush.msra.mxu0 0.0
  %247 = vmatpush.msra.mxu0 0.0
  %248 = vmatpush.msra.mxu0 0.0
  %v249 = vand.u32 %v51, 4294901760
  %v250 = vsub.f32 %v51, %v249
  %v251 = vand.u32 %v250, 4294901760
  %v252 = vsub.f32 %v250, %v251
  %v253 = vand.u32 %v252, 4294901760
  %254 = vmatpush.msra.mxu0 %v253
  %v255 = vand.u32 %v60, 4294901760
  %256 = vmatmul.f32.gmra.mxu0 %v255
  %v257 = vpop.f32.mrf.mxu0
  %v258 = vadd.f32 %v232, %v257
  %259 = vdwg.mxu0
  %260 = vmatpush.msra.mxu0 0.0
  %261 = vmatpush.msra.mxu0 0.0
  %262 = vmatpush.msra.mxu0 0.0
  %263 = vmatpush.msra.mxu0 0.0
  %264 = vmatpush.msra.mxu0 0.0
  %265 = vmatpush.msra.mxu0 0.0
  %266 = vmatpush.msra.mxu0 0.0
  %267 = vmatpush.msra.mxu0 0.0
  %268 = vmatpush.msra.mxu0 0.0
  %269 = vmatpush.msra.mxu0 0.0
  %270 = vmatpush.msra.mxu0 0.0
  %271 = vmatpush.msra.mxu0 0.0
  %272 = vmatpush.msra.mxu0 0.0
  %273 = vmatpush.msra.mxu0 0.0
  %274 = vmatpush.msra.mxu0 0.0
  %v275 = vand.u32 %v51, 4294901760
  %v276 = vsub.f32 %v51, %v275
  %277 = vmatpush.msra.mxu0 %v276
  %v278 = vand.u32 %v60, 4294901760
  %v279 = vsub.f32 %v60, %v278
  %280 = vmatmul.f32.gmra.mxu0 %v279
  %v281 = vpop.f32.mrf.mxu0
  %v282 = vadd.f32 %v258, %v281
  %283 = vdwg.mxu0
  %284 = vmatpush.msra.mxu0 0.0
  %285 = vmatpush.msra.mxu0 0.0
  %286 = vmatpush.msra.mxu0 0.0
  %287 = vmatpush.msra.mxu0 0.0
  %288 = vmatpush.msra.mxu0 0.0
  %289 = vmatpush.msra.mxu0 0.0
  %290 = vmatpush.msra.mxu0 0.0
  %291 = vmatpush.msra.mxu0 0.0
  %292 = vmatpush.msra.mxu0 0.0
  %293 = vmatpush.msra.mxu0 0.0
  %294 = vmatpush.msra.mxu0 0.0
  %295 = vmatpush.msra.mxu0 0.0
  %296 = vmatpush.msra.mxu0 0.0
  %297 = vmatpush.msra.mxu0 0.0
  %298 = vmatpush.msra.mxu0 0.0
  %v299 = vand.u32 %v51, 4294901760
  %300 = vmatpush.msra.mxu0 %v299
  %v301 = vand.u32 %v60, 4294901760
  %v302 = vsub.f32 %v60, %v301
  %v303 = vand.u32 %v302, 4294901760
  %304 = vmatmul.f32.gmra.mxu0 %v303
  %v305 = vpop.f32.mrf.mxu0
  %v306 = vadd.f32 %v282, %v305
  %307 = vdwg.mxu0
  %308 = vmatpush.msra.mxu0 0.0
  %309 = vmatpush.msra.mxu0 0.0
  %310 = vmatpush.msra.mxu0 0.0
  %311 = vmatpush.msra.mxu0 0.0
  %312 = vmatpush.msra.mxu0 0.0
  %313 = vmatpush.msra.mxu0 0.0
  %314 = vmatpush.msra.mxu0 0.0
  %315 = vmatpush.msra.mxu0 0.0
  %316 = vmatpush.msra.mxu0 0.0
  %317 = vmatpush.msra.mxu0 0.0
  %318 = vmatpush.msra.mxu0 0.0
  %319 = vmatpush.msra.mxu0 0.0
  %320 = vmatpush.msra.mxu0 0.0
  %321 = vmatpush.msra.mxu0 0.0
  %322 = vmatpush.msra.mxu0 0.0
  %v323 = vand.u32 %v51, 4294901760
  %v324 = vsub.f32 %v51, %v323
  %v325 = vand.u32 %v324, 4294901760
  %326 = vmatpush.msra.mxu0 %v325
  %v327 = vand.u32 %v60, 4294901760
  %328 = vmatmul.f32.gmra.mxu0 %v327
  %v329 = vpop.f32.mrf.mxu0
  %v330 = vadd.f32 %v306, %v329
  %331 = vdwg.mxu0
  %332 = vmatpush.msra.mxu0 0.0
  %333 = vmatpush.msra.mxu0 0.0
  %334 = vmatpush.msra.mxu0 0.0
  %335 = vmatpush.msra.mxu0 0.0
  %336 = vmatpush.msra.mxu0 0.0
  %337 = vmatpush.msra.mxu0 0.0
  %338 = vmatpush.msra.mxu0 0.0
  %339 = vmatpush.msra.mxu0 0.0
  %340 = vmatpush.msra.mxu0 0.0
  %341 = vmatpush.msra.mxu0 0.0
  %342 = vmatpush.msra.mxu0 0.0
  %343 = vmatpush.msra.mxu0 0.0
  %344 = vmatpush.msra.mxu0 0.0
  %345 = vmatpush.msra.mxu0 0.0
  %346 = vmatpush.msra.mxu0 0.0
  %v347 = vand.u32 %v51, 4294901760
  %348 = vmatpush.msra.mxu0 %v347
  %v349 = vand.u32 %v60, 4294901760
  %350 = vmatmul.f32.gmra.mxu0 %v349
  %v351 = vpop.f32.mrf.mxu0
  %v352 = vadd.f32 %v330, %v351
  %353 = vdwg.mxu0
  %s354 = smul.u32 8, 32
  %s355 = smul.u32 %s354, 4
  %s356 = sshll.u32 %s355, 4
  %357 = dma.done [#allocation4], %s356
  %v358 = vld [vmem:[#allocation2] sm:$0xff]
  %v359 = vld [vmem:[#allocation2 + $0x8] sm:$0xff]
  %v360 = vld [vmem:[#allocation2 + $0x10] sm:$0xff]
  %v361 = vld [vmem:[#allocation2 + $0x18] sm:$0xff]
  %v362 = vld [vmem:[#allocation2 + $0x20] sm:$0xff]
  %v363 = vld [vmem:[#allocation2 + $0x28] sm:$0xff]
  %v364 = vld [vmem:[#allocation2 + $0x30] sm:$0xff]
  %v365 = vld [vmem:[#allocation2 + $0x38] sm:$0xff]
  %v366 = vld [vmem:[#allocation2 + $0x40] sm:$0xff]
  %v367 = vld [vmem:[#allocation2 + $0x48] sm:$0xff]
  %v368 = vld [vmem:[#allocation2 + $0x50] sm:$0xff]
  %v369 = vld [vmem:[#allocation2 + $0x58] sm:$0xff]
  %v370 = vld [vmem:[#allocation2 + $0x60] sm:$0xff]
  %v371 = vld [vmem:[#allocation2 + $0x68] sm:$0xff]
  %v372 = vld [vmem:[#allocation2 + $0x70] sm:$0xff]
  %v373 = vld [vmem:[#allocation2 + $0x78] sm:$0xff]
  %v374 = vld [vmem:[#allocation2 + $0x80] sm:$0xff]
  %v375 = vld [vmem:[#allocation2 + $0x88] sm:$0xff]
  %v376 = vld [vmem:[#allocation2 + $0x90] sm:$0xff]
  %v377 = vld [vmem:[#allocation2 + $0x98] sm:$0xff]
  %v378 = vld [vmem:[#allocation2 + $0xa0] sm:$0xff]
  %v379 = vld [vmem:[#allocation2 + $0xa8] sm:$0xff]
  %v380 = vld [vmem:[#allocation2 + $0xb0] sm:$0xff]
  %v381 = vld [vmem:[#allocation2 + $0xb8] sm:$0xff]
  %v382 = vld [vmem:[#allocation2 + $0xc0] sm:$0xff]
  %v383 = vld [vmem:[#allocation2 + $0xc8] sm:$0xff]
  %v384 = vld [vmem:[#allocation2 + $0xd0] sm:$0xff]
  %v385 = vld [vmem:[#allocation2 + $0xd8] sm:$0xff]
  %v386 = vld [vmem:[#allocation2 + $0xe0] sm:$0xff]
  %v387 = vld [vmem:[#allocation2 + $0xe8] sm:$0xff]
  %v388 = vld [vmem:[#allocation2 + $0xf0] sm:$0xff]
  %v389 = vld [vmem:[#allocation2 + $0xf8] sm:$0xff]
  %v390 = vld [vmem:[#allocation2 + $0x100] sm:$0xff]
  %v391 = vld [vmem:[#allocation2 + $0x108] sm:$0xff]
  %v392 = vld [vmem:[#allocation2 + $0x110] sm:$0xff]
  %v393 = vld [vmem:[#allocation2 + $0x118] sm:$0xff]
  %v394 = vld [vmem:[#allocation2 + $0x120] sm:$0xff]
  %v395 = vld [vmem:[#allocation2 + $0x128] sm:$0xff]
  %v396 = vld [vmem:[#allocation2 + $0x130] sm:$0xff]
  %v397 = vld [vmem:[#allocation2 + $0x138] sm:$0xff]
  %v398 = vld [vmem:[#allocation2 + $0x140] sm:$0xff]
  %v399 = vld [vmem:[#allocation2 + $0x148] sm:$0xff]
  %v400 = vld [vmem:[#allocation2 + $0x150] sm:$0xff]
  %v401 = vld [vmem:[#allocation2 + $0x158] sm:$0xff]
  %v402 = vld [vmem:[#allocation2 + $0x160] sm:$0xff]
  %v403 = vld [vmem:[#allocation2 + $0x168] sm:$0xff]
  %v404 = vld [vmem:[#allocation2 + $0x170] sm:$0xff]
  %v405 = vld [vmem:[#allocation2 + $0x178] sm:$0xff]
  %v406 = vld [vmem:[#allocation2 + $0x180] sm:$0xff]
  %v407 = vld [vmem:[#allocation2 + $0x188] sm:$0xff]
  %v408 = vld [vmem:[#allocation2 + $0x190] sm:$0xff]
  %v409 = vld [vmem:[#allocation2 + $0x198] sm:$0xff]
  %v410 = vld [vmem:[#allocation2 + $0x1a0] sm:$0xff]
  %v411 = vld [vmem:[#allocation2 + $0x1a8] sm:$0xff]
  %v412 = vld [vmem:[#allocation2 + $0x1b0] sm:$0xff]
  %v413 = vld [vmem:[#allocation2 + $0x1b8] sm:$0xff]
  %v414 = vld [vmem:[#allocation2 + $0x1c0] sm:$0xff]
  %v415 = vld [vmem:[#allocation2 + $0x1c8] sm:$0xff]
  %v416 = vld [vmem:[#allocation2 + $0x1d0] sm:$0xff]
  %v417 = vld [vmem:[#allocation2 + $0x1d8] sm:$0xff]
  %v418 = vld [vmem:[#allocation2 + $0x1e0] sm:$0xff]
  %v419 = vld [vmem:[#allocation2 + $0x1e8] sm:$0xff]
  %v420 = vld [vmem:[#allocation2 + $0x1f0] sm:$0xff]
  %v421 = vld [vmem:[#allocation2 + $0x1f8] sm:$0xff]
  %v422 = vld [vmem:[#allocation2 + $0x200] sm:$0xff]
  %v423 = vld [vmem:[#allocation2 + $0x208] sm:$0xff]
  %v424 = vld [vmem:[#allocation2 + $0x210] sm:$0xff]
  %v425 = vld [vmem:[#allocation2 + $0x218] sm:$0xff]
  %v426 = vld [vmem:[#allocation2 + $0x220] sm:$0xff]
  %v427 = vld [vmem:[#allocation2 + $0x228] sm:$0xff]
  %v428 = vld [vmem:[#allocation2 + $0x230] sm:$0xff]
  %v429 = vld [vmem:[#allocation2 + $0x238] sm:$0xff]
  %v430 = vld [vmem:[#allocation2 + $0x240] sm:$0xff]
  %v431 = vld [vmem:[#allocation2 + $0x248] sm:$0xff]
  %v432 = vld [vmem:[#allocation2 + $0x250] sm:$0xff]
  %v433 = vld [vmem:[#allocation2 + $0x258] sm:$0xff]
  %v434 = vld [vmem:[#allocation2 + $0x260] sm:$0xff]
  %v435 = vld [vmem:[#allocation2 + $0x268] sm:$0xff]
  %v436 = vld [vmem:[#allocation2 + $0x270] sm:$0xff]
  %v437 = vld [vmem:[#allocation2 + $0x278] sm:$0xff]
  %v438 = vld [vmem:[#allocation2 + $0x280] sm:$0xff]
  %v439 = vld [vmem:[#allocation2 + $0x288] sm:$0xff]
  %v440 = vld [vmem:[#allocation2 + $0x290] sm:$0xff]
  %v441 = vld [vmem:[#allocation2 + $0x298] sm:$0xff]
  %v442 = vld [vmem:[#allocation2 + $0x2a0] sm:$0xff]
  %v443 = vld [vmem:[#allocation2 + $0x2a8] sm:$0xff]
  %v444 = vld [vmem:[#allocation2 + $0x2b0] sm:$0xff]
  %v445 = vld [vmem:[#allocation2 + $0x2b8] sm:$0xff]
  %v446 = vld [vmem:[#allocation2 + $0x2c0] sm:$0xff]
  %v447 = vld [vmem:[#allocation2 + $0x2c8] sm:$0xff]
  %v448 = vld [vmem:[#allocation2 + $0x2d0] sm:$0xff]
  %v449 = vld [vmem:[#allocation2 + $0x2d8] sm:$0xff]
  %v450 = vld [vmem:[#allocation2 + $0x2e0] sm:$0xff]
  %v451 = vld [vmem:[#allocation2 + $0x2e8] sm:$0xff]
  %v452 = vld [vmem:[#allocation2 + $0x2f0] sm:$0xff]
  %v453 = vld [vmem:[#allocation2 + $0x2f8] sm:$0xff]
  %v454 = vld [vmem:[#allocation2 + $0x300] sm:$0xff]
  %v455 = vld [vmem:[#allocation2 + $0x308] sm:$0xff]
  %v456 = vld [vmem:[#allocation2 + $0x310] sm:$0xff]
  %v457 = vld [vmem:[#allocation2 + $0x318] sm:$0xff]
  %v458 = vld [vmem:[#allocation2 + $0x320] sm:$0xff]
  %v459 = vld [vmem:[#allocation2 + $0x328] sm:$0xff]
  %v460 = vld [vmem:[#allocation2 + $0x330] sm:$0xff]
  %v461 = vld [vmem:[#allocation2 + $0x338] sm:$0xff]
  %v462 = vld [vmem:[#allocation2 + $0x340] sm:$0xff]
  %v463 = vld [vmem:[#allocation2 + $0x348] sm:$0xff]
  %v464 = vld [vmem:[#allocation2 + $0x350] sm:$0xff]
  %v465 = vld [vmem:[#allocation2 + $0x358] sm:$0xff]
  %v466 = vld [vmem:[#allocation2 + $0x360] sm:$0xff]
  %v467 = vld [vmem:[#allocation2 + $0x368] sm:$0xff]
  %v468 = vld [vmem:[#allocation2 + $0x370] sm:$0xff]
  %v469 = vld [vmem:[#allocation2 + $0x378] sm:$0xff]
  %v470 = vld [vmem:[#allocation2 + $0x380] sm:$0xff]
  %v471 = vld [vmem:[#allocation2 + $0x388] sm:$0xff]
  %v472 = vld [vmem:[#allocation2 + $0x390] sm:$0xff]
  %v473 = vld [vmem:[#allocation2 + $0x398] sm:$0xff]
  %v474 = vld [vmem:[#allocation2 + $0x3a0] sm:$0xff]
  %v475 = vld [vmem:[#allocation2 + $0x3a8] sm:$0xff]
  %v476 = vld [vmem:[#allocation2 + $0x3b0] sm:$0xff]
  %v477 = vld [vmem:[#allocation2 + $0x3b8] sm:$0xff]
  %v478 = vld [vmem:[#allocation2 + $0x3c0] sm:$0xff]
  %v479 = vld [vmem:[#allocation2 + $0x3c8] sm:$0xff]
  %v480 = vld [vmem:[#allocation2 + $0x3d0] sm:$0xff]
  %v481 = vld [vmem:[#allocation2 + $0x3d8] sm:$0xff]
  %v482 = vld [vmem:[#allocation2 + $0x3e0] sm:$0xff]
  %v483 = vld [vmem:[#allocation2 + $0x3e8] sm:$0xff]
  %v484 = vld [vmem:[#allocation2 + $0x3f0] sm:$0xff]
  %v485 = vld [vmem:[#allocation2 + $0x3f8] sm:$0xff]
  %v486 = vand.u32 %v418, 4294901760
  %487 = vmatpush.msra.mxu0 %v486
  %v488 = vand.u32 %v414, 4294901760
  %489 = vmatpush.msra.mxu0 %v488
  %v490 = vand.u32 %v410, 4294901760
  %491 = vmatpush.msra.mxu0 %v490
  %v492 = vand.u32 %v406, 4294901760
  %493 = vmatpush.msra.mxu0 %v492
  %v494 = vand.u32 %v402, 4294901760
  %495 = vmatpush.msra.mxu0 %v494
  %v496 = vand.u32 %v398, 4294901760
  %497 = vmatpush.msra.mxu0 %v496
  %v498 = vand.u32 %v394, 4294901760
  %499 = vmatpush.msra.mxu0 %v498
  %v500 = vand.u32 %v390, 4294901760
  %501 = vmatpush.msra.mxu0 %v500
  %v502 = vand.u32 %v386, 4294901760
  %503 = vmatpush.msra.mxu0 %v502
  %v504 = vand.u32 %v382, 4294901760
  %505 = vmatpush.msra.mxu0 %v504
  %v506 = vand.u32 %v378, 4294901760
  %507 = vmatpush.msra.mxu0 %v506
  %v508 = vand.u32 %v374, 4294901760
  %509 = vmatpush.msra.mxu0 %v508
  %v510 = vand.u32 %v370, 4294901760
  %511 = vmatpush.msra.mxu0 %v510
  %v512 = vand.u32 %v366, 4294901760
  %513 = vmatpush.msra.mxu0 %v512
  %v514 = vand.u32 %v362, 4294901760
  %515 = vmatpush.msra.mxu0 %v514
  %v516 = vand.u32 %v358, 4294901760
  %517 = vmatpush.msra.mxu0 %v516
  %v518 = vand.u32 %v206, 4294901760
  %v519 = vsub.f32 %v206, %v518
  %v520 = vand.u32 %v519, 4294901760
  %v521 = vsub.f32 %v519, %v520
  %v522 = vand.u32 %v521, 4294901760
  %523 = vmatmul.f32.gmra.mxu0 %v522
  %v524 = vpop.f32.mrf.mxu0
  %v525 = vadd.f32 0.0, %v524
  %526 = vdwg.mxu0
  %v527 = vand.u32 %v418, 4294901760
  %v528 = vsub.f32 %v418, %v527
  %v529 = vand.u32 %v528, 4294901760
  %v530 = vsub.f32 %v528, %v529
  %v531 = vand.u32 %v530, 4294901760
  %532 = vmatpush.msra.mxu0 %v531
  %v533 = vand.u32 %v414, 4294901760
  %v534 = vsub.f32 %v414, %v533
  %v535 = vand.u32 %v534, 4294901760
  %v536 = vsub.f32 %v534, %v535
  %v537 = vand.u32 %v536, 4294901760
  %538 = vmatpush.msra.mxu0 %v537
  %v539 = vand.u32 %v410, 4294901760
  %v540 = vsub.f32 %v410, %v539
  %v541 = vand.u32 %v540, 4294901760
  %v542 = vsub.f32 %v540, %v541
  %v543 = vand.u32 %v542, 4294901760
  %544 = vmatpush.msra.mxu0 %v543
  %v545 = vand.u32 %v406, 4294901760
  %v546 = vsub.f32 %v406, %v545
  %v547 = vand.u32 %v546, 4294901760
  %v548 = vsub.f32 %v546, %v547
  %v549 = vand.u32 %v548, 4294901760
  %550 = vmatpush.msra.mxu0 %v549
  %v551 = vand.u32 %v402, 4294901760
  %v552 = vsub.f32 %v402, %v551
  %v553 = vand.u32 %v552, 4294901760
  %v554 = vsub.f32 %v552, %v553
  %v555 = vand.u32 %v554, 4294901760
  %556 = vmatpush.msra.mxu0 %v555
  %v557 = vand.u32 %v398, 4294901760
  %v558 = vsub.f32 %v398, %v557
  %v559 = vand.u32 %v558, 4294901760
  %v560 = vsub.f32 %v558, %v559
  %v561 = vand.u32 %v560, 4294901760
  %562 = vmatpush.msra.mxu0 %v561
  %v563 = vand.u32 %v394, 4294901760
  %v564 = vsub.f32 %v394, %v563
  %v565 = vand.u32 %v564, 4294901760
  %v566 = vsub.f32 %v564, %v565
  %v567 = vand.u32 %v566, 4294901760
  %568 = vmatpush.msra.mxu0 %v567
  %v569 = vand.u32 %v390, 4294901760
  %v570 = vsub.f32 %v390, %v569
  %v571 = vand.u32 %v570, 4294901760
  %v572 = vsub.f32 %v570, %v571
  %v573 = vand.u32 %v572, 4294901760
  %574 = vmatpush.msra.mxu0 %v573
  %v575 = vand.u32 %v386, 4294901760
  %v576 = vsub.f32 %v386, %v575
  %v577 = vand.u32 %v576, 4294901760
  %v578 = vsub.f32 %v576, %v577
  %v579 = vand.u32 %v578, 4294901760
  %580 = vmatpush.msra.mxu0 %v579
  %v581 = vand.u32 %v382, 4294901760
  %v582 = vsub.f32 %v382, %v581
  %v583 = vand.u32 %v582, 4294901760
  %v584 = vsub.f32 %v582, %v583
  %v585 = vand.u32 %v584, 4294901760
  %586 = vmatpush.msra.mxu0 %v585
  %v587 = vand.u32 %v378, 4294901760
  %v588 = vsub.f32 %v378, %v587
  %v589 = vand.u32 %v588, 4294901760
  %v590 = vsub.f32 %v588, %v589
  %v591 = vand.u32 %v590, 4294901760
  %592 = vmatpush.msra.mxu0 %v591
  %v593 = vand.u32 %v374, 4294901760
  %v594 = vsub.f32 %v374, %v593
  %v595 = vand.u32 %v594, 4294901760
  %v596 = vsub.f32 %v594, %v595
  %v597 = vand.u32 %v596, 4294901760
  %598 = vmatpush.msra.mxu0 %v597
  %v599 = vand.u32 %v370, 4294901760
  %v600 = vsub.f32 %v370, %v599
  %v601 = vand.u32 %v600, 4294901760
  %v602 = vsub.f32 %v600, %v601
  %v603 = vand.u32 %v602, 4294901760
  %604 = vmatpush.msra.mxu0 %v603
  %v605 = vand.u32 %v366, 4294901760
  %v606 = vsub.f32 %v366, %v605
  %v607 = vand.u32 %v606, 4294901760
  %v608 = vsub.f32 %v606, %v607
  %v609 = vand.u32 %v608, 4294901760
  %610 = vmatpush.msra.mxu0 %v609
  %v611 = vand.u32 %v362, 4294901760
  %v612 = vsub.f32 %v362, %v611
  %v613 = vand.u32 %v612, 4294901760
  %v614 = vsub.f32 %v612, %v613
  %v615 = vand.u32 %v614, 4294901760
  %616 = vmatpush.msra.mxu0 %v615
  %v617 = vand.u32 %v358, 4294901760
  %v618 = vsub.f32 %v358, %v617
  %v619 = vand.u32 %v618, 4294901760
  %v620 = vsub.f32 %v618, %v619
  %v621 = vand.u32 %v620, 4294901760
  %622 = vmatpush.msra.mxu0 %v621
  %v623 = vand.u32 %v206, 4294901760
  %624 = vmatmul.f32.gmra.mxu0 %v623
  %v625 = vpop.f32.mrf.mxu0
  %v626 = vadd.f32 %v525, %v625
  %627 = vdwg.mxu0
  %v628 = vand.u32 %v418, 4294901760
  %v629 = vsub.f32 %v418, %v628
  %630 = vmatpush.msra.mxu0 %v629
  %v631 = vand.u32 %v414, 4294901760
  %v632 = vsub.f32 %v414, %v631
  %633 = vmatpush.msra.mxu0 %v632
  %v634 = vand.u32 %v410, 4294901760
  %v635 = vsub.f32 %v410, %v634
  %636 = vmatpush.msra.mxu0 %v635
  %v637 = vand.u32 %v406, 4294901760
  %v638 = vsub.f32 %v406, %v637
  %639 = vmatpush.msra.mxu0 %v638
  %v640 = vand.u32 %v402, 4294901760
  %v641 = vsub.f32 %v402, %v640
  %642 = vmatpush.msra.mxu0 %v641
  %v643 = vand.u32 %v398, 4294901760
  %v644 = vsub.f32 %v398, %v643
  %645 = vmatpush.msra.mxu0 %v644
  %v646 = vand.u32 %v394, 4294901760
  %v647 = vsub.f32 %v394, %v646
  %648 = vmatpush.msra.mxu0 %v647
  %v649 = vand.u32 %v390, 4294901760
  %v650 = vsub.f32 %v390, %v649
  %651 = vmatpush.msra.mxu0 %v650
  %v652 = vand.u32 %v386, 4294901760
  %v653 = vsub.f32 %v386, %v652
  %654 = vmatpush.msra.mxu0 %v653
  %v655 = vand.u32 %v382, 4294901760
  %v656 = vsub.f32 %v382, %v655
  %657 = vmatpush.msra.mxu0 %v656
  %v658 = vand.u32 %v378, 4294901760
  %v659 = vsub.f32 %v378, %v658
  %660 = vmatpush.msra.mxu0 %v659
  %v661 = vand.u32 %v374, 4294901760
  %v662 = vsub.f32 %v374, %v661
  %663 = vmatpush.msra.mxu0 %v662
  %v664 = vand.u32 %v370, 4294901760
  %v665 = vsub.f32 %v370, %v664
  %666 = vmatpush.msra.mxu0 %v665
  %v667 = vand.u32 %v366, 4294901760
  %v668 = vsub.f32 %v366, %v667
  %669 = vmatpush.msra.mxu0 %v668
  %v670 = vand.u32 %v362, 4294901760
  %v671 = vsub.f32 %v362, %v670
  %672 = vmatpush.msra.mxu0 %v671
  %v673 = vand.u32 %v358, 4294901760
  %v674 = vsub.f32 %v358, %v673
  %675 = vmatpush.msra.mxu0 %v674
  %v676 = vand.u32 %v206, 4294901760
  %v677 = vsub.f32 %v206, %v676
  %678 = vmatmul.f32.gmra.mxu0 %v677
  %v679 = vpop.f32.mrf.mxu0
  %v680 = vadd.f32 %v626, %v679
  %681 = vdwg.mxu0
  %v682 = vand.u32 %v418, 4294901760
  %683 = vmatpush.msra.mxu0 %v682
  %v684 = vand.u32 %v414, 4294901760
  %685 = vmatpush.msra.mxu0 %v684
  %v686 = vand.u32 %v410, 4294901760
  %687 = vmatpush.msra.mxu0 %v686
  %v688 = vand.u32 %v406, 4294901760
  %689 = vmatpush.msra.mxu0 %v688
  %v690 = vand.u32 %v402, 4294901760
  %691 = vmatpush.msra.mxu0 %v690
  %v692 = vand.u32 %v398, 4294901760
  %693 = vmatpush.msra.mxu0 %v692
  %v694 = vand.u32 %v394, 4294901760
  %695 = vmatpush.msra.mxu0 %v694
  %v696 = vand.u32 %v390, 4294901760
  %697 = vmatpush.msra.mxu0 %v696
  %v698 = vand.u32 %v386, 4294901760
  %699 = vmatpush.msra.mxu0 %v698
  %v700 = vand.u32 %v382, 4294901760
  %701 = vmatpush.msra.mxu0 %v700
  %v702 = vand.u32 %v378, 4294901760
  %703 = vmatpush.msra.mxu0 %v702
  %v704 = vand.u32 %v374, 4294901760
  %705 = vmatpush.msra.mxu0 %v704
  %v706 = vand.u32 %v370, 4294901760
  %707 = vmatpush.msra.mxu0 %v706
  %v708 = vand.u32 %v366, 4294901760
  %709 = vmatpush.msra.mxu0 %v708
  %v710 = vand.u32 %v362, 4294901760
  %711 = vmatpush.msra.mxu0 %v710
  %v712 = vand.u32 %v358, 4294901760
  %713 = vmatpush.msra.mxu0 %v712
  %v714 = vand.u32 %v206, 4294901760
  %v715 = vsub.f32 %v206, %v714
  %v716 = vand.u32 %v715, 4294901760
  %717 = vmatmul.f32.gmra.mxu0 %v716
  %v718 = vpop.f32.mrf.mxu0
  %v719 = vadd.f32 %v680, %v718
  %720 = vdwg.mxu0
  %v721 = vand.u32 %v418, 4294901760
  %v722 = vsub.f32 %v418, %v721
  %v723 = vand.u32 %v722, 4294901760
  %724 = vmatpush.msra.mxu0 %v723
  %v725 = vand.u32 %v414, 4294901760
  %v726 = vsub.f32 %v414, %v725
  %v727 = vand.u32 %v726, 4294901760
  %728 = vmatpush.msra.mxu0 %v727
  %v729 = vand.u32 %v410, 4294901760
  %v730 = vsub.f32 %v410, %v729
  %v731 = vand.u32 %v730, 4294901760
  %732 = vmatpush.msra.mxu0 %v731
  %v733 = vand.u32 %v406, 4294901760
  %v734 = vsub.f32 %v406, %v733
  %v735 = vand.u32 %v734, 4294901760
  %736 = vmatpush.msra.mxu0 %v735
  %v737 = vand.u32 %v402, 4294901760
  %v738 = vsub.f32 %v402, %v737
  %v739 = vand.u32 %v738, 4294901760
  %740 = vmatpush.msra.mxu0 %v739
  %v741 = vand.u32 %v398, 4294901760
  %v742 = vsub.f32 %v398, %v741
  %v743 = vand.u32 %v742, 4294901760
  %744 = vmatpush.msra.mxu0 %v743
  %v745 = vand.u32 %v394, 4294901760
  %v746 = vsub.f32 %v394, %v745
  %v747 = vand.u32 %v746, 4294901760
  %748 = vmatpush.msra.mxu0 %v747
  %v749 = vand.u32 %v390, 4294901760
  %v750 = vsub.f32 %v390, %v749
  %v751 = vand.u32 %v750, 4294901760
  %752 = vmatpush.msra.mxu0 %v751
  %v753 = vand.u32 %v386, 4294901760
  %v754 = vsub.f32 %v386, %v753
  %v755 = vand.u32 %v754, 4294901760
  %756 = vmatpush.msra.mxu0 %v755
  %v757 = vand.u32 %v382, 4294901760
  %v758 = vsub.f32 %v382, %v757
  %v759 = vand.u32 %v758, 4294901760
  %760 = vmatpush.msra.mxu0 %v759
  %v761 = vand.u32 %v378, 4294901760
  %v762 = vsub.f32 %v378, %v761
  %v763 = vand.u32 %v762, 4294901760
  %764 = vmatpush.msra.mxu0 %v763
  %v765 = vand.u32 %v374, 4294901760
  %v766 = vsub.f32 %v374, %v765
  %v767 = vand.u32 %v766, 4294901760
  %768 = vmatpush.msra.mxu0 %v767
  %v769 = vand.u32 %v370, 4294901760
  %v770 = vsub.f32 %v370, %v769
  %v771 = vand.u32 %v770, 4294901760
  %772 = vmatpush.msra.mxu0 %v771
  %v773 = vand.u32 %v366, 4294901760
  %v774 = vsub.f32 %v366, %v773
  %v775 = vand.u32 %v774, 4294901760
  %776 = vmatpush.msra.mxu0 %v775
  %v777 = vand.u32 %v362, 4294901760
  %v778 = vsub.f32 %v362, %v777
  %v779 = vand.u32 %v778, 4294901760
  %780 = vmatpush.msra.mxu0 %v779
  %v781 = vand.u32 %v358, 4294901760
  %v782 = vsub.f32 %v358, %v781
  %v783 = vand.u32 %v782, 4294901760
  %784 = vmatpush.msra.mxu0 %v783
  %v785 = vand.u32 %v206, 4294901760
  %786 = vmatmul.f32.gmra.mxu0 %v785
  %v787 = vpop.f32.mrf.mxu0
  %v788 = vadd.f32 %v719, %v787
  %789 = vdwg.mxu0
  %v790 = vand.u32 %v418, 4294901760
  %791 = vmatpush.msra.mxu0 %v790
  %v792 = vand.u32 %v414, 4294901760
  %793 = vmatpush.msra.mxu0 %v792
  %v794 = vand.u32 %v410, 4294901760
  %795 = vmatpush.msra.mxu0 %v794
  %v796 = vand.u32 %v406, 4294901760
  %797 = vmatpush.msra.mxu0 %v796
  %v798 = vand.u32 %v402, 4294901760
  %799 = vmatpush.msra.mxu0 %v798
  %v800 = vand.u32 %v398, 4294901760
  %801 = vmatpush.msra.mxu0 %v800
  %v802 = vand.u32 %v394, 4294901760
  %803 = vmatpush.msra.mxu0 %v802
  %v804 = vand.u32 %v390, 4294901760
  %805 = vmatpush.msra.mxu0 %v804
  %v806 = vand.u32 %v386, 4294901760
  %807 = vmatpush.msra.mxu0 %v806
  %v808 = vand.u32 %v382, 4294901760
  %809 = vmatpush.msra.mxu0 %v808
  %v810 = vand.u32 %v378, 4294901760
  %811 = vmatpush.msra.mxu0 %v810
  %v812 = vand.u32 %v374, 4294901760
  %813 = vmatpush.msra.mxu0 %v812
  %v814 = vand.u32 %v370, 4294901760
  %815 = vmatpush.msra.mxu0 %v814
  %v816 = vand.u32 %v366, 4294901760
  %817 = vmatpush.msra.mxu0 %v816
  %v818 = vand.u32 %v362, 4294901760
  %819 = vmatpush.msra.mxu0 %v818
  %v820 = vand.u32 %v358, 4294901760
  %821 = vmatpush.msra.mxu0 %v820
  %v822 = vand.u32 %v206, 4294901760
  %823 = vmatmul.f32.gmra.mxu0 %v822
  %v824 = vpop.f32.mrf.mxu0
  %v825 = vadd.f32 %v788, %v824
  %826 = vdwg.mxu0
  %v827 = vand.u32 %v482, 4294901760
  %828 = vmatpush.msra.mxu0 %v827
  %v829 = vand.u32 %v478, 4294901760
  %830 = vmatpush.msra.mxu0 %v829
  %v831 = vand.u32 %v474, 4294901760
  %832 = vmatpush.msra.mxu0 %v831
  %v833 = vand.u32 %v470, 4294901760
  %834 = vmatpush.msra.mxu0 %v833
  %v835 = vand.u32 %v466, 4294901760
  %836 = vmatpush.msra.mxu0 %v835
  %v837 = vand.u32 %v462, 4294901760
  %838 = vmatpush.msra.mxu0 %v837
  %v839 = vand.u32 %v458, 4294901760
  %840 = vmatpush.msra.mxu0 %v839
  %v841 = vand.u32 %v454, 4294901760
  %842 = vmatpush.msra.mxu0 %v841
  %v843 = vand.u32 %v450, 4294901760
  %844 = vmatpush.msra.mxu0 %v843
  %v845 = vand.u32 %v446, 4294901760
  %846 = vmatpush.msra.mxu0 %v845
  %v847 = vand.u32 %v442, 4294901760
  %848 = vmatpush.msra.mxu0 %v847
  %v849 = vand.u32 %v438, 4294901760
  %850 = vmatpush.msra.mxu0 %v849
  %v851 = vand.u32 %v434, 4294901760
  %852 = vmatpush.msra.mxu0 %v851
  %v853 = vand.u32 %v430, 4294901760
  %854 = vmatpush.msra.mxu0 %v853
  %v855 = vand.u32 %v426, 4294901760
  %856 = vmatpush.msra.mxu0 %v855
  %v857 = vand.u32 %v422, 4294901760
  %858 = vmatpush.msra.mxu0 %v857
  %v859 = vand.u32 %v352, 4294901760
  %v860 = vsub.f32 %v352, %v859
  %v861 = vand.u32 %v860, 4294901760
  %v862 = vsub.f32 %v860, %v861
  %v863 = vand.u32 %v862, 4294901760
  %864 = vmatmul.f32.gmra.mxu0 %v863
  %v865 = vpop.f32.mrf.mxu0
  %v866 = vadd.f32 %v825, %v865
  %867 = vdwg.mxu0
  %v868 = vand.u32 %v482, 4294901760
  %v869 = vsub.f32 %v482, %v868
  %v870 = vand.u32 %v869, 4294901760
  %v871 = vsub.f32 %v869, %v870
  %v872 = vand.u32 %v871, 4294901760
  %873 = vmatpush.msra.mxu0 %v872
  %v874 = vand.u32 %v478, 4294901760
  %v875 = vsub.f32 %v478, %v874
  %v876 = vand.u32 %v875, 4294901760
  %v877 = vsub.f32 %v875, %v876
  %v878 = vand.u32 %v877, 4294901760
  %879 = vmatpush.msra.mxu0 %v878
  %v880 = vand.u32 %v474, 4294901760
  %v881 = vsub.f32 %v474, %v880
  %v882 = vand.u32 %v881, 4294901760
  %v883 = vsub.f32 %v881, %v882
  %v884 = vand.u32 %v883, 4294901760
  %885 = vmatpush.msra.mxu0 %v884
  %v886 = vand.u32 %v470, 4294901760
  %v887 = vsub.f32 %v470, %v886
  %v888 = vand.u32 %v887, 4294901760
  %v889 = vsub.f32 %v887, %v888
  %v890 = vand.u32 %v889, 4294901760
  %891 = vmatpush.msra.mxu0 %v890
  %v892 = vand.u32 %v466, 4294901760
  %v893 = vsub.f32 %v466, %v892
  %v894 = vand.u32 %v893, 4294901760
  %v895 = vsub.f32 %v893, %v894
  %v896 = vand.u32 %v895, 4294901760
  %897 = vmatpush.msra.mxu0 %v896
  %v898 = vand.u32 %v462, 4294901760
  %v899 = vsub.f32 %v462, %v898
  %v900 = vand.u32 %v899, 4294901760
  %v901 = vsub.f32 %v899, %v900
  %v902 = vand.u32 %v901, 4294901760
  %903 = vmatpush.msra.mxu0 %v902
  %v904 = vand.u32 %v458, 4294901760
  %v905 = vsub.f32 %v458, %v904
  %v906 = vand.u32 %v905, 4294901760
  %v907 = vsub.f32 %v905, %v906
  %v908 = vand.u32 %v907, 4294901760
  %909 = vmatpush.msra.mxu0 %v908
  %v910 = vand.u32 %v454, 4294901760
  %v911 = vsub.f32 %v454, %v910
  %v912 = vand.u32 %v911, 4294901760
  %v913 = vsub.f32 %v911, %v912
  %v914 = vand.u32 %v913, 4294901760
  %915 = vmatpush.msra.mxu0 %v914
  %v916 = vand.u32 %v450, 4294901760
  %v917 = vsub.f32 %v450, %v916
  %v918 = vand.u32 %v917, 4294901760
  %v919 = vsub.f32 %v917, %v918
  %v920 = vand.u32 %v919, 4294901760
  %921 = vmatpush.msra.mxu0 %v920
  %v922 = vand.u32 %v446, 4294901760
  %v923 = vsub.f32 %v446, %v922
  %v924 = vand.u32 %v923, 4294901760
  %v925 = vsub.f32 %v923, %v924
  %v926 = vand.u32 %v925, 4294901760
  %927 = vmatpush.msra.mxu0 %v926
  %v928 = vand.u32 %v442, 4294901760
  %v929 = vsub.f32 %v442, %v928
  %v930 = vand.u32 %v929, 4294901760
  %v931 = vsub.f32 %v929, %v930
  %v932 = vand.u32 %v931, 4294901760
  %933 = vmatpush.msra.mxu0 %v932
  %v934 = vand.u32 %v438, 4294901760
  %v935 = vsub.f32 %v438, %v934
  %v936 = vand.u32 %v935, 4294901760
  %v937 = vsub.f32 %v935, %v936
  %v938 = vand.u32 %v937, 4294901760
  %939 = vmatpush.msra.mxu0 %v938
  %v940 = vand.u32 %v434, 4294901760
  %v941 = vsub.f32 %v434, %v940
  %v942 = vand.u32 %v941, 4294901760
  %v943 = vsub.f32 %v941, %v942
  %v944 = vand.u32 %v943, 4294901760
  %945 = vmatpush.msra.mxu0 %v944
  %v946 = vand.u32 %v430, 4294901760
  %v947 = vsub.f32 %v430, %v946
  %v948 = vand.u32 %v947, 4294901760
  %v949 = vsub.f32 %v947, %v948
  %v950 = vand.u32 %v949, 4294901760
  %951 = vmatpush.msra.mxu0 %v950
  %v952 = vand.u32 %v426, 4294901760
  %v953 = vsub.f32 %v426, %v952
  %v954 = vand.u32 %v953, 4294901760
  %v955 = vsub.f32 %v953, %v954
  %v956 = vand.u32 %v955, 4294901760
  %957 = vmatpush.msra.mxu0 %v956
  %v958 = vand.u32 %v422, 4294901760
  %v959 = vsub.f32 %v422, %v958
  %v960 = vand.u32 %v959, 4294901760
  %v961 = vsub.f32 %v959, %v960
  %v962 = vand.u32 %v961, 4294901760
  %963 = vmatpush.msra.mxu0 %v962
  %v964 = vand.u32 %v352, 4294901760
  %965 = vmatmul.f32.gmra.mxu0 %v964
  %v966 = vpop.f32.mrf.mxu0
  %v967 = vadd.f32 %v866, %v966
  %968 = vdwg.mxu0
  %v969 = vand.u32 %v482, 4294901760
  %v970 = vsub.f32 %v482, %v969
  %971 = vmatpush.msra.mxu0 %v970
  %v972 = vand.u32 %v478, 4294901760
  %v973 = vsub.f32 %v478, %v972
  %974 = vmatpush.msra.mxu0 %v973
  %v975 = vand.u32 %v474, 4294901760
  %v976 = vsub.f32 %v474, %v975
  %977 = vmatpush.msra.mxu0 %v976
  %v978 = vand.u32 %v470, 4294901760
  %v979 = vsub.f32 %v470, %v978
  %980 = vmatpush.msra.mxu0 %v979
  %v981 = vand.u32 %v466, 4294901760
  %v982 = vsub.f32 %v466, %v981
  %983 = vmatpush.msra.mxu0 %v982
  %v984 = vand.u32 %v462, 4294901760
  %v985 = vsub.f32 %v462, %v984
  %986 = vmatpush.msra.mxu0 %v985
  %v987 = vand.u32 %v458, 4294901760
  %v988 = vsub.f32 %v458, %v987
  %989 = vmatpush.msra.mxu0 %v988
  %v990 = vand.u32 %v454, 4294901760
  %v991 = vsub.f32 %v454, %v990
  %992 = vmatpush.msra.mxu0 %v991
  %v993 = vand.u32 %v450, 4294901760
  %v994 = vsub.f32 %v450, %v993
  %995 = vmatpush.msra.mxu0 %v994
  %v996 = vand.u32 %v446, 4294901760
  %v997 = vsub.f32 %v446, %v996
  %998 = vmatpush.msra.mxu0 %v997
  %v999 = vand.u32 %v442, 4294901760
  %v1000 = vsub.f32 %v442, %v999
  %1001 = vmatpush.msra.mxu0 %v1000
  %v1002 = vand.u32 %v438, 4294901760
  %v1003 = vsub.f32 %v438, %v1002
  %1004 = vmatpush.msra.mxu0 %v1003
  %v1005 = vand.u32 %v434, 4294901760
  %v1006 = vsub.f32 %v434, %v1005
  %1007 = vmatpush.msra.mxu0 %v1006
  %v1008 = vand.u32 %v430, 4294901760
  %v1009 = vsub.f32 %v430, %v1008
  %1010 = vmatpush.msra.mxu0 %v1009
  %v1011 = vand.u32 %v426, 4294901760
  %v1012 = vsub.f32 %v426, %v1011
  %1013 = vmatpush.msra.mxu0 %v1012
  %v1014 = vand.u32 %v422, 4294901760
  %v1015 = vsub.f32 %v422, %v1014
  %1016 = vmatpush.msra.mxu0 %v1015
  %v1017 = vand.u32 %v352, 4294901760
  %v1018 = vsub.f32 %v352, %v1017
  %1019 = vmatmul.f32.gmra.mxu0 %v1018
  %v1020 = vpop.f32.mrf.mxu0
  %v1021 = vadd.f32 %v967, %v1020
  %1022 = vdwg.mxu0
  %v1023 = vand.u32 %v482, 4294901760
  %1024 = vmatpush.msra.mxu0 %v1023
  %v1025 = vand.u32 %v478, 4294901760
  %1026 = vmatpush.msra.mxu0 %v1025
  %v1027 = vand.u32 %v474, 4294901760
  %1028 = vmatpush.msra.mxu0 %v1027
  %v1029 = vand.u32 %v470, 4294901760
  %1030 = vmatpush.msra.mxu0 %v1029
  %v1031 = vand.u32 %v466, 4294901760
  %1032 = vmatpush.msra.mxu0 %v1031
  %v1033 = vand.u32 %v462, 4294901760
  %1034 = vmatpush.msra.mxu0 %v1033
  %v1035 = vand.u32 %v458, 4294901760
  %1036 = vmatpush.msra.mxu0 %v1035
  %v1037 = vand.u32 %v454, 4294901760
  %1038 = vmatpush.msra.mxu0 %v1037
  %v1039 = vand.u32 %v450, 4294901760
  %1040 = vmatpush.msra.mxu0 %v1039
  %v1041 = vand.u32 %v446, 4294901760
  %1042 = vmatpush.msra.mxu0 %v1041
  %v1043 = vand.u32 %v442, 4294901760
  %1044 = vmatpush.msra.mxu0 %v1043
  %v1045 = vand.u32 %v438, 4294901760
  %1046 = vmatpush.msra.mxu0 %v1045
  %v1047 = vand.u32 %v434, 4294901760
  %1048 = vmatpush.msra.mxu0 %v1047
  %v1049 = vand.u32 %v430, 4294901760
  %1050 = vmatpush.msra.mxu0 %v1049
  %v1051 = vand.u32 %v426, 4294901760
  %1052 = vmatpush.msra.mxu0 %v1051
  %v1053 = vand.u32 %v422, 4294901760
  %1054 = vmatpush.msra.mxu0 %v1053
  %v1055 = vand.u32 %v352, 4294901760
  %v1056 = vsub.f32 %v352, %v1055
  %v1057 = vand.u32 %v1056, 4294901760
  %1058 = vmatmul.f32.gmra.mxu0 %v1057
  %v1059 = vpop.f32.mrf.mxu0
  %v1060 = vadd.f32 %v1021, %v1059
  %1061 = vdwg.mxu0
  %v1062 = vand.u32 %v482, 4294901760
  %v1063 = vsub.f32 %v482, %v1062
  %v1064 = vand.u32 %v1063, 4294901760
  %1065 = vmatpush.msra.mxu0 %v1064
  %v1066 = vand.u32 %v478, 4294901760
  %v1067 = vsub.f32 %v478, %v1066
  %v1068 = vand.u32 %v1067, 4294901760
  %1069 = vmatpush.msra.mxu0 %v1068
  %v1070 = vand.u32 %v474, 4294901760
  %v1071 = vsub.f32 %v474, %v1070
  %v1072 = vand.u32 %v1071, 4294901760
  %1073 = vmatpush.msra.mxu0 %v1072
  %v1074 = vand.u32 %v470, 4294901760
  %v1075 = vsub.f32 %v470, %v1074
  %v1076 = vand.u32 %v1075, 4294901760
  %1077 = vmatpush.msra.mxu0 %v1076
  %v1078 = vand.u32 %v466, 4294901760
  %v1079 = vsub.f32 %v466, %v1078
  %v1080 = vand.u32 %v1079, 4294901760
  %1081 = vmatpush.msra.mxu0 %v1080
  %v1082 = vand.u32 %v462, 4294901760
  %v1083 = vsub.f32 %v462, %v1082
  %v1084 = vand.u32 %v1083, 4294901760
  %1085 = vmatpush.msra.mxu0 %v1084
  %v1086 = vand.u32 %v458, 4294901760
  %v1087 = vsub.f32 %v458, %v1086
  %v1088 = vand.u32 %v1087, 4294901760
  %1089 = vmatpush.msra.mxu0 %v1088
  %v1090 = vand.u32 %v454, 4294901760
  %v1091 = vsub.f32 %v454, %v1090
  %v1092 = vand.u32 %v1091, 4294901760
  %1093 = vmatpush.msra.mxu0 %v1092
  %v1094 = vand.u32 %v450, 4294901760
  %v1095 = vsub.f32 %v450, %v1094
  %v1096 = vand.u32 %v1095, 4294901760
  %1097 = vmatpush.msra.mxu0 %v1096
  %v1098 = vand.u32 %v446, 4294901760
  %v1099 = vsub.f32 %v446, %v1098
  %v1100 = vand.u32 %v1099, 4294901760
  %1101 = vmatpush.msra.mxu0 %v1100
  %v1102 = vand.u32 %v442, 4294901760
  %v1103 = vsub.f32 %v442, %v1102
  %v1104 = vand.u32 %v1103, 4294901760
  %1105 = vmatpush.msra.mxu0 %v1104
  %v1106 = vand.u32 %v438, 4294901760
  %v1107 = vsub.f32 %v438, %v1106
  %v1108 = vand.u32 %v1107, 4294901760
  %1109 = vmatpush.msra.mxu0 %v1108
  %v1110 = vand.u32 %v434, 4294901760
  %v1111 = vsub.f32 %v434, %v1110
  %v1112 = vand.u32 %v1111, 4294901760
  %1113 = vmatpush.msra.mxu0 %v1112
  %v1114 = vand.u32 %v430, 4294901760
  %v1115 = vsub.f32 %v430, %v1114
  %v1116 = vand.u32 %v1115, 4294901760
  %1117 = vmatpush.msra.mxu0 %v1116
  %v1118 = vand.u32 %v426, 4294901760
  %v1119 = vsub.f32 %v426, %v1118
  %v1120 = vand.u32 %v1119, 4294901760
  %1121 = vmatpush.msra.mxu0 %v1120
  %v1122 = vand.u32 %v422, 4294901760
  %v1123 = vsub.f32 %v422, %v1122
  %v1124 = vand.u32 %v1123, 4294901760
  %1125 = vmatpush.msra.mxu0 %v1124
  %v1126 = vand.u32 %v352, 4294901760
  %1127 = vmatmul.f32.gmra.mxu0 %v1126
  %v1128 = vpop.f32.mrf.mxu0
  %v1129 = vadd.f32 %v1060, %v1128
  %1130 = vdwg.mxu0
  %v1131 = vand.u32 %v482, 4294901760
  %1132 = vmatpush.msra.mxu0 %v1131
  %v1133 = vand.u32 %v478, 4294901760
  %1134 = vmatpush.msra.mxu0 %v1133
  %v1135 = vand.u32 %v474, 4294901760
  %1136 = vmatpush.msra.mxu0 %v1135
  %v1137 = vand.u32 %v470, 4294901760
  %1138 = vmatpush.msra.mxu0 %v1137
  %v1139 = vand.u32 %v466, 4294901760
  %1140 = vmatpush.msra.mxu0 %v1139
  %v1141 = vand.u32 %v462, 4294901760
  %1142 = vmatpush.msra.mxu0 %v1141
  %v1143 = vand.u32 %v458, 4294901760
  %1144 = vmatpush.msra.mxu0 %v1143
  %v1145 = vand.u32 %v454, 4294901760
  %1146 = vmatpush.msra.mxu0 %v1145
  %v1147 = vand.u32 %v450, 4294901760
  %1148 = vmatpush.msra.mxu0 %v1147
  %v1149 = vand.u32 %v446, 4294901760
  %1150 = vmatpush.msra.mxu0 %v1149
  %v1151 = vand.u32 %v442, 4294901760
  %1152 = vmatpush.msra.mxu0 %v1151
  %v1153 = vand.u32 %v438, 4294901760
  %1154 = vmatpush.msra.mxu0 %v1153
  %v1155 = vand.u32 %v434, 4294901760
  %1156 = vmatpush.msra.mxu0 %v1155
  %v1157 = vand.u32 %v430, 4294901760
  %1158 = vmatpush.msra.mxu0 %v1157
  %v1159 = vand.u32 %v426, 4294901760
  %1160 = vmatpush.msra.mxu0 %v1159
  %v1161 = vand.u32 %v422, 4294901760
  %1162 = vmatpush.msra.mxu0 %v1161
  %v1163 = vand.u32 %v352, 4294901760
  %1164 = vmatmul.f32.gmra.mxu0 %v1163
  %v1165 = vpop.f32.mrf.mxu0
  %v1166 = vadd.f32 %v1129, %v1165
  %1167 = vdwg.mxu0
  %v1168 = vand.u32 %v419, 4294901760
  %1169 = vmatpush.msra.mxu0 %v1168
  %v1170 = vand.u32 %v415, 4294901760
  %1171 = vmatpush.msra.mxu0 %v1170
  %v1172 = vand.u32 %v411, 4294901760
  %1173 = vmatpush.msra.mxu0 %v1172
  %v1174 = vand.u32 %v407, 4294901760
  %1175 = vmatpush.msra.mxu0 %v1174
  %v1176 = vand.u32 %v403, 4294901760
  %1177 = vmatpush.msra.mxu0 %v1176
  %v1178 = vand.u32 %v399, 4294901760
  %1179 = vmatpush.msra.mxu0 %v1178
  %v1180 = vand.u32 %v395, 4294901760
  %1181 = vmatpush.msra.mxu0 %v1180
  %v1182 = vand.u32 %v391, 4294901760
  %1183 = vmatpush.msra.mxu0 %v1182
  %v1184 = vand.u32 %v387, 4294901760
  %1185 = vmatpush.msra.mxu0 %v1184
  %v1186 = vand.u32 %v383, 4294901760
  %1187 = vmatpush.msra.mxu0 %v1186
  %v1188 = vand.u32 %v379, 4294901760
  %1189 = vmatpush.msra.mxu0 %v1188
  %v1190 = vand.u32 %v375, 4294901760
  %1191 = vmatpush.msra.mxu0 %v1190
  %v1192 = vand.u32 %v371, 4294901760
  %1193 = vmatpush.msra.mxu0 %v1192
  %v1194 = vand.u32 %v367, 4294901760
  %1195 = vmatpush.msra.mxu0 %v1194
  %v1196 = vand.u32 %v363, 4294901760
  %1197 = vmatpush.msra.mxu0 %v1196
  %v1198 = vand.u32 %v359, 4294901760
  %1199 = vmatpush.msra.mxu0 %v1198
  %v1200 = vand.u32 %v206, 4294901760
  %v1201 = vsub.f32 %v206, %v1200
  %v1202 = vand.u32 %v1201, 4294901760
  %v1203 = vsub.f32 %v1201, %v1202
  %v1204 = vand.u32 %v1203, 4294901760
  %1205 = vmatmul.f32.gmra.mxu0 %v1204
  %v1206 = vpop.f32.mrf.mxu0
  %v1207 = vadd.f32 0.0, %v1206
  %1208 = vdwg.mxu0
  %v1209 = vand.u32 %v419, 4294901760
  %v1210 = vsub.f32 %v419, %v1209
  %v1211 = vand.u32 %v1210, 4294901760
  %v1212 = vsub.f32 %v1210, %v1211
  %v1213 = vand.u32 %v1212, 4294901760
  %1214 = vmatpush.msra.mxu0 %v1213
  %v1215 = vand.u32 %v415, 4294901760
  %v1216 = vsub.f32 %v415, %v1215
  %v1217 = vand.u32 %v1216, 4294901760
  %v1218 = vsub.f32 %v1216, %v1217
  %v1219 = vand.u32 %v1218, 4294901760
  %1220 = vmatpush.msra.mxu0 %v1219
  %v1221 = vand.u32 %v411, 4294901760
  %v1222 = vsub.f32 %v411, %v1221
  %v1223 = vand.u32 %v1222, 4294901760
  %v1224 = vsub.f32 %v1222, %v1223
  %v1225 = vand.u32 %v1224, 4294901760
  %1226 = vmatpush.msra.mxu0 %v1225
  %v1227 = vand.u32 %v407, 4294901760
  %v1228 = vsub.f32 %v407, %v1227
  %v1229 = vand.u32 %v1228, 4294901760
  %v1230 = vsub.f32 %v1228, %v1229
  %v1231 = vand.u32 %v1230, 4294901760
  %1232 = vmatpush.msra.mxu0 %v1231
  %v1233 = vand.u32 %v403, 4294901760
  %v1234 = vsub.f32 %v403, %v1233
  %v1235 = vand.u32 %v1234, 4294901760
  %v1236 = vsub.f32 %v1234, %v1235
  %v1237 = vand.u32 %v1236, 4294901760
  %1238 = vmatpush.msra.mxu0 %v1237
  %v1239 = vand.u32 %v399, 4294901760
  %v1240 = vsub.f32 %v399, %v1239
  %v1241 = vand.u32 %v1240, 4294901760
  %v1242 = vsub.f32 %v1240, %v1241
  %v1243 = vand.u32 %v1242, 4294901760
  %1244 = vmatpush.msra.mxu0 %v1243
  %v1245 = vand.u32 %v395, 4294901760
  %v1246 = vsub.f32 %v395, %v1245
  %v1247 = vand.u32 %v1246, 4294901760
  %v1248 = vsub.f32 %v1246, %v1247
  %v1249 = vand.u32 %v1248, 4294901760
  %1250 = vmatpush.msra.mxu0 %v1249
  %v1251 = vand.u32 %v391, 4294901760
  %v1252 = vsub.f32 %v391, %v1251
  %v1253 = vand.u32 %v1252, 4294901760
  %v1254 = vsub.f32 %v1252, %v1253
  %v1255 = vand.u32 %v1254, 4294901760
  %1256 = vmatpush.msra.mxu0 %v1255
  %v1257 = vand.u32 %v387, 4294901760
  %v1258 = vsub.f32 %v387, %v1257
  %v1259 = vand.u32 %v1258, 4294901760
  %v1260 = vsub.f32 %v1258, %v1259
  %v1261 = vand.u32 %v1260, 4294901760
  %1262 = vmatpush.msra.mxu0 %v1261
  %v1263 = vand.u32 %v383, 4294901760
  %v1264 = vsub.f32 %v383, %v1263
  %v1265 = vand.u32 %v1264, 4294901760
  %v1266 = vsub.f32 %v1264, %v1265
  %v1267 = vand.u32 %v1266, 4294901760
  %1268 = vmatpush.msra.mxu0 %v1267
  %v1269 = vand.u32 %v379, 4294901760
  %v1270 = vsub.f32 %v379, %v1269
  %v1271 = vand.u32 %v1270, 4294901760
  %v1272 = vsub.f32 %v1270, %v1271
  %v1273 = vand.u32 %v1272, 4294901760
  %1274 = vmatpush.msra.mxu0 %v1273
  %v1275 = vand.u32 %v375, 4294901760
  %v1276 = vsub.f32 %v375, %v1275
  %v1277 = vand.u32 %v1276, 4294901760
  %v1278 = vsub.f32 %v1276, %v1277
  %v1279 = vand.u32 %v1278, 4294901760
  %1280 = vmatpush.msra.mxu0 %v1279
  %v1281 = vand.u32 %v371, 4294901760
  %v1282 = vsub.f32 %v371, %v1281
  %v1283 = vand.u32 %v1282, 4294901760
  %v1284 = vsub.f32 %v1282, %v1283
  %v1285 = vand.u32 %v1284, 4294901760
  %1286 = vmatpush.msra.mxu0 %v1285
  %v1287 = vand.u32 %v367, 4294901760
  %v1288 = vsub.f32 %v367, %v1287
  %v1289 = vand.u32 %v1288, 4294901760
  %v1290 = vsub.f32 %v1288, %v1289
  %v1291 = vand.u32 %v1290, 4294901760
  %1292 = vmatpush.msra.mxu0 %v1291
  %v1293 = vand.u32 %v363, 4294901760
  %v1294 = vsub.f32 %v363, %v1293
  %v1295 = vand.u32 %v1294, 4294901760
  %v1296 = vsub.f32 %v1294, %v1295
  %v1297 = vand.u32 %v1296, 4294901760
  %1298 = vmatpush.msra.mxu0 %v1297
  %v1299 = vand.u32 %v359, 4294901760
  %v1300 = vsub.f32 %v359, %v1299
  %v1301 = vand.u32 %v1300, 4294901760
  %v1302 = vsub.f32 %v1300, %v1301
  %v1303 = vand.u32 %v1302, 4294901760
  %1304 = vmatpush.msra.mxu0 %v1303
  %v1305 = vand.u32 %v206, 4294901760
  %1306 = vmatmul.f32.gmra.mxu0 %v1305
  %v1307 = vpop.f32.mrf.mxu0
  %v1308 = vadd.f32 %v1207, %v1307
  %1309 = vdwg.mxu0
  %v1310 = vand.u32 %v419, 4294901760
  %v1311 = vsub.f32 %v419, %v1310
  %1312 = vmatpush.msra.mxu0 %v1311
  %v1313 = vand.u32 %v415, 4294901760
  %v1314 = vsub.f32 %v415, %v1313
  %1315 = vmatpush.msra.mxu0 %v1314
  %v1316 = vand.u32 %v411, 4294901760
  %v1317 = vsub.f32 %v411, %v1316
  %1318 = vmatpush.msra.mxu0 %v1317
  %v1319 = vand.u32 %v407, 4294901760
  %v1320 = vsub.f32 %v407, %v1319
  %1321 = vmatpush.msra.mxu0 %v1320
  %v1322 = vand.u32 %v403, 4294901760
  %v1323 = vsub.f32 %v403, %v1322
  %1324 = vmatpush.msra.mxu0 %v1323
  %v1325 = vand.u32 %v399, 4294901760
  %v1326 = vsub.f32 %v399, %v1325
  %1327 = vmatpush.msra.mxu0 %v1326
  %v1328 = vand.u32 %v395, 4294901760
  %v1329 = vsub.f32 %v395, %v1328
  %1330 = vmatpush.msra.mxu0 %v1329
  %v1331 = vand.u32 %v391, 4294901760
  %v1332 = vsub.f32 %v391, %v1331
  %1333 = vmatpush.msra.mxu0 %v1332
  %v1334 = vand.u32 %v387, 4294901760
  %v1335 = vsub.f32 %v387, %v1334
  %1336 = vmatpush.msra.mxu0 %v1335
  %v1337 = vand.u32 %v383, 4294901760
  %v1338 = vsub.f32 %v383, %v1337
  %1339 = vmatpush.msra.mxu0 %v1338
  %v1340 = vand.u32 %v379, 4294901760
  %v1341 = vsub.f32 %v379, %v1340
  %1342 = vmatpush.msra.mxu0 %v1341
  %v1343 = vand.u32 %v375, 4294901760
  %v1344 = vsub.f32 %v375, %v1343
  %1345 = vmatpush.msra.mxu0 %v1344
  %v1346 = vand.u32 %v371, 4294901760
  %v1347 = vsub.f32 %v371, %v1346
  %1348 = vmatpush.msra.mxu0 %v1347
  %v1349 = vand.u32 %v367, 4294901760
  %v1350 = vsub.f32 %v367, %v1349
  %1351 = vmatpush.msra.mxu0 %v1350
  %v1352 = vand.u32 %v363, 4294901760
  %v1353 = vsub.f32 %v363, %v1352
  %1354 = vmatpush.msra.mxu0 %v1353
  %v1355 = vand.u32 %v359, 4294901760
  %v1356 = vsub.f32 %v359, %v1355
  %1357 = vmatpush.msra.mxu0 %v1356
  %v1358 = vand.u32 %v206, 4294901760
  %v1359 = vsub.f32 %v206, %v1358
  %1360 = vmatmul.f32.gmra.mxu0 %v1359
  %v1361 = vpop.f32.mrf.mxu0
  %v1362 = vadd.f32 %v1308, %v1361
  %1363 = vdwg.mxu0
  %v1364 = vand.u32 %v419, 4294901760
  %1365 = vmatpush.msra.mxu0 %v1364
  %v1366 = vand.u32 %v415, 4294901760
  %1367 = vmatpush.msra.mxu0 %v1366
  %v1368 = vand.u32 %v411, 4294901760
  %1369 = vmatpush.msra.mxu0 %v1368
  %v1370 = vand.u32 %v407, 4294901760
  %1371 = vmatpush.msra.mxu0 %v1370
  %v1372 = vand.u32 %v403, 4294901760
  %1373 = vmatpush.msra.mxu0 %v1372
  %v1374 = vand.u32 %v399, 4294901760
  %1375 = vmatpush.msra.mxu0 %v1374
  %v1376 = vand.u32 %v395, 4294901760
  %1377 = vmatpush.msra.mxu0 %v1376
  %v1378 = vand.u32 %v391, 4294901760
  %1379 = vmatpush.msra.mxu0 %v1378
  %v1380 = vand.u32 %v387, 4294901760
  %1381 = vmatpush.msra.mxu0 %v1380
  %v1382 = vand.u32 %v383, 4294901760
  %1383 = vmatpush.msra.mxu0 %v1382
  %v1384 = vand.u32 %v379, 4294901760
  %1385 = vmatpush.msra.mxu0 %v1384
  %v1386 = vand.u32 %v375, 4294901760
  %1387 = vmatpush.msra.mxu0 %v1386
  %v1388 = vand.u32 %v371, 4294901760
  %1389 = vmatpush.msra.mxu0 %v1388
  %v1390 = vand.u32 %v367, 4294901760
  %1391 = vmatpush.msra.mxu0 %v1390
  %v1392 = vand.u32 %v363, 4294901760
  %1393 = vmatpush.msra.mxu0 %v1392
  %v1394 = vand.u32 %v359, 4294901760
  %1395 = vmatpush.msra.mxu0 %v1394
  %v1396 = vand.u32 %v206, 4294901760
  %v1397 = vsub.f32 %v206, %v1396
  %v1398 = vand.u32 %v1397, 4294901760
  %1399 = vmatmul.f32.gmra.mxu0 %v1398
  %v1400 = vpop.f32.mrf.mxu0
  %v1401 = vadd.f32 %v1362, %v1400
  %1402 = vdwg.mxu0
  %v1403 = vand.u32 %v419, 4294901760
  %v1404 = vsub.f32 %v419, %v1403
  %v1405 = vand.u32 %v1404, 4294901760
  %1406 = vmatpush.msra.mxu0 %v1405
  %v1407 = vand.u32 %v415, 4294901760
  %v1408 = vsub.f32 %v415, %v1407
  %v1409 = vand.u32 %v1408, 4294901760
  %1410 = vmatpush.msra.mxu0 %v1409
  %v1411 = vand.u32 %v411, 4294901760
  %v1412 = vsub.f32 %v411, %v1411
  %v1413 = vand.u32 %v1412, 4294901760
  %1414 = vmatpush.msra.mxu0 %v1413
  %v1415 = vand.u32 %v407, 4294901760
  %v1416 = vsub.f32 %v407, %v1415
  %v1417 = vand.u32 %v1416, 4294901760
  %1418 = vmatpush.msra.mxu0 %v1417
  %v1419 = vand.u32 %v403, 4294901760
  %v1420 = vsub.f32 %v403, %v1419
  %v1421 = vand.u32 %v1420, 4294901760
  %1422 = vmatpush.msra.mxu0 %v1421
  %v1423 = vand.u32 %v399, 4294901760
  %v1424 = vsub.f32 %v399, %v1423
  %v1425 = vand.u32 %v1424, 4294901760
  %1426 = vmatpush.msra.mxu0 %v1425
  %v1427 = vand.u32 %v395, 4294901760
  %v1428 = vsub.f32 %v395, %v1427
  %v1429 = vand.u32 %v1428, 4294901760
  %1430 = vmatpush.msra.mxu0 %v1429
  %v1431 = vand.u32 %v391, 4294901760
  %v1432 = vsub.f32 %v391, %v1431
  %v1433 = vand.u32 %v1432, 4294901760
  %1434 = vmatpush.msra.mxu0 %v1433
  %v1435 = vand.u32 %v387, 4294901760
  %v1436 = vsub.f32 %v387, %v1435
  %v1437 = vand.u32 %v1436, 4294901760
  %1438 = vmatpush.msra.mxu0 %v1437
  %v1439 = vand.u32 %v383, 4294901760
  %v1440 = vsub.f32 %v383, %v1439
  %v1441 = vand.u32 %v1440, 4294901760
  %1442 = vmatpush.msra.mxu0 %v1441
  %v1443 = vand.u32 %v379, 4294901760
  %v1444 = vsub.f32 %v379, %v1443
  %v1445 = vand.u32 %v1444, 4294901760
  %1446 = vmatpush.msra.mxu0 %v1445
  %v1447 = vand.u32 %v375, 4294901760
  %v1448 = vsub.f32 %v375, %v1447
  %v1449 = vand.u32 %v1448, 4294901760
  %1450 = vmatpush.msra.mxu0 %v1449
  %v1451 = vand.u32 %v371, 4294901760
  %v1452 = vsub.f32 %v371, %v1451
  %v1453 = vand.u32 %v1452, 4294901760
  %1454 = vmatpush.msra.mxu0 %v1453
  %v1455 = vand.u32 %v367, 4294901760
  %v1456 = vsub.f32 %v367, %v1455
  %v1457 = vand.u32 %v1456, 4294901760
  %1458 = vmatpush.msra.mxu0 %v1457
  %v1459 = vand.u32 %v363, 4294901760
  %v1460 = vsub.f32 %v363, %v1459
  %v1461 = vand.u32 %v1460, 4294901760
  %1462 = vmatpush.msra.mxu0 %v1461
  %v1463 = vand.u32 %v359, 4294901760
  %v1464 = vsub.f32 %v359, %v1463
  %v1465 = vand.u32 %v1464, 4294901760
  %1466 = vmatpush.msra.mxu0 %v1465
  %v1467 = vand.u32 %v206, 4294901760
  %1468 = vmatmul.f32.gmra.mxu0 %v1467
  %v1469 = vpop.f32.mrf.mxu0
  %v1470 = vadd.f32 %v1401, %v1469
  %1471 = vdwg.mxu0
  %v1472 = vand.u32 %v419, 4294901760
  %1473 = vmatpush.msra.mxu0 %v1472
  %v1474 = vand.u32 %v415, 4294901760
  %1475 = vmatpush.msra.mxu0 %v1474
  %v1476 = vand.u32 %v411, 4294901760
  %1477 = vmatpush.msra.mxu0 %v1476
  %v1478 = vand.u32 %v407, 4294901760
  %1479 = vmatpush.msra.mxu0 %v1478
  %v1480 = vand.u32 %v403, 4294901760
  %1481 = vmatpush.msra.mxu0 %v1480
  %v1482 = vand.u32 %v399, 4294901760
  %1483 = vmatpush.msra.mxu0 %v1482
  %v1484 = vand.u32 %v395, 4294901760
  %1485 = vmatpush.msra.mxu0 %v1484
  %v1486 = vand.u32 %v391, 4294901760
  %1487 = vmatpush.msra.mxu0 %v1486
  %v1488 = vand.u32 %v387, 4294901760
  %1489 = vmatpush.msra.mxu0 %v1488
  %v1490 = vand.u32 %v383, 4294901760
  %1491 = vmatpush.msra.mxu0 %v1490
  %v1492 = vand.u32 %v379, 4294901760
  %1493 = vmatpush.msra.mxu0 %v1492
  %v1494 = vand.u32 %v375, 4294901760
  %1495 = vmatpush.msra.mxu0 %v1494
  %v1496 = vand.u32 %v371, 4294901760
  %1497 = vmatpush.msra.mxu0 %v1496
  %v1498 = vand.u32 %v367, 4294901760
  %1499 = vmatpush.msra.mxu0 %v1498
  %v1500 = vand.u32 %v363, 4294901760
  %1501 = vmatpush.msra.mxu0 %v1500
  %v1502 = vand.u32 %v359, 4294901760
  %1503 = vmatpush.msra.mxu0 %v1502
  %v1504 = vand.u32 %v206, 4294901760
  %1505 = vmatmul.f32.gmra.mxu0 %v1504
  %v1506 = vpop.f32.mrf.mxu0
  %v1507 = vadd.f32 %v1470, %v1506
  %1508 = vdwg.mxu0
  %v1509 = vand.u32 %v483, 4294901760
  %1510 = vmatpush.msra.mxu0 %v1509
  %v1511 = vand.u32 %v479, 4294901760
  %1512 = vmatpush.msra.mxu0 %v1511
  %v1513 = vand.u32 %v475, 4294901760
  %1514 = vmatpush.msra.mxu0 %v1513
  %v1515 = vand.u32 %v471, 4294901760
  %1516 = vmatpush.msra.mxu0 %v1515
  %v1517 = vand.u32 %v467, 4294901760
  %1518 = vmatpush.msra.mxu0 %v1517
  %v1519 = vand.u32 %v463, 4294901760
  %1520 = vmatpush.msra.mxu0 %v1519
  %v1521 = vand.u32 %v459, 4294901760
  %1522 = vmatpush.msra.mxu0 %v1521
  %v1523 = vand.u32 %v455, 4294901760
  %1524 = vmatpush.msra.mxu0 %v1523
  %v1525 = vand.u32 %v451, 4294901760
  %1526 = vmatpush.msra.mxu0 %v1525
  %v1527 = vand.u32 %v447, 4294901760
  %1528 = vmatpush.msra.mxu0 %v1527
  %v1529 = vand.u32 %v443, 4294901760
  %1530 = vmatpush.msra.mxu0 %v1529
  %v1531 = vand.u32 %v439, 4294901760
  %1532 = vmatpush.msra.mxu0 %v1531
  %v1533 = vand.u32 %v435, 4294901760
  %1534 = vmatpush.msra.mxu0 %v1533
  %v1535 = vand.u32 %v431, 4294901760
  %1536 = vmatpush.msra.mxu0 %v1535
  %v1537 = vand.u32 %v427, 4294901760
  %1538 = vmatpush.msra.mxu0 %v1537
  %v1539 = vand.u32 %v423, 4294901760
  %1540 = vmatpush.msra.mxu0 %v1539
  %v1541 = vand.u32 %v352, 4294901760
  %v1542 = vsub.f32 %v352, %v1541
  %v1543 = vand.u32 %v1542, 4294901760
  %v1544 = vsub.f32 %v1542, %v1543
  %v1545 = vand.u32 %v1544, 4294901760
  %1546 = vmatmul.f32.gmra.mxu0 %v1545
  %v1547 = vpop.f32.mrf.mxu0
  %v1548 = vadd.f32 %v1507, %v1547
  %1549 = vdwg.mxu0
  %v1550 = vand.u32 %v483, 4294901760
  %v1551 = vsub.f32 %v483, %v1550
  %v1552 = vand.u32 %v1551, 4294901760
  %v1553 = vsub.f32 %v1551, %v1552
  %v1554 = vand.u32 %v1553, 4294901760
  %1555 = vmatpush.msra.mxu0 %v1554
  %v1556 = vand.u32 %v479, 4294901760
  %v1557 = vsub.f32 %v479, %v1556
  %v1558 = vand.u32 %v1557, 4294901760
  %v1559 = vsub.f32 %v1557, %v1558
  %v1560 = vand.u32 %v1559, 4294901760
  %1561 = vmatpush.msra.mxu0 %v1560
  %v1562 = vand.u32 %v475, 4294901760
  %v1563 = vsub.f32 %v475, %v1562
  %v1564 = vand.u32 %v1563, 4294901760
  %v1565 = vsub.f32 %v1563, %v1564
  %v1566 = vand.u32 %v1565, 4294901760
  %1567 = vmatpush.msra.mxu0 %v1566
  %v1568 = vand.u32 %v471, 4294901760
  %v1569 = vsub.f32 %v471, %v1568
  %v1570 = vand.u32 %v1569, 4294901760
  %v1571 = vsub.f32 %v1569, %v1570
  %v1572 = vand.u32 %v1571, 4294901760
  %1573 = vmatpush.msra.mxu0 %v1572
  %v1574 = vand.u32 %v467, 4294901760
  %v1575 = vsub.f32 %v467, %v1574
  %v1576 = vand.u32 %v1575, 4294901760
  %v1577 = vsub.f32 %v1575, %v1576
  %v1578 = vand.u32 %v1577, 4294901760
  %1579 = vmatpush.msra.mxu0 %v1578
  %v1580 = vand.u32 %v463, 4294901760
  %v1581 = vsub.f32 %v463, %v1580
  %v1582 = vand.u32 %v1581, 4294901760
  %v1583 = vsub.f32 %v1581, %v1582
  %v1584 = vand.u32 %v1583, 4294901760
  %1585 = vmatpush.msra.mxu0 %v1584
  %v1586 = vand.u32 %v459, 4294901760
  %v1587 = vsub.f32 %v459, %v1586
  %v1588 = vand.u32 %v1587, 4294901760
  %v1589 = vsub.f32 %v1587, %v1588
  %v1590 = vand.u32 %v1589, 4294901760
  %1591 = vmatpush.msra.mxu0 %v1590
  %v1592 = vand.u32 %v455, 4294901760
  %v1593 = vsub.f32 %v455, %v1592
  %v1594 = vand.u32 %v1593, 4294901760
  %v1595 = vsub.f32 %v1593, %v1594
  %v1596 = vand.u32 %v1595, 4294901760
  %1597 = vmatpush.msra.mxu0 %v1596
  %v1598 = vand.u32 %v451, 4294901760
  %v1599 = vsub.f32 %v451, %v1598
  %v1600 = vand.u32 %v1599, 4294901760
  %v1601 = vsub.f32 %v1599, %v1600
  %v1602 = vand.u32 %v1601, 4294901760
  %1603 = vmatpush.msra.mxu0 %v1602
  %v1604 = vand.u32 %v447, 4294901760
  %v1605 = vsub.f32 %v447, %v1604
  %v1606 = vand.u32 %v1605, 4294901760
  %v1607 = vsub.f32 %v1605, %v1606
  %v1608 = vand.u32 %v1607, 4294901760
  %1609 = vmatpush.msra.mxu0 %v1608
  %v1610 = vand.u32 %v443, 4294901760
  %v1611 = vsub.f32 %v443, %v1610
  %v1612 = vand.u32 %v1611, 4294901760
  %v1613 = vsub.f32 %v1611, %v1612
  %v1614 = vand.u32 %v1613, 4294901760
  %1615 = vmatpush.msra.mxu0 %v1614
  %v1616 = vand.u32 %v439, 4294901760
  %v1617 = vsub.f32 %v439, %v1616
  %v1618 = vand.u32 %v1617, 4294901760
  %v1619 = vsub.f32 %v1617, %v1618
  %v1620 = vand.u32 %v1619, 4294901760
  %1621 = vmatpush.msra.mxu0 %v1620
  %v1622 = vand.u32 %v435, 4294901760
  %v1623 = vsub.f32 %v435, %v1622
  %v1624 = vand.u32 %v1623, 4294901760
  %v1625 = vsub.f32 %v1623, %v1624
  %v1626 = vand.u32 %v1625, 4294901760
  %1627 = vmatpush.msra.mxu0 %v1626
  %v1628 = vand.u32 %v431, 4294901760
  %v1629 = vsub.f32 %v431, %v1628
  %v1630 = vand.u32 %v1629, 4294901760
  %v1631 = vsub.f32 %v1629, %v1630
  %v1632 = vand.u32 %v1631, 4294901760
  %1633 = vmatpush.msra.mxu0 %v1632
  %v1634 = vand.u32 %v427, 4294901760
  %v1635 = vsub.f32 %v427, %v1634
  %v1636 = vand.u32 %v1635, 4294901760
  %v1637 = vsub.f32 %v1635, %v1636
  %v1638 = vand.u32 %v1637, 4294901760
  %1639 = vmatpush.msra.mxu0 %v1638
  %v1640 = vand.u32 %v423, 4294901760
  %v1641 = vsub.f32 %v423, %v1640
  %v1642 = vand.u32 %v1641, 4294901760
  %v1643 = vsub.f32 %v1641, %v1642
  %v1644 = vand.u32 %v1643, 4294901760
  %1645 = vmatpush.msra.mxu0 %v1644
  %v1646 = vand.u32 %v352, 4294901760
  %1647 = vmatmul.f32.gmra.mxu0 %v1646
  %v1648 = vpop.f32.mrf.mxu0
  %v1649 = vadd.f32 %v1548, %v1648
  %1650 = vdwg.mxu0
  %v1651 = vand.u32 %v483, 4294901760
  %v1652 = vsub.f32 %v483, %v1651
  %1653 = vmatpush.msra.mxu0 %v1652
  %v1654 = vand.u32 %v479, 4294901760
  %v1655 = vsub.f32 %v479, %v1654
  %1656 = vmatpush.msra.mxu0 %v1655
  %v1657 = vand.u32 %v475, 4294901760
  %v1658 = vsub.f32 %v475, %v1657
  %1659 = vmatpush.msra.mxu0 %v1658
  %v1660 = vand.u32 %v471, 4294901760
  %v1661 = vsub.f32 %v471, %v1660
  %1662 = vmatpush.msra.mxu0 %v1661
  %v1663 = vand.u32 %v467, 4294901760
  %v1664 = vsub.f32 %v467, %v1663
  %1665 = vmatpush.msra.mxu0 %v1664
  %v1666 = vand.u32 %v463, 4294901760
  %v1667 = vsub.f32 %v463, %v1666
  %1668 = vmatpush.msra.mxu0 %v1667
  %v1669 = vand.u32 %v459, 4294901760
  %v1670 = vsub.f32 %v459, %v1669
  %1671 = vmatpush.msra.mxu0 %v1670
  %v1672 = vand.u32 %v455, 4294901760
  %v1673 = vsub.f32 %v455, %v1672
  %1674 = vmatpush.msra.mxu0 %v1673
  %v1675 = vand.u32 %v451, 4294901760
  %v1676 = vsub.f32 %v451, %v1675
  %1677 = vmatpush.msra.mxu0 %v1676
  %v1678 = vand.u32 %v447, 4294901760
  %v1679 = vsub.f32 %v447, %v1678
  %1680 = vmatpush.msra.mxu0 %v1679
  %v1681 = vand.u32 %v443, 4294901760
  %v1682 = vsub.f32 %v443, %v1681
  %1683 = vmatpush.msra.mxu0 %v1682
  %v1684 = vand.u32 %v439, 4294901760
  %v1685 = vsub.f32 %v439, %v1684
  %1686 = vmatpush.msra.mxu0 %v1685
  %v1687 = vand.u32 %v435, 4294901760
  %v1688 = vsub.f32 %v435, %v1687
  %1689 = vmatpush.msra.mxu0 %v1688
  %v1690 = vand.u32 %v431, 4294901760
  %v1691 = vsub.f32 %v431, %v1690
  %1692 = vmatpush.msra.mxu0 %v1691
  %v1693 = vand.u32 %v427, 4294901760
  %v1694 = vsub.f32 %v427, %v1693
  %1695 = vmatpush.msra.mxu0 %v1694
  %v1696 = vand.u32 %v423, 4294901760
  %v1697 = vsub.f32 %v423, %v1696
  %1698 = vmatpush.msra.mxu0 %v1697
  %v1699 = vand.u32 %v352, 4294901760
  %v1700 = vsub.f32 %v352, %v1699
  %1701 = vmatmul.f32.gmra.mxu0 %v1700
  %v1702 = vpop.f32.mrf.mxu0
  %v1703 = vadd.f32 %v1649, %v1702
  %1704 = vdwg.mxu0
  %v1705 = vand.u32 %v483, 4294901760
  %1706 = vmatpush.msra.mxu0 %v1705
  %v1707 = vand.u32 %v479, 4294901760
  %1708 = vmatpush.msra.mxu0 %v1707
  %v1709 = vand.u32 %v475, 4294901760
  %1710 = vmatpush.msra.mxu0 %v1709
  %v1711 = vand.u32 %v471, 4294901760
  %1712 = vmatpush.msra.mxu0 %v1711
  %v1713 = vand.u32 %v467, 4294901760
  %1714 = vmatpush.msra.mxu0 %v1713
  %v1715 = vand.u32 %v463, 4294901760
  %1716 = vmatpush.msra.mxu0 %v1715
  %v1717 = vand.u32 %v459, 4294901760
  %1718 = vmatpush.msra.mxu0 %v1717
  %v1719 = vand.u32 %v455, 4294901760
  %1720 = vmatpush.msra.mxu0 %v1719
  %v1721 = vand.u32 %v451, 4294901760
  %1722 = vmatpush.msra.mxu0 %v1721
  %v1723 = vand.u32 %v447, 4294901760
  %1724 = vmatpush.msra.mxu0 %v1723
  %v1725 = vand.u32 %v443, 4294901760
  %1726 = vmatpush.msra.mxu0 %v1725
  %v1727 = vand.u32 %v439, 4294901760
  %1728 = vmatpush.msra.mxu0 %v1727
  %v1729 = vand.u32 %v435, 4294901760
  %1730 = vmatpush.msra.mxu0 %v1729
  %v1731 = vand.u32 %v431, 4294901760
  %1732 = vmatpush.msra.mxu0 %v1731
  %v1733 = vand.u32 %v427, 4294901760
  %1734 = vmatpush.msra.mxu0 %v1733
  %v1735 = vand.u32 %v423, 4294901760
  %1736 = vmatpush.msra.mxu0 %v1735
  %v1737 = vand.u32 %v352, 4294901760
  %v1738 = vsub.f32 %v352, %v1737
  %v1739 = vand.u32 %v1738, 4294901760
  %1740 = vmatmul.f32.gmra.mxu0 %v1739
  %v1741 = vpop.f32.mrf.mxu0
  %v1742 = vadd.f32 %v1703, %v1741
  %1743 = vdwg.mxu0
  %v1744 = vand.u32 %v483, 4294901760
  %v1745 = vsub.f32 %v483, %v1744
  %v1746 = vand.u32 %v1745, 4294901760
  %1747 = vmatpush.msra.mxu0 %v1746
  %v1748 = vand.u32 %v479, 4294901760
  %v1749 = vsub.f32 %v479, %v1748
  %v1750 = vand.u32 %v1749, 4294901760
  %1751 = vmatpush.msra.mxu0 %v1750
  %v1752 = vand.u32 %v475, 4294901760
  %v1753 = vsub.f32 %v475, %v1752
  %v1754 = vand.u32 %v1753, 4294901760
  %1755 = vmatpush.msra.mxu0 %v1754
  %v1756 = vand.u32 %v471, 4294901760
  %v1757 = vsub.f32 %v471, %v1756
  %v1758 = vand.u32 %v1757, 4294901760
  %1759 = vmatpush.msra.mxu0 %v1758
  %v1760 = vand.u32 %v467, 4294901760
  %v1761 = vsub.f32 %v467, %v1760
  %v1762 = vand.u32 %v1761, 4294901760
  %1763 = vmatpush.msra.mxu0 %v1762
  %v1764 = vand.u32 %v463, 4294901760
  %v1765 = vsub.f32 %v463, %v1764
  %v1766 = vand.u32 %v1765, 4294901760
  %1767 = vmatpush.msra.mxu0 %v1766
  %v1768 = vand.u32 %v459, 4294901760
  %v1769 = vsub.f32 %v459, %v1768
  %v1770 = vand.u32 %v1769, 4294901760
  %1771 = vmatpush.msra.mxu0 %v1770
  %v1772 = vand.u32 %v455, 4294901760
  %v1773 = vsub.f32 %v455, %v1772
  %v1774 = vand.u32 %v1773, 4294901760
  %1775 = vmatpush.msra.mxu0 %v1774
  %v1776 = vand.u32 %v451, 4294901760
  %v1777 = vsub.f32 %v451, %v1776
  %v1778 = vand.u32 %v1777, 4294901760
  %1779 = vmatpush.msra.mxu0 %v1778
  %v1780 = vand.u32 %v447, 4294901760
  %v1781 = vsub.f32 %v447, %v1780
  %v1782 = vand.u32 %v1781, 4294901760
  %1783 = vmatpush.msra.mxu0 %v1782
  %v1784 = vand.u32 %v443, 4294901760
  %v1785 = vsub.f32 %v443, %v1784
  %v1786 = vand.u32 %v1785, 4294901760
  %1787 = vmatpush.msra.mxu0 %v1786
  %v1788 = vand.u32 %v439, 4294901760
  %v1789 = vsub.f32 %v439, %v1788
  %v1790 = vand.u32 %v1789, 4294901760
  %1791 = vmatpush.msra.mxu0 %v1790
  %v1792 = vand.u32 %v435, 4294901760
  %v1793 = vsub.f32 %v435, %v1792
  %v1794 = vand.u32 %v1793, 4294901760
  %1795 = vmatpush.msra.mxu0 %v1794
  %v1796 = vand.u32 %v431, 4294901760
  %v1797 = vsub.f32 %v431, %v1796
  %v1798 = vand.u32 %v1797, 4294901760
  %1799 = vmatpush.msra.mxu0 %v1798
  %v1800 = vand.u32 %v427, 4294901760
  %v1801 = vsub.f32 %v427, %v1800
  %v1802 = vand.u32 %v1801, 4294901760
  %1803 = vmatpush.msra.mxu0 %v1802
  %v1804 = vand.u32 %v423, 4294901760
  %v1805 = vsub.f32 %v423, %v1804
  %v1806 = vand.u32 %v1805, 4294901760
  %1807 = vmatpush.msra.mxu0 %v1806
  %v1808 = vand.u32 %v352, 4294901760
  %1809 = vmatmul.f32.gmra.mxu0 %v1808
  %v1810 = vpop.f32.mrf.mxu0
  %v1811 = vadd.f32 %v1742, %v1810
  %1812 = vdwg.mxu0
  %v1813 = vand.u32 %v483, 4294901760
  %1814 = vmatpush.msra.mxu0 %v1813
  %v1815 = vand.u32 %v479, 4294901760
  %1816 = vmatpush.msra.mxu0 %v1815
  %v1817 = vand.u32 %v475, 4294901760
  %1818 = vmatpush.msra.mxu0 %v1817
  %v1819 = vand.u32 %v471, 4294901760
  %1820 = vmatpush.msra.mxu0 %v1819
  %v1821 = vand.u32 %v467, 4294901760
  %1822 = vmatpush.msra.mxu0 %v1821
  %v1823 = vand.u32 %v463, 4294901760
  %1824 = vmatpush.msra.mxu0 %v1823
  %v1825 = vand.u32 %v459, 4294901760
  %1826 = vmatpush.msra.mxu0 %v1825
  %v1827 = vand.u32 %v455, 4294901760
  %1828 = vmatpush.msra.mxu0 %v1827
  %v1829 = vand.u32 %v451, 4294901760
  %1830 = vmatpush.msra.mxu0 %v1829
  %v1831 = vand.u32 %v447, 4294901760
  %1832 = vmatpush.msra.mxu0 %v1831
  %v1833 = vand.u32 %v443, 4294901760
  %1834 = vmatpush.msra.mxu0 %v1833
  %v1835 = vand.u32 %v439, 4294901760
  %1836 = vmatpush.msra.mxu0 %v1835
  %v1837 = vand.u32 %v435, 4294901760
  %1838 = vmatpush.msra.mxu0 %v1837
  %v1839 = vand.u32 %v431, 4294901760
  %1840 = vmatpush.msra.mxu0 %v1839
  %v1841 = vand.u32 %v427, 4294901760
  %1842 = vmatpush.msra.mxu0 %v1841
  %v1843 = vand.u32 %v423, 4294901760
  %1844 = vmatpush.msra.mxu0 %v1843
  %v1845 = vand.u32 %v352, 4294901760
  %1846 = vmatmul.f32.gmra.mxu0 %v1845
  %v1847 = vpop.f32.mrf.mxu0
  %v1848 = vadd.f32 %v1811, %v1847
  %1849 = vdwg.mxu0
  %v1850 = vand.u32 %v420, 4294901760
  %1851 = vmatpush.msra.mxu0 %v1850
  %v1852 = vand.u32 %v416, 4294901760
  %1853 = vmatpush.msra.mxu0 %v1852
  %v1854 = vand.u32 %v412, 4294901760
  %1855 = vmatpush.msra.mxu0 %v1854
  %v1856 = vand.u32 %v408, 4294901760
  %1857 = vmatpush.msra.mxu0 %v1856
  %v1858 = vand.u32 %v404, 4294901760
  %1859 = vmatpush.msra.mxu0 %v1858
  %v1860 = vand.u32 %v400, 4294901760
  %1861 = vmatpush.msra.mxu0 %v1860
  %v1862 = vand.u32 %v396, 4294901760
  %1863 = vmatpush.msra.mxu0 %v1862
  %v1864 = vand.u32 %v392, 4294901760
  %1865 = vmatpush.msra.mxu0 %v1864
  %v1866 = vand.u32 %v388, 4294901760
  %1867 = vmatpush.msra.mxu0 %v1866
  %v1868 = vand.u32 %v384, 4294901760
  %1869 = vmatpush.msra.mxu0 %v1868
  %v1870 = vand.u32 %v380, 4294901760
  %1871 = vmatpush.msra.mxu0 %v1870
  %v1872 = vand.u32 %v376, 4294901760
  %1873 = vmatpush.msra.mxu0 %v1872
  %v1874 = vand.u32 %v372, 4294901760
  %1875 = vmatpush.msra.mxu0 %v1874
  %v1876 = vand.u32 %v368, 4294901760
  %1877 = vmatpush.msra.mxu0 %v1876
  %v1878 = vand.u32 %v364, 4294901760
  %1879 = vmatpush.msra.mxu0 %v1878
  %v1880 = vand.u32 %v360, 4294901760
  %1881 = vmatpush.msra.mxu0 %v1880
  %v1882 = vand.u32 %v206, 4294901760
  %v1883 = vsub.f32 %v206, %v1882
  %v1884 = vand.u32 %v1883, 4294901760
  %v1885 = vsub.f32 %v1883, %v1884
  %v1886 = vand.u32 %v1885, 4294901760
  %1887 = vmatmul.f32.gmra.mxu0 %v1886
  %v1888 = vpop.f32.mrf.mxu0
  %v1889 = vadd.f32 0.0, %v1888
  %1890 = vdwg.mxu0
  %v1891 = vand.u32 %v420, 4294901760
  %v1892 = vsub.f32 %v420, %v1891
  %v1893 = vand.u32 %v1892, 4294901760
  %v1894 = vsub.f32 %v1892, %v1893
  %v1895 = vand.u32 %v1894, 4294901760
  %1896 = vmatpush.msra.mxu0 %v1895
  %v1897 = vand.u32 %v416, 4294901760
  %v1898 = vsub.f32 %v416, %v1897
  %v1899 = vand.u32 %v1898, 4294901760
  %v1900 = vsub.f32 %v1898, %v1899
  %v1901 = vand.u32 %v1900, 4294901760
  %1902 = vmatpush.msra.mxu0 %v1901
  %v1903 = vand.u32 %v412, 4294901760
  %v1904 = vsub.f32 %v412, %v1903
  %v1905 = vand.u32 %v1904, 4294901760
  %v1906 = vsub.f32 %v1904, %v1905
  %v1907 = vand.u32 %v1906, 4294901760
  %1908 = vmatpush.msra.mxu0 %v1907
  %v1909 = vand.u32 %v408, 4294901760
  %v1910 = vsub.f32 %v408, %v1909
  %v1911 = vand.u32 %v1910, 4294901760
  %v1912 = vsub.f32 %v1910, %v1911
  %v1913 = vand.u32 %v1912, 4294901760
  %1914 = vmatpush.msra.mxu0 %v1913
  %v1915 = vand.u32 %v404, 4294901760
  %v1916 = vsub.f32 %v404, %v1915
  %v1917 = vand.u32 %v1916, 4294901760
  %v1918 = vsub.f32 %v1916, %v1917
  %v1919 = vand.u32 %v1918, 4294901760
  %1920 = vmatpush.msra.mxu0 %v1919
  %v1921 = vand.u32 %v400, 4294901760
  %v1922 = vsub.f32 %v400, %v1921
  %v1923 = vand.u32 %v1922, 4294901760
  %v1924 = vsub.f32 %v1922, %v1923
  %v1925 = vand.u32 %v1924, 4294901760
  %1926 = vmatpush.msra.mxu0 %v1925
  %v1927 = vand.u32 %v396, 4294901760
  %v1928 = vsub.f32 %v396, %v1927
  %v1929 = vand.u32 %v1928, 4294901760
  %v1930 = vsub.f32 %v1928, %v1929
  %v1931 = vand.u32 %v1930, 4294901760
  %1932 = vmatpush.msra.mxu0 %v1931
  %v1933 = vand.u32 %v392, 4294901760
  %v1934 = vsub.f32 %v392, %v1933
  %v1935 = vand.u32 %v1934, 4294901760
  %v1936 = vsub.f32 %v1934, %v1935
  %v1937 = vand.u32 %v1936, 4294901760
  %1938 = vmatpush.msra.mxu0 %v1937
  %v1939 = vand.u32 %v388, 4294901760
  %v1940 = vsub.f32 %v388, %v1939
  %v1941 = vand.u32 %v1940, 4294901760
  %v1942 = vsub.f32 %v1940, %v1941
  %v1943 = vand.u32 %v1942, 4294901760
  %1944 = vmatpush.msra.mxu0 %v1943
  %v1945 = vand.u32 %v384, 4294901760
  %v1946 = vsub.f32 %v384, %v1945
  %v1947 = vand.u32 %v1946, 4294901760
  %v1948 = vsub.f32 %v1946, %v1947
  %v1949 = vand.u32 %v1948, 4294901760
  %1950 = vmatpush.msra.mxu0 %v1949
  %v1951 = vand.u32 %v380, 4294901760
  %v1952 = vsub.f32 %v380, %v1951
  %v1953 = vand.u32 %v1952, 4294901760
  %v1954 = vsub.f32 %v1952, %v1953
  %v1955 = vand.u32 %v1954, 4294901760
  %1956 = vmatpush.msra.mxu0 %v1955
  %v1957 = vand.u32 %v376, 4294901760
  %v1958 = vsub.f32 %v376, %v1957
  %v1959 = vand.u32 %v1958, 4294901760
  %v1960 = vsub.f32 %v1958, %v1959
  %v1961 = vand.u32 %v1960, 4294901760
  %1962 = vmatpush.msra.mxu0 %v1961
  %v1963 = vand.u32 %v372, 4294901760
  %v1964 = vsub.f32 %v372, %v1963
  %v1965 = vand.u32 %v1964, 4294901760
  %v1966 = vsub.f32 %v1964, %v1965
  %v1967 = vand.u32 %v1966, 4294901760
  %1968 = vmatpush.msra.mxu0 %v1967
  %v1969 = vand.u32 %v368, 4294901760
  %v1970 = vsub.f32 %v368, %v1969
  %v1971 = vand.u32 %v1970, 4294901760
  %v1972 = vsub.f32 %v1970, %v1971
  %v1973 = vand.u32 %v1972, 4294901760
  %1974 = vmatpush.msra.mxu0 %v1973
  %v1975 = vand.u32 %v364, 4294901760
  %v1976 = vsub.f32 %v364, %v1975
  %v1977 = vand.u32 %v1976, 4294901760
  %v1978 = vsub.f32 %v1976, %v1977
  %v1979 = vand.u32 %v1978, 4294901760
  %1980 = vmatpush.msra.mxu0 %v1979
  %v1981 = vand.u32 %v360, 4294901760
  %v1982 = vsub.f32 %v360, %v1981
  %v1983 = vand.u32 %v1982, 4294901760
  %v1984 = vsub.f32 %v1982, %v1983
  %v1985 = vand.u32 %v1984, 4294901760
  %1986 = vmatpush.msra.mxu0 %v1985
  %v1987 = vand.u32 %v206, 4294901760
  %1988 = vmatmul.f32.gmra.mxu0 %v1987
  %v1989 = vpop.f32.mrf.mxu0
  %v1990 = vadd.f32 %v1889, %v1989
  %1991 = vdwg.mxu0
  %v1992 = vand.u32 %v420, 4294901760
  %v1993 = vsub.f32 %v420, %v1992
  %1994 = vmatpush.msra.mxu0 %v1993
  %v1995 = vand.u32 %v416, 4294901760
  %v1996 = vsub.f32 %v416, %v1995
  %1997 = vmatpush.msra.mxu0 %v1996
  %v1998 = vand.u32 %v412, 4294901760
  %v1999 = vsub.f32 %v412, %v1998
  %2000 = vmatpush.msra.mxu0 %v1999
  %v2001 = vand.u32 %v408, 4294901760
  %v2002 = vsub.f32 %v408, %v2001
  %2003 = vmatpush.msra.mxu0 %v2002
  %v2004 = vand.u32 %v404, 4294901760
  %v2005 = vsub.f32 %v404, %v2004
  %2006 = vmatpush.msra.mxu0 %v2005
  %v2007 = vand.u32 %v400, 4294901760
  %v2008 = vsub.f32 %v400, %v2007
  %2009 = vmatpush.msra.mxu0 %v2008
  %v2010 = vand.u32 %v396, 4294901760
  %v2011 = vsub.f32 %v396, %v2010
  %2012 = vmatpush.msra.mxu0 %v2011
  %v2013 = vand.u32 %v392, 4294901760
  %v2014 = vsub.f32 %v392, %v2013
  %2015 = vmatpush.msra.mxu0 %v2014
  %v2016 = vand.u32 %v388, 4294901760
  %v2017 = vsub.f32 %v388, %v2016
  %2018 = vmatpush.msra.mxu0 %v2017
  %v2019 = vand.u32 %v384, 4294901760
  %v2020 = vsub.f32 %v384, %v2019
  %2021 = vmatpush.msra.mxu0 %v2020
  %v2022 = vand.u32 %v380, 4294901760
  %v2023 = vsub.f32 %v380, %v2022
  %2024 = vmatpush.msra.mxu0 %v2023
  %v2025 = vand.u32 %v376, 4294901760
  %v2026 = vsub.f32 %v376, %v2025
  %2027 = vmatpush.msra.mxu0 %v2026
  %v2028 = vand.u32 %v372, 4294901760
  %v2029 = vsub.f32 %v372, %v2028
  %2030 = vmatpush.msra.mxu0 %v2029
  %v2031 = vand.u32 %v368, 4294901760
  %v2032 = vsub.f32 %v368, %v2031
  %2033 = vmatpush.msra.mxu0 %v2032
  %v2034 = vand.u32 %v364, 4294901760
  %v2035 = vsub.f32 %v364, %v2034
  %2036 = vmatpush.msra.mxu0 %v2035
  %v2037 = vand.u32 %v360, 4294901760
  %v2038 = vsub.f32 %v360, %v2037
  %2039 = vmatpush.msra.mxu0 %v2038
  %v2040 = vand.u32 %v206, 4294901760
  %v2041 = vsub.f32 %v206, %v2040
  %2042 = vmatmul.f32.gmra.mxu0 %v2041
  %v2043 = vpop.f32.mrf.mxu0
  %v2044 = vadd.f32 %v1990, %v2043
  %2045 = vdwg.mxu0
  %v2046 = vand.u32 %v420, 4294901760
  %2047 = vmatpush.msra.mxu0 %v2046
  %v2048 = vand.u32 %v416, 4294901760
  %2049 = vmatpush.msra.mxu0 %v2048
  %v2050 = vand.u32 %v412, 4294901760
  %2051 = vmatpush.msra.mxu0 %v2050
  %v2052 = vand.u32 %v408, 4294901760
  %2053 = vmatpush.msra.mxu0 %v2052
  %v2054 = vand.u32 %v404, 4294901760
  %2055 = vmatpush.msra.mxu0 %v2054
  %v2056 = vand.u32 %v400, 4294901760
  %2057 = vmatpush.msra.mxu0 %v2056
  %v2058 = vand.u32 %v396, 4294901760
  %2059 = vmatpush.msra.mxu0 %v2058
  %v2060 = vand.u32 %v392, 4294901760
  %2061 = vmatpush.msra.mxu0 %v2060
  %v2062 = vand.u32 %v388, 4294901760
  %2063 = vmatpush.msra.mxu0 %v2062
  %v2064 = vand.u32 %v384, 4294901760
  %2065 = vmatpush.msra.mxu0 %v2064
  %v2066 = vand.u32 %v380, 4294901760
  %2067 = vmatpush.msra.mxu0 %v2066
  %v2068 = vand.u32 %v376, 4294901760
  %2069 = vmatpush.msra.mxu0 %v2068
  %v2070 = vand.u32 %v372, 4294901760
  %2071 = vmatpush.msra.mxu0 %v2070
  %v2072 = vand.u32 %v368, 4294901760
  %2073 = vmatpush.msra.mxu0 %v2072
  %v2074 = vand.u32 %v364, 4294901760
  %2075 = vmatpush.msra.mxu0 %v2074
  %v2076 = vand.u32 %v360, 4294901760
  %2077 = vmatpush.msra.mxu0 %v2076
  %v2078 = vand.u32 %v206, 4294901760
  %v2079 = vsub.f32 %v206, %v2078
  %v2080 = vand.u32 %v2079, 4294901760
  %2081 = vmatmul.f32.gmra.mxu0 %v2080
  %v2082 = vpop.f32.mrf.mxu0
  %v2083 = vadd.f32 %v2044, %v2082
  %2084 = vdwg.mxu0
  %v2085 = vand.u32 %v420, 4294901760
  %v2086 = vsub.f32 %v420, %v2085
  %v2087 = vand.u32 %v2086, 4294901760
  %2088 = vmatpush.msra.mxu0 %v2087
  %v2089 = vand.u32 %v416, 4294901760
  %v2090 = vsub.f32 %v416, %v2089
  %v2091 = vand.u32 %v2090, 4294901760
  %2092 = vmatpush.msra.mxu0 %v2091
  %v2093 = vand.u32 %v412, 4294901760
  %v2094 = vsub.f32 %v412, %v2093
  %v2095 = vand.u32 %v2094, 4294901760
  %2096 = vmatpush.msra.mxu0 %v2095
  %v2097 = vand.u32 %v408, 4294901760
  %v2098 = vsub.f32 %v408, %v2097
  %v2099 = vand.u32 %v2098, 4294901760
  %2100 = vmatpush.msra.mxu0 %v2099
  %v2101 = vand.u32 %v404, 4294901760
  %v2102 = vsub.f32 %v404, %v2101
  %v2103 = vand.u32 %v2102, 4294901760
  %2104 = vmatpush.msra.mxu0 %v2103
  %v2105 = vand.u32 %v400, 4294901760
  %v2106 = vsub.f32 %v400, %v2105
  %v2107 = vand.u32 %v2106, 4294901760
  %2108 = vmatpush.msra.mxu0 %v2107
  %v2109 = vand.u32 %v396, 4294901760
  %v2110 = vsub.f32 %v396, %v2109
  %v2111 = vand.u32 %v2110, 4294901760
  %2112 = vmatpush.msra.mxu0 %v2111
  %v2113 = vand.u32 %v392, 4294901760
  %v2114 = vsub.f32 %v392, %v2113
  %v2115 = vand.u32 %v2114, 4294901760
  %2116 = vmatpush.msra.mxu0 %v2115
  %v2117 = vand.u32 %v388, 4294901760
  %v2118 = vsub.f32 %v388, %v2117
  %v2119 = vand.u32 %v2118, 4294901760
  %2120 = vmatpush.msra.mxu0 %v2119
  %v2121 = vand.u32 %v384, 4294901760
  %v2122 = vsub.f32 %v384, %v2121
  %v2123 = vand.u32 %v2122, 4294901760
  %2124 = vmatpush.msra.mxu0 %v2123
  %v2125 = vand.u32 %v380, 4294901760
  %v2126 = vsub.f32 %v380, %v2125
  %v2127 = vand.u32 %v2126, 4294901760
  %2128 = vmatpush.msra.mxu0 %v2127
  %v2129 = vand.u32 %v376, 4294901760
  %v2130 = vsub.f32 %v376, %v2129
  %v2131 = vand.u32 %v2130, 4294901760
  %2132 = vmatpush.msra.mxu0 %v2131
  %v2133 = vand.u32 %v372, 4294901760
  %v2134 = vsub.f32 %v372, %v2133
  %v2135 = vand.u32 %v2134, 4294901760
  %2136 = vmatpush.msra.mxu0 %v2135
  %v2137 = vand.u32 %v368, 4294901760
  %v2138 = vsub.f32 %v368, %v2137
  %v2139 = vand.u32 %v2138, 4294901760
  %2140 = vmatpush.msra.mxu0 %v2139
  %v2141 = vand.u32 %v364, 4294901760
  %v2142 = vsub.f32 %v364, %v2141
  %v2143 = vand.u32 %v2142, 4294901760
  %2144 = vmatpush.msra.mxu0 %v2143
  %v2145 = vand.u32 %v360, 4294901760
  %v2146 = vsub.f32 %v360, %v2145
  %v2147 = vand.u32 %v2146, 4294901760
  %2148 = vmatpush.msra.mxu0 %v2147
  %v2149 = vand.u32 %v206, 4294901760
  %2150 = vmatmul.f32.gmra.mxu0 %v2149
  %v2151 = vpop.f32.mrf.mxu0
  %v2152 = vadd.f32 %v2083, %v2151
  %2153 = vdwg.mxu0
  %v2154 = vand.u32 %v420, 4294901760
  %2155 = vmatpush.msra.mxu0 %v2154
  %v2156 = vand.u32 %v416, 4294901760
  %2157 = vmatpush.msra.mxu0 %v2156
  %v2158 = vand.u32 %v412, 4294901760
  %2159 = vmatpush.msra.mxu0 %v2158
  %v2160 = vand.u32 %v408, 4294901760
  %2161 = vmatpush.msra.mxu0 %v2160
  %v2162 = vand.u32 %v404, 4294901760
  %2163 = vmatpush.msra.mxu0 %v2162
  %v2164 = vand.u32 %v400, 4294901760
  %2165 = vmatpush.msra.mxu0 %v2164
  %v2166 = vand.u32 %v396, 4294901760
  %2167 = vmatpush.msra.mxu0 %v2166
  %v2168 = vand.u32 %v392, 4294901760
  %2169 = vmatpush.msra.mxu0 %v2168
  %v2170 = vand.u32 %v388, 4294901760
  %2171 = vmatpush.msra.mxu0 %v2170
  %v2172 = vand.u32 %v384, 4294901760
  %2173 = vmatpush.msra.mxu0 %v2172
  %v2174 = vand.u32 %v380, 4294901760
  %2175 = vmatpush.msra.mxu0 %v2174
  %v2176 = vand.u32 %v376, 4294901760
  %2177 = vmatpush.msra.mxu0 %v2176
  %v2178 = vand.u32 %v372, 4294901760
  %2179 = vmatpush.msra.mxu0 %v2178
  %v2180 = vand.u32 %v368, 4294901760
  %2181 = vmatpush.msra.mxu0 %v2180
  %v2182 = vand.u32 %v364, 4294901760
  %2183 = vmatpush.msra.mxu0 %v2182
  %v2184 = vand.u32 %v360, 4294901760
  %2185 = vmatpush.msra.mxu0 %v2184
  %v2186 = vand.u32 %v206, 4294901760
  %2187 = vmatmul.f32.gmra.mxu0 %v2186
  %v2188 = vpop.f32.mrf.mxu0
  %v2189 = vadd.f32 %v2152, %v2188
  %2190 = vdwg.mxu0
  %v2191 = vand.u32 %v484, 4294901760
  %2192 = vmatpush.msra.mxu0 %v2191
  %v2193 = vand.u32 %v480, 4294901760
  %2194 = vmatpush.msra.mxu0 %v2193
  %v2195 = vand.u32 %v476, 4294901760
  %2196 = vmatpush.msra.mxu0 %v2195
  %v2197 = vand.u32 %v472, 4294901760
  %2198 = vmatpush.msra.mxu0 %v2197
  %v2199 = vand.u32 %v468, 4294901760
  %2200 = vmatpush.msra.mxu0 %v2199
  %v2201 = vand.u32 %v464, 4294901760
  %2202 = vmatpush.msra.mxu0 %v2201
  %v2203 = vand.u32 %v460, 4294901760
  %2204 = vmatpush.msra.mxu0 %v2203
  %v2205 = vand.u32 %v456, 4294901760
  %2206 = vmatpush.msra.mxu0 %v2205
  %v2207 = vand.u32 %v452, 4294901760
  %2208 = vmatpush.msra.mxu0 %v2207
  %v2209 = vand.u32 %v448, 4294901760
  %2210 = vmatpush.msra.mxu0 %v2209
  %v2211 = vand.u32 %v444, 4294901760
  %2212 = vmatpush.msra.mxu0 %v2211
  %v2213 = vand.u32 %v440, 4294901760
  %2214 = vmatpush.msra.mxu0 %v2213
  %v2215 = vand.u32 %v436, 4294901760
  %2216 = vmatpush.msra.mxu0 %v2215
  %v2217 = vand.u32 %v432, 4294901760
  %2218 = vmatpush.msra.mxu0 %v2217
  %v2219 = vand.u32 %v428, 4294901760
  %2220 = vmatpush.msra.mxu0 %v2219
  %v2221 = vand.u32 %v424, 4294901760
  %2222 = vmatpush.msra.mxu0 %v2221
  %v2223 = vand.u32 %v352, 4294901760
  %v2224 = vsub.f32 %v352, %v2223
  %v2225 = vand.u32 %v2224, 4294901760
  %v2226 = vsub.f32 %v2224, %v2225
  %v2227 = vand.u32 %v2226, 4294901760
  %2228 = vmatmul.f32.gmra.mxu0 %v2227
  %v2229 = vpop.f32.mrf.mxu0
  %v2230 = vadd.f32 %v2189, %v2229
  %2231 = vdwg.mxu0
  %v2232 = vand.u32 %v484, 4294901760
  %v2233 = vsub.f32 %v484, %v2232
  %v2234 = vand.u32 %v2233, 4294901760
  %v2235 = vsub.f32 %v2233, %v2234
  %v2236 = vand.u32 %v2235, 4294901760
  %2237 = vmatpush.msra.mxu0 %v2236
  %v2238 = vand.u32 %v480, 4294901760
  %v2239 = vsub.f32 %v480, %v2238
  %v2240 = vand.u32 %v2239, 4294901760
  %v2241 = vsub.f32 %v2239, %v2240
  %v2242 = vand.u32 %v2241, 4294901760
  %2243 = vmatpush.msra.mxu0 %v2242
  %v2244 = vand.u32 %v476, 4294901760
  %v2245 = vsub.f32 %v476, %v2244
  %v2246 = vand.u32 %v2245, 4294901760
  %v2247 = vsub.f32 %v2245, %v2246
  %v2248 = vand.u32 %v2247, 4294901760
  %2249 = vmatpush.msra.mxu0 %v2248
  %v2250 = vand.u32 %v472, 4294901760
  %v2251 = vsub.f32 %v472, %v2250
  %v2252 = vand.u32 %v2251, 4294901760
  %v2253 = vsub.f32 %v2251, %v2252
  %v2254 = vand.u32 %v2253, 4294901760
  %2255 = vmatpush.msra.mxu0 %v2254
  %v2256 = vand.u32 %v468, 4294901760
  %v2257 = vsub.f32 %v468, %v2256
  %v2258 = vand.u32 %v2257, 4294901760
  %v2259 = vsub.f32 %v2257, %v2258
  %v2260 = vand.u32 %v2259, 4294901760
  %2261 = vmatpush.msra.mxu0 %v2260
  %v2262 = vand.u32 %v464, 4294901760
  %v2263 = vsub.f32 %v464, %v2262
  %v2264 = vand.u32 %v2263, 4294901760
  %v2265 = vsub.f32 %v2263, %v2264
  %v2266 = vand.u32 %v2265, 4294901760
  %2267 = vmatpush.msra.mxu0 %v2266
  %v2268 = vand.u32 %v460, 4294901760
  %v2269 = vsub.f32 %v460, %v2268
  %v2270 = vand.u32 %v2269, 4294901760
  %v2271 = vsub.f32 %v2269, %v2270
  %v2272 = vand.u32 %v2271, 4294901760
  %2273 = vmatpush.msra.mxu0 %v2272
  %v2274 = vand.u32 %v456, 4294901760
  %v2275 = vsub.f32 %v456, %v2274
  %v2276 = vand.u32 %v2275, 4294901760
  %v2277 = vsub.f32 %v2275, %v2276
  %v2278 = vand.u32 %v2277, 4294901760
  %2279 = vmatpush.msra.mxu0 %v2278
  %v2280 = vand.u32 %v452, 4294901760
  %v2281 = vsub.f32 %v452, %v2280
  %v2282 = vand.u32 %v2281, 4294901760
  %v2283 = vsub.f32 %v2281, %v2282
  %v2284 = vand.u32 %v2283, 4294901760
  %2285 = vmatpush.msra.mxu0 %v2284
  %v2286 = vand.u32 %v448, 4294901760
  %v2287 = vsub.f32 %v448, %v2286
  %v2288 = vand.u32 %v2287, 4294901760
  %v2289 = vsub.f32 %v2287, %v2288
  %v2290 = vand.u32 %v2289, 4294901760
  %2291 = vmatpush.msra.mxu0 %v2290
  %v2292 = vand.u32 %v444, 4294901760
  %v2293 = vsub.f32 %v444, %v2292
  %v2294 = vand.u32 %v2293, 4294901760
  %v2295 = vsub.f32 %v2293, %v2294
  %v2296 = vand.u32 %v2295, 4294901760
  %2297 = vmatpush.msra.mxu0 %v2296
  %v2298 = vand.u32 %v440, 4294901760
  %v2299 = vsub.f32 %v440, %v2298
  %v2300 = vand.u32 %v2299, 4294901760
  %v2301 = vsub.f32 %v2299, %v2300
  %v2302 = vand.u32 %v2301, 4294901760
  %2303 = vmatpush.msra.mxu0 %v2302
  %v2304 = vand.u32 %v436, 4294901760
  %v2305 = vsub.f32 %v436, %v2304
  %v2306 = vand.u32 %v2305, 4294901760
  %v2307 = vsub.f32 %v2305, %v2306
  %v2308 = vand.u32 %v2307, 4294901760
  %2309 = vmatpush.msra.mxu0 %v2308
  %v2310 = vand.u32 %v432, 4294901760
  %v2311 = vsub.f32 %v432, %v2310
  %v2312 = vand.u32 %v2311, 4294901760
  %v2313 = vsub.f32 %v2311, %v2312
  %v2314 = vand.u32 %v2313, 4294901760
  %2315 = vmatpush.msra.mxu0 %v2314
  %v2316 = vand.u32 %v428, 4294901760
  %v2317 = vsub.f32 %v428, %v2316
  %v2318 = vand.u32 %v2317, 4294901760
  %v2319 = vsub.f32 %v2317, %v2318
  %v2320 = vand.u32 %v2319, 4294901760
  %2321 = vmatpush.msra.mxu0 %v2320
  %v2322 = vand.u32 %v424, 4294901760
  %v2323 = vsub.f32 %v424, %v2322
  %v2324 = vand.u32 %v2323, 4294901760
  %v2325 = vsub.f32 %v2323, %v2324
  %v2326 = vand.u32 %v2325, 4294901760
  %2327 = vmatpush.msra.mxu0 %v2326
  %v2328 = vand.u32 %v352, 4294901760
  %2329 = vmatmul.f32.gmra.mxu0 %v2328
  %v2330 = vpop.f32.mrf.mxu0
  %v2331 = vadd.f32 %v2230, %v2330
  %2332 = vdwg.mxu0
  %v2333 = vand.u32 %v484, 4294901760
  %v2334 = vsub.f32 %v484, %v2333
  %2335 = vmatpush.msra.mxu0 %v2334
  %v2336 = vand.u32 %v480, 4294901760
  %v2337 = vsub.f32 %v480, %v2336
  %2338 = vmatpush.msra.mxu0 %v2337
  %v2339 = vand.u32 %v476, 4294901760
  %v2340 = vsub.f32 %v476, %v2339
  %2341 = vmatpush.msra.mxu0 %v2340
  %v2342 = vand.u32 %v472, 4294901760
  %v2343 = vsub.f32 %v472, %v2342
  %2344 = vmatpush.msra.mxu0 %v2343
  %v2345 = vand.u32 %v468, 4294901760
  %v2346 = vsub.f32 %v468, %v2345
  %2347 = vmatpush.msra.mxu0 %v2346
  %v2348 = vand.u32 %v464, 4294901760
  %v2349 = vsub.f32 %v464, %v2348
  %2350 = vmatpush.msra.mxu0 %v2349
  %v2351 = vand.u32 %v460, 4294901760
  %v2352 = vsub.f32 %v460, %v2351
  %2353 = vmatpush.msra.mxu0 %v2352
  %v2354 = vand.u32 %v456, 4294901760
  %v2355 = vsub.f32 %v456, %v2354
  %2356 = vmatpush.msra.mxu0 %v2355
  %v2357 = vand.u32 %v452, 4294901760
  %v2358 = vsub.f32 %v452, %v2357
  %2359 = vmatpush.msra.mxu0 %v2358
  %v2360 = vand.u32 %v448, 4294901760
  %v2361 = vsub.f32 %v448, %v2360
  %2362 = vmatpush.msra.mxu0 %v2361
  %v2363 = vand.u32 %v444, 4294901760
  %v2364 = vsub.f32 %v444, %v2363
  %2365 = vmatpush.msra.mxu0 %v2364
  %v2366 = vand.u32 %v440, 4294901760
  %v2367 = vsub.f32 %v440, %v2366
  %2368 = vmatpush.msra.mxu0 %v2367
  %v2369 = vand.u32 %v436, 4294901760
  %v2370 = vsub.f32 %v436, %v2369
  %2371 = vmatpush.msra.mxu0 %v2370
  %v2372 = vand.u32 %v432, 4294901760
  %v2373 = vsub.f32 %v432, %v2372
  %2374 = vmatpush.msra.mxu0 %v2373
  %v2375 = vand.u32 %v428, 4294901760
  %v2376 = vsub.f32 %v428, %v2375
  %2377 = vmatpush.msra.mxu0 %v2376
  %v2378 = vand.u32 %v424, 4294901760
  %v2379 = vsub.f32 %v424, %v2378
  %2380 = vmatpush.msra.mxu0 %v2379
  %v2381 = vand.u32 %v352, 4294901760
  %v2382 = vsub.f32 %v352, %v2381
  %2383 = vmatmul.f32.gmra.mxu0 %v2382
  %v2384 = vpop.f32.mrf.mxu0
  %v2385 = vadd.f32 %v2331, %v2384
  %2386 = vdwg.mxu0
  %v2387 = vand.u32 %v484, 4294901760
  %2388 = vmatpush.msra.mxu0 %v2387
  %v2389 = vand.u32 %v480, 4294901760
  %2390 = vmatpush.msra.mxu0 %v2389
  %v2391 = vand.u32 %v476, 4294901760
  %2392 = vmatpush.msra.mxu0 %v2391
  %v2393 = vand.u32 %v472, 4294901760
  %2394 = vmatpush.msra.mxu0 %v2393
  %v2395 = vand.u32 %v468, 4294901760
  %2396 = vmatpush.msra.mxu0 %v2395
  %v2397 = vand.u32 %v464, 4294901760
  %2398 = vmatpush.msra.mxu0 %v2397
  %v2399 = vand.u32 %v460, 4294901760
  %2400 = vmatpush.msra.mxu0 %v2399
  %v2401 = vand.u32 %v456, 4294901760
  %2402 = vmatpush.msra.mxu0 %v2401
  %v2403 = vand.u32 %v452, 4294901760
  %2404 = vmatpush.msra.mxu0 %v2403
  %v2405 = vand.u32 %v448, 4294901760
  %2406 = vmatpush.msra.mxu0 %v2405
  %v2407 = vand.u32 %v444, 4294901760
  %2408 = vmatpush.msra.mxu0 %v2407
  %v2409 = vand.u32 %v440, 4294901760
  %2410 = vmatpush.msra.mxu0 %v2409
  %v2411 = vand.u32 %v436, 4294901760
  %2412 = vmatpush.msra.mxu0 %v2411
  %v2413 = vand.u32 %v432, 4294901760
  %2414 = vmatpush.msra.mxu0 %v2413
  %v2415 = vand.u32 %v428, 4294901760
  %2416 = vmatpush.msra.mxu0 %v2415
  %v2417 = vand.u32 %v424, 4294901760
  %2418 = vmatpush.msra.mxu0 %v2417
  %v2419 = vand.u32 %v352, 4294901760
  %v2420 = vsub.f32 %v352, %v2419
  %v2421 = vand.u32 %v2420, 4294901760
  %2422 = vmatmul.f32.gmra.mxu0 %v2421
  %v2423 = vpop.f32.mrf.mxu0
  %v2424 = vadd.f32 %v2385, %v2423
  %2425 = vdwg.mxu0
  %v2426 = vand.u32 %v484, 4294901760
  %v2427 = vsub.f32 %v484, %v2426
  %v2428 = vand.u32 %v2427, 4294901760
  %2429 = vmatpush.msra.mxu0 %v2428
  %v2430 = vand.u32 %v480, 4294901760
  %v2431 = vsub.f32 %v480, %v2430
  %v2432 = vand.u32 %v2431, 4294901760
  %2433 = vmatpush.msra.mxu0 %v2432
  %v2434 = vand.u32 %v476, 4294901760
  %v2435 = vsub.f32 %v476, %v2434
  %v2436 = vand.u32 %v2435, 4294901760
  %2437 = vmatpush.msra.mxu0 %v2436
  %v2438 = vand.u32 %v472, 4294901760
  %v2439 = vsub.f32 %v472, %v2438
  %v2440 = vand.u32 %v2439, 4294901760
  %2441 = vmatpush.msra.mxu0 %v2440
  %v2442 = vand.u32 %v468, 4294901760
  %v2443 = vsub.f32 %v468, %v2442
  %v2444 = vand.u32 %v2443, 4294901760
  %2445 = vmatpush.msra.mxu0 %v2444
  %v2446 = vand.u32 %v464, 4294901760
  %v2447 = vsub.f32 %v464, %v2446
  %v2448 = vand.u32 %v2447, 4294901760
  %2449 = vmatpush.msra.mxu0 %v2448
  %v2450 = vand.u32 %v460, 4294901760
  %v2451 = vsub.f32 %v460, %v2450
  %v2452 = vand.u32 %v2451, 4294901760
  %2453 = vmatpush.msra.mxu0 %v2452
  %v2454 = vand.u32 %v456, 4294901760
  %v2455 = vsub.f32 %v456, %v2454
  %v2456 = vand.u32 %v2455, 4294901760
  %2457 = vmatpush.msra.mxu0 %v2456
  %v2458 = vand.u32 %v452, 4294901760
  %v2459 = vsub.f32 %v452, %v2458
  %v2460 = vand.u32 %v2459, 4294901760
  %2461 = vmatpush.msra.mxu0 %v2460
  %v2462 = vand.u32 %v448, 4294901760
  %v2463 = vsub.f32 %v448, %v2462
  %v2464 = vand.u32 %v2463, 4294901760
  %2465 = vmatpush.msra.mxu0 %v2464
  %v2466 = vand.u32 %v444, 4294901760
  %v2467 = vsub.f32 %v444, %v2466
  %v2468 = vand.u32 %v2467, 4294901760
  %2469 = vmatpush.msra.mxu0 %v2468
  %v2470 = vand.u32 %v440, 4294901760
  %v2471 = vsub.f32 %v440, %v2470
  %v2472 = vand.u32 %v2471, 4294901760
  %2473 = vmatpush.msra.mxu0 %v2472
  %v2474 = vand.u32 %v436, 4294901760
  %v2475 = vsub.f32 %v436, %v2474
  %v2476 = vand.u32 %v2475, 4294901760
  %2477 = vmatpush.msra.mxu0 %v2476
  %v2478 = vand.u32 %v432, 4294901760
  %v2479 = vsub.f32 %v432, %v2478
  %v2480 = vand.u32 %v2479, 4294901760
  %2481 = vmatpush.msra.mxu0 %v2480
  %v2482 = vand.u32 %v428, 4294901760
  %v2483 = vsub.f32 %v428, %v2482
  %v2484 = vand.u32 %v2483, 4294901760
  %2485 = vmatpush.msra.mxu0 %v2484
  %v2486 = vand.u32 %v424, 4294901760
  %v2487 = vsub.f32 %v424, %v2486
  %v2488 = vand.u32 %v2487, 4294901760
  %2489 = vmatpush.msra.mxu0 %v2488
  %v2490 = vand.u32 %v352, 4294901760
  %2491 = vmatmul.f32.gmra.mxu0 %v2490
  %v2492 = vpop.f32.mrf.mxu0
  %v2493 = vadd.f32 %v2424, %v2492
  %2494 = vdwg.mxu0
  %v2495 = vand.u32 %v484, 4294901760
  %2496 = vmatpush.msra.mxu0 %v2495
  %v2497 = vand.u32 %v480, 4294901760
  %2498 = vmatpush.msra.mxu0 %v2497
  %v2499 = vand.u32 %v476, 4294901760
  %2500 = vmatpush.msra.mxu0 %v2499
  %v2501 = vand.u32 %v472, 4294901760
  %2502 = vmatpush.msra.mxu0 %v2501
  %v2503 = vand.u32 %v468, 4294901760
  %2504 = vmatpush.msra.mxu0 %v2503
  %v2505 = vand.u32 %v464, 4294901760
  %2506 = vmatpush.msra.mxu0 %v2505
  %v2507 = vand.u32 %v460, 4294901760
  %2508 = vmatpush.msra.mxu0 %v2507
  %v2509 = vand.u32 %v456, 4294901760
  %2510 = vmatpush.msra.mxu0 %v2509
  %v2511 = vand.u32 %v452, 4294901760
  %2512 = vmatpush.msra.mxu0 %v2511
  %v2513 = vand.u32 %v448, 4294901760
  %2514 = vmatpush.msra.mxu0 %v2513
  %v2515 = vand.u32 %v444, 4294901760
  %2516 = vmatpush.msra.mxu0 %v2515
  %v2517 = vand.u32 %v440, 4294901760
  %2518 = vmatpush.msra.mxu0 %v2517
  %v2519 = vand.u32 %v436, 4294901760
  %2520 = vmatpush.msra.mxu0 %v2519
  %v2521 = vand.u32 %v432, 4294901760
  %2522 = vmatpush.msra.mxu0 %v2521
  %v2523 = vand.u32 %v428, 4294901760
  %2524 = vmatpush.msra.mxu0 %v2523
  %v2525 = vand.u32 %v424, 4294901760
  %2526 = vmatpush.msra.mxu0 %v2525
  %v2527 = vand.u32 %v352, 4294901760
  %2528 = vmatmul.f32.gmra.mxu0 %v2527
  %v2529 = vpop.f32.mrf.mxu0
  %v2530 = vadd.f32 %v2493, %v2529
  %2531 = vdwg.mxu0
  %v2532 = vand.u32 %v421, 4294901760
  %2533 = vmatpush.msra.mxu0 %v2532
  %v2534 = vand.u32 %v417, 4294901760
  %2535 = vmatpush.msra.mxu0 %v2534
  %v2536 = vand.u32 %v413, 4294901760
  %2537 = vmatpush.msra.mxu0 %v2536
  %v2538 = vand.u32 %v409, 4294901760
  %2539 = vmatpush.msra.mxu0 %v2538
  %v2540 = vand.u32 %v405, 4294901760
  %2541 = vmatpush.msra.mxu0 %v2540
  %v2542 = vand.u32 %v401, 4294901760
  %2543 = vmatpush.msra.mxu0 %v2542
  %v2544 = vand.u32 %v397, 4294901760
  %2545 = vmatpush.msra.mxu0 %v2544
  %v2546 = vand.u32 %v393, 4294901760
  %2547 = vmatpush.msra.mxu0 %v2546
  %v2548 = vand.u32 %v389, 4294901760
  %2549 = vmatpush.msra.mxu0 %v2548
  %v2550 = vand.u32 %v385, 4294901760
  %2551 = vmatpush.msra.mxu0 %v2550
  %v2552 = vand.u32 %v381, 4294901760
  %2553 = vmatpush.msra.mxu0 %v2552
  %v2554 = vand.u32 %v377, 4294901760
  %2555 = vmatpush.msra.mxu0 %v2554
  %v2556 = vand.u32 %v373, 4294901760
  %2557 = vmatpush.msra.mxu0 %v2556
  %v2558 = vand.u32 %v369, 4294901760
  %2559 = vmatpush.msra.mxu0 %v2558
  %v2560 = vand.u32 %v365, 4294901760
  %2561 = vmatpush.msra.mxu0 %v2560
  %v2562 = vand.u32 %v361, 4294901760
  %2563 = vmatpush.msra.mxu0 %v2562
  %v2564 = vand.u32 %v206, 4294901760
  %v2565 = vsub.f32 %v206, %v2564
  %v2566 = vand.u32 %v2565, 4294901760
  %v2567 = vsub.f32 %v2565, %v2566
  %v2568 = vand.u32 %v2567, 4294901760
  %2569 = vmatmul.f32.gmra.mxu0 %v2568
  %v2570 = vpop.f32.mrf.mxu0
  %v2571 = vadd.f32 0.0, %v2570
  %2572 = vdwg.mxu0
  %v2573 = vand.u32 %v421, 4294901760
  %v2574 = vsub.f32 %v421, %v2573
  %v2575 = vand.u32 %v2574, 4294901760
  %v2576 = vsub.f32 %v2574, %v2575
  %v2577 = vand.u32 %v2576, 4294901760
  %2578 = vmatpush.msra.mxu0 %v2577
  %v2579 = vand.u32 %v417, 4294901760
  %v2580 = vsub.f32 %v417, %v2579
  %v2581 = vand.u32 %v2580, 4294901760
  %v2582 = vsub.f32 %v2580, %v2581
  %v2583 = vand.u32 %v2582, 4294901760
  %2584 = vmatpush.msra.mxu0 %v2583
  %v2585 = vand.u32 %v413, 4294901760
  %v2586 = vsub.f32 %v413, %v2585
  %v2587 = vand.u32 %v2586, 4294901760
  %v2588 = vsub.f32 %v2586, %v2587
  %v2589 = vand.u32 %v2588, 4294901760
  %2590 = vmatpush.msra.mxu0 %v2589
  %v2591 = vand.u32 %v409, 4294901760
  %v2592 = vsub.f32 %v409, %v2591
  %v2593 = vand.u32 %v2592, 4294901760
  %v2594 = vsub.f32 %v2592, %v2593
  %v2595 = vand.u32 %v2594, 4294901760
  %2596 = vmatpush.msra.mxu0 %v2595
  %v2597 = vand.u32 %v405, 4294901760
  %v2598 = vsub.f32 %v405, %v2597
  %v2599 = vand.u32 %v2598, 4294901760
  %v2600 = vsub.f32 %v2598, %v2599
  %v2601 = vand.u32 %v2600, 4294901760
  %2602 = vmatpush.msra.mxu0 %v2601
  %v2603 = vand.u32 %v401, 4294901760
  %v2604 = vsub.f32 %v401, %v2603
  %v2605 = vand.u32 %v2604, 4294901760
  %v2606 = vsub.f32 %v2604, %v2605
  %v2607 = vand.u32 %v2606, 4294901760
  %2608 = vmatpush.msra.mxu0 %v2607
  %v2609 = vand.u32 %v397, 4294901760
  %v2610 = vsub.f32 %v397, %v2609
  %v2611 = vand.u32 %v2610, 4294901760
  %v2612 = vsub.f32 %v2610, %v2611
  %v2613 = vand.u32 %v2612, 4294901760
  %2614 = vmatpush.msra.mxu0 %v2613
  %v2615 = vand.u32 %v393, 4294901760
  %v2616 = vsub.f32 %v393, %v2615
  %v2617 = vand.u32 %v2616, 4294901760
  %v2618 = vsub.f32 %v2616, %v2617
  %v2619 = vand.u32 %v2618, 4294901760
  %2620 = vmatpush.msra.mxu0 %v2619
  %v2621 = vand.u32 %v389, 4294901760
  %v2622 = vsub.f32 %v389, %v2621
  %v2623 = vand.u32 %v2622, 4294901760
  %v2624 = vsub.f32 %v2622, %v2623
  %v2625 = vand.u32 %v2624, 4294901760
  %2626 = vmatpush.msra.mxu0 %v2625
  %v2627 = vand.u32 %v385, 4294901760
  %v2628 = vsub.f32 %v385, %v2627
  %v2629 = vand.u32 %v2628, 4294901760
  %v2630 = vsub.f32 %v2628, %v2629
  %v2631 = vand.u32 %v2630, 4294901760
  %2632 = vmatpush.msra.mxu0 %v2631
  %v2633 = vand.u32 %v381, 4294901760
  %v2634 = vsub.f32 %v381, %v2633
  %v2635 = vand.u32 %v2634, 4294901760
  %v2636 = vsub.f32 %v2634, %v2635
  %v2637 = vand.u32 %v2636, 4294901760
  %2638 = vmatpush.msra.mxu0 %v2637
  %v2639 = vand.u32 %v377, 4294901760
  %v2640 = vsub.f32 %v377, %v2639
  %v2641 = vand.u32 %v2640, 4294901760
  %v2642 = vsub.f32 %v2640, %v2641
  %v2643 = vand.u32 %v2642, 4294901760
  %2644 = vmatpush.msra.mxu0 %v2643
  %v2645 = vand.u32 %v373, 4294901760
  %v2646 = vsub.f32 %v373, %v2645
  %v2647 = vand.u32 %v2646, 4294901760
  %v2648 = vsub.f32 %v2646, %v2647
  %v2649 = vand.u32 %v2648, 4294901760
  %2650 = vmatpush.msra.mxu0 %v2649
  %v2651 = vand.u32 %v369, 4294901760
  %v2652 = vsub.f32 %v369, %v2651
  %v2653 = vand.u32 %v2652, 4294901760
  %v2654 = vsub.f32 %v2652, %v2653
  %v2655 = vand.u32 %v2654, 4294901760
  %2656 = vmatpush.msra.mxu0 %v2655
  %v2657 = vand.u32 %v365, 4294901760
  %v2658 = vsub.f32 %v365, %v2657
  %v2659 = vand.u32 %v2658, 4294901760
  %v2660 = vsub.f32 %v2658, %v2659
  %v2661 = vand.u32 %v2660, 4294901760
  %2662 = vmatpush.msra.mxu0 %v2661
  %v2663 = vand.u32 %v361, 4294901760
  %v2664 = vsub.f32 %v361, %v2663
  %v2665 = vand.u32 %v2664, 4294901760
  %v2666 = vsub.f32 %v2664, %v2665
  %v2667 = vand.u32 %v2666, 4294901760
  %2668 = vmatpush.msra.mxu0 %v2667
  %v2669 = vand.u32 %v206, 4294901760
  %2670 = vmatmul.f32.gmra.mxu0 %v2669
  %v2671 = vpop.f32.mrf.mxu0
  %v2672 = vadd.f32 %v2571, %v2671
  %2673 = vdwg.mxu0
  %v2674 = vand.u32 %v421, 4294901760
  %v2675 = vsub.f32 %v421, %v2674
  %2676 = vmatpush.msra.mxu0 %v2675
  %v2677 = vand.u32 %v417, 4294901760
  %v2678 = vsub.f32 %v417, %v2677
  %2679 = vmatpush.msra.mxu0 %v2678
  %v2680 = vand.u32 %v413, 4294901760
  %v2681 = vsub.f32 %v413, %v2680
  %2682 = vmatpush.msra.mxu0 %v2681
  %v2683 = vand.u32 %v409, 4294901760
  %v2684 = vsub.f32 %v409, %v2683
  %2685 = vmatpush.msra.mxu0 %v2684
  %v2686 = vand.u32 %v405, 4294901760
  %v2687 = vsub.f32 %v405, %v2686
  %2688 = vmatpush.msra.mxu0 %v2687
  %v2689 = vand.u32 %v401, 4294901760
  %v2690 = vsub.f32 %v401, %v2689
  %2691 = vmatpush.msra.mxu0 %v2690
  %v2692 = vand.u32 %v397, 4294901760
  %v2693 = vsub.f32 %v397, %v2692
  %2694 = vmatpush.msra.mxu0 %v2693
  %v2695 = vand.u32 %v393, 4294901760
  %v2696 = vsub.f32 %v393, %v2695
  %2697 = vmatpush.msra.mxu0 %v2696
  %v2698 = vand.u32 %v389, 4294901760
  %v2699 = vsub.f32 %v389, %v2698
  %2700 = vmatpush.msra.mxu0 %v2699
  %v2701 = vand.u32 %v385, 4294901760
  %v2702 = vsub.f32 %v385, %v2701
  %2703 = vmatpush.msra.mxu0 %v2702
  %v2704 = vand.u32 %v381, 4294901760
  %v2705 = vsub.f32 %v381, %v2704
  %2706 = vmatpush.msra.mxu0 %v2705
  %v2707 = vand.u32 %v377, 4294901760
  %v2708 = vsub.f32 %v377, %v2707
  %2709 = vmatpush.msra.mxu0 %v2708
  %v2710 = vand.u32 %v373, 4294901760
  %v2711 = vsub.f32 %v373, %v2710
  %2712 = vmatpush.msra.mxu0 %v2711
  %v2713 = vand.u32 %v369, 4294901760
  %v2714 = vsub.f32 %v369, %v2713
  %2715 = vmatpush.msra.mxu0 %v2714
  %v2716 = vand.u32 %v365, 4294901760
  %v2717 = vsub.f32 %v365, %v2716
  %2718 = vmatpush.msra.mxu0 %v2717
  %v2719 = vand.u32 %v361, 4294901760
  %v2720 = vsub.f32 %v361, %v2719
  %2721 = vmatpush.msra.mxu0 %v2720
  %v2722 = vand.u32 %v206, 4294901760
  %v2723 = vsub.f32 %v206, %v2722
  %2724 = vmatmul.f32.gmra.mxu0 %v2723
  %v2725 = vpop.f32.mrf.mxu0
  %v2726 = vadd.f32 %v2672, %v2725
  %2727 = vdwg.mxu0
  %v2728 = vand.u32 %v421, 4294901760
  %2729 = vmatpush.msra.mxu0 %v2728
  %v2730 = vand.u32 %v417, 4294901760
  %2731 = vmatpush.msra.mxu0 %v2730
  %v2732 = vand.u32 %v413, 4294901760
  %2733 = vmatpush.msra.mxu0 %v2732
  %v2734 = vand.u32 %v409, 4294901760
  %2735 = vmatpush.msra.mxu0 %v2734
  %v2736 = vand.u32 %v405, 4294901760
  %2737 = vmatpush.msra.mxu0 %v2736
  %v2738 = vand.u32 %v401, 4294901760
  %2739 = vmatpush.msra.mxu0 %v2738
  %v2740 = vand.u32 %v397, 4294901760
  %2741 = vmatpush.msra.mxu0 %v2740
  %v2742 = vand.u32 %v393, 4294901760
  %2743 = vmatpush.msra.mxu0 %v2742
  %v2744 = vand.u32 %v389, 4294901760
  %2745 = vmatpush.msra.mxu0 %v2744
  %v2746 = vand.u32 %v385, 4294901760
  %2747 = vmatpush.msra.mxu0 %v2746
  %v2748 = vand.u32 %v381, 4294901760
  %2749 = vmatpush.msra.mxu0 %v2748
  %v2750 = vand.u32 %v377, 4294901760
  %2751 = vmatpush.msra.mxu0 %v2750
  %v2752 = vand.u32 %v373, 4294901760
  %2753 = vmatpush.msra.mxu0 %v2752
  %v2754 = vand.u32 %v369, 4294901760
  %2755 = vmatpush.msra.mxu0 %v2754
  %v2756 = vand.u32 %v365, 4294901760
  %2757 = vmatpush.msra.mxu0 %v2756
  %v2758 = vand.u32 %v361, 4294901760
  %2759 = vmatpush.msra.mxu0 %v2758
  %v2760 = vand.u32 %v206, 4294901760
  %v2761 = vsub.f32 %v206, %v2760
  %v2762 = vand.u32 %v2761, 4294901760
  %2763 = vmatmul.f32.gmra.mxu0 %v2762
  %v2764 = vpop.f32.mrf.mxu0
  %v2765 = vadd.f32 %v2726, %v2764
  %2766 = vdwg.mxu0
  %v2767 = vand.u32 %v421, 4294901760
  %v2768 = vsub.f32 %v421, %v2767
  %v2769 = vand.u32 %v2768, 4294901760
  %2770 = vmatpush.msra.mxu0 %v2769
  %v2771 = vand.u32 %v417, 4294901760
  %v2772 = vsub.f32 %v417, %v2771
  %v2773 = vand.u32 %v2772, 4294901760
  %2774 = vmatpush.msra.mxu0 %v2773
  %v2775 = vand.u32 %v413, 4294901760
  %v2776 = vsub.f32 %v413, %v2775
  %v2777 = vand.u32 %v2776, 4294901760
  %2778 = vmatpush.msra.mxu0 %v2777
  %v2779 = vand.u32 %v409, 4294901760
  %v2780 = vsub.f32 %v409, %v2779
  %v2781 = vand.u32 %v2780, 4294901760
  %2782 = vmatpush.msra.mxu0 %v2781
  %v2783 = vand.u32 %v405, 4294901760
  %v2784 = vsub.f32 %v405, %v2783
  %v2785 = vand.u32 %v2784, 4294901760
  %2786 = vmatpush.msra.mxu0 %v2785
  %v2787 = vand.u32 %v401, 4294901760
  %v2788 = vsub.f32 %v401, %v2787
  %v2789 = vand.u32 %v2788, 4294901760
  %2790 = vmatpush.msra.mxu0 %v2789
  %v2791 = vand.u32 %v397, 4294901760
  %v2792 = vsub.f32 %v397, %v2791
  %v2793 = vand.u32 %v2792, 4294901760
  %2794 = vmatpush.msra.mxu0 %v2793
  %v2795 = vand.u32 %v393, 4294901760
  %v2796 = vsub.f32 %v393, %v2795
  %v2797 = vand.u32 %v2796, 4294901760
  %2798 = vmatpush.msra.mxu0 %v2797
  %v2799 = vand.u32 %v389, 4294901760
  %v2800 = vsub.f32 %v389, %v2799
  %v2801 = vand.u32 %v2800, 4294901760
  %2802 = vmatpush.msra.mxu0 %v2801
  %v2803 = vand.u32 %v385, 4294901760
  %v2804 = vsub.f32 %v385, %v2803
  %v2805 = vand.u32 %v2804, 4294901760
  %2806 = vmatpush.msra.mxu0 %v2805
  %v2807 = vand.u32 %v381, 4294901760
  %v2808 = vsub.f32 %v381, %v2807
  %v2809 = vand.u32 %v2808, 4294901760
  %2810 = vmatpush.msra.mxu0 %v2809
  %v2811 = vand.u32 %v377, 4294901760
  %v2812 = vsub.f32 %v377, %v2811
  %v2813 = vand.u32 %v2812, 4294901760
  %2814 = vmatpush.msra.mxu0 %v2813
  %v2815 = vand.u32 %v373, 4294901760
  %v2816 = vsub.f32 %v373, %v2815
  %v2817 = vand.u32 %v2816, 4294901760
  %2818 = vmatpush.msra.mxu0 %v2817
  %v2819 = vand.u32 %v369, 4294901760
  %v2820 = vsub.f32 %v369, %v2819
  %v2821 = vand.u32 %v2820, 4294901760
  %2822 = vmatpush.msra.mxu0 %v2821
  %v2823 = vand.u32 %v365, 4294901760
  %v2824 = vsub.f32 %v365, %v2823
  %v2825 = vand.u32 %v2824, 4294901760
  %2826 = vmatpush.msra.mxu0 %v2825
  %v2827 = vand.u32 %v361, 4294901760
  %v2828 = vsub.f32 %v361, %v2827
  %v2829 = vand.u32 %v2828, 4294901760
  %2830 = vmatpush.msra.mxu0 %v2829
  %v2831 = vand.u32 %v206, 4294901760
  %2832 = vmatmul.f32.gmra.mxu0 %v2831
  %v2833 = vpop.f32.mrf.mxu0
  %v2834 = vadd.f32 %v2765, %v2833
  %2835 = vdwg.mxu0
  %v2836 = vand.u32 %v421, 4294901760
  %2837 = vmatpush.msra.mxu0 %v2836
  %v2838 = vand.u32 %v417, 4294901760
  %2839 = vmatpush.msra.mxu0 %v2838
  %v2840 = vand.u32 %v413, 4294901760
  %2841 = vmatpush.msra.mxu0 %v2840
  %v2842 = vand.u32 %v409, 4294901760
  %2843 = vmatpush.msra.mxu0 %v2842
  %v2844 = vand.u32 %v405, 4294901760
  %2845 = vmatpush.msra.mxu0 %v2844
  %v2846 = vand.u32 %v401, 4294901760
  %2847 = vmatpush.msra.mxu0 %v2846
  %v2848 = vand.u32 %v397, 4294901760
  %2849 = vmatpush.msra.mxu0 %v2848
  %v2850 = vand.u32 %v393, 4294901760
  %2851 = vmatpush.msra.mxu0 %v2850
  %v2852 = vand.u32 %v389, 4294901760
  %2853 = vmatpush.msra.mxu0 %v2852
  %v2854 = vand.u32 %v385, 4294901760
  %2855 = vmatpush.msra.mxu0 %v2854
  %v2856 = vand.u32 %v381, 4294901760
  %2857 = vmatpush.msra.mxu0 %v2856
  %v2858 = vand.u32 %v377, 4294901760
  %2859 = vmatpush.msra.mxu0 %v2858
  %v2860 = vand.u32 %v373, 4294901760
  %2861 = vmatpush.msra.mxu0 %v2860
  %v2862 = vand.u32 %v369, 4294901760
  %2863 = vmatpush.msra.mxu0 %v2862
  %v2864 = vand.u32 %v365, 4294901760
  %2865 = vmatpush.msra.mxu0 %v2864
  %v2866 = vand.u32 %v361, 4294901760
  %2867 = vmatpush.msra.mxu0 %v2866
  %v2868 = vand.u32 %v206, 4294901760
  %2869 = vmatmul.f32.gmra.mxu0 %v2868
  %v2870 = vpop.f32.mrf.mxu0
  %v2871 = vadd.f32 %v2834, %v2870
  %2872 = vdwg.mxu0
  %v2873 = vand.u32 %v485, 4294901760
  %2874 = vmatpush.msra.mxu0 %v2873
  %v2875 = vand.u32 %v481, 4294901760
  %2876 = vmatpush.msra.mxu0 %v2875
  %v2877 = vand.u32 %v477, 4294901760
  %2878 = vmatpush.msra.mxu0 %v2877
  %v2879 = vand.u32 %v473, 4294901760
  %2880 = vmatpush.msra.mxu0 %v2879
  %v2881 = vand.u32 %v469, 4294901760
  %2882 = vmatpush.msra.mxu0 %v2881
  %v2883 = vand.u32 %v465, 4294901760
  %2884 = vmatpush.msra.mxu0 %v2883
  %v2885 = vand.u32 %v461, 4294901760
  %2886 = vmatpush.msra.mxu0 %v2885
  %v2887 = vand.u32 %v457, 4294901760
  %2888 = vmatpush.msra.mxu0 %v2887
  %v2889 = vand.u32 %v453, 4294901760
  %2890 = vmatpush.msra.mxu0 %v2889
  %v2891 = vand.u32 %v449, 4294901760
  %2892 = vmatpush.msra.mxu0 %v2891
  %v2893 = vand.u32 %v445, 4294901760
  %2894 = vmatpush.msra.mxu0 %v2893
  %v2895 = vand.u32 %v441, 4294901760
  %2896 = vmatpush.msra.mxu0 %v2895
  %v2897 = vand.u32 %v437, 4294901760
  %2898 = vmatpush.msra.mxu0 %v2897
  %v2899 = vand.u32 %v433, 4294901760
  %2900 = vmatpush.msra.mxu0 %v2899
  %v2901 = vand.u32 %v429, 4294901760
  %2902 = vmatpush.msra.mxu0 %v2901
  %v2903 = vand.u32 %v425, 4294901760
  %2904 = vmatpush.msra.mxu0 %v2903
  %v2905 = vand.u32 %v352, 4294901760
  %v2906 = vsub.f32 %v352, %v2905
  %v2907 = vand.u32 %v2906, 4294901760
  %v2908 = vsub.f32 %v2906, %v2907
  %v2909 = vand.u32 %v2908, 4294901760
  %2910 = vmatmul.f32.gmra.mxu0 %v2909
  %v2911 = vpop.f32.mrf.mxu0
  %v2912 = vadd.f32 %v2871, %v2911
  %2913 = vdwg.mxu0
  %v2914 = vand.u32 %v485, 4294901760
  %v2915 = vsub.f32 %v485, %v2914
  %v2916 = vand.u32 %v2915, 4294901760
  %v2917 = vsub.f32 %v2915, %v2916
  %v2918 = vand.u32 %v2917, 4294901760
  %2919 = vmatpush.msra.mxu0 %v2918
  %v2920 = vand.u32 %v481, 4294901760
  %v2921 = vsub.f32 %v481, %v2920
  %v2922 = vand.u32 %v2921, 4294901760
  %v2923 = vsub.f32 %v2921, %v2922
  %v2924 = vand.u32 %v2923, 4294901760
  %2925 = vmatpush.msra.mxu0 %v2924
  %v2926 = vand.u32 %v477, 4294901760
  %v2927 = vsub.f32 %v477, %v2926
  %v2928 = vand.u32 %v2927, 4294901760
  %v2929 = vsub.f32 %v2927, %v2928
  %v2930 = vand.u32 %v2929, 4294901760
  %2931 = vmatpush.msra.mxu0 %v2930
  %v2932 = vand.u32 %v473, 4294901760
  %v2933 = vsub.f32 %v473, %v2932
  %v2934 = vand.u32 %v2933, 4294901760
  %v2935 = vsub.f32 %v2933, %v2934
  %v2936 = vand.u32 %v2935, 4294901760
  %2937 = vmatpush.msra.mxu0 %v2936
  %v2938 = vand.u32 %v469, 4294901760
  %v2939 = vsub.f32 %v469, %v2938
  %v2940 = vand.u32 %v2939, 4294901760
  %v2941 = vsub.f32 %v2939, %v2940
  %v2942 = vand.u32 %v2941, 4294901760
  %2943 = vmatpush.msra.mxu0 %v2942
  %v2944 = vand.u32 %v465, 4294901760
  %v2945 = vsub.f32 %v465, %v2944
  %v2946 = vand.u32 %v2945, 4294901760
  %v2947 = vsub.f32 %v2945, %v2946
  %v2948 = vand.u32 %v2947, 4294901760
  %2949 = vmatpush.msra.mxu0 %v2948
  %v2950 = vand.u32 %v461, 4294901760
  %v2951 = vsub.f32 %v461, %v2950
  %v2952 = vand.u32 %v2951, 4294901760
  %v2953 = vsub.f32 %v2951, %v2952
  %v2954 = vand.u32 %v2953, 4294901760
  %2955 = vmatpush.msra.mxu0 %v2954
  %v2956 = vand.u32 %v457, 4294901760
  %v2957 = vsub.f32 %v457, %v2956
  %v2958 = vand.u32 %v2957, 4294901760
  %v2959 = vsub.f32 %v2957, %v2958
  %v2960 = vand.u32 %v2959, 4294901760
  %2961 = vmatpush.msra.mxu0 %v2960
  %v2962 = vand.u32 %v453, 4294901760
  %v2963 = vsub.f32 %v453, %v2962
  %v2964 = vand.u32 %v2963, 4294901760
  %v2965 = vsub.f32 %v2963, %v2964
  %v2966 = vand.u32 %v2965, 4294901760
  %2967 = vmatpush.msra.mxu0 %v2966
  %v2968 = vand.u32 %v449, 4294901760
  %v2969 = vsub.f32 %v449, %v2968
  %v2970 = vand.u32 %v2969, 4294901760
  %v2971 = vsub.f32 %v2969, %v2970
  %v2972 = vand.u32 %v2971, 4294901760
  %2973 = vmatpush.msra.mxu0 %v2972
  %v2974 = vand.u32 %v445, 4294901760
  %v2975 = vsub.f32 %v445, %v2974
  %v2976 = vand.u32 %v2975, 4294901760
  %v2977 = vsub.f32 %v2975, %v2976
  %v2978 = vand.u32 %v2977, 4294901760
  %2979 = vmatpush.msra.mxu0 %v2978
  %v2980 = vand.u32 %v441, 4294901760
  %v2981 = vsub.f32 %v441, %v2980
  %v2982 = vand.u32 %v2981, 4294901760
  %v2983 = vsub.f32 %v2981, %v2982
  %v2984 = vand.u32 %v2983, 4294901760
  %2985 = vmatpush.msra.mxu0 %v2984
  %v2986 = vand.u32 %v437, 4294901760
  %v2987 = vsub.f32 %v437, %v2986
  %v2988 = vand.u32 %v2987, 4294901760
  %v2989 = vsub.f32 %v2987, %v2988
  %v2990 = vand.u32 %v2989, 4294901760
  %2991 = vmatpush.msra.mxu0 %v2990
  %v2992 = vand.u32 %v433, 4294901760
  %v2993 = vsub.f32 %v433, %v2992
  %v2994 = vand.u32 %v2993, 4294901760
  %v2995 = vsub.f32 %v2993, %v2994
  %v2996 = vand.u32 %v2995, 4294901760
  %2997 = vmatpush.msra.mxu0 %v2996
  %v2998 = vand.u32 %v429, 4294901760
  %v2999 = vsub.f32 %v429, %v2998
  %v3000 = vand.u32 %v2999, 4294901760
  %v3001 = vsub.f32 %v2999, %v3000
  %v3002 = vand.u32 %v3001, 4294901760
  %3003 = vmatpush.msra.mxu0 %v3002
  %v3004 = vand.u32 %v425, 4294901760
  %v3005 = vsub.f32 %v425, %v3004
  %v3006 = vand.u32 %v3005, 4294901760
  %v3007 = vsub.f32 %v3005, %v3006
  %v3008 = vand.u32 %v3007, 4294901760
  %3009 = vmatpush.msra.mxu0 %v3008
  %v3010 = vand.u32 %v352, 4294901760
  %3011 = vmatmul.f32.gmra.mxu0 %v3010
  %v3012 = vpop.f32.mrf.mxu0
  %v3013 = vadd.f32 %v2912, %v3012
  %3014 = vdwg.mxu0
  %v3015 = vand.u32 %v485, 4294901760
  %v3016 = vsub.f32 %v485, %v3015
  %3017 = vmatpush.msra.mxu0 %v3016
  %v3018 = vand.u32 %v481, 4294901760
  %v3019 = vsub.f32 %v481, %v3018
  %3020 = vmatpush.msra.mxu0 %v3019
  %v3021 = vand.u32 %v477, 4294901760
  %v3022 = vsub.f32 %v477, %v3021
  %3023 = vmatpush.msra.mxu0 %v3022
  %v3024 = vand.u32 %v473, 4294901760
  %v3025 = vsub.f32 %v473, %v3024
  %3026 = vmatpush.msra.mxu0 %v3025
  %v3027 = vand.u32 %v469, 4294901760
  %v3028 = vsub.f32 %v469, %v3027
  %3029 = vmatpush.msra.mxu0 %v3028
  %v3030 = vand.u32 %v465, 4294901760
  %v3031 = vsub.f32 %v465, %v3030
  %3032 = vmatpush.msra.mxu0 %v3031
  %v3033 = vand.u32 %v461, 4294901760
  %v3034 = vsub.f32 %v461, %v3033
  %3035 = vmatpush.msra.mxu0 %v3034
  %v3036 = vand.u32 %v457, 4294901760
  %v3037 = vsub.f32 %v457, %v3036
  %3038 = vmatpush.msra.mxu0 %v3037
  %v3039 = vand.u32 %v453, 4294901760
  %v3040 = vsub.f32 %v453, %v3039
  %3041 = vmatpush.msra.mxu0 %v3040
  %v3042 = vand.u32 %v449, 4294901760
  %v3043 = vsub.f32 %v449, %v3042
  %3044 = vmatpush.msra.mxu0 %v3043
  %v3045 = vand.u32 %v445, 4294901760
  %v3046 = vsub.f32 %v445, %v3045
  %3047 = vmatpush.msra.mxu0 %v3046
  %v3048 = vand.u32 %v441, 4294901760
  %v3049 = vsub.f32 %v441, %v3048
  %3050 = vmatpush.msra.mxu0 %v3049
  %v3051 = vand.u32 %v437, 4294901760
  %v3052 = vsub.f32 %v437, %v3051
  %3053 = vmatpush.msra.mxu0 %v3052
  %v3054 = vand.u32 %v433, 4294901760
  %v3055 = vsub.f32 %v433, %v3054
  %3056 = vmatpush.msra.mxu0 %v3055
  %v3057 = vand.u32 %v429, 4294901760
  %v3058 = vsub.f32 %v429, %v3057
  %3059 = vmatpush.msra.mxu0 %v3058
  %v3060 = vand.u32 %v425, 4294901760
  %v3061 = vsub.f32 %v425, %v3060
  %3062 = vmatpush.msra.mxu0 %v3061
  %v3063 = vand.u32 %v352, 4294901760
  %v3064 = vsub.f32 %v352, %v3063
  %3065 = vmatmul.f32.gmra.mxu0 %v3064
  %v3066 = vpop.f32.mrf.mxu0
  %v3067 = vadd.f32 %v3013, %v3066
  %3068 = vdwg.mxu0
  %v3069 = vand.u32 %v485, 4294901760
  %3070 = vmatpush.msra.mxu0 %v3069
  %v3071 = vand.u32 %v481, 4294901760
  %3072 = vmatpush.msra.mxu0 %v3071
  %v3073 = vand.u32 %v477, 4294901760
  %3074 = vmatpush.msra.mxu0 %v3073
  %v3075 = vand.u32 %v473, 4294901760
  %3076 = vmatpush.msra.mxu0 %v3075
  %v3077 = vand.u32 %v469, 4294901760
  %3078 = vmatpush.msra.mxu0 %v3077
  %v3079 = vand.u32 %v465, 4294901760
  %3080 = vmatpush.msra.mxu0 %v3079
  %v3081 = vand.u32 %v461, 4294901760
  %3082 = vmatpush.msra.mxu0 %v3081
  %v3083 = vand.u32 %v457, 4294901760
  %3084 = vmatpush.msra.mxu0 %v3083
  %v3085 = vand.u32 %v453, 4294901760
  %3086 = vmatpush.msra.mxu0 %v3085
  %v3087 = vand.u32 %v449, 4294901760
  %3088 = vmatpush.msra.mxu0 %v3087
  %v3089 = vand.u32 %v445, 4294901760
  %3090 = vmatpush.msra.mxu0 %v3089
  %v3091 = vand.u32 %v441, 4294901760
  %3092 = vmatpush.msra.mxu0 %v3091
  %v3093 = vand.u32 %v437, 4294901760
  %3094 = vmatpush.msra.mxu0 %v3093
  %v3095 = vand.u32 %v433, 4294901760
  %3096 = vmatpush.msra.mxu0 %v3095
  %v3097 = vand.u32 %v429, 4294901760
  %3098 = vmatpush.msra.mxu0 %v3097
  %v3099 = vand.u32 %v425, 4294901760
  %3100 = vmatpush.msra.mxu0 %v3099
  %v3101 = vand.u32 %v352, 4294901760
  %v3102 = vsub.f32 %v352, %v3101
  %v3103 = vand.u32 %v3102, 4294901760
  %3104 = vmatmul.f32.gmra.mxu0 %v3103
  %v3105 = vpop.f32.mrf.mxu0
  %v3106 = vadd.f32 %v3067, %v3105
  %3107 = vdwg.mxu0
  %v3108 = vand.u32 %v485, 4294901760
  %v3109 = vsub.f32 %v485, %v3108
  %v3110 = vand.u32 %v3109, 4294901760
  %3111 = vmatpush.msra.mxu0 %v3110
  %v3112 = vand.u32 %v481, 4294901760
  %v3113 = vsub.f32 %v481, %v3112
  %v3114 = vand.u32 %v3113, 4294901760
  %3115 = vmatpush.msra.mxu0 %v3114
  %v3116 = vand.u32 %v477, 4294901760
  %v3117 = vsub.f32 %v477, %v3116
  %v3118 = vand.u32 %v3117, 4294901760
  %3119 = vmatpush.msra.mxu0 %v3118
  %v3120 = vand.u32 %v473, 4294901760
  %v3121 = vsub.f32 %v473, %v3120
  %v3122 = vand.u32 %v3121, 4294901760
  %3123 = vmatpush.msra.mxu0 %v3122
  %v3124 = vand.u32 %v469, 4294901760
  %v3125 = vsub.f32 %v469, %v3124
  %v3126 = vand.u32 %v3125, 4294901760
  %3127 = vmatpush.msra.mxu0 %v3126
  %v3128 = vand.u32 %v465, 4294901760
  %v3129 = vsub.f32 %v465, %v3128
  %v3130 = vand.u32 %v3129, 4294901760
  %3131 = vmatpush.msra.mxu0 %v3130
  %v3132 = vand.u32 %v461, 4294901760
  %v3133 = vsub.f32 %v461, %v3132
  %v3134 = vand.u32 %v3133, 4294901760
  %3135 = vmatpush.msra.mxu0 %v3134
  %v3136 = vand.u32 %v457, 4294901760
  %v3137 = vsub.f32 %v457, %v3136
  %v3138 = vand.u32 %v3137, 4294901760
  %3139 = vmatpush.msra.mxu0 %v3138
  %v3140 = vand.u32 %v453, 4294901760
  %v3141 = vsub.f32 %v453, %v3140
  %v3142 = vand.u32 %v3141, 4294901760
  %3143 = vmatpush.msra.mxu0 %v3142
  %v3144 = vand.u32 %v449, 4294901760
  %v3145 = vsub.f32 %v449, %v3144
  %v3146 = vand.u32 %v3145, 4294901760
  %3147 = vmatpush.msra.mxu0 %v3146
  %v3148 = vand.u32 %v445, 4294901760
  %v3149 = vsub.f32 %v445, %v3148
  %v3150 = vand.u32 %v3149, 4294901760
  %3151 = vmatpush.msra.mxu0 %v3150
  %v3152 = vand.u32 %v441, 4294901760
  %v3153 = vsub.f32 %v441, %v3152
  %v3154 = vand.u32 %v3153, 4294901760
  %3155 = vmatpush.msra.mxu0 %v3154
  %v3156 = vand.u32 %v437, 4294901760
  %v3157 = vsub.f32 %v437, %v3156
  %v3158 = vand.u32 %v3157, 4294901760
  %3159 = vmatpush.msra.mxu0 %v3158
  %v3160 = vand.u32 %v433, 4294901760
  %v3161 = vsub.f32 %v433, %v3160
  %v3162 = vand.u32 %v3161, 4294901760
  %3163 = vmatpush.msra.mxu0 %v3162
  %v3164 = vand.u32 %v429, 4294901760
  %v3165 = vsub.f32 %v429, %v3164
  %v3166 = vand.u32 %v3165, 4294901760
  %3167 = vmatpush.msra.mxu0 %v3166
  %v3168 = vand.u32 %v425, 4294901760
  %v3169 = vsub.f32 %v425, %v3168
  %v3170 = vand.u32 %v3169, 4294901760
  %3171 = vmatpush.msra.mxu0 %v3170
  %v3172 = vand.u32 %v352, 4294901760
  %3173 = vmatmul.f32.gmra.mxu0 %v3172
  %v3174 = vpop.f32.mrf.mxu0
  %v3175 = vadd.f32 %v3106, %v3174
  %3176 = vdwg.mxu0
  %v3177 = vand.u32 %v485, 4294901760
  %3178 = vmatpush.msra.mxu0 %v3177
  %v3179 = vand.u32 %v481, 4294901760
  %3180 = vmatpush.msra.mxu0 %v3179
  %v3181 = vand.u32 %v477, 4294901760
  %3182 = vmatpush.msra.mxu0 %v3181
  %v3183 = vand.u32 %v473, 4294901760
  %3184 = vmatpush.msra.mxu0 %v3183
  %v3185 = vand.u32 %v469, 4294901760
  %3186 = vmatpush.msra.mxu0 %v3185
  %v3187 = vand.u32 %v465, 4294901760
  %3188 = vmatpush.msra.mxu0 %v3187
  %v3189 = vand.u32 %v461, 4294901760
  %3190 = vmatpush.msra.mxu0 %v3189
  %v3191 = vand.u32 %v457, 4294901760
  %3192 = vmatpush.msra.mxu0 %v3191
  %v3193 = vand.u32 %v453, 4294901760
  %3194 = vmatpush.msra.mxu0 %v3193
  %v3195 = vand.u32 %v449, 4294901760
  %3196 = vmatpush.msra.mxu0 %v3195
  %v3197 = vand.u32 %v445, 4294901760
  %3198 = vmatpush.msra.mxu0 %v3197
  %v3199 = vand.u32 %v441, 4294901760
  %3200 = vmatpush.msra.mxu0 %v3199
  %v3201 = vand.u32 %v437, 4294901760
  %3202 = vmatpush.msra.mxu0 %v3201
  %v3203 = vand.u32 %v433, 4294901760
  %3204 = vmatpush.msra.mxu0 %v3203
  %v3205 = vand.u32 %v429, 4294901760
  %3206 = vmatpush.msra.mxu0 %v3205
  %v3207 = vand.u32 %v425, 4294901760
  %3208 = vmatpush.msra.mxu0 %v3207
  %v3209 = vand.u32 %v352, 4294901760
  %3210 = vmatmul.f32.gmra.mxu0 %v3209
  %v3211 = vpop.f32.mrf.mxu0
  %v3212 = vadd.f32 %v3175, %v3211
  %3213 = vdwg.mxu0
  %v3214 = vmul.f32 %v1166, %v1166
  %v3215 = vmul.f32 %v1848, %v1848
  %v3216 = vmul.f32 %v2530, %v2530
  %v3217 = vmul.f32 %v3212, %v3212
  %v3218 = vadd.f32 %v3214, %v3216
  %v3219 = vadd.f32 %v3215, %v3217
  %v3220 = vrsqrt.pop %v3218
  %v3221 = vmul.f32 %v3220, %v3218
  %v3222 = vmul.f32 %v3221, %v3220
  %v3223 = vmul.f32 0.5, %v3222
  %v3224 = vsub.f32 1.5, %v3223
  %v3225 = vmul.f32 %v3220, %v3224
  %v3226 = vmul.f32 %v3218, %v3225
  %vm3227 = vcmp.eq.f32.partialorder %v3218, inf
  %v3228 = vsel %vm3227, %v3218, %v3226
  %vm3229 = vcmp.eq.f32.partialorder %v3218, 0.0
  %v3230 = vand.u32 %v3218, 2147483648
  %v3231 = vsel %vm3229, %v3230, %v3228
  %v3232 = vrsqrt.pop %v3219
  %v3233 = vmul.f32 %v3232, %v3219
  %v3234 = vmul.f32 %v3233, %v3232
  %v3235 = vmul.f32 0.5, %v3234
  %v3236 = vsub.f32 1.5, %v3235
  %v3237 = vmul.f32 %v3232, %v3236
  %v3238 = vmul.f32 %v3219, %v3237
  %vm3239 = vcmp.eq.f32.partialorder %v3219, inf
  %v3240 = vsel %vm3239, %v3219, %v3238
  %vm3241 = vcmp.eq.f32.partialorder %v3219, 0.0
  %v3242 = vand.u32 %v3219, 2147483648
  %v3243 = vsel %vm3241, %v3242, %v3240
  %v3244 = vand.u32 2147483647, %v1166
  %v3245 = vand.u32 2147483647, %v2530
  %v3246 = vmin.f32 %v3244, %v3245
  %v3247 = vmax.f32 %v3244, %v3245
  %v3248 = vrcp.pop %v3247
  %v3249 = vmul.f32 %v3247, %v3248
  %v3250 = vsub.f32 1.0, %v3249
  %v3251 = vmul.f32 %v3248, %v3250
  %v3252 = vadd.f32 %v3248, %v3251
  %vm3253 = vweird.f32 %v3247
  %vm3254 = vweird.f32 %v3248
  %vm3255 = vmor %vm3253, %vm3254
  %v3256 = vsel %vm3255, %v3248, %v3252
  %v3257 = vand.u32 2147483647, %v3247
  %vm3258 = vcmp.eq.f32.partialorder %v3257, 8.507059e+37
  %v3259 = vand.u32 %v3247, 2147483648
  %v3260 = vor.u32 1.1754944e-38, %v3259
  %v3261 = vsel %vm3258, %v3260, %v3256
  %v3262 = vmul.f32 %v3246, %v3261
  %v3263 = vmul.f32 %v3262, %v3262
  %v3264 = vmul.f32 0.002785687, %v3263
  %v3265 = vadd.f32 %v3264, -0.015866
  %v3266 = vmul.f32 %v3265, %v3263
  %v3267 = vadd.f32 %v3266, 0.04247222
  %v3268 = vmul.f32 %v3267, %v3263
  %v3269 = vadd.f32 %v3268, -0.074975304
  %v3270 = vmul.f32 %v3269, %v3263
  %v3271 = vadd.f32 %v3270, 0.1064488
  %v3272 = vmul.f32 %v3271, %v3263
  %v3273 = vadd.f32 %v3272, -0.14207031
  %v3274 = vmul.f32 %v3273, %v3263
  %v3275 = vadd.f32 %v3274, 0.19993454
  %v3276 = vmul.f32 %v3275, %v3263
  %v3277 = vadd.f32 %v3276, -0.33333147
  %v3278 = vmul.f32 %v3277, %v3263
  %v3279 = vmul.f32 %v3278, %v3262
  %v3280 = vadd.f32 %v3279, %v3262
  %vm3281 = vcmp.gt.f32.partialorder %v3245, %v3244
  %v3282 = vsub.f32 1.5707964, %v3280
  %v3283 = vsel %vm3281, %v3282, %v3280
  %vm3284 = vcmp.lt.f32.partialorder %v1166, 0.0
  %v3285 = vsub.f32 3.1415927, %v3283
  %v3286 = vsel %vm3284, %v3285, %v3283
  %vm3287 = vcmp.lt.s32.totalorder %v1166, 0
  %v3288 = vsel %vm3287, 3.1415927, 0.0
  %vm3289 = vcmp.eq.f32.partialorder %v2530, 0.0
  %v3290 = vsel %vm3289, %v3288, %v3286
  %vm3291 = vcmp.ne.f32.partialorder %v1166, %v1166
  %vm3292 = vcmp.ne.f32.partialorder %v2530, %v2530
  %vm3293 = vmor %vm3291, %vm3292
  %v3294 = vsel %vm3293, nan, %v3290
  %vm3295 = vcmp.lt.f32.partialorder %v1166, 0.0
  %v3296 = vsel %vm3295, 2.3561945, 0.7853982
  %vm3297 = vcmp.eq.s32.totalorder %v3244, inf
  %vm3298 = vcmp.eq.s32.totalorder %v3245, inf
  %vm3299 = vmand %vm3297, %vm3298
  %v3300 = vsel %vm3299, %v3296, %v3294
  %v3301 = vand.u32 2147483647, %v3300
  %v3302 = vand.u32 %v2530, 2147483648
  %v3303 = vor.u32 %v3301, %v3302
  %v3304 = vand.u32 2147483647, %v1848
  %v3305 = vand.u32 2147483647, %v3212
  %v3306 = vmin.f32 %v3304, %v3305
  %v3307 = vmax.f32 %v3304, %v3305
  %v3308 = vrcp.pop %v3307
  %v3309 = vmul.f32 %v3307, %v3308
  %v3310 = vsub.f32 1.0, %v3309
  %v3311 = vmul.f32 %v3308, %v3310
  %v3312 = vadd.f32 %v3308, %v3311
  %vm3313 = vweird.f32 %v3307
  %vm3314 = vweird.f32 %v3308
  %vm3315 = vmor %vm3313, %vm3314
  %v3316 = vsel %vm3315, %v3308, %v3312
  %v3317 = vand.u32 2147483647, %v3307
  %vm3318 = vcmp.eq.f32.partialorder %v3317, 8.507059e+37
  %v3319 = vand.u32 %v3307, 2147483648
  %v3320 = vor.u32 1.1754944e-38, %v3319
  %v3321 = vsel %vm3318, %v3320, %v3316
  %v3322 = vmul.f32 %v3306, %v3321
  %v3323 = vmul.f32 %v3322, %v3322
  %v3324 = vmul.f32 0.002785687, %v3323
  %v3325 = vadd.f32 %v3324, -0.015866
  %v3326 = vmul.f32 %v3325, %v3323
  %v3327 = vadd.f32 %v3326, 0.04247222
  %v3328 = vmul.f32 %v3327, %v3323
  %v3329 = vadd.f32 %v3328, -0.074975304
  %v3330 = vmul.f32 %v3329, %v3323
  %v3331 = vadd.f32 %v3330, 0.1064488
  %v3332 = vmul.f32 %v3331, %v3323
  %v3333 = vadd.f32 %v3332, -0.14207031
  %v3334 = vmul.f32 %v3333, %v3323
  %v3335 = vadd.f32 %v3334, 0.19993454
  %v3336 = vmul.f32 %v3335, %v3323
  %v3337 = vadd.f32 %v3336, -0.33333147
  %v3338 = vmul.f32 %v3337, %v3323
  %v3339 = vmul.f32 %v3338, %v3322
  %v3340 = vadd.f32 %v3339, %v3322
  %vm3341 = vcmp.gt.f32.partialorder %v3305, %v3304
  %v3342 = vsub.f32 1.5707964, %v3340
  %v3343 = vsel %vm3341, %v3342, %v3340
  %vm3344 = vcmp.lt.f32.partialorder %v1848, 0.0
  %v3345 = vsub.f32 3.1415927, %v3343
  %v3346 = vsel %vm3344, %v3345, %v3343
  %vm3347 = vcmp.lt.s32.totalorder %v1848, 0
  %v3348 = vsel %vm3347, 3.1415927, 0.0
  %vm3349 = vcmp.eq.f32.partialorder %v3212, 0.0
  %v3350 = vsel %vm3349, %v3348, %v3346
  %vm3351 = vcmp.ne.f32.partialorder %v1848, %v1848
  %vm3352 = vcmp.ne.f32.partialorder %v3212, %v3212
  %vm3353 = vmor %vm3351, %vm3352
  %v3354 = vsel %vm3353, nan, %v3350
  %vm3355 = vcmp.lt.f32.partialorder %v1848, 0.0
  %v3356 = vsel %vm3355, 2.3561945, 0.7853982
  %vm3357 = vcmp.eq.s32.totalorder %v3304, inf
  %vm3358 = vcmp.eq.s32.totalorder %v3305, inf
  %vm3359 = vmand %vm3357, %vm3358
  %v3360 = vsel %vm3359, %v3356, %v3354
  %v3361 = vand.u32 2147483647, %v3360
  %v3362 = vand.u32 %v3212, 2147483648
  %v3363 = vor.u32 %v3361, %v3362
  %v3364 = vld [vmem:[%s3] sm:$0xff]
  %v3365 = vld [vmem:[%s3 + $0x8] sm:$0xff]
  %v3366 = vld [vmem:[%s4] sm:$0xff]
  %v3367 = vld [vmem:[%s4 + $0x8] sm:$0xff]
  %3369 = vset.pattern.permute.xlu0 0
  %3370 = vperm.xlu0 %3369, %v3366
  %v3371 = vpop.permute.xlu0 %3370
  %3374 = vset.pattern.permute.xlu0 0
  %3375 = vperm.xlu0 %3374, %v3367
  %v3376 = vpop.permute.xlu0 %3375
  %vm3378 = vcmask 130048
  %v3380 = vsel %vm3378, %v3364, 0
  %v3383 = vsel %vm3378, %v3365, 0
  %3385 = vmatpush.msra.mxu0 0.0
  %3386 = vmatpush.msra.mxu0 0.0
  %3387 = vmatpush.msra.mxu0 0.0
  %3388 = vmatpush.msra.mxu0 0.0
  %3389 = vmatpush.msra.mxu0 0.0
  %3390 = vmatpush.msra.mxu0 0.0
  %3391 = vmatpush.msra.mxu0 0.0
  %3392 = vmatpush.msra.mxu0 0.0
  %3393 = vmatpush.msra.mxu0 0.0
  %3394 = vmatpush.msra.mxu0 0.0
  %3395 = vmatpush.msra.mxu0 0.0
  %3396 = vmatpush.msra.mxu0 0.0
  %3397 = vmatpush.msra.mxu0 0.0
  %3398 = vmatpush.msra.mxu0 0.0
  %v3399 = vand.u32 %v3303, 4294901760
  %3400 = vmatpush.msra.mxu0 %v3399
  %v3401 = vand.u32 %v3231, 4294901760
  %3402 = vmatpush.msra.mxu0 %v3401
  %v3403 = vand.u32 %v3380, 4294901760
  %v3404 = vsub.f32 %v3380, %v3403
  %v3405 = vand.u32 %v3404, 4294901760
  %v3406 = vsub.f32 %v3404, %v3405
  %v3407 = vand.u32 %v3406, 4294901760
  %3408 = vmatmul.f32.gmra.mxu0 %v3407
  %v3409 = vpop.f32.mrf.mxu0
  %v3410 = vadd.f32 %v3371, %v3409
  %v3411 = vand.u32 %v3383, 4294901760
  %v3412 = vsub.f32 %v3383, %v3411
  %v3413 = vand.u32 %v3412, 4294901760
  %v3414 = vsub.f32 %v3412, %v3413
  %v3415 = vand.u32 %v3414, 4294901760
  %3416 = vmatmul.f32.gmra.mxu0 %v3415
  %v3417 = vpop.f32.mrf.mxu0
  %v3418 = vadd.f32 %v3376, %v3417
  %3419 = vdwg.mxu0
  %3420 = vmatpush.msra.mxu0 0.0
  %3421 = vmatpush.msra.mxu0 0.0
  %3422 = vmatpush.msra.mxu0 0.0
  %3423 = vmatpush.msra.mxu0 0.0
  %3424 = vmatpush.msra.mxu0 0.0
  %3425 = vmatpush.msra.mxu0 0.0
  %3426 = vmatpush.msra.mxu0 0.0
  %3427 = vmatpush.msra.mxu0 0.0
  %3428 = vmatpush.msra.mxu0 0.0
  %3429 = vmatpush.msra.mxu0 0.0
  %3430 = vmatpush.msra.mxu0 0.0
  %3431 = vmatpush.msra.mxu0 0.0
  %3432 = vmatpush.msra.mxu0 0.0
  %3433 = vmatpush.msra.mxu0 0.0
  %v3434 = vand.u32 %v3303, 4294901760
  %v3435 = vsub.f32 %v3303, %v3434
  %v3436 = vand.u32 %v3435, 4294901760
  %v3437 = vsub.f32 %v3435, %v3436
  %v3438 = vand.u32 %v3437, 4294901760
  %3439 = vmatpush.msra.mxu0 %v3438
  %v3440 = vand.u32 %v3231, 4294901760
  %v3441 = vsub.f32 %v3231, %v3440
  %v3442 = vand.u32 %v3441, 4294901760
  %v3443 = vsub.f32 %v3441, %v3442
  %v3444 = vand.u32 %v3443, 4294901760
  %3445 = vmatpush.msra.mxu0 %v3444
  %v3446 = vand.u32 %v3380, 4294901760
  %3447 = vmatmul.f32.gmra.mxu0 %v3446
  %v3448 = vpop.f32.mrf.mxu0
  %v3449 = vadd.f32 %v3410, %v3448
  %v3450 = vand.u32 %v3383, 4294901760
  %3451 = vmatmul.f32.gmra.mxu0 %v3450
  %v3452 = vpop.f32.mrf.mxu0
  %v3453 = vadd.f32 %v3418, %v3452
  %3454 = vdwg.mxu0
  %3455 = vmatpush.msra.mxu0 0.0
  %3456 = vmatpush.msra.mxu0 0.0
  %3457 = vmatpush.msra.mxu0 0.0
  %3458 = vmatpush.msra.mxu0 0.0
  %3459 = vmatpush.msra.mxu0 0.0
  %3460 = vmatpush.msra.mxu0 0.0
  %3461 = vmatpush.msra.mxu0 0.0
  %3462 = vmatpush.msra.mxu0 0.0
  %3463 = vmatpush.msra.mxu0 0.0
  %3464 = vmatpush.msra.mxu0 0.0
  %3465 = vmatpush.msra.mxu0 0.0
  %3466 = vmatpush.msra.mxu0 0.0
  %3467 = vmatpush.msra.mxu0 0.0
  %3468 = vmatpush.msra.mxu0 0.0
  %v3469 = vand.u32 %v3303, 4294901760
  %v3470 = vsub.f32 %v3303, %v3469
  %3471 = vmatpush.msra.mxu0 %v3470
  %v3472 = vand.u32 %v3231, 4294901760
  %v3473 = vsub.f32 %v3231, %v3472
  %3474 = vmatpush.msra.mxu0 %v3473
  %v3475 = vand.u32 %v3380, 4294901760
  %v3476 = vsub.f32 %v3380, %v3475
  %3477 = vmatmul.f32.gmra.mxu0 %v3476
  %v3478 = vpop.f32.mrf.mxu0
  %v3479 = vadd.f32 %v3449, %v3478
  %v3480 = vand.u32 %v3383, 4294901760
  %v3481 = vsub.f32 %v3383, %v3480
  %3482 = vmatmul.f32.gmra.mxu0 %v3481
  %v3483 = vpop.f32.mrf.mxu0
  %v3484 = vadd.f32 %v3453, %v3483
  %3485 = vdwg.mxu0
  %3486 = vmatpush.msra.mxu0 0.0
  %3487 = vmatpush.msra.mxu0 0.0
  %3488 = vmatpush.msra.mxu0 0.0
  %3489 = vmatpush.msra.mxu0 0.0
  %3490 = vmatpush.msra.mxu0 0.0
  %3491 = vmatpush.msra.mxu0 0.0
  %3492 = vmatpush.msra.mxu0 0.0
  %3493 = vmatpush.msra.mxu0 0.0
  %3494 = vmatpush.msra.mxu0 0.0
  %3495 = vmatpush.msra.mxu0 0.0
  %3496 = vmatpush.msra.mxu0 0.0
  %3497 = vmatpush.msra.mxu0 0.0
  %3498 = vmatpush.msra.mxu0 0.0
  %3499 = vmatpush.msra.mxu0 0.0
  %v3500 = vand.u32 %v3303, 4294901760
  %3501 = vmatpush.msra.mxu0 %v3500
  %v3502 = vand.u32 %v3231, 4294901760
  %3503 = vmatpush.msra.mxu0 %v3502
  %v3504 = vand.u32 %v3380, 4294901760
  %v3505 = vsub.f32 %v3380, %v3504
  %v3506 = vand.u32 %v3505, 4294901760
  %3507 = vmatmul.f32.gmra.mxu0 %v3506
  %v3508 = vpop.f32.mrf.mxu0
  %v3509 = vadd.f32 %v3479, %v3508
  %v3510 = vand.u32 %v3383, 4294901760
  %v3511 = vsub.f32 %v3383, %v3510
  %v3512 = vand.u32 %v3511, 4294901760
  %3513 = vmatmul.f32.gmra.mxu0 %v3512
  %v3514 = vpop.f32.mrf.mxu0
  %v3515 = vadd.f32 %v3484, %v3514
  %3516 = vdwg.mxu0
  %3517 = vmatpush.msra.mxu0 0.0
  %3518 = vmatpush.msra.mxu0 0.0
  %3519 = vmatpush.msra.mxu0 0.0
  %3520 = vmatpush.msra.mxu0 0.0
  %3521 = vmatpush.msra.mxu0 0.0
  %3522 = vmatpush.msra.mxu0 0.0
  %3523 = vmatpush.msra.mxu0 0.0
  %3524 = vmatpush.msra.mxu0 0.0
  %3525 = vmatpush.msra.mxu0 0.0
  %3526 = vmatpush.msra.mxu0 0.0
  %3527 = vmatpush.msra.mxu0 0.0
  %3528 = vmatpush.msra.mxu0 0.0
  %3529 = vmatpush.msra.mxu0 0.0
  %3530 = vmatpush.msra.mxu0 0.0
  %v3531 = vand.u32 %v3303, 4294901760
  %v3532 = vsub.f32 %v3303, %v3531
  %v3533 = vand.u32 %v3532, 4294901760
  %3534 = vmatpush.msra.mxu0 %v3533
  %v3535 = vand.u32 %v3231, 4294901760
  %v3536 = vsub.f32 %v3231, %v3535
  %v3537 = vand.u32 %v3536, 4294901760
  %3538 = vmatpush.msra.mxu0 %v3537
  %v3539 = vand.u32 %v3380, 4294901760
  %3540 = vmatmul.f32.gmra.mxu0 %v3539
  %v3541 = vpop.f32.mrf.mxu0
  %v3542 = vadd.f32 %v3509, %v3541
  %v3543 = vand.u32 %v3383, 4294901760
  %3544 = vmatmul.f32.gmra.mxu0 %v3543
  %v3545 = vpop.f32.mrf.mxu0
  %v3546 = vadd.f32 %v3515, %v3545
  %3547 = vdwg.mxu0
  %3548 = vmatpush.msra.mxu0 0.0
  %3549 = vmatpush.msra.mxu0 0.0
  %3550 = vmatpush.msra.mxu0 0.0
  %3551 = vmatpush.msra.mxu0 0.0
  %3552 = vmatpush.msra.mxu0 0.0
  %3553 = vmatpush.msra.mxu0 0.0
  %3554 = vmatpush.msra.mxu0 0.0
  %3555 = vmatpush.msra.mxu0 0.0
  %3556 = vmatpush.msra.mxu0 0.0
  %3557 = vmatpush.msra.mxu0 0.0
  %3558 = vmatpush.msra.mxu0 0.0
  %3559 = vmatpush.msra.mxu0 0.0
  %3560 = vmatpush.msra.mxu0 0.0
  %3561 = vmatpush.msra.mxu0 0.0
  %v3562 = vand.u32 %v3303, 4294901760
  %3563 = vmatpush.msra.mxu0 %v3562
  %v3564 = vand.u32 %v3231, 4294901760
  %3565 = vmatpush.msra.mxu0 %v3564
  %v3566 = vand.u32 %v3380, 4294901760
  %3567 = vmatmul.f32.gmra.mxu0 %v3566
  %v3568 = vpop.f32.mrf.mxu0
  %v3569 = vadd.f32 %v3542, %v3568
  %v3570 = vand.u32 %v3383, 4294901760
  %3571 = vmatmul.f32.gmra.mxu0 %v3570
  %v3572 = vpop.f32.mrf.mxu0
  %v3573 = vadd.f32 %v3546, %v3572
  %3574 = vdwg.mxu0
  %3575 = vmatpush.msra.mxu0 0.0
  %3576 = vmatpush.msra.mxu0 0.0
  %3577 = vmatpush.msra.mxu0 0.0
  %3578 = vmatpush.msra.mxu0 0.0
  %3579 = vmatpush.msra.mxu0 0.0
  %3580 = vmatpush.msra.mxu0 0.0
  %3581 = vmatpush.msra.mxu0 0.0
  %3582 = vmatpush.msra.mxu0 0.0
  %3583 = vmatpush.msra.mxu0 0.0
  %3584 = vmatpush.msra.mxu0 0.0
  %3585 = vmatpush.msra.mxu0 0.0
  %3586 = vmatpush.msra.mxu0 0.0
  %3587 = vmatpush.msra.mxu0 0.0
  %3588 = vmatpush.msra.mxu0 0.0
  %v3589 = vand.u32 %v3363, 4294901760
  %3590 = vmatpush.msra.mxu0 %v3589
  %v3591 = vand.u32 %v3243, 4294901760
  %3592 = vmatpush.msra.mxu0 %v3591
  %v3593 = vand.u32 %v3380, 4294901760
  %v3594 = vsub.f32 %v3380, %v3593
  %v3595 = vand.u32 %v3594, 4294901760
  %v3596 = vsub.f32 %v3594, %v3595
  %v3597 = vand.u32 %v3596, 4294901760
  %3598 = vmatmul.f32.gmra.mxu0 %v3597
  %v3599 = vpop.f32.mrf.mxu0
  %v3600 = vadd.f32 %v3371, %v3599
  %v3601 = vand.u32 %v3383, 4294901760
  %v3602 = vsub.f32 %v3383, %v3601
  %v3603 = vand.u32 %v3602, 4294901760
  %v3604 = vsub.f32 %v3602, %v3603
  %v3605 = vand.u32 %v3604, 4294901760
  %3606 = vmatmul.f32.gmra.mxu0 %v3605
  %v3607 = vpop.f32.mrf.mxu0
  %v3608 = vadd.f32 %v3376, %v3607
  %3609 = vdwg.mxu0
  %3610 = vmatpush.msra.mxu0 0.0
  %3611 = vmatpush.msra.mxu0 0.0
  %3612 = vmatpush.msra.mxu0 0.0
  %3613 = vmatpush.msra.mxu0 0.0
  %3614 = vmatpush.msra.mxu0 0.0
  %3615 = vmatpush.msra.mxu0 0.0
  %3616 = vmatpush.msra.mxu0 0.0
  %3617 = vmatpush.msra.mxu0 0.0
  %3618 = vmatpush.msra.mxu0 0.0
  %3619 = vmatpush.msra.mxu0 0.0
  %3620 = vmatpush.msra.mxu0 0.0
  %3621 = vmatpush.msra.mxu0 0.0
  %3622 = vmatpush.msra.mxu0 0.0
  %3623 = vmatpush.msra.mxu0 0.0
  %v3624 = vand.u32 %v3363, 4294901760
  %v3625 = vsub.f32 %v3363, %v3624
  %v3626 = vand.u32 %v3625, 4294901760
  %v3627 = vsub.f32 %v3625, %v3626
  %v3628 = vand.u32 %v3627, 4294901760
  %3629 = vmatpush.msra.mxu0 %v3628
  %v3630 = vand.u32 %v3243, 4294901760
  %v3631 = vsub.f32 %v3243, %v3630
  %v3632 = vand.u32 %v3631, 4294901760
  %v3633 = vsub.f32 %v3631, %v3632
  %v3634 = vand.u32 %v3633, 4294901760
  %3635 = vmatpush.msra.mxu0 %v3634
  %v3636 = vand.u32 %v3380, 4294901760
  %3637 = vmatmul.f32.gmra.mxu0 %v3636
  %v3638 = vpop.f32.mrf.mxu0
  %v3639 = vadd.f32 %v3600, %v3638
  %v3640 = vand.u32 %v3383, 4294901760
  %3641 = vmatmul.f32.gmra.mxu0 %v3640
  %v3642 = vpop.f32.mrf.mxu0
  %v3643 = vadd.f32 %v3608, %v3642
  %3644 = vdwg.mxu0
  %3645 = vmatpush.msra.mxu0 0.0
  %3646 = vmatpush.msra.mxu0 0.0
  %3647 = vmatpush.msra.mxu0 0.0
  %3648 = vmatpush.msra.mxu0 0.0
  %3649 = vmatpush.msra.mxu0 0.0
  %3650 = vmatpush.msra.mxu0 0.0
  %3651 = vmatpush.msra.mxu0 0.0
  %3652 = vmatpush.msra.mxu0 0.0
  %3653 = vmatpush.msra.mxu0 0.0
  %3654 = vmatpush.msra.mxu0 0.0
  %3655 = vmatpush.msra.mxu0 0.0
  %3656 = vmatpush.msra.mxu0 0.0
  %3657 = vmatpush.msra.mxu0 0.0
  %3658 = vmatpush.msra.mxu0 0.0
  %v3659 = vand.u32 %v3363, 4294901760
  %v3660 = vsub.f32 %v3363, %v3659
  %3661 = vmatpush.msra.mxu0 %v3660
  %v3662 = vand.u32 %v3243, 4294901760
  %v3663 = vsub.f32 %v3243, %v3662
  %3664 = vmatpush.msra.mxu0 %v3663
  %v3665 = vand.u32 %v3380, 4294901760
  %v3666 = vsub.f32 %v3380, %v3665
  %3667 = vmatmul.f32.gmra.mxu0 %v3666
  %v3668 = vpop.f32.mrf.mxu0
  %v3669 = vadd.f32 %v3639, %v3668
  %v3670 = vand.u32 %v3383, 4294901760
  %v3671 = vsub.f32 %v3383, %v3670
  %3672 = vmatmul.f32.gmra.mxu0 %v3671
  %v3673 = vpop.f32.mrf.mxu0
  %v3674 = vadd.f32 %v3643, %v3673
  %3675 = vdwg.mxu0
  %3676 = vmatpush.msra.mxu0 0.0
  %3677 = vmatpush.msra.mxu0 0.0
  %3678 = vmatpush.msra.mxu0 0.0
  %3679 = vmatpush.msra.mxu0 0.0
  %3680 = vmatpush.msra.mxu0 0.0
  %3681 = vmatpush.msra.mxu0 0.0
  %3682 = vmatpush.msra.mxu0 0.0
  %3683 = vmatpush.msra.mxu0 0.0
  %3684 = vmatpush.msra.mxu0 0.0
  %3685 = vmatpush.msra.mxu0 0.0
  %3686 = vmatpush.msra.mxu0 0.0
  %3687 = vmatpush.msra.mxu0 0.0
  %3688 = vmatpush.msra.mxu0 0.0
  %3689 = vmatpush.msra.mxu0 0.0
  %v3690 = vand.u32 %v3363, 4294901760
  %3691 = vmatpush.msra.mxu0 %v3690
  %v3692 = vand.u32 %v3243, 4294901760
  %3693 = vmatpush.msra.mxu0 %v3692
  %v3694 = vand.u32 %v3380, 4294901760
  %v3695 = vsub.f32 %v3380, %v3694
  %v3696 = vand.u32 %v3695, 4294901760
  %3697 = vmatmul.f32.gmra.mxu0 %v3696
  %v3698 = vpop.f32.mrf.mxu0
  %v3699 = vadd.f32 %v3669, %v3698
  %v3700 = vand.u32 %v3383, 4294901760
  %v3701 = vsub.f32 %v3383, %v3700
  %v3702 = vand.u32 %v3701, 4294901760
  %3703 = vmatmul.f32.gmra.mxu0 %v3702
  %v3704 = vpop.f32.mrf.mxu0
  %v3705 = vadd.f32 %v3674, %v3704
  %3706 = vdwg.mxu0
  %3707 = vmatpush.msra.mxu0 0.0
  %3708 = vmatpush.msra.mxu0 0.0
  %3709 = vmatpush.msra.mxu0 0.0
  %3710 = vmatpush.msra.mxu0 0.0
  %3711 = vmatpush.msra.mxu0 0.0
  %3712 = vmatpush.msra.mxu0 0.0
  %3713 = vmatpush.msra.mxu0 0.0
  %3714 = vmatpush.msra.mxu0 0.0
  %3715 = vmatpush.msra.mxu0 0.0
  %3716 = vmatpush.msra.mxu0 0.0
  %3717 = vmatpush.msra.mxu0 0.0
  %3718 = vmatpush.msra.mxu0 0.0
  %3719 = vmatpush.msra.mxu0 0.0
  %3720 = vmatpush.msra.mxu0 0.0
  %v3721 = vand.u32 %v3363, 4294901760
  %v3722 = vsub.f32 %v3363, %v3721
  %v3723 = vand.u32 %v3722, 4294901760
  %3724 = vmatpush.msra.mxu0 %v3723
  %v3725 = vand.u32 %v3243, 4294901760
  %v3726 = vsub.f32 %v3243, %v3725
  %v3727 = vand.u32 %v3726, 4294901760
  %3728 = vmatpush.msra.mxu0 %v3727
  %v3729 = vand.u32 %v3380, 4294901760
  %3730 = vmatmul.f32.gmra.mxu0 %v3729
  %v3731 = vpop.f32.mrf.mxu0
  %v3732 = vadd.f32 %v3699, %v3731
  %v3733 = vand.u32 %v3383, 4294901760
  %3734 = vmatmul.f32.gmra.mxu0 %v3733
  %v3735 = vpop.f32.mrf.mxu0
  %v3736 = vadd.f32 %v3705, %v3735
  %3737 = vdwg.mxu0
  %3738 = vmatpush.msra.mxu0 0.0
  %3739 = vmatpush.msra.mxu0 0.0
  %3740 = vmatpush.msra.mxu0 0.0
  %3741 = vmatpush.msra.mxu0 0.0
  %3742 = vmatpush.msra.mxu0 0.0
  %3743 = vmatpush.msra.mxu0 0.0
  %3744 = vmatpush.msra.mxu0 0.0
  %3745 = vmatpush.msra.mxu0 0.0
  %3746 = vmatpush.msra.mxu0 0.0
  %3747 = vmatpush.msra.mxu0 0.0
  %3748 = vmatpush.msra.mxu0 0.0
  %3749 = vmatpush.msra.mxu0 0.0
  %3750 = vmatpush.msra.mxu0 0.0
  %3751 = vmatpush.msra.mxu0 0.0
  %v3752 = vand.u32 %v3363, 4294901760
  %3753 = vmatpush.msra.mxu0 %v3752
  %v3754 = vand.u32 %v3243, 4294901760
  %3755 = vmatpush.msra.mxu0 %v3754
  %v3756 = vand.u32 %v3380, 4294901760
  %3757 = vmatmul.f32.gmra.mxu0 %v3756
  %v3758 = vpop.f32.mrf.mxu0
  %v3759 = vadd.f32 %v3732, %v3758
  %v3760 = vand.u32 %v3383, 4294901760
  %3761 = vmatmul.f32.gmra.mxu0 %v3760
  %v3762 = vpop.f32.mrf.mxu0
  %v3763 = vadd.f32 %v3736, %v3762
  %3764 = vdwg.mxu0
  %v3765 = vmax.f32 %v3569, 0.0
  %v3766 = vmax.f32 %v3759, 0.0
  %v3767 = vmax.f32 %v3573, 0.0
  %v3768 = vmax.f32 %v3763, 0.0
  %v3769 = vand.u32 2147483647, %v3767
  %vm3770 = vcmp.le.f32.partialorder %v3769, 0.7853982
  %vm3771 = vcmp.lt.s32.totalorder %v3767, 0
  %v3772 = vand.u32 %v3767, 2139095040
  %v3773 = vshrl.u32 %v3772, 23
  %v3774 = vsub.s32 %v3773, 127
  %v3775 = vand.u32 2147483647, %v3767
  %v3776 = vand.u32 %v3775, 8388607
  %v3777 = vor.u32 %v3776, 8388608
  %v3778 = vsub.s32 0, %v3777
  %v3779 = vadd.s32 %v3774, 1
  %vm3780 = vcmp.gt.s32.totalorder %v3779, 0
  %v3781 = vsel %vm3780, %v3779, 0
  %v3782 = vshrl.u32 %v3781, 5
  %v3783 = vand.u32 %v3781, 31
  %v3784 = vsub.s32 32, %v3783
  %v3785 = vshrl.u32 683565275, %v3784
  %v3786 = vshll.u32 683565275, %v3783
  %v3787 = vshrl.u32 2475754826, %v3784
  %v3788 = vor.u32 %v3786, %v3787
  %v3789 = vshll.u32 2475754826, %v3783
  %v3790 = vshrl.u32 2131351028, %v3784
  %v3791 = vor.u32 %v3789, %v3790
  %v3792 = vshll.u32 2131351028, %v3783
  %v3793 = vshrl.u32 2102212464, %v3784
  %v3794 = vor.u32 %v3792, %v3793
  %v3795 = vshll.u32 2102212464, %v3783
  %v3796 = vshrl.u32 920167782, %v3784
  %v3797 = vor.u32 %v3795, %v3796
  %v3798 = vshll.u32 920167782, %v3783
  %v3799 = vshrl.u32 1326507024, %v3784
  %v3800 = vor.u32 %v3798, %v3799
  %vm3801 = vcmp.lt.s32.totalorder %v3782, 1
  %vm3802 = vcmp.lt.s32.totalorder %v3782, 2
  %vm3803 = vcmp.lt.s32.totalorder %v3782, 3
  %vm3804 = vcmp.lt.s32.totalorder %v3782, 4
  %v3805 = vsel %vm3801, %v3785, %v3788
  %v3806 = vsel %vm3804, %v3794, 2102212464
  %v3807 = vsel %vm3803, %v3791, %v3806
  %v3808 = vsel %vm3802, %v3805, %v3807
  %v3809 = vsel %vm3801, %v3788, %v3791
  %v3810 = vsel %vm3804, %v3797, 920167782
  %v3811 = vsel %vm3803, %v3794, %v3810
  %v3812 = vsel %vm3802, %v3809, %v3811
  %v3813 = vsel %vm3801, %v3791, %v3794
  %v3814 = vsel %vm3804, %v3800, 1326507024
  %v3815 = vsel %vm3803, %v3797, %v3814
  %v3816 = vsel %vm3802, %v3813, %v3815
  %v3817 = vshll.u32 %v3777, 8
  %v3818 = vand.u32 %v3817, 65535
  %v3819 = vshrl.u32 %v3817, 16
  %v3820 = vand.u32 %v3816, 65535
  %v3821 = vshrl.u32 %v3816, 16
  %v3822 = vmul.u32 %v3818, %v3820
  %v3823 = vmul.u32 %v3818, %v3821
  %v3824 = vmul.u32 %v3819, %v3820
  %v3825 = vmul.u32 %v3819, %v3821
  %v3826 = vshll.u32 %v3823, 16
  %v3827 = vshrl.u32 %v3823, 16
  %v3828 = vshll.u32 %v3824, 16
  %v3829 = vshrl.u32 %v3824, 16
  %vm3830 = vc.u32 %v3822, %v3826
  %v3831 = vsel %vm3830, 1, 0
  %v3832 = vadd.s32 %v3822, %v3826
  %v3833 = vadd.s32 %v3825, %v3831
  %vm3834 = vc.u32 %v3832, %v3828
  %v3835 = vsel %vm3834, 1, 0
  %v3836 = vadd.s32 %v3832, %v3828
  %v3837 = vadd.s32 %v3833, %v3835
  %v3838 = vadd.s32 %v3837, %v3827
  %v3839 = vadd.s32 %v3838, %v3829
  %v3840 = vand.u32 %v3817, 65535
  %v3841 = vshrl.u32 %v3817, 16
  %v3842 = vand.u32 %v3812, 65535
  %v3843 = vshrl.u32 %v3812, 16
  %v3844 = vmul.u32 %v3840, %v3842
  %v3845 = vmul.u32 %v3840, %v3843
  %v3846 = vmul.u32 %v3841, %v3842
  %v3847 = vmul.u32 %v3841, %v3843
  %v3848 = vshll.u32 %v3845, 16
  %v3849 = vshrl.u32 %v3845, 16
  %v3850 = vshll.u32 %v3846, 16
  %v3851 = vshrl.u32 %v3846, 16
  %vm3852 = vc.u32 %v3844, %v3848
  %v3853 = vsel %vm3852, 1, 0
  %v3854 = vadd.s32 %v3844, %v3848
  %v3855 = vadd.s32 %v3847, %v3853
  %vm3856 = vc.u32 %v3854, %v3850
  %v3857 = vsel %vm3856, 1, 0
  %v3858 = vadd.s32 %v3854, %v3850
  %v3859 = vadd.s32 %v3855, %v3857
  %v3860 = vadd.s32 %v3859, %v3849
  %v3861 = vadd.s32 %v3860, %v3851
  %v3862 = vmul.u32 %v3817, %v3808
  %v3863 = vadd.s32 %v3839, %v3858
  %vm3864 = vc.u32 %v3839, %v3858
  %v3865 = vadd.s32 %v3861, 1
  %v3866 = vsel %vm3864, %v3865, %v3861
  %v3867 = vadd.s32 %v3862, %v3866
  %v3868 = vadd.s32 %v3867, 536870912
  %v3869 = vshrl.u32 %v3868, 30
  %v3870 = vshll.u32 %v3869, 30
  %v3871 = vsub.s32 %v3867, %v3870
  %vm3872 = vcmp.lt.s32.totalorder %v3871, 0
  %v3873 = vsub.s32 0, %v3871
  %v3874 = vsel %vm3872, %v3873, %v3871
  %v3875 = vclz %v3874
  %v3876 = vsub.s32 %v3875, 2
  %vm3877 = vcmp.gt.s32.totalorder 0, %v3876
  %v3878 = vsel %vm3877, 0, %v3876
  %v3879 = vsub.s32 32, %v3878
  %v3880 = vshll.u32 %v3871, %v3878
  %v3881 = vshrl.u32 %v3863, %v3879
  %v3882 = vor.u32 %v3880, %v3881
  %v3883 = vsub.s32 4294967266, %v3878
  %v3884 = vadd.s32 %v3883, 127
  %v3885 = vshll.u32 %v3884, 23
  %v3886 = vor.u32 4788187, %v3885
  %v3887 = vand.u32 2147483647, %v3886
  %v3889 = vcvt.s32.f32 %v3882
  %v3890 = vmul.f32 %v3889, %v3887
  %v3891 = vxor.u32 %v3890, 2147483648
  %v3892 = vsel %vm3771, %v3891, %v3890
  %v3893 = vsub.s32 4, %v3869
  %v3894 = vsel %vm3771, %v3893, %v3869
  %v3895 = vsel %vm3770, %v3767, %v3892
  %v3896 = vsel %vm3770, 0, %v3894
  %v3897 = vmul.f32 %v3895, %v3895
  %v3898 = vmul.f32 %v3897, -0.001358992
  %v3899 = vadd.f32 %v3898, 0.041655596
  %v3900 = vmul.f32 %v3897, %v3899
  %v3901 = vadd.f32 %v3900, -0.4999988
  %v3902 = vmul.f32 %v3897, %v3901
  %v3903 = vadd.f32 1.0, %v3902
  %v3904 = vmul.f32 %v3895, %v3895
  %v3905 = vmul.f32 %v3904, -0.00019511016
  %v3906 = vadd.f32 %v3905, 0.008332121
  %v3907 = vmul.f32 %v3904, %v3906
  %v3908 = vadd.f32 %v3907, -0.16666654
  %v3909 = vmul.f32 %v3904, %v3908
  %v3910 = vadd.f32 %v3909, 1.0
  %v3911 = vmul.f32 %v3910, %v3895
  %vm3912 = vweird.f32 %v3767
  %v3913 = vand.u32 %v3896, 3
  %vm3914 = vcmp.lt.s32.totalorder %v3913, 2
  %vm3915 = vcmp.eq.s32.totalorder %v3913, 0
  %v3916 = vxor.u32 %v3911, 2147483648
  %v3917 = vsel %vm3915, %v3903, %v3916
  %vm3918 = vcmp.eq.s32.totalorder %v3913, 2
  %v3919 = vxor.u32 %v3903, 2147483648
  %v3920 = vsel %vm3918, %v3919, %v3911
  %v3921 = vsel %vm3914, %v3917, %v3920
  %v3922 = vsel %vm3912, nan, %v3921
  %v3923 = vand.u32 2147483647, %v3768
  %vm3924 = vcmp.le.f32.partialorder %v3923, 0.7853982
  %vm3925 = vcmp.lt.s32.totalorder %v3768, 0
  %v3926 = vand.u32 %v3768, 2139095040
  %v3927 = vshrl.u32 %v3926, 23
  %v3928 = vsub.s32 %v3927, 127
  %v3929 = vand.u32 2147483647, %v3768
  %v3930 = vand.u32 %v3929, 8388607
  %v3931 = vor.u32 %v3930, 8388608
  %v3932 = vsub.s32 0, %v3931
  %v3933 = vadd.s32 %v3928, 1
  %vm3934 = vcmp.gt.s32.totalorder %v3933, 0
  %v3935 = vsel %vm3934, %v3933, 0
  %v3936 = vshrl.u32 %v3935, 5
  %v3937 = vand.u32 %v3935, 31
  %v3938 = vsub.s32 32, %v3937
  %v3939 = vshrl.u32 683565275, %v3938
  %v3940 = vshll.u32 683565275, %v3937
  %v3941 = vshrl.u32 2475754826, %v3938
  %v3942 = vor.u32 %v3940, %v3941
  %v3943 = vshll.u32 2475754826, %v3937
  %v3944 = vshrl.u32 2131351028, %v3938
  %v3945 = vor.u32 %v3943, %v3944
  %v3946 = vshll.u32 2131351028, %v3937
  %v3947 = vshrl.u32 2102212464, %v3938
  %v3948 = vor.u32 %v3946, %v3947
  %v3949 = vshll.u32 2102212464, %v3937
  %v3950 = vshrl.u32 920167782, %v3938
  %v3951 = vor.u32 %v3949, %v3950
  %v3952 = vshll.u32 920167782, %v3937
  %v3953 = vshrl.u32 1326507024, %v3938
  %v3954 = vor.u32 %v3952, %v3953
  %vm3955 = vcmp.lt.s32.totalorder %v3936, 1
  %vm3956 = vcmp.lt.s32.totalorder %v3936, 2
  %vm3957 = vcmp.lt.s32.totalorder %v3936, 3
  %vm3958 = vcmp.lt.s32.totalorder %v3936, 4
  %v3959 = vsel %vm3955, %v3939, %v3942
  %v3960 = vsel %vm3958, %v3948, 2102212464
  %v3961 = vsel %vm3957, %v3945, %v3960
  %v3962 = vsel %vm3956, %v3959, %v3961
  %v3963 = vsel %vm3955, %v3942, %v3945
  %v3964 = vsel %vm3958, %v3951, 920167782
  %v3965 = vsel %vm3957, %v3948, %v3964
  %v3966 = vsel %vm3956, %v3963, %v3965
  %v3967 = vsel %vm3955, %v3945, %v3948
  %v3968 = vsel %vm3958, %v3954, 1326507024
  %v3969 = vsel %vm3957, %v3951, %v3968
  %v3970 = vsel %vm3956, %v3967, %v3969
  %v3971 = vshll.u32 %v3931, 8
  %v3972 = vand.u32 %v3971, 65535
  %v3973 = vshrl.u32 %v3971, 16
  %v3974 = vand.u32 %v3970, 65535
  %v3975 = vshrl.u32 %v3970, 16
  %v3976 = vmul.u32 %v3972, %v3974
  %v3977 = vmul.u32 %v3972, %v3975
  %v3978 = vmul.u32 %v3973, %v3974
  %v3979 = vmul.u32 %v3973, %v3975
  %v3980 = vshll.u32 %v3977, 16
  %v3981 = vshrl.u32 %v3977, 16
  %v3982 = vshll.u32 %v3978, 16
  %v3983 = vshrl.u32 %v3978, 16
  %vm3984 = vc.u32 %v3976, %v3980
  %v3985 = vsel %vm3984, 1, 0
  %v3986 = vadd.s32 %v3976, %v3980
  %v3987 = vadd.s32 %v3979, %v3985
  %vm3988 = vc.u32 %v3986, %v3982
  %v3989 = vsel %vm3988, 1, 0
  %v3990 = vadd.s32 %v3986, %v3982
  %v3991 = vadd.s32 %v3987, %v3989
  %v3992 = vadd.s32 %v3991, %v3981
  %v3993 = vadd.s32 %v3992, %v3983
  %v3994 = vand.u32 %v3971, 65535
  %v3995 = vshrl.u32 %v3971, 16
  %v3996 = vand.u32 %v3966, 65535
  %v3997 = vshrl.u32 %v3966, 16
  %v3998 = vmul.u32 %v3994, %v3996
  %v3999 = vmul.u32 %v3994, %v3997
  %v4000 = vmul.u32 %v3995, %v3996
  %v4001 = vmul.u32 %v3995, %v3997
  %v4002 = vshll.u32 %v3999, 16
  %v4003 = vshrl.u32 %v3999, 16
  %v4004 = vshll.u32 %v4000, 16
  %v4005 = vshrl.u32 %v4000, 16
  %vm4006 = vc.u32 %v3998, %v4002
  %v4007 = vsel %vm4006, 1, 0
  %v4008 = vadd.s32 %v3998, %v4002
  %v4009 = vadd.s32 %v4001, %v4007
  %vm4010 = vc.u32 %v4008, %v4004
  %v4011 = vsel %vm4010, 1, 0
  %v4012 = vadd.s32 %v4008, %v4004
  %v4013 = vadd.s32 %v4009, %v4011
  %v4014 = vadd.s32 %v4013, %v4003
  %v4015 = vadd.s32 %v4014, %v4005
  %v4016 = vmul.u32 %v3971, %v3962
  %v4017 = vadd.s32 %v3993, %v4012
  %vm4018 = vc.u32 %v3993, %v4012
  %v4019 = vadd.s32 %v4015, 1
  %v4020 = vsel %vm4018, %v4019, %v4015
  %v4021 = vadd.s32 %v4016, %v4020
  %v4022 = vadd.s32 %v4021, 536870912
  %v4023 = vshrl.u32 %v4022, 30
  %v4024 = vshll.u32 %v4023, 30
  %v4025 = vsub.s32 %v4021, %v4024
  %vm4026 = vcmp.lt.s32.totalorder %v4025, 0
  %v4027 = vsub.s32 0, %v4025
  %v4028 = vsel %vm4026, %v4027, %v4025
  %v4029 = vclz %v4028
  %v4030 = vsub.s32 %v4029, 2
  %vm4031 = vcmp.gt.s32.totalorder 0, %v4030
  %v4032 = vsel %vm4031, 0, %v4030
  %v4033 = vsub.s32 32, %v4032
  %v4034 = vshll.u32 %v4025, %v4032
  %v4035 = vshrl.u32 %v4017, %v4033
  %v4036 = vor.u32 %v4034, %v4035
  %v4037 = vsub.s32 4294967266, %v4032
  %v4038 = vadd.s32 %v4037, 127
  %v4039 = vshll.u32 %v4038, 23
  %v4040 = vor.u32 4788187, %v4039
  %v4041 = vand.u32 2147483647, %v4040
  %v4043 = vcvt.s32.f32 %v4036
  %v4044 = vmul.f32 %v4043, %v4041
  %v4045 = vxor.u32 %v4044, 2147483648
  %v4046 = vsel %vm3925, %v4045, %v4044
  %v4047 = vsub.s32 4, %v4023
  %v4048 = vsel %vm3925, %v4047, %v4023
  %v4049 = vsel %vm3924, %v3768, %v4046
  %v4050 = vsel %vm3924, 0, %v4048
  %v4051 = vmul.f32 %v4049, %v4049
  %v4052 = vmul.f32 %v4051, -0.001358992
  %v4053 = vadd.f32 %v4052, 0.041655596
  %v4054 = vmul.f32 %v4051, %v4053
  %v4055 = vadd.f32 %v4054, -0.4999988
  %v4056 = vmul.f32 %v4051, %v4055
  %v4057 = vadd.f32 1.0, %v4056
  %v4058 = vmul.f32 %v4049, %v4049
  %v4059 = vmul.f32 %v4058, -0.00019511016
  %v4060 = vadd.f32 %v4059, 0.008332121
  %v4061 = vmul.f32 %v4058, %v4060
  %v4062 = vadd.f32 %v4061, -0.16666654
  %v4063 = vmul.f32 %v4058, %v4062
  %v4064 = vadd.f32 %v4063, 1.0
  %v4065 = vmul.f32 %v4064, %v4049
  %vm4066 = vweird.f32 %v3768
  %v4067 = vand.u32 %v4050, 3
  %vm4068 = vcmp.lt.s32.totalorder %v4067, 2
  %vm4069 = vcmp.eq.s32.totalorder %v4067, 0
  %v4070 = vxor.u32 %v4065, 2147483648
  %v4071 = vsel %vm4069, %v4057, %v4070
  %vm4072 = vcmp.eq.s32.totalorder %v4067, 2
  %v4073 = vxor.u32 %v4057, 2147483648
  %v4074 = vsel %vm4072, %v4073, %v4065
  %v4075 = vsel %vm4068, %v4071, %v4074
  %v4076 = vsel %vm4066, nan, %v4075
  %v4077 = vmul.f32 %v3765, %v3922
  %v4078 = vmul.f32 %v3766, %v4076
  %v4079 = vand.u32 2147483647, %v3767
  %vm4080 = vcmp.le.f32.partialorder %v4079, 0.7853982
  %vm4081 = vcmp.lt.s32.totalorder %v3767, 0
  %v4082 = vand.u32 %v3767, 2139095040
  %v4083 = vshrl.u32 %v4082, 23
  %v4084 = vsub.s32 %v4083, 127
  %v4085 = vand.u32 2147483647, %v3767
  %v4086 = vand.u32 %v4085, 8388607
  %v4087 = vor.u32 %v4086, 8388608
  %v4088 = vsub.s32 0, %v4087
  %v4089 = vadd.s32 %v4084, 1
  %vm4090 = vcmp.gt.s32.totalorder %v4089, 0
  %v4091 = vsel %vm4090, %v4089, 0
  %v4092 = vshrl.u32 %v4091, 5
  %v4093 = vand.u32 %v4091, 31
  %v4094 = vsub.s32 32, %v4093
  %v4095 = vshrl.u32 683565275, %v4094
  %v4096 = vshll.u32 683565275, %v4093
  %v4097 = vshrl.u32 2475754826, %v4094
  %v4098 = vor.u32 %v4096, %v4097
  %v4099 = vshll.u32 2475754826, %v4093
  %v4100 = vshrl.u32 2131351028, %v4094
  %v4101 = vor.u32 %v4099, %v4100
  %v4102 = vshll.u32 2131351028, %v4093
  %v4103 = vshrl.u32 2102212464, %v4094
  %v4104 = vor.u32 %v4102, %v4103
  %v4105 = vshll.u32 2102212464, %v4093
  %v4106 = vshrl.u32 920167782, %v4094
  %v4107 = vor.u32 %v4105, %v4106
  %v4108 = vshll.u32 920167782, %v4093
  %v4109 = vshrl.u32 1326507024, %v4094
  %v4110 = vor.u32 %v4108, %v4109
  %vm4111 = vcmp.lt.s32.totalorder %v4092, 1
  %vm4112 = vcmp.lt.s32.totalorder %v4092, 2
  %vm4113 = vcmp.lt.s32.totalorder %v4092, 3
  %vm4114 = vcmp.lt.s32.totalorder %v4092, 4
  %v4115 = vsel %vm4111, %v4095, %v4098
  %v4116 = vsel %vm4114, %v4104, 2102212464
  %v4117 = vsel %vm4113, %v4101, %v4116
  %v4118 = vsel %vm4112, %v4115, %v4117
  %v4119 = vsel %vm4111, %v4098, %v4101
  %v4120 = vsel %vm4114, %v4107, 920167782
  %v4121 = vsel %vm4113, %v4104, %v4120
  %v4122 = vsel %vm4112, %v4119, %v4121
  %v4123 = vsel %vm4111, %v4101, %v4104
  %v4124 = vsel %vm4114, %v4110, 1326507024
  %v4125 = vsel %vm4113, %v4107, %v4124
  %v4126 = vsel %vm4112, %v4123, %v4125
  %v4127 = vshll.u32 %v4087, 8
  %v4128 = vand.u32 %v4127, 65535
  %v4129 = vshrl.u32 %v4127, 16
  %v4130 = vand.u32 %v4126, 65535
  %v4131 = vshrl.u32 %v4126, 16
  %v4132 = vmul.u32 %v4128, %v4130
  %v4133 = vmul.u32 %v4128, %v4131
  %v4134 = vmul.u32 %v4129, %v4130
  %v4135 = vmul.u32 %v4129, %v4131
  %v4136 = vshll.u32 %v4133, 16
  %v4137 = vshrl.u32 %v4133, 16
  %v4138 = vshll.u32 %v4134, 16
  %v4139 = vshrl.u32 %v4134, 16
  %vm4140 = vc.u32 %v4132, %v4136
  %v4141 = vsel %vm4140, 1, 0
  %v4142 = vadd.s32 %v4132, %v4136
  %v4143 = vadd.s32 %v4135, %v4141
  %vm4144 = vc.u32 %v4142, %v4138
  %v4145 = vsel %vm4144, 1, 0
  %v4146 = vadd.s32 %v4142, %v4138
  %v4147 = vadd.s32 %v4143, %v4145
  %v4148 = vadd.s32 %v4147, %v4137
  %v4149 = vadd.s32 %v4148, %v4139
  %v4150 = vand.u32 %v4127, 65535
  %v4151 = vshrl.u32 %v4127, 16
  %v4152 = vand.u32 %v4122, 65535
  %v4153 = vshrl.u32 %v4122, 16
  %v4154 = vmul.u32 %v4150, %v4152
  %v4155 = vmul.u32 %v4150, %v4153
  %v4156 = vmul.u32 %v4151, %v4152
  %v4157 = vmul.u32 %v4151, %v4153
  %v4158 = vshll.u32 %v4155, 16
  %v4159 = vshrl.u32 %v4155, 16
  %v4160 = vshll.u32 %v4156, 16
  %v4161 = vshrl.u32 %v4156, 16
  %vm4162 = vc.u32 %v4154, %v4158
  %v4163 = vsel %vm4162, 1, 0
  %v4164 = vadd.s32 %v4154, %v4158
  %v4165 = vadd.s32 %v4157, %v4163
  %vm4166 = vc.u32 %v4164, %v4160
  %v4167 = vsel %vm4166, 1, 0
  %v4168 = vadd.s32 %v4164, %v4160
  %v4169 = vadd.s32 %v4165, %v4167
  %v4170 = vadd.s32 %v4169, %v4159
  %v4171 = vadd.s32 %v4170, %v4161
  %v4172 = vmul.u32 %v4127, %v4118
  %v4173 = vadd.s32 %v4149, %v4168
  %vm4174 = vc.u32 %v4149, %v4168
  %v4175 = vadd.s32 %v4171, 1
  %v4176 = vsel %vm4174, %v4175, %v4171
  %v4177 = vadd.s32 %v4172, %v4176
  %v4178 = vadd.s32 %v4177, 536870912
  %v4179 = vshrl.u32 %v4178, 30
  %v4180 = vshll.u32 %v4179, 30
  %v4181 = vsub.s32 %v4177, %v4180
  %vm4182 = vcmp.lt.s32.totalorder %v4181, 0
  %v4183 = vsub.s32 0, %v4181
  %v4184 = vsel %vm4182, %v4183, %v4181
  %v4185 = vclz %v4184
  %v4186 = vsub.s32 %v4185, 2
  %vm4187 = vcmp.gt.s32.totalorder 0, %v4186
  %v4188 = vsel %vm4187, 0, %v4186
  %v4189 = vsub.s32 32, %v4188
  %v4190 = vshll.u32 %v4181, %v4188
  %v4191 = vshrl.u32 %v4173, %v4189
  %v4192 = vor.u32 %v4190, %v4191
  %v4193 = vsub.s32 4294967266, %v4188
  %v4194 = vadd.s32 %v4193, 127
  %v4195 = vshll.u32 %v4194, 23
  %v4196 = vor.u32 4788187, %v4195
  %v4197 = vand.u32 2147483647, %v4196
  %v4199 = vcvt.s32.f32 %v4192
  %v4200 = vmul.f32 %v4199, %v4197
  %v4201 = vxor.u32 %v4200, 2147483648
  %v4202 = vsel %vm4081, %v4201, %v4200
  %v4203 = vsub.s32 4, %v4179
  %v4204 = vsel %vm4081, %v4203, %v4179
  %v4205 = vsel %vm4080, %v3767, %v4202
  %v4206 = vsel %vm4080, 0, %v4204
  %v4207 = vmul.f32 %v4205, %v4205
  %v4208 = vmul.f32 %v4207, -0.001358992
  %v4209 = vadd.f32 %v4208, 0.041655596
  %v4210 = vmul.f32 %v4207, %v4209
  %v4211 = vadd.f32 %v4210, -0.4999988
  %v4212 = vmul.f32 %v4207, %v4211
  %v4213 = vadd.f32 1.0, %v4212
  %v4214 = vmul.f32 %v4205, %v4205
  %v4215 = vmul.f32 %v4214, -0.00019511016
  %v4216 = vadd.f32 %v4215, 0.008332121
  %v4217 = vmul.f32 %v4214, %v4216
  %v4218 = vadd.f32 %v4217, -0.16666654
  %v4219 = vmul.f32 %v4214, %v4218
  %v4220 = vadd.f32 %v4219, 1.0
  %v4221 = vmul.f32 %v4220, %v4205
  %vm4222 = vweird.f32 %v3767
  %v4223 = vadd.s32 %v4206, 3
  %v4224 = vand.u32 %v4223, 3
  %vm4225 = vcmp.lt.s32.totalorder %v4224, 2
  %vm4226 = vcmp.eq.s32.totalorder %v4224, 0
  %v4227 = vxor.u32 %v4221, 2147483648
  %v4228 = vsel %vm4226, %v4213, %v4227
  %vm4229 = vcmp.eq.s32.totalorder %v4224, 2
  %v4230 = vxor.u32 %v4213, 2147483648
  %v4231 = vsel %vm4229, %v4230, %v4221
  %v4232 = vsel %vm4225, %v4228, %v4231
  %v4233 = vsel %vm4222, nan, %v4232
  %v4234 = vand.u32 2147483647, %v3768
  %vm4235 = vcmp.le.f32.partialorder %v4234, 0.7853982
  %vm4236 = vcmp.lt.s32.totalorder %v3768, 0
  %v4237 = vand.u32 %v3768, 2139095040
  %v4238 = vshrl.u32 %v4237, 23
  %v4239 = vsub.s32 %v4238, 127
  %v4240 = vand.u32 2147483647, %v3768
  %v4241 = vand.u32 %v4240, 8388607
  %v4242 = vor.u32 %v4241, 8388608
  %v4243 = vsub.s32 0, %v4242
  %v4244 = vadd.s32 %v4239, 1
  %vm4245 = vcmp.gt.s32.totalorder %v4244, 0
  %v4246 = vsel %vm4245, %v4244, 0
  %v4247 = vshrl.u32 %v4246, 5
  %v4248 = vand.u32 %v4246, 31
  %v4249 = vsub.s32 32, %v4248
  %v4250 = vshrl.u32 683565275, %v4249
  %v4251 = vshll.u32 683565275, %v4248
  %v4252 = vshrl.u32 2475754826, %v4249
  %v4253 = vor.u32 %v4251, %v4252
  %v4254 = vshll.u32 2475754826, %v4248
  %v4255 = vshrl.u32 2131351028, %v4249
  %v4256 = vor.u32 %v4254, %v4255
  %v4257 = vshll.u32 2131351028, %v4248
  %v4258 = vshrl.u32 2102212464, %v4249
  %v4259 = vor.u32 %v4257, %v4258
  %v4260 = vshll.u32 2102212464, %v4248
  %v4261 = vshrl.u32 920167782, %v4249
  %v4262 = vor.u32 %v4260, %v4261
  %v4263 = vshll.u32 920167782, %v4248
  %v4264 = vshrl.u32 1326507024, %v4249
  %v4265 = vor.u32 %v4263, %v4264
  %vm4266 = vcmp.lt.s32.totalorder %v4247, 1
  %vm4267 = vcmp.lt.s32.totalorder %v4247, 2
  %vm4268 = vcmp.lt.s32.totalorder %v4247, 3
  %vm4269 = vcmp.lt.s32.totalorder %v4247, 4
  %v4270 = vsel %vm4266, %v4250, %v4253
  %v4271 = vsel %vm4269, %v4259, 2102212464
  %v4272 = vsel %vm4268, %v4256, %v4271
  %v4273 = vsel %vm4267, %v4270, %v4272
  %v4274 = vsel %vm4266, %v4253, %v4256
  %v4275 = vsel %vm4269, %v4262, 920167782
  %v4276 = vsel %vm4268, %v4259, %v4275
  %v4277 = vsel %vm4267, %v4274, %v4276
  %v4278 = vsel %vm4266, %v4256, %v4259
  %v4279 = vsel %vm4269, %v4265, 1326507024
  %v4280 = vsel %vm4268, %v4262, %v4279
  %v4281 = vsel %vm4267, %v4278, %v4280
  %v4282 = vshll.u32 %v4242, 8
  %v4283 = vand.u32 %v4282, 65535
  %v4284 = vshrl.u32 %v4282, 16
  %v4285 = vand.u32 %v4281, 65535
  %v4286 = vshrl.u32 %v4281, 16
  %v4287 = vmul.u32 %v4283, %v4285
  %v4288 = vmul.u32 %v4283, %v4286
  %v4289 = vmul.u32 %v4284, %v4285
  %v4290 = vmul.u32 %v4284, %v4286
  %v4291 = vshll.u32 %v4288, 16
  %v4292 = vshrl.u32 %v4288, 16
  %v4293 = vshll.u32 %v4289, 16
  %v4294 = vshrl.u32 %v4289, 16
  %vm4295 = vc.u32 %v4287, %v4291
  %v4296 = vsel %vm4295, 1, 0
  %v4297 = vadd.s32 %v4287, %v4291
  %v4298 = vadd.s32 %v4290, %v4296
  %vm4299 = vc.u32 %v4297, %v4293
  %v4300 = vsel %vm4299, 1, 0
  %v4301 = vadd.s32 %v4297, %v4293
  %v4302 = vadd.s32 %v4298, %v4300
  %v4303 = vadd.s32 %v4302, %v4292
  %v4304 = vadd.s32 %v4303, %v4294
  %v4305 = vand.u32 %v4282, 65535
  %v4306 = vshrl.u32 %v4282, 16
  %v4307 = vand.u32 %v4277, 65535
  %v4308 = vshrl.u32 %v4277, 16
  %v4309 = vmul.u32 %v4305, %v4307
  %v4310 = vmul.u32 %v4305, %v4308
  %v4311 = vmul.u32 %v4306, %v4307
  %v4312 = vmul.u32 %v4306, %v4308
  %v4313 = vshll.u32 %v4310, 16
  %v4314 = vshrl.u32 %v4310, 16
  %v4315 = vshll.u32 %v4311, 16
  %v4316 = vshrl.u32 %v4311, 16
  %vm4317 = vc.u32 %v4309, %v4313
  %v4318 = vsel %vm4317, 1, 0
  %v4319 = vadd.s32 %v4309, %v4313
  %v4320 = vadd.s32 %v4312, %v4318
  %vm4321 = vc.u32 %v4319, %v4315
  %v4322 = vsel %vm4321, 1, 0
  %v4323 = vadd.s32 %v4319, %v4315
  %v4324 = vadd.s32 %v4320, %v4322
  %v4325 = vadd.s32 %v4324, %v4314
  %v4326 = vadd.s32 %v4325, %v4316
  %v4327 = vmul.u32 %v4282, %v4273
  %v4328 = vadd.s32 %v4304, %v4323
  %vm4329 = vc.u32 %v4304, %v4323
  %v4330 = vadd.s32 %v4326, 1
  %v4331 = vsel %vm4329, %v4330, %v4326
  %v4332 = vadd.s32 %v4327, %v4331
  %v4333 = vadd.s32 %v4332, 536870912
  %v4334 = vshrl.u32 %v4333, 30
  %v4335 = vshll.u32 %v4334, 30
  %v4336 = vsub.s32 %v4332, %v4335
  %vm4337 = vcmp.lt.s32.totalorder %v4336, 0
  %v4338 = vsub.s32 0, %v4336
  %v4339 = vsel %vm4337, %v4338, %v4336
  %v4340 = vclz %v4339
  %v4341 = vsub.s32 %v4340, 2
  %vm4342 = vcmp.gt.s32.totalorder 0, %v4341
  %v4343 = vsel %vm4342, 0, %v4341
  %v4344 = vsub.s32 32, %v4343
  %v4345 = vshll.u32 %v4336, %v4343
  %v4346 = vshrl.u32 %v4328, %v4344
  %v4347 = vor.u32 %v4345, %v4346
  %v4348 = vsub.s32 4294967266, %v4343
  %v4349 = vadd.s32 %v4348, 127
  %v4350 = vshll.u32 %v4349, 23
  %v4351 = vor.u32 4788187, %v4350
  %v4352 = vand.u32 2147483647, %v4351
  %v4354 = vcvt.s32.f32 %v4347
  %v4355 = vmul.f32 %v4354, %v4352
  %v4356 = vxor.u32 %v4355, 2147483648
  %v4357 = vsel %vm4236, %v4356, %v4355
  %v4358 = vsub.s32 4, %v4334
  %v4359 = vsel %vm4236, %v4358, %v4334
  %v4360 = vsel %vm4235, %v3768, %v4357
  %v4361 = vsel %vm4235, 0, %v4359
  %v4362 = vmul.f32 %v4360, %v4360
  %v4363 = vmul.f32 %v4362, -0.001358992
  %v4364 = vadd.f32 %v4363, 0.041655596
  %v4365 = vmul.f32 %v4362, %v4364
  %v4366 = vadd.f32 %v4365, -0.4999988
  %v4367 = vmul.f32 %v4362, %v4366
  %v4368 = vadd.f32 1.0, %v4367
  %v4369 = vmul.f32 %v4360, %v4360
  %v4370 = vmul.f32 %v4369, -0.00019511016
  %v4371 = vadd.f32 %v4370, 0.008332121
  %v4372 = vmul.f32 %v4369, %v4371
  %v4373 = vadd.f32 %v4372, -0.16666654
  %v4374 = vmul.f32 %v4369, %v4373
  %v4375 = vadd.f32 %v4374, 1.0
  %v4376 = vmul.f32 %v4375, %v4360
  %vm4377 = vweird.f32 %v3768
  %v4378 = vadd.s32 %v4361, 3
  %v4379 = vand.u32 %v4378, 3
  %vm4380 = vcmp.lt.s32.totalorder %v4379, 2
  %vm4381 = vcmp.eq.s32.totalorder %v4379, 0
  %v4382 = vxor.u32 %v4376, 2147483648
  %v4383 = vsel %vm4381, %v4368, %v4382
  %vm4384 = vcmp.eq.s32.totalorder %v4379, 2
  %v4385 = vxor.u32 %v4368, 2147483648
  %v4386 = vsel %vm4384, %v4385, %v4376
  %v4387 = vsel %vm4380, %v4383, %v4386
  %v4388 = vsel %vm4377, nan, %v4387
  %v4389 = vmul.f32 %v3765, %v4233
  %v4390 = vmul.f32 %v3766, %v4388
  %s4391 = smul.u32 8, 64
  %s4392 = smul.u32 %s4391, 2
  %s4393 = sshll.u32 %s4392, 4
  %4394 = dma.done %s35, %s4393
  %v4395 = vld [vmem:[#allocation3] sm:$0xff]
  %v4396 = vld [vmem:[#allocation3 + $0x8] sm:$0xff]
  %v4397 = vld [vmem:[#allocation3 + $0x10] sm:$0xff]
  %v4398 = vld [vmem:[#allocation3 + $0x18] sm:$0xff]
  %v4399 = vld [vmem:[#allocation3 + $0x20] sm:$0xff]
  %v4400 = vld [vmem:[#allocation3 + $0x28] sm:$0xff]
  %v4401 = vld [vmem:[#allocation3 + $0x30] sm:$0xff]
  %v4402 = vld [vmem:[#allocation3 + $0x38] sm:$0xff]
  %v4403 = vld [vmem:[#allocation3 + $0x40] sm:$0xff]
  %v4404 = vld [vmem:[#allocation3 + $0x48] sm:$0xff]
  %v4405 = vld [vmem:[#allocation3 + $0x50] sm:$0xff]
  %v4406 = vld [vmem:[#allocation3 + $0x58] sm:$0xff]
  %v4407 = vld [vmem:[#allocation3 + $0x60] sm:$0xff]
  %v4408 = vld [vmem:[#allocation3 + $0x68] sm:$0xff]
  %v4409 = vld [vmem:[#allocation3 + $0x70] sm:$0xff]
  %v4410 = vld [vmem:[#allocation3 + $0x78] sm:$0xff]
  %v4411 = vld [vmem:[#allocation3 + $0x80] sm:$0xff]
  %v4412 = vld [vmem:[#allocation3 + $0x88] sm:$0xff]
  %v4413 = vld [vmem:[#allocation3 + $0x90] sm:$0xff]
  %v4414 = vld [vmem:[#allocation3 + $0x98] sm:$0xff]
  %v4415 = vld [vmem:[#allocation3 + $0xa0] sm:$0xff]
  %v4416 = vld [vmem:[#allocation3 + $0xa8] sm:$0xff]
  %v4417 = vld [vmem:[#allocation3 + $0xb0] sm:$0xff]
  %v4418 = vld [vmem:[#allocation3 + $0xb8] sm:$0xff]
  %v4419 = vld [vmem:[#allocation3 + $0xc0] sm:$0xff]
  %v4420 = vld [vmem:[#allocation3 + $0xc8] sm:$0xff]
  %v4421 = vld [vmem:[#allocation3 + $0xd0] sm:$0xff]
  %v4422 = vld [vmem:[#allocation3 + $0xd8] sm:$0xff]
  %v4423 = vld [vmem:[#allocation3 + $0xe0] sm:$0xff]
  %v4424 = vld [vmem:[#allocation3 + $0xe8] sm:$0xff]
  %v4425 = vld [vmem:[#allocation3 + $0xf0] sm:$0xff]
  %v4426 = vld [vmem:[#allocation3 + $0xf8] sm:$0xff]
  %v4427 = vld [vmem:[#allocation3 + $0x100] sm:$0xff]
  %v4428 = vld [vmem:[#allocation3 + $0x108] sm:$0xff]
  %v4429 = vld [vmem:[#allocation3 + $0x110] sm:$0xff]
  %v4430 = vld [vmem:[#allocation3 + $0x118] sm:$0xff]
  %v4431 = vld [vmem:[#allocation3 + $0x120] sm:$0xff]
  %v4432 = vld [vmem:[#allocation3 + $0x128] sm:$0xff]
  %v4433 = vld [vmem:[#allocation3 + $0x130] sm:$0xff]
  %v4434 = vld [vmem:[#allocation3 + $0x138] sm:$0xff]
  %v4435 = vld [vmem:[#allocation3 + $0x140] sm:$0xff]
  %v4436 = vld [vmem:[#allocation3 + $0x148] sm:$0xff]
  %v4437 = vld [vmem:[#allocation3 + $0x150] sm:$0xff]
  %v4438 = vld [vmem:[#allocation3 + $0x158] sm:$0xff]
  %v4439 = vld [vmem:[#allocation3 + $0x160] sm:$0xff]
  %v4440 = vld [vmem:[#allocation3 + $0x168] sm:$0xff]
  %v4441 = vld [vmem:[#allocation3 + $0x170] sm:$0xff]
  %v4442 = vld [vmem:[#allocation3 + $0x178] sm:$0xff]
  %v4443 = vld [vmem:[#allocation3 + $0x180] sm:$0xff]
  %v4444 = vld [vmem:[#allocation3 + $0x188] sm:$0xff]
  %v4445 = vld [vmem:[#allocation3 + $0x190] sm:$0xff]
  %v4446 = vld [vmem:[#allocation3 + $0x198] sm:$0xff]
  %v4447 = vld [vmem:[#allocation3 + $0x1a0] sm:$0xff]
  %v4448 = vld [vmem:[#allocation3 + $0x1a8] sm:$0xff]
  %v4449 = vld [vmem:[#allocation3 + $0x1b0] sm:$0xff]
  %v4450 = vld [vmem:[#allocation3 + $0x1b8] sm:$0xff]
  %v4451 = vld [vmem:[#allocation3 + $0x1c0] sm:$0xff]
  %v4452 = vld [vmem:[#allocation3 + $0x1c8] sm:$0xff]
  %v4453 = vld [vmem:[#allocation3 + $0x1d0] sm:$0xff]
  %v4454 = vld [vmem:[#allocation3 + $0x1d8] sm:$0xff]
  %v4455 = vld [vmem:[#allocation3 + $0x1e0] sm:$0xff]
  %v4456 = vld [vmem:[#allocation3 + $0x1e8] sm:$0xff]
  %v4457 = vld [vmem:[#allocation3 + $0x1f0] sm:$0xff]
  %v4458 = vld [vmem:[#allocation3 + $0x1f8] sm:$0xff]
  %v4459 = vld [vmem:[#allocation3 + $0x200] sm:$0xff]
  %v4460 = vld [vmem:[#allocation3 + $0x208] sm:$0xff]
  %v4461 = vld [vmem:[#allocation3 + $0x210] sm:$0xff]
  %v4462 = vld [vmem:[#allocation3 + $0x218] sm:$0xff]
  %v4463 = vld [vmem:[#allocation3 + $0x220] sm:$0xff]
  %v4464 = vld [vmem:[#allocation3 + $0x228] sm:$0xff]
  %v4465 = vld [vmem:[#allocation3 + $0x230] sm:$0xff]
  %v4466 = vld [vmem:[#allocation3 + $0x238] sm:$0xff]
  %v4467 = vld [vmem:[#allocation3 + $0x240] sm:$0xff]
  %v4468 = vld [vmem:[#allocation3 + $0x248] sm:$0xff]
  %v4469 = vld [vmem:[#allocation3 + $0x250] sm:$0xff]
  %v4470 = vld [vmem:[#allocation3 + $0x258] sm:$0xff]
  %v4471 = vld [vmem:[#allocation3 + $0x260] sm:$0xff]
  %v4472 = vld [vmem:[#allocation3 + $0x268] sm:$0xff]
  %v4473 = vld [vmem:[#allocation3 + $0x270] sm:$0xff]
  %v4474 = vld [vmem:[#allocation3 + $0x278] sm:$0xff]
  %v4475 = vld [vmem:[#allocation3 + $0x280] sm:$0xff]
  %v4476 = vld [vmem:[#allocation3 + $0x288] sm:$0xff]
  %v4477 = vld [vmem:[#allocation3 + $0x290] sm:$0xff]
  %v4478 = vld [vmem:[#allocation3 + $0x298] sm:$0xff]
  %v4479 = vld [vmem:[#allocation3 + $0x2a0] sm:$0xff]
  %v4480 = vld [vmem:[#allocation3 + $0x2a8] sm:$0xff]
  %v4481 = vld [vmem:[#allocation3 + $0x2b0] sm:$0xff]
  %v4482 = vld [vmem:[#allocation3 + $0x2b8] sm:$0xff]
  %v4483 = vld [vmem:[#allocation3 + $0x2c0] sm:$0xff]
  %v4484 = vld [vmem:[#allocation3 + $0x2c8] sm:$0xff]
  %v4485 = vld [vmem:[#allocation3 + $0x2d0] sm:$0xff]
  %v4486 = vld [vmem:[#allocation3 + $0x2d8] sm:$0xff]
  %v4487 = vld [vmem:[#allocation3 + $0x2e0] sm:$0xff]
  %v4488 = vld [vmem:[#allocation3 + $0x2e8] sm:$0xff]
  %v4489 = vld [vmem:[#allocation3 + $0x2f0] sm:$0xff]
  %v4490 = vld [vmem:[#allocation3 + $0x2f8] sm:$0xff]
  %v4491 = vld [vmem:[#allocation3 + $0x300] sm:$0xff]
  %v4492 = vld [vmem:[#allocation3 + $0x308] sm:$0xff]
  %v4493 = vld [vmem:[#allocation3 + $0x310] sm:$0xff]
  %v4494 = vld [vmem:[#allocation3 + $0x318] sm:$0xff]
  %v4495 = vld [vmem:[#allocation3 + $0x320] sm:$0xff]
  %v4496 = vld [vmem:[#allocation3 + $0x328] sm:$0xff]
  %v4497 = vld [vmem:[#allocation3 + $0x330] sm:$0xff]
  %v4498 = vld [vmem:[#allocation3 + $0x338] sm:$0xff]
  %v4499 = vld [vmem:[#allocation3 + $0x340] sm:$0xff]
  %v4500 = vld [vmem:[#allocation3 + $0x348] sm:$0xff]
  %v4501 = vld [vmem:[#allocation3 + $0x350] sm:$0xff]
  %v4502 = vld [vmem:[#allocation3 + $0x358] sm:$0xff]
  %v4503 = vld [vmem:[#allocation3 + $0x360] sm:$0xff]
  %v4504 = vld [vmem:[#allocation3 + $0x368] sm:$0xff]
  %v4505 = vld [vmem:[#allocation3 + $0x370] sm:$0xff]
  %v4506 = vld [vmem:[#allocation3 + $0x378] sm:$0xff]
  %v4507 = vld [vmem:[#allocation3 + $0x380] sm:$0xff]
  %v4508 = vld [vmem:[#allocation3 + $0x388] sm:$0xff]
  %v4509 = vld [vmem:[#allocation3 + $0x390] sm:$0xff]
  %v4510 = vld [vmem:[#allocation3 + $0x398] sm:$0xff]
  %v4511 = vld [vmem:[#allocation3 + $0x3a0] sm:$0xff]
  %v4512 = vld [vmem:[#allocation3 + $0x3a8] sm:$0xff]
  %v4513 = vld [vmem:[#allocation3 + $0x3b0] sm:$0xff]
  %v4514 = vld [vmem:[#allocation3 + $0x3b8] sm:$0xff]
  %v4515 = vld [vmem:[#allocation3 + $0x3c0] sm:$0xff]
  %v4516 = vld [vmem:[#allocation3 + $0x3c8] sm:$0xff]
  %v4517 = vld [vmem:[#allocation3 + $0x3d0] sm:$0xff]
  %v4518 = vld [vmem:[#allocation3 + $0x3d8] sm:$0xff]
  %v4519 = vld [vmem:[#allocation3 + $0x3e0] sm:$0xff]
  %v4520 = vld [vmem:[#allocation3 + $0x3e8] sm:$0xff]
  %v4521 = vld [vmem:[#allocation3 + $0x3f0] sm:$0xff]
  %v4522 = vld [vmem:[#allocation3 + $0x3f8] sm:$0xff]
  %v4523 = vand.u32 %v4425, 4294901760
  %4524 = vmatpush.msra.mxu0 %v4523
  %v4525 = vand.u32 %v4423, 4294901760
  %4526 = vmatpush.msra.mxu0 %v4525
  %v4527 = vand.u32 %v4421, 4294901760
  %4528 = vmatpush.msra.mxu0 %v4527
  %v4529 = vand.u32 %v4419, 4294901760
  %4530 = vmatpush.msra.mxu0 %v4529
  %v4531 = vand.u32 %v4417, 4294901760
  %4532 = vmatpush.msra.mxu0 %v4531
  %v4533 = vand.u32 %v4415, 4294901760
  %4534 = vmatpush.msra.mxu0 %v4533
  %v4535 = vand.u32 %v4413, 4294901760
  %4536 = vmatpush.msra.mxu0 %v4535
  %v4537 = vand.u32 %v4411, 4294901760
  %4538 = vmatpush.msra.mxu0 %v4537
  %v4539 = vand.u32 %v4409, 4294901760
  %4540 = vmatpush.msra.mxu0 %v4539
  %v4541 = vand.u32 %v4407, 4294901760
  %4542 = vmatpush.msra.mxu0 %v4541
  %v4543 = vand.u32 %v4405, 4294901760
  %4544 = vmatpush.msra.mxu0 %v4543
  %v4545 = vand.u32 %v4403, 4294901760
  %4546 = vmatpush.msra.mxu0 %v4545
  %v4547 = vand.u32 %v4401, 4294901760
  %4548 = vmatpush.msra.mxu0 %v4547
  %v4549 = vand.u32 %v4399, 4294901760
  %4550 = vmatpush.msra.mxu0 %v4549
  %v4551 = vand.u32 %v4397, 4294901760
  %4552 = vmatpush.msra.mxu0 %v4551
  %v4553 = vand.u32 %v4395, 4294901760
  %4554 = vmatpush.msra.mxu0 %v4553
  %v4555 = vand.u32 %v4077, 4294901760
  %v4556 = vsub.f32 %v4077, %v4555
  %v4557 = vand.u32 %v4556, 4294901760
  %v4558 = vsub.f32 %v4556, %v4557
  %v4559 = vand.u32 %v4558, 4294901760
  %4560 = vmatmul.f32.gmra.mxu0 %v4559
  %v4561 = vpop.f32.mrf.mxu0
  %v4562 = vadd.f32 0.0, %v4561
  %4563 = vdwg.mxu0
  %v4564 = vand.u32 %v4425, 4294901760
  %v4565 = vsub.f32 %v4425, %v4564
  %v4566 = vand.u32 %v4565, 4294901760
  %v4567 = vsub.f32 %v4565, %v4566
  %v4568 = vand.u32 %v4567, 4294901760
  %4569 = vmatpush.msra.mxu0 %v4568
  %v4570 = vand.u32 %v4423, 4294901760
  %v4571 = vsub.f32 %v4423, %v4570
  %v4572 = vand.u32 %v4571, 4294901760
  %v4573 = vsub.f32 %v4571, %v4572
  %v4574 = vand.u32 %v4573, 4294901760
  %4575 = vmatpush.msra.mxu0 %v4574
  %v4576 = vand.u32 %v4421, 4294901760
  %v4577 = vsub.f32 %v4421, %v4576
  %v4578 = vand.u32 %v4577, 4294901760
  %v4579 = vsub.f32 %v4577, %v4578
  %v4580 = vand.u32 %v4579, 4294901760
  %4581 = vmatpush.msra.mxu0 %v4580
  %v4582 = vand.u32 %v4419, 4294901760
  %v4583 = vsub.f32 %v4419, %v4582
  %v4584 = vand.u32 %v4583, 4294901760
  %v4585 = vsub.f32 %v4583, %v4584
  %v4586 = vand.u32 %v4585, 4294901760
  %4587 = vmatpush.msra.mxu0 %v4586
  %v4588 = vand.u32 %v4417, 4294901760
  %v4589 = vsub.f32 %v4417, %v4588
  %v4590 = vand.u32 %v4589, 4294901760
  %v4591 = vsub.f32 %v4589, %v4590
  %v4592 = vand.u32 %v4591, 4294901760
  %4593 = vmatpush.msra.mxu0 %v4592
  %v4594 = vand.u32 %v4415, 4294901760
  %v4595 = vsub.f32 %v4415, %v4594
  %v4596 = vand.u32 %v4595, 4294901760
  %v4597 = vsub.f32 %v4595, %v4596
  %v4598 = vand.u32 %v4597, 4294901760
  %4599 = vmatpush.msra.mxu0 %v4598
  %v4600 = vand.u32 %v4413, 4294901760
  %v4601 = vsub.f32 %v4413, %v4600
  %v4602 = vand.u32 %v4601, 4294901760
  %v4603 = vsub.f32 %v4601, %v4602
  %v4604 = vand.u32 %v4603, 4294901760
  %4605 = vmatpush.msra.mxu0 %v4604
  %v4606 = vand.u32 %v4411, 4294901760
  %v4607 = vsub.f32 %v4411, %v4606
  %v4608 = vand.u32 %v4607, 4294901760
  %v4609 = vsub.f32 %v4607, %v4608
  %v4610 = vand.u32 %v4609, 4294901760
  %4611 = vmatpush.msra.mxu0 %v4610
  %v4612 = vand.u32 %v4409, 4294901760
  %v4613 = vsub.f32 %v4409, %v4612
  %v4614 = vand.u32 %v4613, 4294901760
  %v4615 = vsub.f32 %v4613, %v4614
  %v4616 = vand.u32 %v4615, 4294901760
  %4617 = vmatpush.msra.mxu0 %v4616
  %v4618 = vand.u32 %v4407, 4294901760
  %v4619 = vsub.f32 %v4407, %v4618
  %v4620 = vand.u32 %v4619, 4294901760
  %v4621 = vsub.f32 %v4619, %v4620
  %v4622 = vand.u32 %v4621, 4294901760
  %4623 = vmatpush.msra.mxu0 %v4622
  %v4624 = vand.u32 %v4405, 4294901760
  %v4625 = vsub.f32 %v4405, %v4624
  %v4626 = vand.u32 %v4625, 4294901760
  %v4627 = vsub.f32 %v4625, %v4626
  %v4628 = vand.u32 %v4627, 4294901760
  %4629 = vmatpush.msra.mxu0 %v4628
  %v4630 = vand.u32 %v4403, 4294901760
  %v4631 = vsub.f32 %v4403, %v4630
  %v4632 = vand.u32 %v4631, 4294901760
  %v4633 = vsub.f32 %v4631, %v4632
  %v4634 = vand.u32 %v4633, 4294901760
  %4635 = vmatpush.msra.mxu0 %v4634
  %v4636 = vand.u32 %v4401, 4294901760
  %v4637 = vsub.f32 %v4401, %v4636
  %v4638 = vand.u32 %v4637, 4294901760
  %v4639 = vsub.f32 %v4637, %v4638
  %v4640 = vand.u32 %v4639, 4294901760
  %4641 = vmatpush.msra.mxu0 %v4640
  %v4642 = vand.u32 %v4399, 4294901760
  %v4643 = vsub.f32 %v4399, %v4642
  %v4644 = vand.u32 %v4643, 4294901760
  %v4645 = vsub.f32 %v4643, %v4644
  %v4646 = vand.u32 %v4645, 4294901760
  %4647 = vmatpush.msra.mxu0 %v4646
  %v4648 = vand.u32 %v4397, 4294901760
  %v4649 = vsub.f32 %v4397, %v4648
  %v4650 = vand.u32 %v4649, 4294901760
  %v4651 = vsub.f32 %v4649, %v4650
  %v4652 = vand.u32 %v4651, 4294901760
  %4653 = vmatpush.msra.mxu0 %v4652
  %v4654 = vand.u32 %v4395, 4294901760
  %v4655 = vsub.f32 %v4395, %v4654
  %v4656 = vand.u32 %v4655, 4294901760
  %v4657 = vsub.f32 %v4655, %v4656
  %v4658 = vand.u32 %v4657, 4294901760
  %4659 = vmatpush.msra.mxu0 %v4658
  %v4660 = vand.u32 %v4077, 4294901760
  %4661 = vmatmul.f32.gmra.mxu0 %v4660
  %v4662 = vpop.f32.mrf.mxu0
  %v4663 = vadd.f32 %v4562, %v4662
  %4664 = vdwg.mxu0
  %v4665 = vand.u32 %v4425, 4294901760
  %v4666 = vsub.f32 %v4425, %v4665
  %4667 = vmatpush.msra.mxu0 %v4666
  %v4668 = vand.u32 %v4423, 4294901760
  %v4669 = vsub.f32 %v4423, %v4668
  %4670 = vmatpush.msra.mxu0 %v4669
  %v4671 = vand.u32 %v4421, 4294901760
  %v4672 = vsub.f32 %v4421, %v4671
  %4673 = vmatpush.msra.mxu0 %v4672
  %v4674 = vand.u32 %v4419, 4294901760
  %v4675 = vsub.f32 %v4419, %v4674
  %4676 = vmatpush.msra.mxu0 %v4675
  %v4677 = vand.u32 %v4417, 4294901760
  %v4678 = vsub.f32 %v4417, %v4677
  %4679 = vmatpush.msra.mxu0 %v4678
  %v4680 = vand.u32 %v4415, 4294901760
  %v4681 = vsub.f32 %v4415, %v4680
  %4682 = vmatpush.msra.mxu0 %v4681
  %v4683 = vand.u32 %v4413, 4294901760
  %v4684 = vsub.f32 %v4413, %v4683
  %4685 = vmatpush.msra.mxu0 %v4684
  %v4686 = vand.u32 %v4411, 4294901760
  %v4687 = vsub.f32 %v4411, %v4686
  %4688 = vmatpush.msra.mxu0 %v4687
  %v4689 = vand.u32 %v4409, 4294901760
  %v4690 = vsub.f32 %v4409, %v4689
  %4691 = vmatpush.msra.mxu0 %v4690
  %v4692 = vand.u32 %v4407, 4294901760
  %v4693 = vsub.f32 %v4407, %v4692
  %4694 = vmatpush.msra.mxu0 %v4693
  %v4695 = vand.u32 %v4405, 4294901760
  %v4696 = vsub.f32 %v4405, %v4695
  %4697 = vmatpush.msra.mxu0 %v4696
  %v4698 = vand.u32 %v4403, 4294901760
  %v4699 = vsub.f32 %v4403, %v4698
  %4700 = vmatpush.msra.mxu0 %v4699
  %v4701 = vand.u32 %v4401, 4294901760
  %v4702 = vsub.f32 %v4401, %v4701
  %4703 = vmatpush.msra.mxu0 %v4702
  %v4704 = vand.u32 %v4399, 4294901760
  %v4705 = vsub.f32 %v4399, %v4704
  %4706 = vmatpush.msra.mxu0 %v4705
  %v4707 = vand.u32 %v4397, 4294901760
  %v4708 = vsub.f32 %v4397, %v4707
  %4709 = vmatpush.msra.mxu0 %v4708
  %v4710 = vand.u32 %v4395, 4294901760
  %v4711 = vsub.f32 %v4395, %v4710
  %4712 = vmatpush.msra.mxu0 %v4711
  %v4713 = vand.u32 %v4077, 4294901760
  %v4714 = vsub.f32 %v4077, %v4713
  %4715 = vmatmul.f32.gmra.mxu0 %v4714
  %v4716 = vpop.f32.mrf.mxu0
  %v4717 = vadd.f32 %v4663, %v4716
  %4718 = vdwg.mxu0
  %v4719 = vand.u32 %v4425, 4294901760
  %4720 = vmatpush.msra.mxu0 %v4719
  %v4721 = vand.u32 %v4423, 4294901760
  %4722 = vmatpush.msra.mxu0 %v4721
  %v4723 = vand.u32 %v4421, 4294901760
  %4724 = vmatpush.msra.mxu0 %v4723
  %v4725 = vand.u32 %v4419, 4294901760
  %4726 = vmatpush.msra.mxu0 %v4725
  %v4727 = vand.u32 %v4417, 4294901760
  %4728 = vmatpush.msra.mxu0 %v4727
  %v4729 = vand.u32 %v4415, 4294901760
  %4730 = vmatpush.msra.mxu0 %v4729
  %v4731 = vand.u32 %v4413, 4294901760
  %4732 = vmatpush.msra.mxu0 %v4731
  %v4733 = vand.u32 %v4411, 4294901760
  %4734 = vmatpush.msra.mxu0 %v4733
  %v4735 = vand.u32 %v4409, 4294901760
  %4736 = vmatpush.msra.mxu0 %v4735
  %v4737 = vand.u32 %v4407, 4294901760
  %4738 = vmatpush.msra.mxu0 %v4737
  %v4739 = vand.u32 %v4405, 4294901760
  %4740 = vmatpush.msra.mxu0 %v4739
  %v4741 = vand.u32 %v4403, 4294901760
  %4742 = vmatpush.msra.mxu0 %v4741
  %v4743 = vand.u32 %v4401, 4294901760
  %4744 = vmatpush.msra.mxu0 %v4743
  %v4745 = vand.u32 %v4399, 4294901760
  %4746 = vmatpush.msra.mxu0 %v4745
  %v4747 = vand.u32 %v4397, 4294901760
  %4748 = vmatpush.msra.mxu0 %v4747
  %v4749 = vand.u32 %v4395, 4294901760
  %4750 = vmatpush.msra.mxu0 %v4749
  %v4751 = vand.u32 %v4077, 4294901760
  %v4752 = vsub.f32 %v4077, %v4751
  %v4753 = vand.u32 %v4752, 4294901760
  %4754 = vmatmul.f32.gmra.mxu0 %v4753
  %v4755 = vpop.f32.mrf.mxu0
  %v4756 = vadd.f32 %v4717, %v4755
  %4757 = vdwg.mxu0
  %v4758 = vand.u32 %v4425, 4294901760
  %v4759 = vsub.f32 %v4425, %v4758
  %v4760 = vand.u32 %v4759, 4294901760
  %4761 = vmatpush.msra.mxu0 %v4760
  %v4762 = vand.u32 %v4423, 4294901760
  %v4763 = vsub.f32 %v4423, %v4762
  %v4764 = vand.u32 %v4763, 4294901760
  %4765 = vmatpush.msra.mxu0 %v4764
  %v4766 = vand.u32 %v4421, 4294901760
  %v4767 = vsub.f32 %v4421, %v4766
  %v4768 = vand.u32 %v4767, 4294901760
  %4769 = vmatpush.msra.mxu0 %v4768
  %v4770 = vand.u32 %v4419, 4294901760
  %v4771 = vsub.f32 %v4419, %v4770
  %v4772 = vand.u32 %v4771, 4294901760
  %4773 = vmatpush.msra.mxu0 %v4772
  %v4774 = vand.u32 %v4417, 4294901760
  %v4775 = vsub.f32 %v4417, %v4774
  %v4776 = vand.u32 %v4775, 4294901760
  %4777 = vmatpush.msra.mxu0 %v4776
  %v4778 = vand.u32 %v4415, 4294901760
  %v4779 = vsub.f32 %v4415, %v4778
  %v4780 = vand.u32 %v4779, 4294901760
  %4781 = vmatpush.msra.mxu0 %v4780
  %v4782 = vand.u32 %v4413, 4294901760
  %v4783 = vsub.f32 %v4413, %v4782
  %v4784 = vand.u32 %v4783, 4294901760
  %4785 = vmatpush.msra.mxu0 %v4784
  %v4786 = vand.u32 %v4411, 4294901760
  %v4787 = vsub.f32 %v4411, %v4786
  %v4788 = vand.u32 %v4787, 4294901760
  %4789 = vmatpush.msra.mxu0 %v4788
  %v4790 = vand.u32 %v4409, 4294901760
  %v4791 = vsub.f32 %v4409, %v4790
  %v4792 = vand.u32 %v4791, 4294901760
  %4793 = vmatpush.msra.mxu0 %v4792
  %v4794 = vand.u32 %v4407, 4294901760
  %v4795 = vsub.f32 %v4407, %v4794
  %v4796 = vand.u32 %v4795, 4294901760
  %4797 = vmatpush.msra.mxu0 %v4796
  %v4798 = vand.u32 %v4405, 4294901760
  %v4799 = vsub.f32 %v4405, %v4798
  %v4800 = vand.u32 %v4799, 4294901760
  %4801 = vmatpush.msra.mxu0 %v4800
  %v4802 = vand.u32 %v4403, 4294901760
  %v4803 = vsub.f32 %v4403, %v4802
  %v4804 = vand.u32 %v4803, 4294901760
  %4805 = vmatpush.msra.mxu0 %v4804
  %v4806 = vand.u32 %v4401, 4294901760
  %v4807 = vsub.f32 %v4401, %v4806
  %v4808 = vand.u32 %v4807, 4294901760
  %4809 = vmatpush.msra.mxu0 %v4808
  %v4810 = vand.u32 %v4399, 4294901760
  %v4811 = vsub.f32 %v4399, %v4810
  %v4812 = vand.u32 %v4811, 4294901760
  %4813 = vmatpush.msra.mxu0 %v4812
  %v4814 = vand.u32 %v4397, 4294901760
  %v4815 = vsub.f32 %v4397, %v4814
  %v4816 = vand.u32 %v4815, 4294901760
  %4817 = vmatpush.msra.mxu0 %v4816
  %v4818 = vand.u32 %v4395, 4294901760
  %v4819 = vsub.f32 %v4395, %v4818
  %v4820 = vand.u32 %v4819, 4294901760
  %4821 = vmatpush.msra.mxu0 %v4820
  %v4822 = vand.u32 %v4077, 4294901760
  %4823 = vmatmul.f32.gmra.mxu0 %v4822
  %v4824 = vpop.f32.mrf.mxu0
  %v4825 = vadd.f32 %v4756, %v4824
  %4826 = vdwg.mxu0
  %v4827 = vand.u32 %v4425, 4294901760
  %4828 = vmatpush.msra.mxu0 %v4827
  %v4829 = vand.u32 %v4423, 4294901760
  %4830 = vmatpush.msra.mxu0 %v4829
  %v4831 = vand.u32 %v4421, 4294901760
  %4832 = vmatpush.msra.mxu0 %v4831
  %v4833 = vand.u32 %v4419, 4294901760
  %4834 = vmatpush.msra.mxu0 %v4833
  %v4835 = vand.u32 %v4417, 4294901760
  %4836 = vmatpush.msra.mxu0 %v4835
  %v4837 = vand.u32 %v4415, 4294901760
  %4838 = vmatpush.msra.mxu0 %v4837
  %v4839 = vand.u32 %v4413, 4294901760
  %4840 = vmatpush.msra.mxu0 %v4839
  %v4841 = vand.u32 %v4411, 4294901760
  %4842 = vmatpush.msra.mxu0 %v4841
  %v4843 = vand.u32 %v4409, 4294901760
  %4844 = vmatpush.msra.mxu0 %v4843
  %v4845 = vand.u32 %v4407, 4294901760
  %4846 = vmatpush.msra.mxu0 %v4845
  %v4847 = vand.u32 %v4405, 4294901760
  %4848 = vmatpush.msra.mxu0 %v4847
  %v4849 = vand.u32 %v4403, 4294901760
  %4850 = vmatpush.msra.mxu0 %v4849
  %v4851 = vand.u32 %v4401, 4294901760
  %4852 = vmatpush.msra.mxu0 %v4851
  %v4853 = vand.u32 %v4399, 4294901760
  %4854 = vmatpush.msra.mxu0 %v4853
  %v4855 = vand.u32 %v4397, 4294901760
  %4856 = vmatpush.msra.mxu0 %v4855
  %v4857 = vand.u32 %v4395, 4294901760
  %4858 = vmatpush.msra.mxu0 %v4857
  %v4859 = vand.u32 %v4077, 4294901760
  %4860 = vmatmul.f32.gmra.mxu0 %v4859
  %v4861 = vpop.f32.mrf.mxu0
  %v4862 = vadd.f32 %v4825, %v4861
  %4863 = vdwg.mxu0
  %v4864 = vand.u32 %v4457, 4294901760
  %4865 = vmatpush.msra.mxu0 %v4864
  %v4866 = vand.u32 %v4455, 4294901760
  %4867 = vmatpush.msra.mxu0 %v4866
  %v4868 = vand.u32 %v4453, 4294901760
  %4869 = vmatpush.msra.mxu0 %v4868
  %v4870 = vand.u32 %v4451, 4294901760
  %4871 = vmatpush.msra.mxu0 %v4870
  %v4872 = vand.u32 %v4449, 4294901760
  %4873 = vmatpush.msra.mxu0 %v4872
  %v4874 = vand.u32 %v4447, 4294901760
  %4875 = vmatpush.msra.mxu0 %v4874
  %v4876 = vand.u32 %v4445, 4294901760
  %4877 = vmatpush.msra.mxu0 %v4876
  %v4878 = vand.u32 %v4443, 4294901760
  %4879 = vmatpush.msra.mxu0 %v4878
  %v4880 = vand.u32 %v4441, 4294901760
  %4881 = vmatpush.msra.mxu0 %v4880
  %v4882 = vand.u32 %v4439, 4294901760
  %4883 = vmatpush.msra.mxu0 %v4882
  %v4884 = vand.u32 %v4437, 4294901760
  %4885 = vmatpush.msra.mxu0 %v4884
  %v4886 = vand.u32 %v4435, 4294901760
  %4887 = vmatpush.msra.mxu0 %v4886
  %v4888 = vand.u32 %v4433, 4294901760
  %4889 = vmatpush.msra.mxu0 %v4888
  %v4890 = vand.u32 %v4431, 4294901760
  %4891 = vmatpush.msra.mxu0 %v4890
  %v4892 = vand.u32 %v4429, 4294901760
  %4893 = vmatpush.msra.mxu0 %v4892
  %v4894 = vand.u32 %v4427, 4294901760
  %4895 = vmatpush.msra.mxu0 %v4894
  %v4896 = vand.u32 %v4078, 4294901760
  %v4897 = vsub.f32 %v4078, %v4896
  %v4898 = vand.u32 %v4897, 4294901760
  %v4899 = vsub.f32 %v4897, %v4898
  %v4900 = vand.u32 %v4899, 4294901760
  %4901 = vmatmul.f32.gmra.mxu0 %v4900
  %v4902 = vpop.f32.mrf.mxu0
  %v4903 = vadd.f32 %v4862, %v4902
  %4904 = vdwg.mxu0
  %v4905 = vand.u32 %v4457, 4294901760
  %v4906 = vsub.f32 %v4457, %v4905
  %v4907 = vand.u32 %v4906, 4294901760
  %v4908 = vsub.f32 %v4906, %v4907
  %v4909 = vand.u32 %v4908, 4294901760
  %4910 = vmatpush.msra.mxu0 %v4909
  %v4911 = vand.u32 %v4455, 4294901760
  %v4912 = vsub.f32 %v4455, %v4911
  %v4913 = vand.u32 %v4912, 4294901760
  %v4914 = vsub.f32 %v4912, %v4913
  %v4915 = vand.u32 %v4914, 4294901760
  %4916 = vmatpush.msra.mxu0 %v4915
  %v4917 = vand.u32 %v4453, 4294901760
  %v4918 = vsub.f32 %v4453, %v4917
  %v4919 = vand.u32 %v4918, 4294901760
  %v4920 = vsub.f32 %v4918, %v4919
  %v4921 = vand.u32 %v4920, 4294901760
  %4922 = vmatpush.msra.mxu0 %v4921
  %v4923 = vand.u32 %v4451, 4294901760
  %v4924 = vsub.f32 %v4451, %v4923
  %v4925 = vand.u32 %v4924, 4294901760
  %v4926 = vsub.f32 %v4924, %v4925
  %v4927 = vand.u32 %v4926, 4294901760
  %4928 = vmatpush.msra.mxu0 %v4927
  %v4929 = vand.u32 %v4449, 4294901760
  %v4930 = vsub.f32 %v4449, %v4929
  %v4931 = vand.u32 %v4930, 4294901760
  %v4932 = vsub.f32 %v4930, %v4931
  %v4933 = vand.u32 %v4932, 4294901760
  %4934 = vmatpush.msra.mxu0 %v4933
  %v4935 = vand.u32 %v4447, 4294901760
  %v4936 = vsub.f32 %v4447, %v4935
  %v4937 = vand.u32 %v4936, 4294901760
  %v4938 = vsub.f32 %v4936, %v4937
  %v4939 = vand.u32 %v4938, 4294901760
  %4940 = vmatpush.msra.mxu0 %v4939
  %v4941 = vand.u32 %v4445, 4294901760
  %v4942 = vsub.f32 %v4445, %v4941
  %v4943 = vand.u32 %v4942, 4294901760
  %v4944 = vsub.f32 %v4942, %v4943
  %v4945 = vand.u32 %v4944, 4294901760
  %4946 = vmatpush.msra.mxu0 %v4945
  %v4947 = vand.u32 %v4443, 4294901760
  %v4948 = vsub.f32 %v4443, %v4947
  %v4949 = vand.u32 %v4948, 4294901760
  %v4950 = vsub.f32 %v4948, %v4949
  %v4951 = vand.u32 %v4950, 4294901760
  %4952 = vmatpush.msra.mxu0 %v4951
  %v4953 = vand.u32 %v4441, 4294901760
  %v4954 = vsub.f32 %v4441, %v4953
  %v4955 = vand.u32 %v4954, 4294901760
  %v4956 = vsub.f32 %v4954, %v4955
  %v4957 = vand.u32 %v4956, 4294901760
  %4958 = vmatpush.msra.mxu0 %v4957
  %v4959 = vand.u32 %v4439, 4294901760
  %v4960 = vsub.f32 %v4439, %v4959
  %v4961 = vand.u32 %v4960, 4294901760
  %v4962 = vsub.f32 %v4960, %v4961
  %v4963 = vand.u32 %v4962, 4294901760
  %4964 = vmatpush.msra.mxu0 %v4963
  %v4965 = vand.u32 %v4437, 4294901760
  %v4966 = vsub.f32 %v4437, %v4965
  %v4967 = vand.u32 %v4966, 4294901760
  %v4968 = vsub.f32 %v4966, %v4967
  %v4969 = vand.u32 %v4968, 4294901760
  %4970 = vmatpush.msra.mxu0 %v4969
  %v4971 = vand.u32 %v4435, 4294901760
  %v4972 = vsub.f32 %v4435, %v4971
  %v4973 = vand.u32 %v4972, 4294901760
  %v4974 = vsub.f32 %v4972, %v4973
  %v4975 = vand.u32 %v4974, 4294901760
  %4976 = vmatpush.msra.mxu0 %v4975
  %v4977 = vand.u32 %v4433, 4294901760
  %v4978 = vsub.f32 %v4433, %v4977
  %v4979 = vand.u32 %v4978, 4294901760
  %v4980 = vsub.f32 %v4978, %v4979
  %v4981 = vand.u32 %v4980, 4294901760
  %4982 = vmatpush.msra.mxu0 %v4981
  %v4983 = vand.u32 %v4431, 4294901760
  %v4984 = vsub.f32 %v4431, %v4983
  %v4985 = vand.u32 %v4984, 4294901760
  %v4986 = vsub.f32 %v4984, %v4985
  %v4987 = vand.u32 %v4986, 4294901760
  %4988 = vmatpush.msra.mxu0 %v4987
  %v4989 = vand.u32 %v4429, 4294901760
  %v4990 = vsub.f32 %v4429, %v4989
  %v4991 = vand.u32 %v4990, 4294901760
  %v4992 = vsub.f32 %v4990, %v4991
  %v4993 = vand.u32 %v4992, 4294901760
  %4994 = vmatpush.msra.mxu0 %v4993
  %v4995 = vand.u32 %v4427, 4294901760
  %v4996 = vsub.f32 %v4427, %v4995
  %v4997 = vand.u32 %v4996, 4294901760
  %v4998 = vsub.f32 %v4996, %v4997
  %v4999 = vand.u32 %v4998, 4294901760
  %5000 = vmatpush.msra.mxu0 %v4999
  %v5001 = vand.u32 %v4078, 4294901760
  %5002 = vmatmul.f32.gmra.mxu0 %v5001
  %v5003 = vpop.f32.mrf.mxu0
  %v5004 = vadd.f32 %v4903, %v5003
  %5005 = vdwg.mxu0
  %v5006 = vand.u32 %v4457, 4294901760
  %v5007 = vsub.f32 %v4457, %v5006
  %5008 = vmatpush.msra.mxu0 %v5007
  %v5009 = vand.u32 %v4455, 4294901760
  %v5010 = vsub.f32 %v4455, %v5009
  %5011 = vmatpush.msra.mxu0 %v5010
  %v5012 = vand.u32 %v4453, 4294901760
  %v5013 = vsub.f32 %v4453, %v5012
  %5014 = vmatpush.msra.mxu0 %v5013
  %v5015 = vand.u32 %v4451, 4294901760
  %v5016 = vsub.f32 %v4451, %v5015
  %5017 = vmatpush.msra.mxu0 %v5016
  %v5018 = vand.u32 %v4449, 4294901760
  %v5019 = vsub.f32 %v4449, %v5018
  %5020 = vmatpush.msra.mxu0 %v5019
  %v5021 = vand.u32 %v4447, 4294901760
  %v5022 = vsub.f32 %v4447, %v5021
  %5023 = vmatpush.msra.mxu0 %v5022
  %v5024 = vand.u32 %v4445, 4294901760
  %v5025 = vsub.f32 %v4445, %v5024
  %5026 = vmatpush.msra.mxu0 %v5025
  %v5027 = vand.u32 %v4443, 4294901760
  %v5028 = vsub.f32 %v4443, %v5027
  %5029 = vmatpush.msra.mxu0 %v5028
  %v5030 = vand.u32 %v4441, 4294901760
  %v5031 = vsub.f32 %v4441, %v5030
  %5032 = vmatpush.msra.mxu0 %v5031
  %v5033 = vand.u32 %v4439, 4294901760
  %v5034 = vsub.f32 %v4439, %v5033
  %5035 = vmatpush.msra.mxu0 %v5034
  %v5036 = vand.u32 %v4437, 4294901760
  %v5037 = vsub.f32 %v4437, %v5036
  %5038 = vmatpush.msra.mxu0 %v5037
  %v5039 = vand.u32 %v4435, 4294901760
  %v5040 = vsub.f32 %v4435, %v5039
  %5041 = vmatpush.msra.mxu0 %v5040
  %v5042 = vand.u32 %v4433, 4294901760
  %v5043 = vsub.f32 %v4433, %v5042
  %5044 = vmatpush.msra.mxu0 %v5043
  %v5045 = vand.u32 %v4431, 4294901760
  %v5046 = vsub.f32 %v4431, %v5045
  %5047 = vmatpush.msra.mxu0 %v5046
  %v5048 = vand.u32 %v4429, 4294901760
  %v5049 = vsub.f32 %v4429, %v5048
  %5050 = vmatpush.msra.mxu0 %v5049
  %v5051 = vand.u32 %v4427, 4294901760
  %v5052 = vsub.f32 %v4427, %v5051
  %5053 = vmatpush.msra.mxu0 %v5052
  %v5054 = vand.u32 %v4078, 4294901760
  %v5055 = vsub.f32 %v4078, %v5054
  %5056 = vmatmul.f32.gmra.mxu0 %v5055
  %v5057 = vpop.f32.mrf.mxu0
  %v5058 = vadd.f32 %v5004, %v5057
  %5059 = vdwg.mxu0
  %v5060 = vand.u32 %v4457, 4294901760
  %5061 = vmatpush.msra.mxu0 %v5060
  %v5062 = vand.u32 %v4455, 4294901760
  %5063 = vmatpush.msra.mxu0 %v5062
  %v5064 = vand.u32 %v4453, 4294901760
  %5065 = vmatpush.msra.mxu0 %v5064
  %v5066 = vand.u32 %v4451, 4294901760
  %5067 = vmatpush.msra.mxu0 %v5066
  %v5068 = vand.u32 %v4449, 4294901760
  %5069 = vmatpush.msra.mxu0 %v5068
  %v5070 = vand.u32 %v4447, 4294901760
  %5071 = vmatpush.msra.mxu0 %v5070
  %v5072 = vand.u32 %v4445, 4294901760
  %5073 = vmatpush.msra.mxu0 %v5072
  %v5074 = vand.u32 %v4443, 4294901760
  %5075 = vmatpush.msra.mxu0 %v5074
  %v5076 = vand.u32 %v4441, 4294901760
  %5077 = vmatpush.msra.mxu0 %v5076
  %v5078 = vand.u32 %v4439, 4294901760
  %5079 = vmatpush.msra.mxu0 %v5078
  %v5080 = vand.u32 %v4437, 4294901760
  %5081 = vmatpush.msra.mxu0 %v5080
  %v5082 = vand.u32 %v4435, 4294901760
  %5083 = vmatpush.msra.mxu0 %v5082
  %v5084 = vand.u32 %v4433, 4294901760
  %5085 = vmatpush.msra.mxu0 %v5084
  %v5086 = vand.u32 %v4431, 4294901760
  %5087 = vmatpush.msra.mxu0 %v5086
  %v5088 = vand.u32 %v4429, 4294901760
  %5089 = vmatpush.msra.mxu0 %v5088
  %v5090 = vand.u32 %v4427, 4294901760
  %5091 = vmatpush.msra.mxu0 %v5090
  %v5092 = vand.u32 %v4078, 4294901760
  %v5093 = vsub.f32 %v4078, %v5092
  %v5094 = vand.u32 %v5093, 4294901760
  %5095 = vmatmul.f32.gmra.mxu0 %v5094
  %v5096 = vpop.f32.mrf.mxu0
  %v5097 = vadd.f32 %v5058, %v5096
  %5098 = vdwg.mxu0
  %v5099 = vand.u32 %v4457, 4294901760
  %v5100 = vsub.f32 %v4457, %v5099
  %v5101 = vand.u32 %v5100, 4294901760
  %5102 = vmatpush.msra.mxu0 %v5101
  %v5103 = vand.u32 %v4455, 4294901760
  %v5104 = vsub.f32 %v4455, %v5103
  %v5105 = vand.u32 %v5104, 4294901760
  %5106 = vmatpush.msra.mxu0 %v5105
  %v5107 = vand.u32 %v4453, 4294901760
  %v5108 = vsub.f32 %v4453, %v5107
  %v5109 = vand.u32 %v5108, 4294901760
  %5110 = vmatpush.msra.mxu0 %v5109
  %v5111 = vand.u32 %v4451, 4294901760
  %v5112 = vsub.f32 %v4451, %v5111
  %v5113 = vand.u32 %v5112, 4294901760
  %5114 = vmatpush.msra.mxu0 %v5113
  %v5115 = vand.u32 %v4449, 4294901760
  %v5116 = vsub.f32 %v4449, %v5115
  %v5117 = vand.u32 %v5116, 4294901760
  %5118 = vmatpush.msra.mxu0 %v5117
  %v5119 = vand.u32 %v4447, 4294901760
  %v5120 = vsub.f32 %v4447, %v5119
  %v5121 = vand.u32 %v5120, 4294901760
  %5122 = vmatpush.msra.mxu0 %v5121
  %v5123 = vand.u32 %v4445, 4294901760
  %v5124 = vsub.f32 %v4445, %v5123
  %v5125 = vand.u32 %v5124, 4294901760
  %5126 = vmatpush.msra.mxu0 %v5125
  %v5127 = vand.u32 %v4443, 4294901760
  %v5128 = vsub.f32 %v4443, %v5127
  %v5129 = vand.u32 %v5128, 4294901760
  %5130 = vmatpush.msra.mxu0 %v5129
  %v5131 = vand.u32 %v4441, 4294901760
  %v5132 = vsub.f32 %v4441, %v5131
  %v5133 = vand.u32 %v5132, 4294901760
  %5134 = vmatpush.msra.mxu0 %v5133
  %v5135 = vand.u32 %v4439, 4294901760
  %v5136 = vsub.f32 %v4439, %v5135
  %v5137 = vand.u32 %v5136, 4294901760
  %5138 = vmatpush.msra.mxu0 %v5137
  %v5139 = vand.u32 %v4437, 4294901760
  %v5140 = vsub.f32 %v4437, %v5139
  %v5141 = vand.u32 %v5140, 4294901760
  %5142 = vmatpush.msra.mxu0 %v5141
  %v5143 = vand.u32 %v4435, 4294901760
  %v5144 = vsub.f32 %v4435, %v5143
  %v5145 = vand.u32 %v5144, 4294901760
  %5146 = vmatpush.msra.mxu0 %v5145
  %v5147 = vand.u32 %v4433, 4294901760
  %v5148 = vsub.f32 %v4433, %v5147
  %v5149 = vand.u32 %v5148, 4294901760
  %5150 = vmatpush.msra.mxu0 %v5149
  %v5151 = vand.u32 %v4431, 4294901760
  %v5152 = vsub.f32 %v4431, %v5151
  %v5153 = vand.u32 %v5152, 4294901760
  %5154 = vmatpush.msra.mxu0 %v5153
  %v5155 = vand.u32 %v4429, 4294901760
  %v5156 = vsub.f32 %v4429, %v5155
  %v5157 = vand.u32 %v5156, 4294901760
  %5158 = vmatpush.msra.mxu0 %v5157
  %v5159 = vand.u32 %v4427, 4294901760
  %v5160 = vsub.f32 %v4427, %v5159
  %v5161 = vand.u32 %v5160, 4294901760
  %5162 = vmatpush.msra.mxu0 %v5161
  %v5163 = vand.u32 %v4078, 4294901760
  %5164 = vmatmul.f32.gmra.mxu0 %v5163
  %v5165 = vpop.f32.mrf.mxu0
  %v5166 = vadd.f32 %v5097, %v5165
  %5167 = vdwg.mxu0
  %v5168 = vand.u32 %v4457, 4294901760
  %5169 = vmatpush.msra.mxu0 %v5168
  %v5170 = vand.u32 %v4455, 4294901760
  %5171 = vmatpush.msra.mxu0 %v5170
  %v5172 = vand.u32 %v4453, 4294901760
  %5173 = vmatpush.msra.mxu0 %v5172
  %v5174 = vand.u32 %v4451, 4294901760
  %5175 = vmatpush.msra.mxu0 %v5174
  %v5176 = vand.u32 %v4449, 4294901760
  %5177 = vmatpush.msra.mxu0 %v5176
  %v5178 = vand.u32 %v4447, 4294901760
  %5179 = vmatpush.msra.mxu0 %v5178
  %v5180 = vand.u32 %v4445, 4294901760
  %5181 = vmatpush.msra.mxu0 %v5180
  %v5182 = vand.u32 %v4443, 4294901760
  %5183 = vmatpush.msra.mxu0 %v5182
  %v5184 = vand.u32 %v4441, 4294901760
  %5185 = vmatpush.msra.mxu0 %v5184
  %v5186 = vand.u32 %v4439, 4294901760
  %5187 = vmatpush.msra.mxu0 %v5186
  %v5188 = vand.u32 %v4437, 4294901760
  %5189 = vmatpush.msra.mxu0 %v5188
  %v5190 = vand.u32 %v4435, 4294901760
  %5191 = vmatpush.msra.mxu0 %v5190
  %v5192 = vand.u32 %v4433, 4294901760
  %5193 = vmatpush.msra.mxu0 %v5192
  %v5194 = vand.u32 %v4431, 4294901760
  %5195 = vmatpush.msra.mxu0 %v5194
  %v5196 = vand.u32 %v4429, 4294901760
  %5197 = vmatpush.msra.mxu0 %v5196
  %v5198 = vand.u32 %v4427, 4294901760
  %5199 = vmatpush.msra.mxu0 %v5198
  %v5200 = vand.u32 %v4078, 4294901760
  %5201 = vmatmul.f32.gmra.mxu0 %v5200
  %v5202 = vpop.f32.mrf.mxu0
  %v5203 = vadd.f32 %v5166, %v5202
  %5204 = vdwg.mxu0
  %v5205 = vand.u32 %v4489, 4294901760
  %5206 = vmatpush.msra.mxu0 %v5205
  %v5207 = vand.u32 %v4487, 4294901760
  %5208 = vmatpush.msra.mxu0 %v5207
  %v5209 = vand.u32 %v4485, 4294901760
  %5210 = vmatpush.msra.mxu0 %v5209
  %v5211 = vand.u32 %v4483, 4294901760
  %5212 = vmatpush.msra.mxu0 %v5211
  %v5213 = vand.u32 %v4481, 4294901760
  %5214 = vmatpush.msra.mxu0 %v5213
  %v5215 = vand.u32 %v4479, 4294901760
  %5216 = vmatpush.msra.mxu0 %v5215
  %v5217 = vand.u32 %v4477, 4294901760
  %5218 = vmatpush.msra.mxu0 %v5217
  %v5219 = vand.u32 %v4475, 4294901760
  %5220 = vmatpush.msra.mxu0 %v5219
  %v5221 = vand.u32 %v4473, 4294901760
  %5222 = vmatpush.msra.mxu0 %v5221
  %v5223 = vand.u32 %v4471, 4294901760
  %5224 = vmatpush.msra.mxu0 %v5223
  %v5225 = vand.u32 %v4469, 4294901760
  %5226 = vmatpush.msra.mxu0 %v5225
  %v5227 = vand.u32 %v4467, 4294901760
  %5228 = vmatpush.msra.mxu0 %v5227
  %v5229 = vand.u32 %v4465, 4294901760
  %5230 = vmatpush.msra.mxu0 %v5229
  %v5231 = vand.u32 %v4463, 4294901760
  %5232 = vmatpush.msra.mxu0 %v5231
  %v5233 = vand.u32 %v4461, 4294901760
  %5234 = vmatpush.msra.mxu0 %v5233
  %v5235 = vand.u32 %v4459, 4294901760
  %5236 = vmatpush.msra.mxu0 %v5235
  %v5237 = vand.u32 %v4389, 4294901760
  %v5238 = vsub.f32 %v4389, %v5237
  %v5239 = vand.u32 %v5238, 4294901760
  %v5240 = vsub.f32 %v5238, %v5239
  %v5241 = vand.u32 %v5240, 4294901760
  %5242 = vmatmul.f32.gmra.mxu0 %v5241
  %v5243 = vpop.f32.mrf.mxu0
  %v5244 = vadd.f32 %v5203, %v5243
  %5245 = vdwg.mxu0
  %v5246 = vand.u32 %v4489, 4294901760
  %v5247 = vsub.f32 %v4489, %v5246
  %v5248 = vand.u32 %v5247, 4294901760
  %v5249 = vsub.f32 %v5247, %v5248
  %v5250 = vand.u32 %v5249, 4294901760
  %5251 = vmatpush.msra.mxu0 %v5250
  %v5252 = vand.u32 %v4487, 4294901760
  %v5253 = vsub.f32 %v4487, %v5252
  %v5254 = vand.u32 %v5253, 4294901760
  %v5255 = vsub.f32 %v5253, %v5254
  %v5256 = vand.u32 %v5255, 4294901760
  %5257 = vmatpush.msra.mxu0 %v5256
  %v5258 = vand.u32 %v4485, 4294901760
  %v5259 = vsub.f32 %v4485, %v5258
  %v5260 = vand.u32 %v5259, 4294901760
  %v5261 = vsub.f32 %v5259, %v5260
  %v5262 = vand.u32 %v5261, 4294901760
  %5263 = vmatpush.msra.mxu0 %v5262
  %v5264 = vand.u32 %v4483, 4294901760
  %v5265 = vsub.f32 %v4483, %v5264
  %v5266 = vand.u32 %v5265, 4294901760
  %v5267 = vsub.f32 %v5265, %v5266
  %v5268 = vand.u32 %v5267, 4294901760
  %5269 = vmatpush.msra.mxu0 %v5268
  %v5270 = vand.u32 %v4481, 4294901760
  %v5271 = vsub.f32 %v4481, %v5270
  %v5272 = vand.u32 %v5271, 4294901760
  %v5273 = vsub.f32 %v5271, %v5272
  %v5274 = vand.u32 %v5273, 4294901760
  %5275 = vmatpush.msra.mxu0 %v5274
  %v5276 = vand.u32 %v4479, 4294901760
  %v5277 = vsub.f32 %v4479, %v5276
  %v5278 = vand.u32 %v5277, 4294901760
  %v5279 = vsub.f32 %v5277, %v5278
  %v5280 = vand.u32 %v5279, 4294901760
  %5281 = vmatpush.msra.mxu0 %v5280
  %v5282 = vand.u32 %v4477, 4294901760
  %v5283 = vsub.f32 %v4477, %v5282
  %v5284 = vand.u32 %v5283, 4294901760
  %v5285 = vsub.f32 %v5283, %v5284
  %v5286 = vand.u32 %v5285, 4294901760
  %5287 = vmatpush.msra.mxu0 %v5286
  %v5288 = vand.u32 %v4475, 4294901760
  %v5289 = vsub.f32 %v4475, %v5288
  %v5290 = vand.u32 %v5289, 4294901760
  %v5291 = vsub.f32 %v5289, %v5290
  %v5292 = vand.u32 %v5291, 4294901760
  %5293 = vmatpush.msra.mxu0 %v5292
  %v5294 = vand.u32 %v4473, 4294901760
  %v5295 = vsub.f32 %v4473, %v5294
  %v5296 = vand.u32 %v5295, 4294901760
  %v5297 = vsub.f32 %v5295, %v5296
  %v5298 = vand.u32 %v5297, 4294901760
  %5299 = vmatpush.msra.mxu0 %v5298
  %v5300 = vand.u32 %v4471, 4294901760
  %v5301 = vsub.f32 %v4471, %v5300
  %v5302 = vand.u32 %v5301, 4294901760
  %v5303 = vsub.f32 %v5301, %v5302
  %v5304 = vand.u32 %v5303, 4294901760
  %5305 = vmatpush.msra.mxu0 %v5304
  %v5306 = vand.u32 %v4469, 4294901760
  %v5307 = vsub.f32 %v4469, %v5306
  %v5308 = vand.u32 %v5307, 4294901760
  %v5309 = vsub.f32 %v5307, %v5308
  %v5310 = vand.u32 %v5309, 4294901760
  %5311 = vmatpush.msra.mxu0 %v5310
  %v5312 = vand.u32 %v4467, 4294901760
  %v5313 = vsub.f32 %v4467, %v5312
  %v5314 = vand.u32 %v5313, 4294901760
  %v5315 = vsub.f32 %v5313, %v5314
  %v5316 = vand.u32 %v5315, 4294901760
  %5317 = vmatpush.msra.mxu0 %v5316
  %v5318 = vand.u32 %v4465, 4294901760
  %v5319 = vsub.f32 %v4465, %v5318
  %v5320 = vand.u32 %v5319, 4294901760
  %v5321 = vsub.f32 %v5319, %v5320
  %v5322 = vand.u32 %v5321, 4294901760
  %5323 = vmatpush.msra.mxu0 %v5322
  %v5324 = vand.u32 %v4463, 4294901760
  %v5325 = vsub.f32 %v4463, %v5324
  %v5326 = vand.u32 %v5325, 4294901760
  %v5327 = vsub.f32 %v5325, %v5326
  %v5328 = vand.u32 %v5327, 4294901760
  %5329 = vmatpush.msra.mxu0 %v5328
  %v5330 = vand.u32 %v4461, 4294901760
  %v5331 = vsub.f32 %v4461, %v5330
  %v5332 = vand.u32 %v5331, 4294901760
  %v5333 = vsub.f32 %v5331, %v5332
  %v5334 = vand.u32 %v5333, 4294901760
  %5335 = vmatpush.msra.mxu0 %v5334
  %v5336 = vand.u32 %v4459, 4294901760
  %v5337 = vsub.f32 %v4459, %v5336
  %v5338 = vand.u32 %v5337, 4294901760
  %v5339 = vsub.f32 %v5337, %v5338
  %v5340 = vand.u32 %v5339, 4294901760
  %5341 = vmatpush.msra.mxu0 %v5340
  %v5342 = vand.u32 %v4389, 4294901760
  %5343 = vmatmul.f32.gmra.mxu0 %v5342
  %v5344 = vpop.f32.mrf.mxu0
  %v5345 = vadd.f32 %v5244, %v5344
  %5346 = vdwg.mxu0
  %v5347 = vand.u32 %v4489, 4294901760
  %v5348 = vsub.f32 %v4489, %v5347
  %5349 = vmatpush.msra.mxu0 %v5348
  %v5350 = vand.u32 %v4487, 4294901760
  %v5351 = vsub.f32 %v4487, %v5350
  %5352 = vmatpush.msra.mxu0 %v5351
  %v5353 = vand.u32 %v4485, 4294901760
  %v5354 = vsub.f32 %v4485, %v5353
  %5355 = vmatpush.msra.mxu0 %v5354
  %v5356 = vand.u32 %v4483, 4294901760
  %v5357 = vsub.f32 %v4483, %v5356
  %5358 = vmatpush.msra.mxu0 %v5357
  %v5359 = vand.u32 %v4481, 4294901760
  %v5360 = vsub.f32 %v4481, %v5359
  %5361 = vmatpush.msra.mxu0 %v5360
  %v5362 = vand.u32 %v4479, 4294901760
  %v5363 = vsub.f32 %v4479, %v5362
  %5364 = vmatpush.msra.mxu0 %v5363
  %v5365 = vand.u32 %v4477, 4294901760
  %v5366 = vsub.f32 %v4477, %v5365
  %5367 = vmatpush.msra.mxu0 %v5366
  %v5368 = vand.u32 %v4475, 4294901760
  %v5369 = vsub.f32 %v4475, %v5368
  %5370 = vmatpush.msra.mxu0 %v5369
  %v5371 = vand.u32 %v4473, 4294901760
  %v5372 = vsub.f32 %v4473, %v5371
  %5373 = vmatpush.msra.mxu0 %v5372
  %v5374 = vand.u32 %v4471, 4294901760
  %v5375 = vsub.f32 %v4471, %v5374
  %5376 = vmatpush.msra.mxu0 %v5375
  %v5377 = vand.u32 %v4469, 4294901760
  %v5378 = vsub.f32 %v4469, %v5377
  %5379 = vmatpush.msra.mxu0 %v5378
  %v5380 = vand.u32 %v4467, 4294901760
  %v5381 = vsub.f32 %v4467, %v5380
  %5382 = vmatpush.msra.mxu0 %v5381
  %v5383 = vand.u32 %v4465, 4294901760
  %v5384 = vsub.f32 %v4465, %v5383
  %5385 = vmatpush.msra.mxu0 %v5384
  %v5386 = vand.u32 %v4463, 4294901760
  %v5387 = vsub.f32 %v4463, %v5386
  %5388 = vmatpush.msra.mxu0 %v5387
  %v5389 = vand.u32 %v4461, 4294901760
  %v5390 = vsub.f32 %v4461, %v5389
  %5391 = vmatpush.msra.mxu0 %v5390
  %v5392 = vand.u32 %v4459, 4294901760
  %v5393 = vsub.f32 %v4459, %v5392
  %5394 = vmatpush.msra.mxu0 %v5393
  %v5395 = vand.u32 %v4389, 4294901760
  %v5396 = vsub.f32 %v4389, %v5395
  %5397 = vmatmul.f32.gmra.mxu0 %v5396
  %v5398 = vpop.f32.mrf.mxu0
  %v5399 = vadd.f32 %v5345, %v5398
  %5400 = vdwg.mxu0
  %v5401 = vand.u32 %v4489, 4294901760
  %5402 = vmatpush.msra.mxu0 %v5401
  %v5403 = vand.u32 %v4487, 4294901760
  %5404 = vmatpush.msra.mxu0 %v5403
  %v5405 = vand.u32 %v4485, 4294901760
  %5406 = vmatpush.msra.mxu0 %v5405
  %v5407 = vand.u32 %v4483, 4294901760
  %5408 = vmatpush.msra.mxu0 %v5407
  %v5409 = vand.u32 %v4481, 4294901760
  %5410 = vmatpush.msra.mxu0 %v5409
  %v5411 = vand.u32 %v4479, 4294901760
  %5412 = vmatpush.msra.mxu0 %v5411
  %v5413 = vand.u32 %v4477, 4294901760
  %5414 = vmatpush.msra.mxu0 %v5413
  %v5415 = vand.u32 %v4475, 4294901760
  %5416 = vmatpush.msra.mxu0 %v5415
  %v5417 = vand.u32 %v4473, 4294901760
  %5418 = vmatpush.msra.mxu0 %v5417
  %v5419 = vand.u32 %v4471, 4294901760
  %5420 = vmatpush.msra.mxu0 %v5419
  %v5421 = vand.u32 %v4469, 4294901760
  %5422 = vmatpush.msra.mxu0 %v5421
  %v5423 = vand.u32 %v4467, 4294901760
  %5424 = vmatpush.msra.mxu0 %v5423
  %v5425 = vand.u32 %v4465, 4294901760
  %5426 = vmatpush.msra.mxu0 %v5425
  %v5427 = vand.u32 %v4463, 4294901760
  %5428 = vmatpush.msra.mxu0 %v5427
  %v5429 = vand.u32 %v4461, 4294901760
  %5430 = vmatpush.msra.mxu0 %v5429
  %v5431 = vand.u32 %v4459, 4294901760
  %5432 = vmatpush.msra.mxu0 %v5431
  %v5433 = vand.u32 %v4389, 4294901760
  %v5434 = vsub.f32 %v4389, %v5433
  %v5435 = vand.u32 %v5434, 4294901760
  %5436 = vmatmul.f32.gmra.mxu0 %v5435
  %v5437 = vpop.f32.mrf.mxu0
  %v5438 = vadd.f32 %v5399, %v5437
  %5439 = vdwg.mxu0
  %v5440 = vand.u32 %v4489, 4294901760
  %v5441 = vsub.f32 %v4489, %v5440
  %v5442 = vand.u32 %v5441, 4294901760
  %5443 = vmatpush.msra.mxu0 %v5442
  %v5444 = vand.u32 %v4487, 4294901760
  %v5445 = vsub.f32 %v4487, %v5444
  %v5446 = vand.u32 %v5445, 4294901760
  %5447 = vmatpush.msra.mxu0 %v5446
  %v5448 = vand.u32 %v4485, 4294901760
  %v5449 = vsub.f32 %v4485, %v5448
  %v5450 = vand.u32 %v5449, 4294901760
  %5451 = vmatpush.msra.mxu0 %v5450
  %v5452 = vand.u32 %v4483, 4294901760
  %v5453 = vsub.f32 %v4483, %v5452
  %v5454 = vand.u32 %v5453, 4294901760
  %5455 = vmatpush.msra.mxu0 %v5454
  %v5456 = vand.u32 %v4481, 4294901760
  %v5457 = vsub.f32 %v4481, %v5456
  %v5458 = vand.u32 %v5457, 4294901760
  %5459 = vmatpush.msra.mxu0 %v5458
  %v5460 = vand.u32 %v4479, 4294901760
  %v5461 = vsub.f32 %v4479, %v5460
  %v5462 = vand.u32 %v5461, 4294901760
  %5463 = vmatpush.msra.mxu0 %v5462
  %v5464 = vand.u32 %v4477, 4294901760
  %v5465 = vsub.f32 %v4477, %v5464
  %v5466 = vand.u32 %v5465, 4294901760
  %5467 = vmatpush.msra.mxu0 %v5466
  %v5468 = vand.u32 %v4475, 4294901760
  %v5469 = vsub.f32 %v4475, %v5468
  %v5470 = vand.u32 %v5469, 4294901760
  %5471 = vmatpush.msra.mxu0 %v5470
  %v5472 = vand.u32 %v4473, 4294901760
  %v5473 = vsub.f32 %v4473, %v5472
  %v5474 = vand.u32 %v5473, 4294901760
  %5475 = vmatpush.msra.mxu0 %v5474
  %v5476 = vand.u32 %v4471, 4294901760
  %v5477 = vsub.f32 %v4471, %v5476
  %v5478 = vand.u32 %v5477, 4294901760
  %5479 = vmatpush.msra.mxu0 %v5478
  %v5480 = vand.u32 %v4469, 4294901760
  %v5481 = vsub.f32 %v4469, %v5480
  %v5482 = vand.u32 %v5481, 4294901760
  %5483 = vmatpush.msra.mxu0 %v5482
  %v5484 = vand.u32 %v4467, 4294901760
  %v5485 = vsub.f32 %v4467, %v5484
  %v5486 = vand.u32 %v5485, 4294901760
  %5487 = vmatpush.msra.mxu0 %v5486
  %v5488 = vand.u32 %v4465, 4294901760
  %v5489 = vsub.f32 %v4465, %v5488
  %v5490 = vand.u32 %v5489, 4294901760
  %5491 = vmatpush.msra.mxu0 %v5490
  %v5492 = vand.u32 %v4463, 4294901760
  %v5493 = vsub.f32 %v4463, %v5492
  %v5494 = vand.u32 %v5493, 4294901760
  %5495 = vmatpush.msra.mxu0 %v5494
  %v5496 = vand.u32 %v4461, 4294901760
  %v5497 = vsub.f32 %v4461, %v5496
  %v5498 = vand.u32 %v5497, 4294901760
  %5499 = vmatpush.msra.mxu0 %v5498
  %v5500 = vand.u32 %v4459, 4294901760
  %v5501 = vsub.f32 %v4459, %v5500
  %v5502 = vand.u32 %v5501, 4294901760
  %5503 = vmatpush.msra.mxu0 %v5502
  %v5504 = vand.u32 %v4389, 4294901760
  %5505 = vmatmul.f32.gmra.mxu0 %v5504
  %v5506 = vpop.f32.mrf.mxu0
  %v5507 = vadd.f32 %v5438, %v5506
  %5508 = vdwg.mxu0
  %v5509 = vand.u32 %v4489, 4294901760
  %5510 = vmatpush.msra.mxu0 %v5509
  %v5511 = vand.u32 %v4487, 4294901760
  %5512 = vmatpush.msra.mxu0 %v5511
  %v5513 = vand.u32 %v4485, 4294901760
  %5514 = vmatpush.msra.mxu0 %v5513
  %v5515 = vand.u32 %v4483, 4294901760
  %5516 = vmatpush.msra.mxu0 %v5515
  %v5517 = vand.u32 %v4481, 4294901760
  %5518 = vmatpush.msra.mxu0 %v5517
  %v5519 = vand.u32 %v4479, 4294901760
  %5520 = vmatpush.msra.mxu0 %v5519
  %v5521 = vand.u32 %v4477, 4294901760
  %5522 = vmatpush.msra.mxu0 %v5521
  %v5523 = vand.u32 %v4475, 4294901760
  %5524 = vmatpush.msra.mxu0 %v5523
  %v5525 = vand.u32 %v4473, 4294901760
  %5526 = vmatpush.msra.mxu0 %v5525
  %v5527 = vand.u32 %v4471, 4294901760
  %5528 = vmatpush.msra.mxu0 %v5527
  %v5529 = vand.u32 %v4469, 4294901760
  %5530 = vmatpush.msra.mxu0 %v5529
  %v5531 = vand.u32 %v4467, 4294901760
  %5532 = vmatpush.msra.mxu0 %v5531
  %v5533 = vand.u32 %v4465, 4294901760
  %5534 = vmatpush.msra.mxu0 %v5533
  %v5535 = vand.u32 %v4463, 4294901760
  %5536 = vmatpush.msra.mxu0 %v5535
  %v5537 = vand.u32 %v4461, 4294901760
  %5538 = vmatpush.msra.mxu0 %v5537
  %v5539 = vand.u32 %v4459, 4294901760
  %5540 = vmatpush.msra.mxu0 %v5539
  %v5541 = vand.u32 %v4389, 4294901760
  %5542 = vmatmul.f32.gmra.mxu0 %v5541
  %v5543 = vpop.f32.mrf.mxu0
  %v5544 = vadd.f32 %v5507, %v5543
  %5545 = vdwg.mxu0
  %v5546 = vand.u32 %v4521, 4294901760
  %5547 = vmatpush.msra.mxu0 %v5546
  %v5548 = vand.u32 %v4519, 4294901760
  %5549 = vmatpush.msra.mxu0 %v5548
  %v5550 = vand.u32 %v4517, 4294901760
  %5551 = vmatpush.msra.mxu0 %v5550
  %v5552 = vand.u32 %v4515, 4294901760
  %5553 = vmatpush.msra.mxu0 %v5552
  %v5554 = vand.u32 %v4513, 4294901760
  %5555 = vmatpush.msra.mxu0 %v5554
  %v5556 = vand.u32 %v4511, 4294901760
  %5557 = vmatpush.msra.mxu0 %v5556
  %v5558 = vand.u32 %v4509, 4294901760
  %5559 = vmatpush.msra.mxu0 %v5558
  %v5560 = vand.u32 %v4507, 4294901760
  %5561 = vmatpush.msra.mxu0 %v5560
  %v5562 = vand.u32 %v4505, 4294901760
  %5563 = vmatpush.msra.mxu0 %v5562
  %v5564 = vand.u32 %v4503, 4294901760
  %5565 = vmatpush.msra.mxu0 %v5564
  %v5566 = vand.u32 %v4501, 4294901760
  %5567 = vmatpush.msra.mxu0 %v5566
  %v5568 = vand.u32 %v4499, 4294901760
  %5569 = vmatpush.msra.mxu0 %v5568
  %v5570 = vand.u32 %v4497, 4294901760
  %5571 = vmatpush.msra.mxu0 %v5570
  %v5572 = vand.u32 %v4495, 4294901760
  %5573 = vmatpush.msra.mxu0 %v5572
  %v5574 = vand.u32 %v4493, 4294901760
  %5575 = vmatpush.msra.mxu0 %v5574
  %v5576 = vand.u32 %v4491, 4294901760
  %5577 = vmatpush.msra.mxu0 %v5576
  %v5578 = vand.u32 %v4390, 4294901760
  %v5579 = vsub.f32 %v4390, %v5578
  %v5580 = vand.u32 %v5579, 4294901760
  %v5581 = vsub.f32 %v5579, %v5580
  %v5582 = vand.u32 %v5581, 4294901760
  %5583 = vmatmul.f32.gmra.mxu0 %v5582
  %v5584 = vpop.f32.mrf.mxu0
  %v5585 = vadd.f32 %v5544, %v5584
  %5586 = vdwg.mxu0
  %v5587 = vand.u32 %v4521, 4294901760
  %v5588 = vsub.f32 %v4521, %v5587
  %v5589 = vand.u32 %v5588, 4294901760
  %v5590 = vsub.f32 %v5588, %v5589
  %v5591 = vand.u32 %v5590, 4294901760
  %5592 = vmatpush.msra.mxu0 %v5591
  %v5593 = vand.u32 %v4519, 4294901760
  %v5594 = vsub.f32 %v4519, %v5593
  %v5595 = vand.u32 %v5594, 4294901760
  %v5596 = vsub.f32 %v5594, %v5595
  %v5597 = vand.u32 %v5596, 4294901760
  %5598 = vmatpush.msra.mxu0 %v5597
  %v5599 = vand.u32 %v4517, 4294901760
  %v5600 = vsub.f32 %v4517, %v5599
  %v5601 = vand.u32 %v5600, 4294901760
  %v5602 = vsub.f32 %v5600, %v5601
  %v5603 = vand.u32 %v5602, 4294901760
  %5604 = vmatpush.msra.mxu0 %v5603
  %v5605 = vand.u32 %v4515, 4294901760
  %v5606 = vsub.f32 %v4515, %v5605
  %v5607 = vand.u32 %v5606, 4294901760
  %v5608 = vsub.f32 %v5606, %v5607
  %v5609 = vand.u32 %v5608, 4294901760
  %5610 = vmatpush.msra.mxu0 %v5609
  %v5611 = vand.u32 %v4513, 4294901760
  %v5612 = vsub.f32 %v4513, %v5611
  %v5613 = vand.u32 %v5612, 4294901760
  %v5614 = vsub.f32 %v5612, %v5613
  %v5615 = vand.u32 %v5614, 4294901760
  %5616 = vmatpush.msra.mxu0 %v5615
  %v5617 = vand.u32 %v4511, 4294901760
  %v5618 = vsub.f32 %v4511, %v5617
  %v5619 = vand.u32 %v5618, 4294901760
  %v5620 = vsub.f32 %v5618, %v5619
  %v5621 = vand.u32 %v5620, 4294901760
  %5622 = vmatpush.msra.mxu0 %v5621
  %v5623 = vand.u32 %v4509, 4294901760
  %v5624 = vsub.f32 %v4509, %v5623
  %v5625 = vand.u32 %v5624, 4294901760
  %v5626 = vsub.f32 %v5624, %v5625
  %v5627 = vand.u32 %v5626, 4294901760
  %5628 = vmatpush.msra.mxu0 %v5627
  %v5629 = vand.u32 %v4507, 4294901760
  %v5630 = vsub.f32 %v4507, %v5629
  %v5631 = vand.u32 %v5630, 4294901760
  %v5632 = vsub.f32 %v5630, %v5631
  %v5633 = vand.u32 %v5632, 4294901760
  %5634 = vmatpush.msra.mxu0 %v5633
  %v5635 = vand.u32 %v4505, 4294901760
  %v5636 = vsub.f32 %v4505, %v5635
  %v5637 = vand.u32 %v5636, 4294901760
  %v5638 = vsub.f32 %v5636, %v5637
  %v5639 = vand.u32 %v5638, 4294901760
  %5640 = vmatpush.msra.mxu0 %v5639
  %v5641 = vand.u32 %v4503, 4294901760
  %v5642 = vsub.f32 %v4503, %v5641
  %v5643 = vand.u32 %v5642, 4294901760
  %v5644 = vsub.f32 %v5642, %v5643
  %v5645 = vand.u32 %v5644, 4294901760
  %5646 = vmatpush.msra.mxu0 %v5645
  %v5647 = vand.u32 %v4501, 4294901760
  %v5648 = vsub.f32 %v4501, %v5647
  %v5649 = vand.u32 %v5648, 4294901760
  %v5650 = vsub.f32 %v5648, %v5649
  %v5651 = vand.u32 %v5650, 4294901760
  %5652 = vmatpush.msra.mxu0 %v5651
  %v5653 = vand.u32 %v4499, 4294901760
  %v5654 = vsub.f32 %v4499, %v5653
  %v5655 = vand.u32 %v5654, 4294901760
  %v5656 = vsub.f32 %v5654, %v5655
  %v5657 = vand.u32 %v5656, 4294901760
  %5658 = vmatpush.msra.mxu0 %v5657
  %v5659 = vand.u32 %v4497, 4294901760
  %v5660 = vsub.f32 %v4497, %v5659
  %v5661 = vand.u32 %v5660, 4294901760
  %v5662 = vsub.f32 %v5660, %v5661
  %v5663 = vand.u32 %v5662, 4294901760
  %5664 = vmatpush.msra.mxu0 %v5663
  %v5665 = vand.u32 %v4495, 4294901760
  %v5666 = vsub.f32 %v4495, %v5665
  %v5667 = vand.u32 %v5666, 4294901760
  %v5668 = vsub.f32 %v5666, %v5667
  %v5669 = vand.u32 %v5668, 4294901760
  %5670 = vmatpush.msra.mxu0 %v5669
  %v5671 = vand.u32 %v4493, 4294901760
  %v5672 = vsub.f32 %v4493, %v5671
  %v5673 = vand.u32 %v5672, 4294901760
  %v5674 = vsub.f32 %v5672, %v5673
  %v5675 = vand.u32 %v5674, 4294901760
  %5676 = vmatpush.msra.mxu0 %v5675
  %v5677 = vand.u32 %v4491, 4294901760
  %v5678 = vsub.f32 %v4491, %v5677
  %v5679 = vand.u32 %v5678, 4294901760
  %v5680 = vsub.f32 %v5678, %v5679
  %v5681 = vand.u32 %v5680, 4294901760
  %5682 = vmatpush.msra.mxu0 %v5681
  %v5683 = vand.u32 %v4390, 4294901760
  %5684 = vmatmul.f32.gmra.mxu0 %v5683
  %v5685 = vpop.f32.mrf.mxu0
  %v5686 = vadd.f32 %v5585, %v5685
  %5687 = vdwg.mxu0
  %v5688 = vand.u32 %v4521, 4294901760
  %v5689 = vsub.f32 %v4521, %v5688
  %5690 = vmatpush.msra.mxu0 %v5689
  %v5691 = vand.u32 %v4519, 4294901760
  %v5692 = vsub.f32 %v4519, %v5691
  %5693 = vmatpush.msra.mxu0 %v5692
  %v5694 = vand.u32 %v4517, 4294901760
  %v5695 = vsub.f32 %v4517, %v5694
  %5696 = vmatpush.msra.mxu0 %v5695
  %v5697 = vand.u32 %v4515, 4294901760
  %v5698 = vsub.f32 %v4515, %v5697
  %5699 = vmatpush.msra.mxu0 %v5698
  %v5700 = vand.u32 %v4513, 4294901760
  %v5701 = vsub.f32 %v4513, %v5700
  %5702 = vmatpush.msra.mxu0 %v5701
  %v5703 = vand.u32 %v4511, 4294901760
  %v5704 = vsub.f32 %v4511, %v5703
  %5705 = vmatpush.msra.mxu0 %v5704
  %v5706 = vand.u32 %v4509, 4294901760
  %v5707 = vsub.f32 %v4509, %v5706
  %5708 = vmatpush.msra.mxu0 %v5707
  %v5709 = vand.u32 %v4507, 4294901760
  %v5710 = vsub.f32 %v4507, %v5709
  %5711 = vmatpush.msra.mxu0 %v5710
  %v5712 = vand.u32 %v4505, 4294901760
  %v5713 = vsub.f32 %v4505, %v5712
  %5714 = vmatpush.msra.mxu0 %v5713
  %v5715 = vand.u32 %v4503, 4294901760
  %v5716 = vsub.f32 %v4503, %v5715
  %5717 = vmatpush.msra.mxu0 %v5716
  %v5718 = vand.u32 %v4501, 4294901760
  %v5719 = vsub.f32 %v4501, %v5718
  %5720 = vmatpush.msra.mxu0 %v5719
  %v5721 = vand.u32 %v4499, 4294901760
  %v5722 = vsub.f32 %v4499, %v5721
  %5723 = vmatpush.msra.mxu0 %v5722
  %v5724 = vand.u32 %v4497, 4294901760
  %v5725 = vsub.f32 %v4497, %v5724
  %5726 = vmatpush.msra.mxu0 %v5725
  %v5727 = vand.u32 %v4495, 4294901760
  %v5728 = vsub.f32 %v4495, %v5727
  %5729 = vmatpush.msra.mxu0 %v5728
  %v5730 = vand.u32 %v4493, 4294901760
  %v5731 = vsub.f32 %v4493, %v5730
  %5732 = vmatpush.msra.mxu0 %v5731
  %v5733 = vand.u32 %v4491, 4294901760
  %v5734 = vsub.f32 %v4491, %v5733
  %5735 = vmatpush.msra.mxu0 %v5734
  %v5736 = vand.u32 %v4390, 4294901760
  %v5737 = vsub.f32 %v4390, %v5736
  %5738 = vmatmul.f32.gmra.mxu0 %v5737
  %v5739 = vpop.f32.mrf.mxu0
  %v5740 = vadd.f32 %v5686, %v5739
  %5741 = vdwg.mxu0
  %v5742 = vand.u32 %v4521, 4294901760
  %5743 = vmatpush.msra.mxu0 %v5742
  %v5744 = vand.u32 %v4519, 4294901760
  %5745 = vmatpush.msra.mxu0 %v5744
  %v5746 = vand.u32 %v4517, 4294901760
  %5747 = vmatpush.msra.mxu0 %v5746
  %v5748 = vand.u32 %v4515, 4294901760
  %5749 = vmatpush.msra.mxu0 %v5748
  %v5750 = vand.u32 %v4513, 4294901760
  %5751 = vmatpush.msra.mxu0 %v5750
  %v5752 = vand.u32 %v4511, 4294901760
  %5753 = vmatpush.msra.mxu0 %v5752
  %v5754 = vand.u32 %v4509, 4294901760
  %5755 = vmatpush.msra.mxu0 %v5754
  %v5756 = vand.u32 %v4507, 4294901760
  %5757 = vmatpush.msra.mxu0 %v5756
  %v5758 = vand.u32 %v4505, 4294901760
  %5759 = vmatpush.msra.mxu0 %v5758
  %v5760 = vand.u32 %v4503, 4294901760
  %5761 = vmatpush.msra.mxu0 %v5760
  %v5762 = vand.u32 %v4501, 4294901760
  %5763 = vmatpush.msra.mxu0 %v5762
  %v5764 = vand.u32 %v4499, 4294901760
  %5765 = vmatpush.msra.mxu0 %v5764
  %v5766 = vand.u32 %v4497, 4294901760
  %5767 = vmatpush.msra.mxu0 %v5766
  %v5768 = vand.u32 %v4495, 4294901760
  %5769 = vmatpush.msra.mxu0 %v5768
  %v5770 = vand.u32 %v4493, 4294901760
  %5771 = vmatpush.msra.mxu0 %v5770
  %v5772 = vand.u32 %v4491, 4294901760
  %5773 = vmatpush.msra.mxu0 %v5772
  %v5774 = vand.u32 %v4390, 4294901760
  %v5775 = vsub.f32 %v4390, %v5774
  %v5776 = vand.u32 %v5775, 4294901760
  %5777 = vmatmul.f32.gmra.mxu0 %v5776
  %v5778 = vpop.f32.mrf.mxu0
  %v5779 = vadd.f32 %v5740, %v5778
  %5780 = vdwg.mxu0
  %v5781 = vand.u32 %v4521, 4294901760
  %v5782 = vsub.f32 %v4521, %v5781
  %v5783 = vand.u32 %v5782, 4294901760
  %5784 = vmatpush.msra.mxu0 %v5783
  %v5785 = vand.u32 %v4519, 4294901760
  %v5786 = vsub.f32 %v4519, %v5785
  %v5787 = vand.u32 %v5786, 4294901760
  %5788 = vmatpush.msra.mxu0 %v5787
  %v5789 = vand.u32 %v4517, 4294901760
  %v5790 = vsub.f32 %v4517, %v5789
  %v5791 = vand.u32 %v5790, 4294901760
  %5792 = vmatpush.msra.mxu0 %v5791
  %v5793 = vand.u32 %v4515, 4294901760
  %v5794 = vsub.f32 %v4515, %v5793
  %v5795 = vand.u32 %v5794, 4294901760
  %5796 = vmatpush.msra.mxu0 %v5795
  %v5797 = vand.u32 %v4513, 4294901760
  %v5798 = vsub.f32 %v4513, %v5797
  %v5799 = vand.u32 %v5798, 4294901760
  %5800 = vmatpush.msra.mxu0 %v5799
  %v5801 = vand.u32 %v4511, 4294901760
  %v5802 = vsub.f32 %v4511, %v5801
  %v5803 = vand.u32 %v5802, 4294901760
  %5804 = vmatpush.msra.mxu0 %v5803
  %v5805 = vand.u32 %v4509, 4294901760
  %v5806 = vsub.f32 %v4509, %v5805
  %v5807 = vand.u32 %v5806, 4294901760
  %5808 = vmatpush.msra.mxu0 %v5807
  %v5809 = vand.u32 %v4507, 4294901760
  %v5810 = vsub.f32 %v4507, %v5809
  %v5811 = vand.u32 %v5810, 4294901760
  %5812 = vmatpush.msra.mxu0 %v5811
  %v5813 = vand.u32 %v4505, 4294901760
  %v5814 = vsub.f32 %v4505, %v5813
  %v5815 = vand.u32 %v5814, 4294901760
  %5816 = vmatpush.msra.mxu0 %v5815
  %v5817 = vand.u32 %v4503, 4294901760
  %v5818 = vsub.f32 %v4503, %v5817
  %v5819 = vand.u32 %v5818, 4294901760
  %5820 = vmatpush.msra.mxu0 %v5819
  %v5821 = vand.u32 %v4501, 4294901760
  %v5822 = vsub.f32 %v4501, %v5821
  %v5823 = vand.u32 %v5822, 4294901760
  %5824 = vmatpush.msra.mxu0 %v5823
  %v5825 = vand.u32 %v4499, 4294901760
  %v5826 = vsub.f32 %v4499, %v5825
  %v5827 = vand.u32 %v5826, 4294901760
  %5828 = vmatpush.msra.mxu0 %v5827
  %v5829 = vand.u32 %v4497, 4294901760
  %v5830 = vsub.f32 %v4497, %v5829
  %v5831 = vand.u32 %v5830, 4294901760
  %5832 = vmatpush.msra.mxu0 %v5831
  %v5833 = vand.u32 %v4495, 4294901760
  %v5834 = vsub.f32 %v4495, %v5833
  %v5835 = vand.u32 %v5834, 4294901760
  %5836 = vmatpush.msra.mxu0 %v5835
  %v5837 = vand.u32 %v4493, 4294901760
  %v5838 = vsub.f32 %v4493, %v5837
  %v5839 = vand.u32 %v5838, 4294901760
  %5840 = vmatpush.msra.mxu0 %v5839
  %v5841 = vand.u32 %v4491, 4294901760
  %v5842 = vsub.f32 %v4491, %v5841
  %v5843 = vand.u32 %v5842, 4294901760
  %5844 = vmatpush.msra.mxu0 %v5843
  %v5845 = vand.u32 %v4390, 4294901760
  %5846 = vmatmul.f32.gmra.mxu0 %v5845
  %v5847 = vpop.f32.mrf.mxu0
  %v5848 = vadd.f32 %v5779, %v5847
  %5849 = vdwg.mxu0
  %v5850 = vand.u32 %v4521, 4294901760
  %5851 = vmatpush.msra.mxu0 %v5850
  %v5852 = vand.u32 %v4519, 4294901760
  %5853 = vmatpush.msra.mxu0 %v5852
  %v5854 = vand.u32 %v4517, 4294901760
  %5855 = vmatpush.msra.mxu0 %v5854
  %v5856 = vand.u32 %v4515, 4294901760
  %5857 = vmatpush.msra.mxu0 %v5856
  %v5858 = vand.u32 %v4513, 4294901760
  %5859 = vmatpush.msra.mxu0 %v5858
  %v5860 = vand.u32 %v4511, 4294901760
  %5861 = vmatpush.msra.mxu0 %v5860
  %v5862 = vand.u32 %v4509, 4294901760
  %5863 = vmatpush.msra.mxu0 %v5862
  %v5864 = vand.u32 %v4507, 4294901760
  %5865 = vmatpush.msra.mxu0 %v5864
  %v5866 = vand.u32 %v4505, 4294901760
  %5867 = vmatpush.msra.mxu0 %v5866
  %v5868 = vand.u32 %v4503, 4294901760
  %5869 = vmatpush.msra.mxu0 %v5868
  %v5870 = vand.u32 %v4501, 4294901760
  %5871 = vmatpush.msra.mxu0 %v5870
  %v5872 = vand.u32 %v4499, 4294901760
  %5873 = vmatpush.msra.mxu0 %v5872
  %v5874 = vand.u32 %v4497, 4294901760
  %5875 = vmatpush.msra.mxu0 %v5874
  %v5876 = vand.u32 %v4495, 4294901760
  %5877 = vmatpush.msra.mxu0 %v5876
  %v5878 = vand.u32 %v4493, 4294901760
  %5879 = vmatpush.msra.mxu0 %v5878
  %v5880 = vand.u32 %v4491, 4294901760
  %5881 = vmatpush.msra.mxu0 %v5880
  %v5882 = vand.u32 %v4390, 4294901760
  %5883 = vmatmul.f32.gmra.mxu0 %v5882
  %v5884 = vpop.f32.mrf.mxu0
  %v5885 = vadd.f32 %v5848, %v5884
  %5886 = vdwg.mxu0
  %v5887 = vand.u32 %v4426, 4294901760
  %5888 = vmatpush.msra.mxu0 %v5887
  %v5889 = vand.u32 %v4424, 4294901760
  %5890 = vmatpush.msra.mxu0 %v5889
  %v5891 = vand.u32 %v4422, 4294901760
  %5892 = vmatpush.msra.mxu0 %v5891
  %v5893 = vand.u32 %v4420, 4294901760
  %5894 = vmatpush.msra.mxu0 %v5893
  %v5895 = vand.u32 %v4418, 4294901760
  %5896 = vmatpush.msra.mxu0 %v5895
  %v5897 = vand.u32 %v4416, 4294901760
  %5898 = vmatpush.msra.mxu0 %v5897
  %v5899 = vand.u32 %v4414, 4294901760
  %5900 = vmatpush.msra.mxu0 %v5899
  %v5901 = vand.u32 %v4412, 4294901760
  %5902 = vmatpush.msra.mxu0 %v5901
  %v5903 = vand.u32 %v4410, 4294901760
  %5904 = vmatpush.msra.mxu0 %v5903
  %v5905 = vand.u32 %v4408, 4294901760
  %5906 = vmatpush.msra.mxu0 %v5905
  %v5907 = vand.u32 %v4406, 4294901760
  %5908 = vmatpush.msra.mxu0 %v5907
  %v5909 = vand.u32 %v4404, 4294901760
  %5910 = vmatpush.msra.mxu0 %v5909
  %v5911 = vand.u32 %v4402, 4294901760
  %5912 = vmatpush.msra.mxu0 %v5911
  %v5913 = vand.u32 %v4400, 4294901760
  %5914 = vmatpush.msra.mxu0 %v5913
  %v5915 = vand.u32 %v4398, 4294901760
  %5916 = vmatpush.msra.mxu0 %v5915
  %v5917 = vand.u32 %v4396, 4294901760
  %5918 = vmatpush.msra.mxu0 %v5917
  %v5919 = vand.u32 %v4077, 4294901760
  %v5920 = vsub.f32 %v4077, %v5919
  %v5921 = vand.u32 %v5920, 4294901760
  %v5922 = vsub.f32 %v5920, %v5921
  %v5923 = vand.u32 %v5922, 4294901760
  %5924 = vmatmul.f32.gmra.mxu0 %v5923
  %v5925 = vpop.f32.mrf.mxu0
  %v5926 = vadd.f32 0.0, %v5925
  %5927 = vdwg.mxu0
  %v5928 = vand.u32 %v4426, 4294901760
  %v5929 = vsub.f32 %v4426, %v5928
  %v5930 = vand.u32 %v5929, 4294901760
  %v5931 = vsub.f32 %v5929, %v5930
  %v5932 = vand.u32 %v5931, 4294901760
  %5933 = vmatpush.msra.mxu0 %v5932
  %v5934 = vand.u32 %v4424, 4294901760
  %v5935 = vsub.f32 %v4424, %v5934
  %v5936 = vand.u32 %v5935, 4294901760
  %v5937 = vsub.f32 %v5935, %v5936
  %v5938 = vand.u32 %v5937, 4294901760
  %5939 = vmatpush.msra.mxu0 %v5938
  %v5940 = vand.u32 %v4422, 4294901760
  %v5941 = vsub.f32 %v4422, %v5940
  %v5942 = vand.u32 %v5941, 4294901760
  %v5943 = vsub.f32 %v5941, %v5942
  %v5944 = vand.u32 %v5943, 4294901760
  %5945 = vmatpush.msra.mxu0 %v5944
  %v5946 = vand.u32 %v4420, 4294901760
  %v5947 = vsub.f32 %v4420, %v5946
  %v5948 = vand.u32 %v5947, 4294901760
  %v5949 = vsub.f32 %v5947, %v5948
  %v5950 = vand.u32 %v5949, 4294901760
  %5951 = vmatpush.msra.mxu0 %v5950
  %v5952 = vand.u32 %v4418, 4294901760
  %v5953 = vsub.f32 %v4418, %v5952
  %v5954 = vand.u32 %v5953, 4294901760
  %v5955 = vsub.f32 %v5953, %v5954
  %v5956 = vand.u32 %v5955, 4294901760
  %5957 = vmatpush.msra.mxu0 %v5956
  %v5958 = vand.u32 %v4416, 4294901760
  %v5959 = vsub.f32 %v4416, %v5958
  %v5960 = vand.u32 %v5959, 4294901760
  %v5961 = vsub.f32 %v5959, %v5960
  %v5962 = vand.u32 %v5961, 4294901760
  %5963 = vmatpush.msra.mxu0 %v5962
  %v5964 = vand.u32 %v4414, 4294901760
  %v5965 = vsub.f32 %v4414, %v5964
  %v5966 = vand.u32 %v5965, 4294901760
  %v5967 = vsub.f32 %v5965, %v5966
  %v5968 = vand.u32 %v5967, 4294901760
  %5969 = vmatpush.msra.mxu0 %v5968
  %v5970 = vand.u32 %v4412, 4294901760
  %v5971 = vsub.f32 %v4412, %v5970
  %v5972 = vand.u32 %v5971, 4294901760
  %v5973 = vsub.f32 %v5971, %v5972
  %v5974 = vand.u32 %v5973, 4294901760
  %5975 = vmatpush.msra.mxu0 %v5974
  %v5976 = vand.u32 %v4410, 4294901760
  %v5977 = vsub.f32 %v4410, %v5976
  %v5978 = vand.u32 %v5977, 4294901760
  %v5979 = vsub.f32 %v5977, %v5978
  %v5980 = vand.u32 %v5979, 4294901760
  %5981 = vmatpush.msra.mxu0 %v5980
  %v5982 = vand.u32 %v4408, 4294901760
  %v5983 = vsub.f32 %v4408, %v5982
  %v5984 = vand.u32 %v5983, 4294901760
  %v5985 = vsub.f32 %v5983, %v5984
  %v5986 = vand.u32 %v5985, 4294901760
  %5987 = vmatpush.msra.mxu0 %v5986
  %v5988 = vand.u32 %v4406, 4294901760
  %v5989 = vsub.f32 %v4406, %v5988
  %v5990 = vand.u32 %v5989, 4294901760
  %v5991 = vsub.f32 %v5989, %v5990
  %v5992 = vand.u32 %v5991, 4294901760
  %5993 = vmatpush.msra.mxu0 %v5992
  %v5994 = vand.u32 %v4404, 4294901760
  %v5995 = vsub.f32 %v4404, %v5994
  %v5996 = vand.u32 %v5995, 4294901760
  %v5997 = vsub.f32 %v5995, %v5996
  %v5998 = vand.u32 %v5997, 4294901760
  %5999 = vmatpush.msra.mxu0 %v5998
  %v6000 = vand.u32 %v4402, 4294901760
  %v6001 = vsub.f32 %v4402, %v6000
  %v6002 = vand.u32 %v6001, 4294901760
  %v6003 = vsub.f32 %v6001, %v6002
  %v6004 = vand.u32 %v6003, 4294901760
  %6005 = vmatpush.msra.mxu0 %v6004
  %v6006 = vand.u32 %v4400, 4294901760
  %v6007 = vsub.f32 %v4400, %v6006
  %v6008 = vand.u32 %v6007, 4294901760
  %v6009 = vsub.f32 %v6007, %v6008
  %v6010 = vand.u32 %v6009, 4294901760
  %6011 = vmatpush.msra.mxu0 %v6010
  %v6012 = vand.u32 %v4398, 4294901760
  %v6013 = vsub.f32 %v4398, %v6012
  %v6014 = vand.u32 %v6013, 4294901760
  %v6015 = vsub.f32 %v6013, %v6014
  %v6016 = vand.u32 %v6015, 4294901760
  %6017 = vmatpush.msra.mxu0 %v6016
  %v6018 = vand.u32 %v4396, 4294901760
  %v6019 = vsub.f32 %v4396, %v6018
  %v6020 = vand.u32 %v6019, 4294901760
  %v6021 = vsub.f32 %v6019, %v6020
  %v6022 = vand.u32 %v6021, 4294901760
  %6023 = vmatpush.msra.mxu0 %v6022
  %v6024 = vand.u32 %v4077, 4294901760
  %6025 = vmatmul.f32.gmra.mxu0 %v6024
  %v6026 = vpop.f32.mrf.mxu0
  %v6027 = vadd.f32 %v5926, %v6026
  %6028 = vdwg.mxu0
  %v6029 = vand.u32 %v4426, 4294901760
  %v6030 = vsub.f32 %v4426, %v6029
  %6031 = vmatpush.msra.mxu0 %v6030
  %v6032 = vand.u32 %v4424, 4294901760
  %v6033 = vsub.f32 %v4424, %v6032
  %6034 = vmatpush.msra.mxu0 %v6033
  %v6035 = vand.u32 %v4422, 4294901760
  %v6036 = vsub.f32 %v4422, %v6035
  %6037 = vmatpush.msra.mxu0 %v6036
  %v6038 = vand.u32 %v4420, 4294901760
  %v6039 = vsub.f32 %v4420, %v6038
  %6040 = vmatpush.msra.mxu0 %v6039
  %v6041 = vand.u32 %v4418, 4294901760
  %v6042 = vsub.f32 %v4418, %v6041
  %6043 = vmatpush.msra.mxu0 %v6042
  %v6044 = vand.u32 %v4416, 4294901760
  %v6045 = vsub.f32 %v4416, %v6044
  %6046 = vmatpush.msra.mxu0 %v6045
  %v6047 = vand.u32 %v4414, 4294901760
  %v6048 = vsub.f32 %v4414, %v6047
  %6049 = vmatpush.msra.mxu0 %v6048
  %v6050 = vand.u32 %v4412, 4294901760
  %v6051 = vsub.f32 %v4412, %v6050
  %6052 = vmatpush.msra.mxu0 %v6051
  %v6053 = vand.u32 %v4410, 4294901760
  %v6054 = vsub.f32 %v4410, %v6053
  %6055 = vmatpush.msra.mxu0 %v6054
  %v6056 = vand.u32 %v4408, 4294901760
  %v6057 = vsub.f32 %v4408, %v6056
  %6058 = vmatpush.msra.mxu0 %v6057
  %v6059 = vand.u32 %v4406, 4294901760
  %v6060 = vsub.f32 %v4406, %v6059
  %6061 = vmatpush.msra.mxu0 %v6060
  %v6062 = vand.u32 %v4404, 4294901760
  %v6063 = vsub.f32 %v4404, %v6062
  %6064 = vmatpush.msra.mxu0 %v6063
  %v6065 = vand.u32 %v4402, 4294901760
  %v6066 = vsub.f32 %v4402, %v6065
  %6067 = vmatpush.msra.mxu0 %v6066
  %v6068 = vand.u32 %v4400, 4294901760
  %v6069 = vsub.f32 %v4400, %v6068
  %6070 = vmatpush.msra.mxu0 %v6069
  %v6071 = vand.u32 %v4398, 4294901760
  %v6072 = vsub.f32 %v4398, %v6071
  %6073 = vmatpush.msra.mxu0 %v6072
  %v6074 = vand.u32 %v4396, 4294901760
  %v6075 = vsub.f32 %v4396, %v6074
  %6076 = vmatpush.msra.mxu0 %v6075
  %v6077 = vand.u32 %v4077, 4294901760
  %v6078 = vsub.f32 %v4077, %v6077
  %6079 = vmatmul.f32.gmra.mxu0 %v6078
  %v6080 = vpop.f32.mrf.mxu0
  %v6081 = vadd.f32 %v6027, %v6080
  %6082 = vdwg.mxu0
  %v6083 = vand.u32 %v4426, 4294901760
  %6084 = vmatpush.msra.mxu0 %v6083
  %v6085 = vand.u32 %v4424, 4294901760
  %6086 = vmatpush.msra.mxu0 %v6085
  %v6087 = vand.u32 %v4422, 4294901760
  %6088 = vmatpush.msra.mxu0 %v6087
  %v6089 = vand.u32 %v4420, 4294901760
  %6090 = vmatpush.msra.mxu0 %v6089
  %v6091 = vand.u32 %v4418, 4294901760
  %6092 = vmatpush.msra.mxu0 %v6091
  %v6093 = vand.u32 %v4416, 4294901760
  %6094 = vmatpush.msra.mxu0 %v6093
  %v6095 = vand.u32 %v4414, 4294901760
  %6096 = vmatpush.msra.mxu0 %v6095
  %v6097 = vand.u32 %v4412, 4294901760
  %6098 = vmatpush.msra.mxu0 %v6097
  %v6099 = vand.u32 %v4410, 4294901760
  %6100 = vmatpush.msra.mxu0 %v6099
  %v6101 = vand.u32 %v4408, 4294901760
  %6102 = vmatpush.msra.mxu0 %v6101
  %v6103 = vand.u32 %v4406, 4294901760
  %6104 = vmatpush.msra.mxu0 %v6103
  %v6105 = vand.u32 %v4404, 4294901760
  %6106 = vmatpush.msra.mxu0 %v6105
  %v6107 = vand.u32 %v4402, 4294901760
  %6108 = vmatpush.msra.mxu0 %v6107
  %v6109 = vand.u32 %v4400, 4294901760
  %6110 = vmatpush.msra.mxu0 %v6109
  %v6111 = vand.u32 %v4398, 4294901760
  %6112 = vmatpush.msra.mxu0 %v6111
  %v6113 = vand.u32 %v4396, 4294901760
  %6114 = vmatpush.msra.mxu0 %v6113
  %v6115 = vand.u32 %v4077, 4294901760
  %v6116 = vsub.f32 %v4077, %v6115
  %v6117 = vand.u32 %v6116, 4294901760
  %6118 = vmatmul.f32.gmra.mxu0 %v6117
  %v6119 = vpop.f32.mrf.mxu0
  %v6120 = vadd.f32 %v6081, %v6119
  %6121 = vdwg.mxu0
  %v6122 = vand.u32 %v4426, 4294901760
  %v6123 = vsub.f32 %v4426, %v6122
  %v6124 = vand.u32 %v6123, 4294901760
  %6125 = vmatpush.msra.mxu0 %v6124
  %v6126 = vand.u32 %v4424, 4294901760
  %v6127 = vsub.f32 %v4424, %v6126
  %v6128 = vand.u32 %v6127, 4294901760
  %6129 = vmatpush.msra.mxu0 %v6128
  %v6130 = vand.u32 %v4422, 4294901760
  %v6131 = vsub.f32 %v4422, %v6130
  %v6132 = vand.u32 %v6131, 4294901760
  %6133 = vmatpush.msra.mxu0 %v6132
  %v6134 = vand.u32 %v4420, 4294901760
  %v6135 = vsub.f32 %v4420, %v6134
  %v6136 = vand.u32 %v6135, 4294901760
  %6137 = vmatpush.msra.mxu0 %v6136
  %v6138 = vand.u32 %v4418, 4294901760
  %v6139 = vsub.f32 %v4418, %v6138
  %v6140 = vand.u32 %v6139, 4294901760
  %6141 = vmatpush.msra.mxu0 %v6140
  %v6142 = vand.u32 %v4416, 4294901760
  %v6143 = vsub.f32 %v4416, %v6142
  %v6144 = vand.u32 %v6143, 4294901760
  %6145 = vmatpush.msra.mxu0 %v6144
  %v6146 = vand.u32 %v4414, 4294901760
  %v6147 = vsub.f32 %v4414, %v6146
  %v6148 = vand.u32 %v6147, 4294901760
  %6149 = vmatpush.msra.mxu0 %v6148
  %v6150 = vand.u32 %v4412, 4294901760
  %v6151 = vsub.f32 %v4412, %v6150
  %v6152 = vand.u32 %v6151, 4294901760
  %6153 = vmatpush.msra.mxu0 %v6152
  %v6154 = vand.u32 %v4410, 4294901760
  %v6155 = vsub.f32 %v4410, %v6154
  %v6156 = vand.u32 %v6155, 4294901760
  %6157 = vmatpush.msra.mxu0 %v6156
  %v6158 = vand.u32 %v4408, 4294901760
  %v6159 = vsub.f32 %v4408, %v6158
  %v6160 = vand.u32 %v6159, 4294901760
  %6161 = vmatpush.msra.mxu0 %v6160
  %v6162 = vand.u32 %v4406, 4294901760
  %v6163 = vsub.f32 %v4406, %v6162
  %v6164 = vand.u32 %v6163, 4294901760
  %6165 = vmatpush.msra.mxu0 %v6164
  %v6166 = vand.u32 %v4404, 4294901760
  %v6167 = vsub.f32 %v4404, %v6166
  %v6168 = vand.u32 %v6167, 4294901760
  %6169 = vmatpush.msra.mxu0 %v6168
  %v6170 = vand.u32 %v4402, 4294901760
  %v6171 = vsub.f32 %v4402, %v6170
  %v6172 = vand.u32 %v6171, 4294901760
  %6173 = vmatpush.msra.mxu0 %v6172
  %v6174 = vand.u32 %v4400, 4294901760
  %v6175 = vsub.f32 %v4400, %v6174
  %v6176 = vand.u32 %v6175, 4294901760
  %6177 = vmatpush.msra.mxu0 %v6176
  %v6178 = vand.u32 %v4398, 4294901760
  %v6179 = vsub.f32 %v4398, %v6178
  %v6180 = vand.u32 %v6179, 4294901760
  %6181 = vmatpush.msra.mxu0 %v6180
  %v6182 = vand.u32 %v4396, 4294901760
  %v6183 = vsub.f32 %v4396, %v6182
  %v6184 = vand.u32 %v6183, 4294901760
  %6185 = vmatpush.msra.mxu0 %v6184
  %v6186 = vand.u32 %v4077, 4294901760
  %6187 = vmatmul.f32.gmra.mxu0 %v6186
  %v6188 = vpop.f32.mrf.mxu0
  %v6189 = vadd.f32 %v6120, %v6188
  %6190 = vdwg.mxu0
  %v6191 = vand.u32 %v4426, 4294901760
  %6192 = vmatpush.msra.mxu0 %v6191
  %v6193 = vand.u32 %v4424, 4294901760
  %6194 = vmatpush.msra.mxu0 %v6193
  %v6195 = vand.u32 %v4422, 4294901760
  %6196 = vmatpush.msra.mxu0 %v6195
  %v6197 = vand.u32 %v4420, 4294901760
  %6198 = vmatpush.msra.mxu0 %v6197
  %v6199 = vand.u32 %v4418, 4294901760
  %6200 = vmatpush.msra.mxu0 %v6199
  %v6201 = vand.u32 %v4416, 4294901760
  %6202 = vmatpush.msra.mxu0 %v6201
  %v6203 = vand.u32 %v4414, 4294901760
  %6204 = vmatpush.msra.mxu0 %v6203
  %v6205 = vand.u32 %v4412, 4294901760
  %6206 = vmatpush.msra.mxu0 %v6205
  %v6207 = vand.u32 %v4410, 4294901760
  %6208 = vmatpush.msra.mxu0 %v6207
  %v6209 = vand.u32 %v4408, 4294901760
  %6210 = vmatpush.msra.mxu0 %v6209
  %v6211 = vand.u32 %v4406, 4294901760
  %6212 = vmatpush.msra.mxu0 %v6211
  %v6213 = vand.u32 %v4404, 4294901760
  %6214 = vmatpush.msra.mxu0 %v6213
  %v6215 = vand.u32 %v4402, 4294901760
  %6216 = vmatpush.msra.mxu0 %v6215
  %v6217 = vand.u32 %v4400, 4294901760
  %6218 = vmatpush.msra.mxu0 %v6217
  %v6219 = vand.u32 %v4398, 4294901760
  %6220 = vmatpush.msra.mxu0 %v6219
  %v6221 = vand.u32 %v4396, 4294901760
  %6222 = vmatpush.msra.mxu0 %v6221
  %v6223 = vand.u32 %v4077, 4294901760
  %6224 = vmatmul.f32.gmra.mxu0 %v6223
  %v6225 = vpop.f32.mrf.mxu0
  %v6226 = vadd.f32 %v6189, %v6225
  %6227 = vdwg.mxu0
  %v6228 = vand.u32 %v4458, 4294901760
  %6229 = vmatpush.msra.mxu0 %v6228
  %v6230 = vand.u32 %v4456, 4294901760
  %6231 = vmatpush.msra.mxu0 %v6230
  %v6232 = vand.u32 %v4454, 4294901760
  %6233 = vmatpush.msra.mxu0 %v6232
  %v6234 = vand.u32 %v4452, 4294901760
  %6235 = vmatpush.msra.mxu0 %v6234
  %v6236 = vand.u32 %v4450, 4294901760
  %6237 = vmatpush.msra.mxu0 %v6236
  %v6238 = vand.u32 %v4448, 4294901760
  %6239 = vmatpush.msra.mxu0 %v6238
  %v6240 = vand.u32 %v4446, 4294901760
  %6241 = vmatpush.msra.mxu0 %v6240
  %v6242 = vand.u32 %v4444, 4294901760
  %6243 = vmatpush.msra.mxu0 %v6242
  %v6244 = vand.u32 %v4442, 4294901760
  %6245 = vmatpush.msra.mxu0 %v6244
  %v6246 = vand.u32 %v4440, 4294901760
  %6247 = vmatpush.msra.mxu0 %v6246
  %v6248 = vand.u32 %v4438, 4294901760
  %6249 = vmatpush.msra.mxu0 %v6248
  %v6250 = vand.u32 %v4436, 4294901760
  %6251 = vmatpush.msra.mxu0 %v6250
  %v6252 = vand.u32 %v4434, 4294901760
  %6253 = vmatpush.msra.mxu0 %v6252
  %v6254 = vand.u32 %v4432, 4294901760
  %6255 = vmatpush.msra.mxu0 %v6254
  %v6256 = vand.u32 %v4430, 4294901760
  %6257 = vmatpush.msra.mxu0 %v6256
  %v6258 = vand.u32 %v4428, 4294901760
  %6259 = vmatpush.msra.mxu0 %v6258
  %v6260 = vand.u32 %v4078, 4294901760
  %v6261 = vsub.f32 %v4078, %v6260
  %v6262 = vand.u32 %v6261, 4294901760
  %v6263 = vsub.f32 %v6261, %v6262
  %v6264 = vand.u32 %v6263, 4294901760
  %6265 = vmatmul.f32.gmra.mxu0 %v6264
  %v6266 = vpop.f32.mrf.mxu0
  %v6267 = vadd.f32 %v6226, %v6266
  %6268 = vdwg.mxu0
  %v6269 = vand.u32 %v4458, 4294901760
  %v6270 = vsub.f32 %v4458, %v6269
  %v6271 = vand.u32 %v6270, 4294901760
  %v6272 = vsub.f32 %v6270, %v6271
  %v6273 = vand.u32 %v6272, 4294901760
  %6274 = vmatpush.msra.mxu0 %v6273
  %v6275 = vand.u32 %v4456, 4294901760
  %v6276 = vsub.f32 %v4456, %v6275
  %v6277 = vand.u32 %v6276, 4294901760
  %v6278 = vsub.f32 %v6276, %v6277
  %v6279 = vand.u32 %v6278, 4294901760
  %6280 = vmatpush.msra.mxu0 %v6279
  %v6281 = vand.u32 %v4454, 4294901760
  %v6282 = vsub.f32 %v4454, %v6281
  %v6283 = vand.u32 %v6282, 4294901760
  %v6284 = vsub.f32 %v6282, %v6283
  %v6285 = vand.u32 %v6284, 4294901760
  %6286 = vmatpush.msra.mxu0 %v6285
  %v6287 = vand.u32 %v4452, 4294901760
  %v6288 = vsub.f32 %v4452, %v6287
  %v6289 = vand.u32 %v6288, 4294901760
  %v6290 = vsub.f32 %v6288, %v6289
  %v6291 = vand.u32 %v6290, 4294901760
  %6292 = vmatpush.msra.mxu0 %v6291
  %v6293 = vand.u32 %v4450, 4294901760
  %v6294 = vsub.f32 %v4450, %v6293
  %v6295 = vand.u32 %v6294, 4294901760
  %v6296 = vsub.f32 %v6294, %v6295
  %v6297 = vand.u32 %v6296, 4294901760
  %6298 = vmatpush.msra.mxu0 %v6297
  %v6299 = vand.u32 %v4448, 4294901760
  %v6300 = vsub.f32 %v4448, %v6299
  %v6301 = vand.u32 %v6300, 4294901760
  %v6302 = vsub.f32 %v6300, %v6301
  %v6303 = vand.u32 %v6302, 4294901760
  %6304 = vmatpush.msra.mxu0 %v6303
  %v6305 = vand.u32 %v4446, 4294901760
  %v6306 = vsub.f32 %v4446, %v6305
  %v6307 = vand.u32 %v6306, 4294901760
  %v6308 = vsub.f32 %v6306, %v6307
  %v6309 = vand.u32 %v6308, 4294901760
  %6310 = vmatpush.msra.mxu0 %v6309
  %v6311 = vand.u32 %v4444, 4294901760
  %v6312 = vsub.f32 %v4444, %v6311
  %v6313 = vand.u32 %v6312, 4294901760
  %v6314 = vsub.f32 %v6312, %v6313
  %v6315 = vand.u32 %v6314, 4294901760
  %6316 = vmatpush.msra.mxu0 %v6315
  %v6317 = vand.u32 %v4442, 4294901760
  %v6318 = vsub.f32 %v4442, %v6317
  %v6319 = vand.u32 %v6318, 4294901760
  %v6320 = vsub.f32 %v6318, %v6319
  %v6321 = vand.u32 %v6320, 4294901760
  %6322 = vmatpush.msra.mxu0 %v6321
  %v6323 = vand.u32 %v4440, 4294901760
  %v6324 = vsub.f32 %v4440, %v6323
  %v6325 = vand.u32 %v6324, 4294901760
  %v6326 = vsub.f32 %v6324, %v6325
  %v6327 = vand.u32 %v6326, 4294901760
  %6328 = vmatpush.msra.mxu0 %v6327
  %v6329 = vand.u32 %v4438, 4294901760
  %v6330 = vsub.f32 %v4438, %v6329
  %v6331 = vand.u32 %v6330, 4294901760
  %v6332 = vsub.f32 %v6330, %v6331
  %v6333 = vand.u32 %v6332, 4294901760
  %6334 = vmatpush.msra.mxu0 %v6333
  %v6335 = vand.u32 %v4436, 4294901760
  %v6336 = vsub.f32 %v4436, %v6335
  %v6337 = vand.u32 %v6336, 4294901760
  %v6338 = vsub.f32 %v6336, %v6337
  %v6339 = vand.u32 %v6338, 4294901760
  %6340 = vmatpush.msra.mxu0 %v6339
  %v6341 = vand.u32 %v4434, 4294901760
  %v6342 = vsub.f32 %v4434, %v6341
  %v6343 = vand.u32 %v6342, 4294901760
  %v6344 = vsub.f32 %v6342, %v6343
  %v6345 = vand.u32 %v6344, 4294901760
  %6346 = vmatpush.msra.mxu0 %v6345
  %v6347 = vand.u32 %v4432, 4294901760
  %v6348 = vsub.f32 %v4432, %v6347
  %v6349 = vand.u32 %v6348, 4294901760
  %v6350 = vsub.f32 %v6348, %v6349
  %v6351 = vand.u32 %v6350, 4294901760
  %6352 = vmatpush.msra.mxu0 %v6351
  %v6353 = vand.u32 %v4430, 4294901760
  %v6354 = vsub.f32 %v4430, %v6353
  %v6355 = vand.u32 %v6354, 4294901760
  %v6356 = vsub.f32 %v6354, %v6355
  %v6357 = vand.u32 %v6356, 4294901760
  %6358 = vmatpush.msra.mxu0 %v6357
  %v6359 = vand.u32 %v4428, 4294901760
  %v6360 = vsub.f32 %v4428, %v6359
  %v6361 = vand.u32 %v6360, 4294901760
  %v6362 = vsub.f32 %v6360, %v6361
  %v6363 = vand.u32 %v6362, 4294901760
  %6364 = vmatpush.msra.mxu0 %v6363
  %v6365 = vand.u32 %v4078, 4294901760
  %6366 = vmatmul.f32.gmra.mxu0 %v6365
  %v6367 = vpop.f32.mrf.mxu0
  %v6368 = vadd.f32 %v6267, %v6367
  %6369 = vdwg.mxu0
  %v6370 = vand.u32 %v4458, 4294901760
  %v6371 = vsub.f32 %v4458, %v6370
  %6372 = vmatpush.msra.mxu0 %v6371
  %v6373 = vand.u32 %v4456, 4294901760
  %v6374 = vsub.f32 %v4456, %v6373
  %6375 = vmatpush.msra.mxu0 %v6374
  %v6376 = vand.u32 %v4454, 4294901760
  %v6377 = vsub.f32 %v4454, %v6376
  %6378 = vmatpush.msra.mxu0 %v6377
  %v6379 = vand.u32 %v4452, 4294901760
  %v6380 = vsub.f32 %v4452, %v6379
  %6381 = vmatpush.msra.mxu0 %v6380
  %v6382 = vand.u32 %v4450, 4294901760
  %v6383 = vsub.f32 %v4450, %v6382
  %6384 = vmatpush.msra.mxu0 %v6383
  %v6385 = vand.u32 %v4448, 4294901760
  %v6386 = vsub.f32 %v4448, %v6385
  %6387 = vmatpush.msra.mxu0 %v6386
  %v6388 = vand.u32 %v4446, 4294901760
  %v6389 = vsub.f32 %v4446, %v6388
  %6390 = vmatpush.msra.mxu0 %v6389
  %v6391 = vand.u32 %v4444, 4294901760
  %v6392 = vsub.f32 %v4444, %v6391
  %6393 = vmatpush.msra.mxu0 %v6392
  %v6394 = vand.u32 %v4442, 4294901760
  %v6395 = vsub.f32 %v4442, %v6394
  %6396 = vmatpush.msra.mxu0 %v6395
  %v6397 = vand.u32 %v4440, 4294901760
  %v6398 = vsub.f32 %v4440, %v6397
  %6399 = vmatpush.msra.mxu0 %v6398
  %v6400 = vand.u32 %v4438, 4294901760
  %v6401 = vsub.f32 %v4438, %v6400
  %6402 = vmatpush.msra.mxu0 %v6401
  %v6403 = vand.u32 %v4436, 4294901760
  %v6404 = vsub.f32 %v4436, %v6403
  %6405 = vmatpush.msra.mxu0 %v6404
  %v6406 = vand.u32 %v4434, 4294901760
  %v6407 = vsub.f32 %v4434, %v6406
  %6408 = vmatpush.msra.mxu0 %v6407
  %v6409 = vand.u32 %v4432, 4294901760
  %v6410 = vsub.f32 %v4432, %v6409
  %6411 = vmatpush.msra.mxu0 %v6410
  %v6412 = vand.u32 %v4430, 4294901760
  %v6413 = vsub.f32 %v4430, %v6412
  %6414 = vmatpush.msra.mxu0 %v6413
  %v6415 = vand.u32 %v4428, 4294901760
  %v6416 = vsub.f32 %v4428, %v6415
  %6417 = vmatpush.msra.mxu0 %v6416
  %v6418 = vand.u32 %v4078, 4294901760
  %v6419 = vsub.f32 %v4078, %v6418
  %6420 = vmatmul.f32.gmra.mxu0 %v6419
  %v6421 = vpop.f32.mrf.mxu0
  %v6422 = vadd.f32 %v6368, %v6421
  %6423 = vdwg.mxu0
  %v6424 = vand.u32 %v4458, 4294901760
  %6425 = vmatpush.msra.mxu0 %v6424
  %v6426 = vand.u32 %v4456, 4294901760
  %6427 = vmatpush.msra.mxu0 %v6426
  %v6428 = vand.u32 %v4454, 4294901760
  %6429 = vmatpush.msra.mxu0 %v6428
  %v6430 = vand.u32 %v4452, 4294901760
  %6431 = vmatpush.msra.mxu0 %v6430
  %v6432 = vand.u32 %v4450, 4294901760
  %6433 = vmatpush.msra.mxu0 %v6432
  %v6434 = vand.u32 %v4448, 4294901760
  %6435 = vmatpush.msra.mxu0 %v6434
  %v6436 = vand.u32 %v4446, 4294901760
  %6437 = vmatpush.msra.mxu0 %v6436
  %v6438 = vand.u32 %v4444, 4294901760
  %6439 = vmatpush.msra.mxu0 %v6438
  %v6440 = vand.u32 %v4442, 4294901760
  %6441 = vmatpush.msra.mxu0 %v6440
  %v6442 = vand.u32 %v4440, 4294901760
  %6443 = vmatpush.msra.mxu0 %v6442
  %v6444 = vand.u32 %v4438, 4294901760
  %6445 = vmatpush.msra.mxu0 %v6444
  %v6446 = vand.u32 %v4436, 4294901760
  %6447 = vmatpush.msra.mxu0 %v6446
  %v6448 = vand.u32 %v4434, 4294901760
  %6449 = vmatpush.msra.mxu0 %v6448
  %v6450 = vand.u32 %v4432, 4294901760
  %6451 = vmatpush.msra.mxu0 %v6450
  %v6452 = vand.u32 %v4430, 4294901760
  %6453 = vmatpush.msra.mxu0 %v6452
  %v6454 = vand.u32 %v4428, 4294901760
  %6455 = vmatpush.msra.mxu0 %v6454
  %v6456 = vand.u32 %v4078, 4294901760
  %v6457 = vsub.f32 %v4078, %v6456
  %v6458 = vand.u32 %v6457, 4294901760
  %6459 = vmatmul.f32.gmra.mxu0 %v6458
  %v6460 = vpop.f32.mrf.mxu0
  %v6461 = vadd.f32 %v6422, %v6460
  %6462 = vdwg.mxu0
  %v6463 = vand.u32 %v4458, 4294901760
  %v6464 = vsub.f32 %v4458, %v6463
  %v6465 = vand.u32 %v6464, 4294901760
  %6466 = vmatpush.msra.mxu0 %v6465
  %v6467 = vand.u32 %v4456, 4294901760
  %v6468 = vsub.f32 %v4456, %v6467
  %v6469 = vand.u32 %v6468, 4294901760
  %6470 = vmatpush.msra.mxu0 %v6469
  %v6471 = vand.u32 %v4454, 4294901760
  %v6472 = vsub.f32 %v4454, %v6471
  %v6473 = vand.u32 %v6472, 4294901760
  %6474 = vmatpush.msra.mxu0 %v6473
  %v6475 = vand.u32 %v4452, 4294901760
  %v6476 = vsub.f32 %v4452, %v6475
  %v6477 = vand.u32 %v6476, 4294901760
  %6478 = vmatpush.msra.mxu0 %v6477
  %v6479 = vand.u32 %v4450, 4294901760
  %v6480 = vsub.f32 %v4450, %v6479
  %v6481 = vand.u32 %v6480, 4294901760
  %6482 = vmatpush.msra.mxu0 %v6481
  %v6483 = vand.u32 %v4448, 4294901760
  %v6484 = vsub.f32 %v4448, %v6483
  %v6485 = vand.u32 %v6484, 4294901760
  %6486 = vmatpush.msra.mxu0 %v6485
  %v6487 = vand.u32 %v4446, 4294901760
  %v6488 = vsub.f32 %v4446, %v6487
  %v6489 = vand.u32 %v6488, 4294901760
  %6490 = vmatpush.msra.mxu0 %v6489
  %v6491 = vand.u32 %v4444, 4294901760
  %v6492 = vsub.f32 %v4444, %v6491
  %v6493 = vand.u32 %v6492, 4294901760
  %6494 = vmatpush.msra.mxu0 %v6493
  %v6495 = vand.u32 %v4442, 4294901760
  %v6496 = vsub.f32 %v4442, %v6495
  %v6497 = vand.u32 %v6496, 4294901760
  %6498 = vmatpush.msra.mxu0 %v6497
  %v6499 = vand.u32 %v4440, 4294901760
  %v6500 = vsub.f32 %v4440, %v6499
  %v6501 = vand.u32 %v6500, 4294901760
  %6502 = vmatpush.msra.mxu0 %v6501
  %v6503 = vand.u32 %v4438, 4294901760
  %v6504 = vsub.f32 %v4438, %v6503
  %v6505 = vand.u32 %v6504, 4294901760
  %6506 = vmatpush.msra.mxu0 %v6505
  %v6507 = vand.u32 %v4436, 4294901760
  %v6508 = vsub.f32 %v4436, %v6507
  %v6509 = vand.u32 %v6508, 4294901760
  %6510 = vmatpush.msra.mxu0 %v6509
  %v6511 = vand.u32 %v4434, 4294901760
  %v6512 = vsub.f32 %v4434, %v6511
  %v6513 = vand.u32 %v6512, 4294901760
  %6514 = vmatpush.msra.mxu0 %v6513
  %v6515 = vand.u32 %v4432, 4294901760
  %v6516 = vsub.f32 %v4432, %v6515
  %v6517 = vand.u32 %v6516, 4294901760
  %6518 = vmatpush.msra.mxu0 %v6517
  %v6519 = vand.u32 %v4430, 4294901760
  %v6520 = vsub.f32 %v4430, %v6519
  %v6521 = vand.u32 %v6520, 4294901760
  %6522 = vmatpush.msra.mxu0 %v6521
  %v6523 = vand.u32 %v4428, 4294901760
  %v6524 = vsub.f32 %v4428, %v6523
  %v6525 = vand.u32 %v6524, 4294901760
  %6526 = vmatpush.msra.mxu0 %v6525
  %v6527 = vand.u32 %v4078, 4294901760
  %6528 = vmatmul.f32.gmra.mxu0 %v6527
  %v6529 = vpop.f32.mrf.mxu0
  %v6530 = vadd.f32 %v6461, %v6529
  %6531 = vdwg.mxu0
  %v6532 = vand.u32 %v4458, 4294901760
  %6533 = vmatpush.msra.mxu0 %v6532
  %v6534 = vand.u32 %v4456, 4294901760
  %6535 = vmatpush.msra.mxu0 %v6534
  %v6536 = vand.u32 %v4454, 4294901760
  %6537 = vmatpush.msra.mxu0 %v6536
  %v6538 = vand.u32 %v4452, 4294901760
  %6539 = vmatpush.msra.mxu0 %v6538
  %v6540 = vand.u32 %v4450, 4294901760
  %6541 = vmatpush.msra.mxu0 %v6540
  %v6542 = vand.u32 %v4448, 4294901760
  %6543 = vmatpush.msra.mxu0 %v6542
  %v6544 = vand.u32 %v4446, 4294901760
  %6545 = vmatpush.msra.mxu0 %v6544
  %v6546 = vand.u32 %v4444, 4294901760
  %6547 = vmatpush.msra.mxu0 %v6546
  %v6548 = vand.u32 %v4442, 4294901760
  %6549 = vmatpush.msra.mxu0 %v6548
  %v6550 = vand.u32 %v4440, 4294901760
  %6551 = vmatpush.msra.mxu0 %v6550
  %v6552 = vand.u32 %v4438, 4294901760
  %6553 = vmatpush.msra.mxu0 %v6552
  %v6554 = vand.u32 %v4436, 4294901760
  %6555 = vmatpush.msra.mxu0 %v6554
  %v6556 = vand.u32 %v4434, 4294901760
  %6557 = vmatpush.msra.mxu0 %v6556
  %v6558 = vand.u32 %v4432, 4294901760
  %6559 = vmatpush.msra.mxu0 %v6558
  %v6560 = vand.u32 %v4430, 4294901760
  %6561 = vmatpush.msra.mxu0 %v6560
  %v6562 = vand.u32 %v4428, 4294901760
  %6563 = vmatpush.msra.mxu0 %v6562
  %v6564 = vand.u32 %v4078, 4294901760
  %6565 = vmatmul.f32.gmra.mxu0 %v6564
  %v6566 = vpop.f32.mrf.mxu0
  %v6567 = vadd.f32 %v6530, %v6566
  %6568 = vdwg.mxu0
  %v6569 = vand.u32 %v4490, 4294901760
  %6570 = vmatpush.msra.mxu0 %v6569
  %v6571 = vand.u32 %v4488, 4294901760
  %6572 = vmatpush.msra.mxu0 %v6571
  %v6573 = vand.u32 %v4486, 4294901760
  %6574 = vmatpush.msra.mxu0 %v6573
  %v6575 = vand.u32 %v4484, 4294901760
  %6576 = vmatpush.msra.mxu0 %v6575
  %v6577 = vand.u32 %v4482, 4294901760
  %6578 = vmatpush.msra.mxu0 %v6577
  %v6579 = vand.u32 %v4480, 4294901760
  %6580 = vmatpush.msra.mxu0 %v6579
  %v6581 = vand.u32 %v4478, 4294901760
  %6582 = vmatpush.msra.mxu0 %v6581
  %v6583 = vand.u32 %v4476, 4294901760
  %6584 = vmatpush.msra.mxu0 %v6583
  %v6585 = vand.u32 %v4474, 4294901760
  %6586 = vmatpush.msra.mxu0 %v6585
  %v6587 = vand.u32 %v4472, 4294901760
  %6588 = vmatpush.msra.mxu0 %v6587
  %v6589 = vand.u32 %v4470, 4294901760
  %6590 = vmatpush.msra.mxu0 %v6589
  %v6591 = vand.u32 %v4468, 4294901760
  %6592 = vmatpush.msra.mxu0 %v6591
  %v6593 = vand.u32 %v4466, 4294901760
  %6594 = vmatpush.msra.mxu0 %v6593
  %v6595 = vand.u32 %v4464, 4294901760
  %6596 = vmatpush.msra.mxu0 %v6595
  %v6597 = vand.u32 %v4462, 4294901760
  %6598 = vmatpush.msra.mxu0 %v6597
  %v6599 = vand.u32 %v4460, 4294901760
  %6600 = vmatpush.msra.mxu0 %v6599
  %v6601 = vand.u32 %v4389, 4294901760
  %v6602 = vsub.f32 %v4389, %v6601
  %v6603 = vand.u32 %v6602, 4294901760
  %v6604 = vsub.f32 %v6602, %v6603
  %v6605 = vand.u32 %v6604, 4294901760
  %6606 = vmatmul.f32.gmra.mxu0 %v6605
  %v6607 = vpop.f32.mrf.mxu0
  %v6608 = vadd.f32 %v6567, %v6607
  %6609 = vdwg.mxu0
  %v6610 = vand.u32 %v4490, 4294901760
  %v6611 = vsub.f32 %v4490, %v6610
  %v6612 = vand.u32 %v6611, 4294901760
  %v6613 = vsub.f32 %v6611, %v6612
  %v6614 = vand.u32 %v6613, 4294901760
  %6615 = vmatpush.msra.mxu0 %v6614
  %v6616 = vand.u32 %v4488, 4294901760
  %v6617 = vsub.f32 %v4488, %v6616
  %v6618 = vand.u32 %v6617, 4294901760
  %v6619 = vsub.f32 %v6617, %v6618
  %v6620 = vand.u32 %v6619, 4294901760
  %6621 = vmatpush.msra.mxu0 %v6620
  %v6622 = vand.u32 %v4486, 4294901760
  %v6623 = vsub.f32 %v4486, %v6622
  %v6624 = vand.u32 %v6623, 4294901760
  %v6625 = vsub.f32 %v6623, %v6624
  %v6626 = vand.u32 %v6625, 4294901760
  %6627 = vmatpush.msra.mxu0 %v6626
  %v6628 = vand.u32 %v4484, 4294901760
  %v6629 = vsub.f32 %v4484, %v6628
  %v6630 = vand.u32 %v6629, 4294901760
  %v6631 = vsub.f32 %v6629, %v6630
  %v6632 = vand.u32 %v6631, 4294901760
  %6633 = vmatpush.msra.mxu0 %v6632
  %v6634 = vand.u32 %v4482, 4294901760
  %v6635 = vsub.f32 %v4482, %v6634
  %v6636 = vand.u32 %v6635, 4294901760
  %v6637 = vsub.f32 %v6635, %v6636
  %v6638 = vand.u32 %v6637, 4294901760
  %6639 = vmatpush.msra.mxu0 %v6638
  %v6640 = vand.u32 %v4480, 4294901760
  %v6641 = vsub.f32 %v4480, %v6640
  %v6642 = vand.u32 %v6641, 4294901760
  %v6643 = vsub.f32 %v6641, %v6642
  %v6644 = vand.u32 %v6643, 4294901760
  %6645 = vmatpush.msra.mxu0 %v6644
  %v6646 = vand.u32 %v4478, 4294901760
  %v6647 = vsub.f32 %v4478, %v6646
  %v6648 = vand.u32 %v6647, 4294901760
  %v6649 = vsub.f32 %v6647, %v6648
  %v6650 = vand.u32 %v6649, 4294901760
  %6651 = vmatpush.msra.mxu0 %v6650
  %v6652 = vand.u32 %v4476, 4294901760
  %v6653 = vsub.f32 %v4476, %v6652
  %v6654 = vand.u32 %v6653, 4294901760
  %v6655 = vsub.f32 %v6653, %v6654
  %v6656 = vand.u32 %v6655, 4294901760
  %6657 = vmatpush.msra.mxu0 %v6656
  %v6658 = vand.u32 %v4474, 4294901760
  %v6659 = vsub.f32 %v4474, %v6658
  %v6660 = vand.u32 %v6659, 4294901760
  %v6661 = vsub.f32 %v6659, %v6660
  %v6662 = vand.u32 %v6661, 4294901760
  %6663 = vmatpush.msra.mxu0 %v6662
  %v6664 = vand.u32 %v4472, 4294901760
  %v6665 = vsub.f32 %v4472, %v6664
  %v6666 = vand.u32 %v6665, 4294901760
  %v6667 = vsub.f32 %v6665, %v6666
  %v6668 = vand.u32 %v6667, 4294901760
  %6669 = vmatpush.msra.mxu0 %v6668
  %v6670 = vand.u32 %v4470, 4294901760
  %v6671 = vsub.f32 %v4470, %v6670
  %v6672 = vand.u32 %v6671, 4294901760
  %v6673 = vsub.f32 %v6671, %v6672
  %v6674 = vand.u32 %v6673, 4294901760
  %6675 = vmatpush.msra.mxu0 %v6674
  %v6676 = vand.u32 %v4468, 4294901760
  %v6677 = vsub.f32 %v4468, %v6676
  %v6678 = vand.u32 %v6677, 4294901760
  %v6679 = vsub.f32 %v6677, %v6678
  %v6680 = vand.u32 %v6679, 4294901760
  %6681 = vmatpush.msra.mxu0 %v6680
  %v6682 = vand.u32 %v4466, 4294901760
  %v6683 = vsub.f32 %v4466, %v6682
  %v6684 = vand.u32 %v6683, 4294901760
  %v6685 = vsub.f32 %v6683, %v6684
  %v6686 = vand.u32 %v6685, 4294901760
  %6687 = vmatpush.msra.mxu0 %v6686
  %v6688 = vand.u32 %v4464, 4294901760
  %v6689 = vsub.f32 %v4464, %v6688
  %v6690 = vand.u32 %v6689, 4294901760
  %v6691 = vsub.f32 %v6689, %v6690
  %v6692 = vand.u32 %v6691, 4294901760
  %6693 = vmatpush.msra.mxu0 %v6692
  %v6694 = vand.u32 %v4462, 4294901760
  %v6695 = vsub.f32 %v4462, %v6694
  %v6696 = vand.u32 %v6695, 4294901760
  %v6697 = vsub.f32 %v6695, %v6696
  %v6698 = vand.u32 %v6697, 4294901760
  %6699 = vmatpush.msra.mxu0 %v6698
  %v6700 = vand.u32 %v4460, 4294901760
  %v6701 = vsub.f32 %v4460, %v6700
  %v6702 = vand.u32 %v6701, 4294901760
  %v6703 = vsub.f32 %v6701, %v6702
  %v6704 = vand.u32 %v6703, 4294901760
  %6705 = vmatpush.msra.mxu0 %v6704
  %v6706 = vand.u32 %v4389, 4294901760
  %6707 = vmatmul.f32.gmra.mxu0 %v6706
  %v6708 = vpop.f32.mrf.mxu0
  %v6709 = vadd.f32 %v6608, %v6708
  %6710 = vdwg.mxu0
  %v6711 = vand.u32 %v4490, 4294901760
  %v6712 = vsub.f32 %v4490, %v6711
  %6713 = vmatpush.msra.mxu0 %v6712
  %v6714 = vand.u32 %v4488, 4294901760
  %v6715 = vsub.f32 %v4488, %v6714
  %6716 = vmatpush.msra.mxu0 %v6715
  %v6717 = vand.u32 %v4486, 4294901760
  %v6718 = vsub.f32 %v4486, %v6717
  %6719 = vmatpush.msra.mxu0 %v6718
  %v6720 = vand.u32 %v4484, 4294901760
  %v6721 = vsub.f32 %v4484, %v6720
  %6722 = vmatpush.msra.mxu0 %v6721
  %v6723 = vand.u32 %v4482, 4294901760
  %v6724 = vsub.f32 %v4482, %v6723
  %6725 = vmatpush.msra.mxu0 %v6724
  %v6726 = vand.u32 %v4480, 4294901760
  %v6727 = vsub.f32 %v4480, %v6726
  %6728 = vmatpush.msra.mxu0 %v6727
  %v6729 = vand.u32 %v4478, 4294901760
  %v6730 = vsub.f32 %v4478, %v6729
  %6731 = vmatpush.msra.mxu0 %v6730
  %v6732 = vand.u32 %v4476, 4294901760
  %v6733 = vsub.f32 %v4476, %v6732
  %6734 = vmatpush.msra.mxu0 %v6733
  %v6735 = vand.u32 %v4474, 4294901760
  %v6736 = vsub.f32 %v4474, %v6735
  %6737 = vmatpush.msra.mxu0 %v6736
  %v6738 = vand.u32 %v4472, 4294901760
  %v6739 = vsub.f32 %v4472, %v6738
  %6740 = vmatpush.msra.mxu0 %v6739
  %v6741 = vand.u32 %v4470, 4294901760
  %v6742 = vsub.f32 %v4470, %v6741
  %6743 = vmatpush.msra.mxu0 %v6742
  %v6744 = vand.u32 %v4468, 4294901760
  %v6745 = vsub.f32 %v4468, %v6744
  %6746 = vmatpush.msra.mxu0 %v6745
  %v6747 = vand.u32 %v4466, 4294901760
  %v6748 = vsub.f32 %v4466, %v6747
  %6749 = vmatpush.msra.mxu0 %v6748
  %v6750 = vand.u32 %v4464, 4294901760
  %v6751 = vsub.f32 %v4464, %v6750
  %6752 = vmatpush.msra.mxu0 %v6751
  %v6753 = vand.u32 %v4462, 4294901760
  %v6754 = vsub.f32 %v4462, %v6753
  %6755 = vmatpush.msra.mxu0 %v6754
  %v6756 = vand.u32 %v4460, 4294901760
  %v6757 = vsub.f32 %v4460, %v6756
  %6758 = vmatpush.msra.mxu0 %v6757
  %v6759 = vand.u32 %v4389, 4294901760
  %v6760 = vsub.f32 %v4389, %v6759
  %6761 = vmatmul.f32.gmra.mxu0 %v6760
  %v6762 = vpop.f32.mrf.mxu0
  %v6763 = vadd.f32 %v6709, %v6762
  %6764 = vdwg.mxu0
  %v6765 = vand.u32 %v4490, 4294901760
  %6766 = vmatpush.msra.mxu0 %v6765
  %v6767 = vand.u32 %v4488, 4294901760
  %6768 = vmatpush.msra.mxu0 %v6767
  %v6769 = vand.u32 %v4486, 4294901760
  %6770 = vmatpush.msra.mxu0 %v6769
  %v6771 = vand.u32 %v4484, 4294901760
  %6772 = vmatpush.msra.mxu0 %v6771
  %v6773 = vand.u32 %v4482, 4294901760
  %6774 = vmatpush.msra.mxu0 %v6773
  %v6775 = vand.u32 %v4480, 4294901760
  %6776 = vmatpush.msra.mxu0 %v6775
  %v6777 = vand.u32 %v4478, 4294901760
  %6778 = vmatpush.msra.mxu0 %v6777
  %v6779 = vand.u32 %v4476, 4294901760
  %6780 = vmatpush.msra.mxu0 %v6779
  %v6781 = vand.u32 %v4474, 4294901760
  %6782 = vmatpush.msra.mxu0 %v6781
  %v6783 = vand.u32 %v4472, 4294901760
  %6784 = vmatpush.msra.mxu0 %v6783
  %v6785 = vand.u32 %v4470, 4294901760
  %6786 = vmatpush.msra.mxu0 %v6785
  %v6787 = vand.u32 %v4468, 4294901760
  %6788 = vmatpush.msra.mxu0 %v6787
  %v6789 = vand.u32 %v4466, 4294901760
  %6790 = vmatpush.msra.mxu0 %v6789
  %v6791 = vand.u32 %v4464, 4294901760
  %6792 = vmatpush.msra.mxu0 %v6791
  %v6793 = vand.u32 %v4462, 4294901760
  %6794 = vmatpush.msra.mxu0 %v6793
  %v6795 = vand.u32 %v4460, 4294901760
  %6796 = vmatpush.msra.mxu0 %v6795
  %v6797 = vand.u32 %v4389, 4294901760
  %v6798 = vsub.f32 %v4389, %v6797
  %v6799 = vand.u32 %v6798, 4294901760
  %6800 = vmatmul.f32.gmra.mxu0 %v6799
  %v6801 = vpop.f32.mrf.mxu0
  %v6802 = vadd.f32 %v6763, %v6801
  %6803 = vdwg.mxu0
  %v6804 = vand.u32 %v4490, 4294901760
  %v6805 = vsub.f32 %v4490, %v6804
  %v6806 = vand.u32 %v6805, 4294901760
  %6807 = vmatpush.msra.mxu0 %v6806
  %v6808 = vand.u32 %v4488, 4294901760
  %v6809 = vsub.f32 %v4488, %v6808
  %v6810 = vand.u32 %v6809, 4294901760
  %6811 = vmatpush.msra.mxu0 %v6810
  %v6812 = vand.u32 %v4486, 4294901760
  %v6813 = vsub.f32 %v4486, %v6812
  %v6814 = vand.u32 %v6813, 4294901760
  %6815 = vmatpush.msra.mxu0 %v6814
  %v6816 = vand.u32 %v4484, 4294901760
  %v6817 = vsub.f32 %v4484, %v6816
  %v6818 = vand.u32 %v6817, 4294901760
  %6819 = vmatpush.msra.mxu0 %v6818
  %v6820 = vand.u32 %v4482, 4294901760
  %v6821 = vsub.f32 %v4482, %v6820
  %v6822 = vand.u32 %v6821, 4294901760
  %6823 = vmatpush.msra.mxu0 %v6822
  %v6824 = vand.u32 %v4480, 4294901760
  %v6825 = vsub.f32 %v4480, %v6824
  %v6826 = vand.u32 %v6825, 4294901760
  %6827 = vmatpush.msra.mxu0 %v6826
  %v6828 = vand.u32 %v4478, 4294901760
  %v6829 = vsub.f32 %v4478, %v6828
  %v6830 = vand.u32 %v6829, 4294901760
  %6831 = vmatpush.msra.mxu0 %v6830
  %v6832 = vand.u32 %v4476, 4294901760
  %v6833 = vsub.f32 %v4476, %v6832
  %v6834 = vand.u32 %v6833, 4294901760
  %6835 = vmatpush.msra.mxu0 %v6834
  %v6836 = vand.u32 %v4474, 4294901760
  %v6837 = vsub.f32 %v4474, %v6836
  %v6838 = vand.u32 %v6837, 4294901760
  %6839 = vmatpush.msra.mxu0 %v6838
  %v6840 = vand.u32 %v4472, 4294901760
  %v6841 = vsub.f32 %v4472, %v6840
  %v6842 = vand.u32 %v6841, 4294901760
  %6843 = vmatpush.msra.mxu0 %v6842
  %v6844 = vand.u32 %v4470, 4294901760
  %v6845 = vsub.f32 %v4470, %v6844
  %v6846 = vand.u32 %v6845, 4294901760
  %6847 = vmatpush.msra.mxu0 %v6846
  %v6848 = vand.u32 %v4468, 4294901760
  %v6849 = vsub.f32 %v4468, %v6848
  %v6850 = vand.u32 %v6849, 4294901760
  %6851 = vmatpush.msra.mxu0 %v6850
  %v6852 = vand.u32 %v4466, 4294901760
  %v6853 = vsub.f32 %v4466, %v6852
  %v6854 = vand.u32 %v6853, 4294901760
  %6855 = vmatpush.msra.mxu0 %v6854
  %v6856 = vand.u32 %v4464, 4294901760
  %v6857 = vsub.f32 %v4464, %v6856
  %v6858 = vand.u32 %v6857, 4294901760
  %6859 = vmatpush.msra.mxu0 %v6858
  %v6860 = vand.u32 %v4462, 4294901760
  %v6861 = vsub.f32 %v4462, %v6860
  %v6862 = vand.u32 %v6861, 4294901760
  %6863 = vmatpush.msra.mxu0 %v6862
  %v6864 = vand.u32 %v4460, 4294901760
  %v6865 = vsub.f32 %v4460, %v6864
  %v6866 = vand.u32 %v6865, 4294901760
  %6867 = vmatpush.msra.mxu0 %v6866
  %v6868 = vand.u32 %v4389, 4294901760
  %6869 = vmatmul.f32.gmra.mxu0 %v6868
  %v6870 = vpop.f32.mrf.mxu0
  %v6871 = vadd.f32 %v6802, %v6870
  %6872 = vdwg.mxu0
  %v6873 = vand.u32 %v4490, 4294901760
  %6874 = vmatpush.msra.mxu0 %v6873
  %v6875 = vand.u32 %v4488, 4294901760
  %6876 = vmatpush.msra.mxu0 %v6875
  %v6877 = vand.u32 %v4486, 4294901760
  %6878 = vmatpush.msra.mxu0 %v6877
  %v6879 = vand.u32 %v4484, 4294901760
  %6880 = vmatpush.msra.mxu0 %v6879
  %v6881 = vand.u32 %v4482, 4294901760
  %6882 = vmatpush.msra.mxu0 %v6881
  %v6883 = vand.u32 %v4480, 4294901760
  %6884 = vmatpush.msra.mxu0 %v6883
  %v6885 = vand.u32 %v4478, 4294901760
  %6886 = vmatpush.msra.mxu0 %v6885
  %v6887 = vand.u32 %v4476, 4294901760
  %6888 = vmatpush.msra.mxu0 %v6887
  %v6889 = vand.u32 %v4474, 4294901760
  %6890 = vmatpush.msra.mxu0 %v6889
  %v6891 = vand.u32 %v4472, 4294901760
  %6892 = vmatpush.msra.mxu0 %v6891
  %v6893 = vand.u32 %v4470, 4294901760
  %6894 = vmatpush.msra.mxu0 %v6893
  %v6895 = vand.u32 %v4468, 4294901760
  %6896 = vmatpush.msra.mxu0 %v6895
  %v6897 = vand.u32 %v4466, 4294901760
  %6898 = vmatpush.msra.mxu0 %v6897
  %v6899 = vand.u32 %v4464, 4294901760
  %6900 = vmatpush.msra.mxu0 %v6899
  %v6901 = vand.u32 %v4462, 4294901760
  %6902 = vmatpush.msra.mxu0 %v6901
  %v6903 = vand.u32 %v4460, 4294901760
  %6904 = vmatpush.msra.mxu0 %v6903
  %v6905 = vand.u32 %v4389, 4294901760
  %6906 = vmatmul.f32.gmra.mxu0 %v6905
  %v6907 = vpop.f32.mrf.mxu0
  %v6908 = vadd.f32 %v6871, %v6907
  %6909 = vdwg.mxu0
  %v6910 = vand.u32 %v4522, 4294901760
  %6911 = vmatpush.msra.mxu0 %v6910
  %v6912 = vand.u32 %v4520, 4294901760
  %6913 = vmatpush.msra.mxu0 %v6912
  %v6914 = vand.u32 %v4518, 4294901760
  %6915 = vmatpush.msra.mxu0 %v6914
  %v6916 = vand.u32 %v4516, 4294901760
  %6917 = vmatpush.msra.mxu0 %v6916
  %v6918 = vand.u32 %v4514, 4294901760
  %6919 = vmatpush.msra.mxu0 %v6918
  %v6920 = vand.u32 %v4512, 4294901760
  %6921 = vmatpush.msra.mxu0 %v6920
  %v6922 = vand.u32 %v4510, 4294901760
  %6923 = vmatpush.msra.mxu0 %v6922
  %v6924 = vand.u32 %v4508, 4294901760
  %6925 = vmatpush.msra.mxu0 %v6924
  %v6926 = vand.u32 %v4506, 4294901760
  %6927 = vmatpush.msra.mxu0 %v6926
  %v6928 = vand.u32 %v4504, 4294901760
  %6929 = vmatpush.msra.mxu0 %v6928
  %v6930 = vand.u32 %v4502, 4294901760
  %6931 = vmatpush.msra.mxu0 %v6930
  %v6932 = vand.u32 %v4500, 4294901760
  %6933 = vmatpush.msra.mxu0 %v6932
  %v6934 = vand.u32 %v4498, 4294901760
  %6935 = vmatpush.msra.mxu0 %v6934
  %v6936 = vand.u32 %v4496, 4294901760
  %6937 = vmatpush.msra.mxu0 %v6936
  %v6938 = vand.u32 %v4494, 4294901760
  %6939 = vmatpush.msra.mxu0 %v6938
  %v6940 = vand.u32 %v4492, 4294901760
  %6941 = vmatpush.msra.mxu0 %v6940
  %v6942 = vand.u32 %v4390, 4294901760
  %v6943 = vsub.f32 %v4390, %v6942
  %v6944 = vand.u32 %v6943, 4294901760
  %v6945 = vsub.f32 %v6943, %v6944
  %v6946 = vand.u32 %v6945, 4294901760
  %6947 = vmatmul.f32.gmra.mxu0 %v6946
  %v6948 = vpop.f32.mrf.mxu0
  %v6949 = vadd.f32 %v6908, %v6948
  %6950 = vdwg.mxu0
  %v6951 = vand.u32 %v4522, 4294901760
  %v6952 = vsub.f32 %v4522, %v6951
  %v6953 = vand.u32 %v6952, 4294901760
  %v6954 = vsub.f32 %v6952, %v6953
  %v6955 = vand.u32 %v6954, 4294901760
  %6956 = vmatpush.msra.mxu0 %v6955
  %v6957 = vand.u32 %v4520, 4294901760
  %v6958 = vsub.f32 %v4520, %v6957
  %v6959 = vand.u32 %v6958, 4294901760
  %v6960 = vsub.f32 %v6958, %v6959
  %v6961 = vand.u32 %v6960, 4294901760
  %6962 = vmatpush.msra.mxu0 %v6961
  %v6963 = vand.u32 %v4518, 4294901760
  %v6964 = vsub.f32 %v4518, %v6963
  %v6965 = vand.u32 %v6964, 4294901760
  %v6966 = vsub.f32 %v6964, %v6965
  %v6967 = vand.u32 %v6966, 4294901760
  %6968 = vmatpush.msra.mxu0 %v6967
  %v6969 = vand.u32 %v4516, 4294901760
  %v6970 = vsub.f32 %v4516, %v6969
  %v6971 = vand.u32 %v6970, 4294901760
  %v6972 = vsub.f32 %v6970, %v6971
  %v6973 = vand.u32 %v6972, 4294901760
  %6974 = vmatpush.msra.mxu0 %v6973
  %v6975 = vand.u32 %v4514, 4294901760
  %v6976 = vsub.f32 %v4514, %v6975
  %v6977 = vand.u32 %v6976, 4294901760
  %v6978 = vsub.f32 %v6976, %v6977
  %v6979 = vand.u32 %v6978, 4294901760
  %6980 = vmatpush.msra.mxu0 %v6979
  %v6981 = vand.u32 %v4512, 4294901760
  %v6982 = vsub.f32 %v4512, %v6981
  %v6983 = vand.u32 %v6982, 4294901760
  %v6984 = vsub.f32 %v6982, %v6983
  %v6985 = vand.u32 %v6984, 4294901760
  %6986 = vmatpush.msra.mxu0 %v6985
  %v6987 = vand.u32 %v4510, 4294901760
  %v6988 = vsub.f32 %v4510, %v6987
  %v6989 = vand.u32 %v6988, 4294901760
  %v6990 = vsub.f32 %v6988, %v6989
  %v6991 = vand.u32 %v6990, 4294901760
  %6992 = vmatpush.msra.mxu0 %v6991
  %v6993 = vand.u32 %v4508, 4294901760
  %v6994 = vsub.f32 %v4508, %v6993
  %v6995 = vand.u32 %v6994, 4294901760
  %v6996 = vsub.f32 %v6994, %v6995
  %v6997 = vand.u32 %v6996, 4294901760
  %6998 = vmatpush.msra.mxu0 %v6997
  %v6999 = vand.u32 %v4506, 4294901760
  %v7000 = vsub.f32 %v4506, %v6999
  %v7001 = vand.u32 %v7000, 4294901760
  %v7002 = vsub.f32 %v7000, %v7001
  %v7003 = vand.u32 %v7002, 4294901760
  %7004 = vmatpush.msra.mxu0 %v7003
  %v7005 = vand.u32 %v4504, 4294901760
  %v7006 = vsub.f32 %v4504, %v7005
  %v7007 = vand.u32 %v7006, 4294901760
  %v7008 = vsub.f32 %v7006, %v7007
  %v7009 = vand.u32 %v7008, 4294901760
  %7010 = vmatpush.msra.mxu0 %v7009
  %v7011 = vand.u32 %v4502, 4294901760
  %v7012 = vsub.f32 %v4502, %v7011
  %v7013 = vand.u32 %v7012, 4294901760
  %v7014 = vsub.f32 %v7012, %v7013
  %v7015 = vand.u32 %v7014, 4294901760
  %7016 = vmatpush.msra.mxu0 %v7015
  %v7017 = vand.u32 %v4500, 4294901760
  %v7018 = vsub.f32 %v4500, %v7017
  %v7019 = vand.u32 %v7018, 4294901760
  %v7020 = vsub.f32 %v7018, %v7019
  %v7021 = vand.u32 %v7020, 4294901760
  %7022 = vmatpush.msra.mxu0 %v7021
  %v7023 = vand.u32 %v4498, 4294901760
  %v7024 = vsub.f32 %v4498, %v7023
  %v7025 = vand.u32 %v7024, 4294901760
  %v7026 = vsub.f32 %v7024, %v7025
  %v7027 = vand.u32 %v7026, 4294901760
  %7028 = vmatpush.msra.mxu0 %v7027
  %v7029 = vand.u32 %v4496, 4294901760
  %v7030 = vsub.f32 %v4496, %v7029
  %v7031 = vand.u32 %v7030, 4294901760
  %v7032 = vsub.f32 %v7030, %v7031
  %v7033 = vand.u32 %v7032, 4294901760
  %7034 = vmatpush.msra.mxu0 %v7033
  %v7035 = vand.u32 %v4494, 4294901760
  %v7036 = vsub.f32 %v4494, %v7035
  %v7037 = vand.u32 %v7036, 4294901760
  %v7038 = vsub.f32 %v7036, %v7037
  %v7039 = vand.u32 %v7038, 4294901760
  %7040 = vmatpush.msra.mxu0 %v7039
  %v7041 = vand.u32 %v4492, 4294901760
  %v7042 = vsub.f32 %v4492, %v7041
  %v7043 = vand.u32 %v7042, 4294901760
  %v7044 = vsub.f32 %v7042, %v7043
  %v7045 = vand.u32 %v7044, 4294901760
  %7046 = vmatpush.msra.mxu0 %v7045
  %v7047 = vand.u32 %v4390, 4294901760
  %7048 = vmatmul.f32.gmra.mxu0 %v7047
  %v7049 = vpop.f32.mrf.mxu0
  %v7050 = vadd.f32 %v6949, %v7049
  %7051 = vdwg.mxu0
  %v7052 = vand.u32 %v4522, 4294901760
  %v7053 = vsub.f32 %v4522, %v7052
  %7054 = vmatpush.msra.mxu0 %v7053
  %v7055 = vand.u32 %v4520, 4294901760
  %v7056 = vsub.f32 %v4520, %v7055
  %7057 = vmatpush.msra.mxu0 %v7056
  %v7058 = vand.u32 %v4518, 4294901760
  %v7059 = vsub.f32 %v4518, %v7058
  %7060 = vmatpush.msra.mxu0 %v7059
  %v7061 = vand.u32 %v4516, 4294901760
  %v7062 = vsub.f32 %v4516, %v7061
  %7063 = vmatpush.msra.mxu0 %v7062
  %v7064 = vand.u32 %v4514, 4294901760
  %v7065 = vsub.f32 %v4514, %v7064
  %7066 = vmatpush.msra.mxu0 %v7065
  %v7067 = vand.u32 %v4512, 4294901760
  %v7068 = vsub.f32 %v4512, %v7067
  %7069 = vmatpush.msra.mxu0 %v7068
  %v7070 = vand.u32 %v4510, 4294901760
  %v7071 = vsub.f32 %v4510, %v7070
  %7072 = vmatpush.msra.mxu0 %v7071
  %v7073 = vand.u32 %v4508, 4294901760
  %v7074 = vsub.f32 %v4508, %v7073
  %7075 = vmatpush.msra.mxu0 %v7074
  %v7076 = vand.u32 %v4506, 4294901760
  %v7077 = vsub.f32 %v4506, %v7076
  %7078 = vmatpush.msra.mxu0 %v7077
  %v7079 = vand.u32 %v4504, 4294901760
  %v7080 = vsub.f32 %v4504, %v7079
  %7081 = vmatpush.msra.mxu0 %v7080
  %v7082 = vand.u32 %v4502, 4294901760
  %v7083 = vsub.f32 %v4502, %v7082
  %7084 = vmatpush.msra.mxu0 %v7083
  %v7085 = vand.u32 %v4500, 4294901760
  %v7086 = vsub.f32 %v4500, %v7085
  %7087 = vmatpush.msra.mxu0 %v7086
  %v7088 = vand.u32 %v4498, 4294901760
  %v7089 = vsub.f32 %v4498, %v7088
  %7090 = vmatpush.msra.mxu0 %v7089
  %v7091 = vand.u32 %v4496, 4294901760
  %v7092 = vsub.f32 %v4496, %v7091
  %7093 = vmatpush.msra.mxu0 %v7092
  %v7094 = vand.u32 %v4494, 4294901760
  %v7095 = vsub.f32 %v4494, %v7094
  %7096 = vmatpush.msra.mxu0 %v7095
  %v7097 = vand.u32 %v4492, 4294901760
  %v7098 = vsub.f32 %v4492, %v7097
  %7099 = vmatpush.msra.mxu0 %v7098
  %v7100 = vand.u32 %v4390, 4294901760
  %v7101 = vsub.f32 %v4390, %v7100
  %7102 = vmatmul.f32.gmra.mxu0 %v7101
  %v7103 = vpop.f32.mrf.mxu0
  %v7104 = vadd.f32 %v7050, %v7103
  %7105 = vdwg.mxu0
  %v7106 = vand.u32 %v4522, 4294901760
  %7107 = vmatpush.msra.mxu0 %v7106
  %v7108 = vand.u32 %v4520, 4294901760
  %7109 = vmatpush.msra.mxu0 %v7108
  %v7110 = vand.u32 %v4518, 4294901760
  %7111 = vmatpush.msra.mxu0 %v7110
  %v7112 = vand.u32 %v4516, 4294901760
  %7113 = vmatpush.msra.mxu0 %v7112
  %v7114 = vand.u32 %v4514, 4294901760
  %7115 = vmatpush.msra.mxu0 %v7114
  %v7116 = vand.u32 %v4512, 4294901760
  %7117 = vmatpush.msra.mxu0 %v7116
  %v7118 = vand.u32 %v4510, 4294901760
  %7119 = vmatpush.msra.mxu0 %v7118
  %v7120 = vand.u32 %v4508, 4294901760
  %7121 = vmatpush.msra.mxu0 %v7120
  %v7122 = vand.u32 %v4506, 4294901760
  %7123 = vmatpush.msra.mxu0 %v7122
  %v7124 = vand.u32 %v4504, 4294901760
  %7125 = vmatpush.msra.mxu0 %v7124
  %v7126 = vand.u32 %v4502, 4294901760
  %7127 = vmatpush.msra.mxu0 %v7126
  %v7128 = vand.u32 %v4500, 4294901760
  %7129 = vmatpush.msra.mxu0 %v7128
  %v7130 = vand.u32 %v4498, 4294901760
  %7131 = vmatpush.msra.mxu0 %v7130
  %v7132 = vand.u32 %v4496, 4294901760
  %7133 = vmatpush.msra.mxu0 %v7132
  %v7134 = vand.u32 %v4494, 4294901760
  %7135 = vmatpush.msra.mxu0 %v7134
  %v7136 = vand.u32 %v4492, 4294901760
  %7137 = vmatpush.msra.mxu0 %v7136
  %v7138 = vand.u32 %v4390, 4294901760
  %v7139 = vsub.f32 %v4390, %v7138
  %v7140 = vand.u32 %v7139, 4294901760
  %7141 = vmatmul.f32.gmra.mxu0 %v7140
  %v7142 = vpop.f32.mrf.mxu0
  %v7143 = vadd.f32 %v7104, %v7142
  %7144 = vdwg.mxu0
  %v7145 = vand.u32 %v4522, 4294901760
  %v7146 = vsub.f32 %v4522, %v7145
  %v7147 = vand.u32 %v7146, 4294901760
  %7148 = vmatpush.msra.mxu0 %v7147
  %v7149 = vand.u32 %v4520, 4294901760
  %v7150 = vsub.f32 %v4520, %v7149
  %v7151 = vand.u32 %v7150, 4294901760
  %7152 = vmatpush.msra.mxu0 %v7151
  %v7153 = vand.u32 %v4518, 4294901760
  %v7154 = vsub.f32 %v4518, %v7153
  %v7155 = vand.u32 %v7154, 4294901760
  %7156 = vmatpush.msra.mxu0 %v7155
  %v7157 = vand.u32 %v4516, 4294901760
  %v7158 = vsub.f32 %v4516, %v7157
  %v7159 = vand.u32 %v7158, 4294901760
  %7160 = vmatpush.msra.mxu0 %v7159
  %v7161 = vand.u32 %v4514, 4294901760
  %v7162 = vsub.f32 %v4514, %v7161
  %v7163 = vand.u32 %v7162, 4294901760
  %7164 = vmatpush.msra.mxu0 %v7163
  %v7165 = vand.u32 %v4512, 4294901760
  %v7166 = vsub.f32 %v4512, %v7165
  %v7167 = vand.u32 %v7166, 4294901760
  %7168 = vmatpush.msra.mxu0 %v7167
  %v7169 = vand.u32 %v4510, 4294901760
  %v7170 = vsub.f32 %v4510, %v7169
  %v7171 = vand.u32 %v7170, 4294901760
  %7172 = vmatpush.msra.mxu0 %v7171
  %v7173 = vand.u32 %v4508, 4294901760
  %v7174 = vsub.f32 %v4508, %v7173
  %v7175 = vand.u32 %v7174, 4294901760
  %7176 = vmatpush.msra.mxu0 %v7175
  %v7177 = vand.u32 %v4506, 4294901760
  %v7178 = vsub.f32 %v4506, %v7177
  %v7179 = vand.u32 %v7178, 4294901760
  %7180 = vmatpush.msra.mxu0 %v7179
  %v7181 = vand.u32 %v4504, 4294901760
  %v7182 = vsub.f32 %v4504, %v7181
  %v7183 = vand.u32 %v7182, 4294901760
  %7184 = vmatpush.msra.mxu0 %v7183
  %v7185 = vand.u32 %v4502, 4294901760
  %v7186 = vsub.f32 %v4502, %v7185
  %v7187 = vand.u32 %v7186, 4294901760
  %7188 = vmatpush.msra.mxu0 %v7187
  %v7189 = vand.u32 %v4500, 4294901760
  %v7190 = vsub.f32 %v4500, %v7189
  %v7191 = vand.u32 %v7190, 4294901760
  %7192 = vmatpush.msra.mxu0 %v7191
  %v7193 = vand.u32 %v4498, 4294901760
  %v7194 = vsub.f32 %v4498, %v7193
  %v7195 = vand.u32 %v7194, 4294901760
  %7196 = vmatpush.msra.mxu0 %v7195
  %v7197 = vand.u32 %v4496, 4294901760
  %v7198 = vsub.f32 %v4496, %v7197
  %v7199 = vand.u32 %v7198, 4294901760
  %7200 = vmatpush.msra.mxu0 %v7199
  %v7201 = vand.u32 %v4494, 4294901760
  %v7202 = vsub.f32 %v4494, %v7201
  %v7203 = vand.u32 %v7202, 4294901760
  %7204 = vmatpush.msra.mxu0 %v7203
  %v7205 = vand.u32 %v4492, 4294901760
  %v7206 = vsub.f32 %v4492, %v7205
  %v7207 = vand.u32 %v7206, 4294901760
  %7208 = vmatpush.msra.mxu0 %v7207
  %v7209 = vand.u32 %v4390, 4294901760
  %7210 = vmatmul.f32.gmra.mxu0 %v7209
  %v7211 = vpop.f32.mrf.mxu0
  %v7212 = vadd.f32 %v7143, %v7211
  %7213 = vdwg.mxu0
  %v7214 = vand.u32 %v4522, 4294901760
  %7215 = vmatpush.msra.mxu0 %v7214
  %v7216 = vand.u32 %v4520, 4294901760
  %7217 = vmatpush.msra.mxu0 %v7216
  %v7218 = vand.u32 %v4518, 4294901760
  %7219 = vmatpush.msra.mxu0 %v7218
  %v7220 = vand.u32 %v4516, 4294901760
  %7221 = vmatpush.msra.mxu0 %v7220
  %v7222 = vand.u32 %v4514, 4294901760
  %7223 = vmatpush.msra.mxu0 %v7222
  %v7224 = vand.u32 %v4512, 4294901760
  %7225 = vmatpush.msra.mxu0 %v7224
  %v7226 = vand.u32 %v4510, 4294901760
  %7227 = vmatpush.msra.mxu0 %v7226
  %v7228 = vand.u32 %v4508, 4294901760
  %7229 = vmatpush.msra.mxu0 %v7228
  %v7230 = vand.u32 %v4506, 4294901760
  %7231 = vmatpush.msra.mxu0 %v7230
  %v7232 = vand.u32 %v4504, 4294901760
  %7233 = vmatpush.msra.mxu0 %v7232
  %v7234 = vand.u32 %v4502, 4294901760
  %7235 = vmatpush.msra.mxu0 %v7234
  %v7236 = vand.u32 %v4500, 4294901760
  %7237 = vmatpush.msra.mxu0 %v7236
  %v7238 = vand.u32 %v4498, 4294901760
  %7239 = vmatpush.msra.mxu0 %v7238
  %v7240 = vand.u32 %v4496, 4294901760
  %7241 = vmatpush.msra.mxu0 %v7240
  %v7242 = vand.u32 %v4494, 4294901760
  %7243 = vmatpush.msra.mxu0 %v7242
  %v7244 = vand.u32 %v4492, 4294901760
  %7245 = vmatpush.msra.mxu0 %v7244
  %v7246 = vand.u32 %v4390, 4294901760
  %7247 = vmatmul.f32.gmra.mxu0 %v7246
  %v7248 = vpop.f32.mrf.mxu0
  %v7249 = vadd.f32 %v7212, %v7248
  %7250 = vdwg.mxu0
  %v7251 = vmul.f32 %v5885, 0.00390625
  %v7252 = vmul.f32 %v7249, 0.00390625
  %7253 = vst [vmem:[%s7] sm:$0xff] %v7251
  %7254 = vst [vmem:[%s7 + $0x8] sm:$0xff] %v7252
  // Predicated region
  $region30: #{fourier_branch_pallas.1} parent=0 // pred_check
    _
  $region31: #{fourier_branch_pallas.1} parent=0 // pred_check_branch
    %7256 = sbr.rel (0) target = $region33
  $region32: #{fourier_branch_pallas.1} parent=0 // pred_region
    _
  $region33: #{fourier_branch_pallas.1} parent=0 // pred_fallthru
    _
  // Predicated region
  $region34: #{fourier_branch_pallas.1} parent=0 // pred_check
    _
  $region35: #{fourier_branch_pallas.1} parent=0 // pred_check_branch
    %7258 = sbr.rel (0) target = $region37
  $region36: #{fourier_branch_pallas.1} parent=0 // pred_region
    _
  $region37: #{fourier_branch_pallas.1} parent=0 // pred_fallthru
    _
  %7259 = vsyncmov [#allocation4]
  %s7260 = vpop.sfrf %7259
  %p7261 = scmp.eq.s32.totalorder %s7260, 0
  %p7262 = pneg %p7261
  %7264 = shalt.err (%p7262)
  %s7265 = scalar_lea.sflag [#allocation4], 1
  %7266 = vsyncmov %s7265
  %s7267 = vpop.sfrf %7266
  %p7268 = scmp.eq.s32.totalorder %s7267, 0
  %p7269 = pneg %p7268
  %7271 = shalt.err (%p7269)

</llo_original>
